<compile_context>
chip_gen: v7x
topology: tpu7x:2x2x1
jax: 0.10.0
libtpu: 0.0.40
codegen_flags: <defaults>
</compile_context>

<pallas_src>
import functools

import jax
import jax.numpy as jnp
from jax.experimental import pallas as pl
from jax.experimental.pallas import tpu as pltpu


def _round_up(x: int, m: int) -> int:
    return ((x + m - 1) // m) * m


# ----------------------------------------------------------------------------
# Pallas kernel: fused (patches @ [W_feat|W_gate]) + bias, LeakyReLU * sigmoid
# gating, optional final Sigmoid.  MXU inputs bf16, accumulation/elementwise f32.
# ----------------------------------------------------------------------------
def _gated_conv_kernel(p_ref, w_ref, b_ref, o_ref, *, cpad: int,
                       final_sigmoid: bool):
    acc = jnp.dot(p_ref[...], w_ref[...],
                  preferred_element_type=jnp.float32)        # (TM, 2*Cpad) f32
    acc = acc + b_ref[...]                                   # broadcast bias
    feat = acc[:, :cpad]
    gate = acc[:, cpad:]
    act = jnp.where(feat >= 0.0, feat, 0.2 * feat)           # LeakyReLU(0.2)
    # sigmoid(gate): exp -> EUP, approx reciprocal keeps the divide off the VALU
    out = act * pl.reciprocal(1.0 + jnp.exp(-gate), approx=True)
    if final_sigmoid:
        out = 1.0 / (1.0 + jnp.exp(-out))                    # exact nn.Sigmoid
    o_ref[...] = out.astype(o_ref.dtype)


def _gated_conv_matmul(patches, w_fused, b_fused, *, cpad: int,
                       final_sigmoid: bool, out_dtype):
    """patches: (M, Kp) bf16; w_fused: (Kp, 2*cpad) bf16; b_fused: (1, 2*cpad) f32."""
    M, Kp = patches.shape
    # Per-layer tile: no pointless padding of tiny deep-layer M up to 128.
    tm = min(512, _round_up(M, 16))
    Mpad = _round_up(M, tm)
    if Mpad != M:
        patches = jnp.pad(patches, ((0, Mpad - M), (0, 0)))

    kern = functools.partial(_gated_conv_kernel, cpad=cpad,
                             final_sigmoid=final_sigmoid)
    out = pl.pallas_call(
        kern,
        out_shape=jax.ShapeDtypeStruct((Mpad, cpad), out_dtype),
        grid=(Mpad // tm,),
        in_specs=[
            pl.BlockSpec((tm, Kp), lambda i: (i, 0)),          # patches tile
            pl.BlockSpec((Kp, 2 * cpad), lambda i: (0, 0)),    # fused weights (resident)
            pl.BlockSpec((1, 2 * cpad), lambda i: (0, 0)),     # fused bias (resident)
        ],
        out_specs=pl.BlockSpec((tm, cpad), lambda i: (i, 0)),
        compiler_params=pltpu.CompilerParams(
            dimension_semantics=("parallel",)),
    )(patches, w_fused, b_fused)
    return out[:M]


# ----------------------------------------------------------------------------
# Glue: 3-D im2col (channels-last) and fused weight re-layout.
# ----------------------------------------------------------------------------
def _extract_patches_3d(x, ksize, stride, pad):
    """x: (N, D, H, W, C) -> (N*Do*Ho*Wo, kd*kh*kw*C), plus (N, Do, Ho, Wo)."""
    kd, kh, kw = ksize
    sd, sh, sw = stride
    pd, ph, pw = pad
    x = jnp.pad(x, ((0, 0), (pd, pd), (ph, ph), (pw, pw), (0, 0)))
    N, D, H, W, C = x.shape
    Do = (D - kd) // sd + 1
    Ho = (H - kh) // sh + 1
    Wo = (W - kw) // sw + 1
    taps = []
    for dz in range(kd):
        for dy in range(kh):
            for dx in range(kw):
                taps.append(x[:, dz:dz + Do * sd:sd,
                              dy:dy + Ho * sh:sh,
                              dx:dx + Wo * sw:sw, :])
    p = jnp.stack(taps, axis=-2)                 # (N, Do, Ho, Wo, kd*kh*kw, C)
    p = p.reshape(N * Do * Ho * Wo, kd * kh * kw * C)
    return p, (N, Do, Ho, Wo)


def _fuse_weights(wf, bf, wg, bg, cin_pad: int, cout_pad: int):
    """torch Conv3d weights (Cout, Cin, kd, kh, kw) -> bf16 (Kp, 2*cout_pad)
    matmul weight and f32 (1, 2*cout_pad) bias.  Cin/Cout zero-padded so padded
    activation channels stay exactly zero."""
    def relayout(w):
        cout, cin, kd, kh, kw = w.shape
        w = jnp.pad(w, ((0, cout_pad - cout), (0, cin_pad - cin),
                        (0, 0), (0, 0), (0, 0)))
        w = jnp.transpose(w, (2, 3, 4, 1, 0))    # (kd, kh, kw, Cin_pad, Cout_pad)
        return w.reshape(kd * kh * kw * cin_pad, cout_pad)

    w_fused = jnp.concatenate([relayout(wf), relayout(wg)],
                              axis=1).astype(jnp.bfloat16)

    def padb(b):
        return jnp.pad(b, (0, cout_pad - b.shape[0]))

    b_fused = jnp.concatenate([padb(bf), padb(bg)]).reshape(1, 2 * cout_pad)
    return w_fused, b_fused.astype(jnp.float32)


# ----------------------------------------------------------------------------
# Discriminator forward.
# ----------------------------------------------------------------------------
def _layer_configs(feature_num, in_channels):
    f = feature_num
    return [
        # (Cin, Cout, kernel, stride, padding)
        (in_channels, f * 1, (3, 5, 5), (1, 2, 2), (1, 1, 1)),  # padding=1
        (f * 1, f * 2, (3, 5, 5), (1, 2, 2), (1, 2, 2)),
        (f * 2, f * 4, (3, 5, 5), (1, 2, 2), (1, 2, 2)),
        (f * 4, f * 4, (3, 5, 5), (1, 2, 2), (1, 2, 2)),
        (f * 4, f * 4, (3, 5, 5), (1, 2, 2), (1, 2, 2)),
    ]


def init_params(key, feature_num, in_channels):
    params = []
    for (cin, cout, (kd, kh, kw), _, _) in _layer_configs(feature_num,
                                                          in_channels):
        key, k1, k2, k3, k4 = jax.random.split(key, 5)
        scale = 1.0 / jnp.sqrt(float(cin * kd * kh * kw))
        wf = jax.random.normal(k1, (cout, cin, kd, kh, kw), jnp.float32) * scale
        bf = jax.random.normal(k2, (cout,), jnp.float32) * scale
        wg = jax.random.normal(k3, (cout, cin, kd, kh, kw), jnp.float32) * scale
        bg = jax.random.normal(k4, (cout,), jnp.float32) * scale
        params.append((wf, bf, wg, bg))
    return params


def discriminator_forward(x, params, feature_num, in_channels):
    """x: (N, T, C, H, W) f32 (PyTorch convention). Returns (N, T, Cout, Ho, Wo) f32."""
    cfgs = _layer_configs(feature_num, in_channels)
    n_layers = len(cfgs)

    # preprocess: (N, T, C, H, W) -> channels-last (N, T, H, W, C), bf16,
    # channels zero-padded to a multiple of 8 (carried padded between layers).
    h = jnp.transpose(x, (0, 1, 3, 4, 2)).astype(jnp.bfloat16)
    cin_pad = _round_up(in_channels, 8)
    h = jnp.pad(h, ((0, 0), (0, 0), (0, 0), (0, 0), (0, cin_pad - in_channels)))

    for li, ((cin, cout, k, s, p), (wf, bf, wg, bg)) in enumerate(
            zip(cfgs, params)):
        last = li == n_layers - 1
        cout_pad = _round_up(cout, 8)
        w_fused, b_fused = _fuse_weights(wf, bf, wg, bg, cin_pad, cout_pad)
        patches, (N, Do, Ho, Wo) = _extract_patches_3d(h, k, s, p)
        out2d = _gated_conv_matmul(
            patches, w_fused, b_fused, cpad=cout_pad,
            final_sigmoid=last,                    # fuse nn.Sigmoid into last layer
            out_dtype=jnp.float32 if last else jnp.bfloat16)
        h = out2d.reshape(N, Do, Ho, Wo, cout_pad)
        cin_pad = cout_pad

    # postprocess: drop padded channels, back to (N, T, C, H, W) in f32.
    cout_last = cfgs[-1][1]
    h = h[..., :cout_last].astype(jnp.float32)
    return jnp.transpose(h, (0, 1, 4, 2, 3))


if __name__ == "__main__":
    feature_num = 4
    in_channels = 4
    N, T, H, W = 1, 4, 32, 32

    key = jax.random.PRNGKey(0)
    kx, kp = jax.random.split(key)
    x = jax.random.normal(kx, (N, T, in_channels, H, W), jnp.float32)
    params = init_params(kp, feature_num, in_channels)

    fwd = jax.jit(functools.partial(discriminator_forward,
                                    feature_num=feature_num,
                                    in_channels=in_channels))
    out = jax.block_until_ready(fwd(x, params))

    # Expected: temporal dim preserved (T=4), spatial 32 -> 15 -> 8 -> 4 -> 2 -> 1,
    # channels 4 -> 16, output in (0, 1) from the final sigmoid.
    assert out.shape == (N, T, feature_num * 4, 1, 1), out.shape
    assert bool(jnp.all((out > 0.0) & (out < 1.0)))
    print("KERNEL_OK")
</pallas_src>

<mosaic_0001>
module attributes {stable_mosaic.version = 11 : i64} {
  func.func @_gated_conv_kernel(%arg0: i32, %arg1: memref<512x600xbf16, #tpu.memory_space<vmem>>, %arg2: memref<600x16xbf16, #tpu.memory_space<vmem>>, %arg3: memref<1x16xf32, #tpu.memory_space<vmem>>, %arg4: memref<512x8xbf16, #tpu.memory_space<vmem>>) attributes {dimension_semantics = [#tpu.dimension_semantics<parallel>], iteration_bounds = array<i64: 2>, scalar_prefetch = 0 : i64, scratch_operands = 0 : i64, tpu.core_type = #tpu.core_type<tc>, window_params = [{transform_indices = @transform_0, window_bounds = array<i64: 512, 600>}, {pipeline_mode = #tpu.pipeline_mode<synchronous>, transform_indices = @transform_1, window_bounds = array<i64: 600, 16>}, {pipeline_mode = #tpu.pipeline_mode<synchronous>, transform_indices = @transform_2, window_bounds = array<i64: 1, 16>}, {transform_indices = @transform_3, window_bounds = array<i64: 512, 8>}]} {
    %c0 = arith.constant 0 : index
    %c0_0 = arith.constant 0 : index
    %0 = vector.load %arg1[%c0, %c0_0] : memref<512x600xbf16, #tpu.memory_space<vmem>>, vector<512x600xbf16>
    %c0_1 = arith.constant 0 : index
    %c0_2 = arith.constant 0 : index
    %1 = vector.load %arg2[%c0_1, %c0_2] : memref<600x16xbf16, #tpu.memory_space<vmem>>, vector<600x16xbf16>
    %cst = arith.constant dense<0.000000e+00> : vector<512x16xf32>
    %2 = tpu.matmul %0, %1, %cst {dimension_numbers = #tpu.dot_dimension_numbers<[1], [0], [0], [1], [0, 0, 1, 1], [], []>} : vector<512x600xbf16>, vector<600x16xbf16>, vector<512x16xf32> -> vector<512x16xf32>
    %c0_3 = arith.constant 0 : index
    %c0_4 = arith.constant 0 : index
    %3 = vector.load %arg3[%c0_3, %c0_4] : memref<1x16xf32, #tpu.memory_space<vmem>>, vector<1x16xf32>
    %4 = vector.broadcast %3 : vector<1x16xf32> to vector<512x16xf32>
    %5 = arith.addf %2, %4 : vector<512x16xf32>
    %6 = vector.extract_strided_slice %5 {offsets = [0, 0], sizes = [512, 8], strides = [1, 1]} : vector<512x16xf32> to vector<512x8xf32>
    %7 = vector.extract_strided_slice %5 {offsets = [0, 8], sizes = [512, 8], strides = [1, 1]} : vector<512x16xf32> to vector<512x8xf32>
    %cst_5 = arith.constant 0.000000e+00 : f32
    %8 = vector.broadcast %cst_5 : f32 to vector<512x8xf32>
    %9 = arith.cmpf oge, %6, %8 : vector<512x8xf32>
    %cst_6 = arith.constant 2.000000e-01 : f32
    %10 = vector.broadcast %cst_6 : f32 to vector<512x8xf32>
    %11 = arith.mulf %10, %6 : vector<512x8xf32>
    %12 = arith.select %9, %6, %11 : vector<512x8xi1>, vector<512x8xf32>
    %cst_7 = arith.constant 0.000000e+00 : f32
    %13 = vector.broadcast %cst_7 : f32 to vector<512x8xf32>
    %14 = arith.subf %13, %7 : vector<512x8xf32>
    %15 = math.exp %14 : vector<512x8xf32>
    %cst_8 = arith.constant 1.000000e+00 : f32
    %16 = vector.broadcast %cst_8 : f32 to vector<512x8xf32>
    %17 = arith.addf %16, %15 : vector<512x8xf32>
    %18 = tpu.reciprocal %17 {approx = true} : vector<512x8xf32> -> vector<512x8xf32>
    %19 = arith.mulf %12, %18 : vector<512x8xf32>
    %20 = arith.truncf %19 : vector<512x8xf32> to vector<512x8xbf16>
    %c0_9 = arith.constant 0 : index
    %c0_10 = arith.constant 0 : index
    %21 = vector.load %arg4[%c0_9, %c0_10] : memref<512x8xbf16, #tpu.memory_space<vmem>>, vector<512x8xbf16>
    tpu.vector_store %arg4[%c0_9, %c0_10], %20 {strides = array<i32>} : memref<512x8xbf16, #tpu.memory_space<vmem>>, vector<512x8xbf16>,
    return
  }
  func.func @transform_0(%arg0: i32) -> (i32, i32) {
    %c0_i32 = arith.constant 0 : i32
    %c0_i32_0 = arith.constant 0 : i32
    return %arg0, %c0_i32 : i32, i32
  }
  func.func @transform_1(%arg0: i32) -> (i32, i32) {
    %c0_i32 = arith.constant 0 : i32
    %c0_i32_0 = arith.constant 0 : i32
    %c0_i32_1 = arith.constant 0 : i32
    return %c0_i32, %c0_i32_0 : i32, i32
  }
  func.func @transform_2(%arg0: i32) -> (i32, i32) {
    %c0_i32 = arith.constant 0 : i32
    %c0_i32_0 = arith.constant 0 : i32
    %c0_i32_1 = arith.constant 0 : i32
    return %c0_i32, %c0_i32_0 : i32, i32
  }
  func.func @transform_3(%arg0: i32) -> (i32, i32) {
    %c0_i32 = arith.constant 0 : i32
    %c0_i32_0 = arith.constant 0 : i32
    return %arg0, %c0_i32 : i32, i32
  }
}

module attributes {stable_mosaic.version = 11 : i64} {
  func.func @_gated_conv_kernel(%arg0: i32, %arg1: memref<256x600xbf16, #tpu.memory_space<vmem>>, %arg2: memref<600x16xbf16, #tpu.memory_space<vmem>>, %arg3: memref<1x16xf32, #tpu.memory_space<vmem>>, %arg4: memref<256x8xbf16, #tpu.memory_space<vmem>>) attributes {dimension_semantics = [#tpu.dimension_semantics<parallel>], iteration_bounds = array<i64: 1>, scalar_prefetch = 0 : i64, scratch_operands = 0 : i64, tpu.core_type = #tpu.core_type<tc>, window_params = [{transform_indices = @transform_0, window_bounds = array<i64: 256, 600>}, {pipeline_mode = #tpu.pipeline_mode<synchronous>, transform_indices = @transform_1, window_bounds = array<i64: 600, 16>}, {pipeline_mode = #tpu.pipeline_mode<synchronous>, transform_indices = @transform_2, window_bounds = array<i64: 1, 16>}, {transform_indices = @transform_3, window_bounds = array<i64: 256, 8>}]} {
    %c0 = arith.constant 0 : index
    %c0_0 = arith.constant 0 : index
    %0 = vector.load %arg1[%c0, %c0_0] : memref<256x600xbf16, #tpu.memory_space<vmem>>, vector<256x600xbf16>
    %c0_1 = arith.constant 0 : index
    %c0_2 = arith.constant 0 : index
    %1 = vector.load %arg2[%c0_1, %c0_2] : memref<600x16xbf16, #tpu.memory_space<vmem>>, vector<600x16xbf16>
    %cst = arith.constant dense<0.000000e+00> : vector<256x16xf32>
    %2 = tpu.matmul %0, %1, %cst {dimension_numbers = #tpu.dot_dimension_numbers<[1], [0], [0], [1], [0, 0, 1, 1], [], []>} : vector<256x600xbf16>, vector<600x16xbf16>, vector<256x16xf32> -> vector<256x16xf32>
    %c0_3 = arith.constant 0 : index
    %c0_4 = arith.constant 0 : index
    %3 = vector.load %arg3[%c0_3, %c0_4] : memref<1x16xf32, #tpu.memory_space<vmem>>, vector<1x16xf32>
    %4 = vector.broadcast %3 : vector<1x16xf32> to vector<256x16xf32>
    %5 = arith.addf %2, %4 : vector<256x16xf32>
    %6 = vector.extract_strided_slice %5 {offsets = [0, 0], sizes = [256, 8], strides = [1, 1]} : vector<256x16xf32> to vector<256x8xf32>
    %7 = vector.extract_strided_slice %5 {offsets = [0, 8], sizes = [256, 8], strides = [1, 1]} : vector<256x16xf32> to vector<256x8xf32>
    %cst_5 = arith.constant 0.000000e+00 : f32
    %8 = vector.broadcast %cst_5 : f32 to vector<256x8xf32>
    %9 = arith.cmpf oge, %6, %8 : vector<256x8xf32>
    %cst_6 = arith.constant 2.000000e-01 : f32
    %10 = vector.broadcast %cst_6 : f32 to vector<256x8xf32>
    %11 = arith.mulf %10, %6 : vector<256x8xf32>
    %12 = arith.select %9, %6, %11 : vector<256x8xi1>, vector<256x8xf32>
    %cst_7 = arith.constant 0.000000e+00 : f32
    %13 = vector.broadcast %cst_7 : f32 to vector<256x8xf32>
    %14 = arith.subf %13, %7 : vector<256x8xf32>
    %15 = math.exp %14 : vector<256x8xf32>
    %cst_8 = arith.constant 1.000000e+00 : f32
    %16 = vector.broadcast %cst_8 : f32 to vector<256x8xf32>
    %17 = arith.addf %16, %15 : vector<256x8xf32>
    %18 = tpu.reciprocal %17 {approx = true} : vector<256x8xf32> -> vector<256x8xf32>
    %19 = arith.mulf %12, %18 : vector<256x8xf32>
    %20 = arith.truncf %19 : vector<256x8xf32> to vector<256x8xbf16>
    %c0_9 = arith.constant 0 : index
    %c0_10 = arith.constant 0 : index
    %21 = vector.load %arg4[%c0_9, %c0_10] : memref<256x8xbf16, #tpu.memory_space<vmem>>, vector<256x8xbf16>
    tpu.vector_store %arg4[%c0_9, %c0_10], %20 {strides = array<i32>} : memref<256x8xbf16, #tpu.memory_space<vmem>>, vector<256x8xbf16>,
    return
  }
  func.func @transform_0(%arg0: i32) -> (i32, i32) {
    %c0_i32 = arith.constant 0 : i32
    %c0_i32_0 = arith.constant 0 : i32
    return %arg0, %c0_i32 : i32, i32
  }
  func.func @transform_1(%arg0: i32) -> (i32, i32) {
    %c0_i32 = arith.constant 0 : i32
    %c0_i32_0 = arith.constant 0 : i32
    %c0_i32_1 = arith.constant 0 : i32
    return %c0_i32, %c0_i32_0 : i32, i32
  }
  func.func @transform_2(%arg0: i32) -> (i32, i32) {
    %c0_i32 = arith.constant 0 : i32
    %c0_i32_0 = arith.constant 0 : i32
    %c0_i32_1 = arith.constant 0 : i32
    return %c0_i32, %c0_i32_0 : i32, i32
  }
  func.func @transform_3(%arg0: i32) -> (i32, i32) {
    %c0_i32 = arith.constant 0 : i32
    %c0_i32_0 = arith.constant 0 : i32
    return %arg0, %c0_i32 : i32, i32
  }
}

module attributes {stable_mosaic.version = 11 : i64} {
  func.func @_gated_conv_kernel(%arg0: i32, %arg1: memref<64x600xbf16, #tpu.memory_space<vmem>>, %arg2: memref<600x32xbf16, #tpu.memory_space<vmem>>, %arg3: memref<1x32xf32, #tpu.memory_space<vmem>>, %arg4: memref<64x16xbf16, #tpu.memory_space<vmem>>) attributes {dimension_semantics = [#tpu.dimension_semantics<parallel>], iteration_bounds = array<i64: 1>, scalar_prefetch = 0 : i64, scratch_operands = 0 : i64, tpu.core_type = #tpu.core_type<tc>, window_params = [{transform_indices = @transform_0, window_bounds = array<i64: 64, 600>}, {pipeline_mode = #tpu.pipeline_mode<synchronous>, transform_indices = @transform_1, window_bounds = array<i64: 600, 32>}, {pipeline_mode = #tpu.pipeline_mode<synchronous>, transform_indices = @transform_2, window_bounds = array<i64: 1, 32>}, {transform_indices = @transform_3, window_bounds = array<i64: 64, 16>}]} {
    %c0 = arith.constant 0 : index
    %c0_0 = arith.constant 0 : index
    %0 = vector.load %arg1[%c0, %c0_0] : memref<64x600xbf16, #tpu.memory_space<vmem>>, vector<64x600xbf16>
    %c0_1 = arith.constant 0 : index
    %c0_2 = arith.constant 0 : index
    %1 = vector.load %arg2[%c0_1, %c0_2] : memref<600x32xbf16, #tpu.memory_space<vmem>>, vector<600x32xbf16>
    %cst = arith.constant dense<0.000000e+00> : vector<64x32xf32>
    %2 = tpu.matmul %0, %1, %cst {dimension_numbers = #tpu.dot_dimension_numbers<[1], [0], [0], [1], [0, 0, 1, 1], [], []>} : vector<64x600xbf16>, vector<600x32xbf16>, vector<64x32xf32> -> vector<64x32xf32>
    %c0_3 = arith.constant 0 : index
    %c0_4 = arith.constant 0 : index
    %3 = vector.load %arg3[%c0_3, %c0_4] : memref<1x32xf32, #tpu.memory_space<vmem>>, vector<1x32xf32>
    %4 = vector.broadcast %3 : vector<1x32xf32> to vector<64x32xf32>
    %5 = arith.addf %2, %4 : vector<64x32xf32>
    %6 = vector.extract_strided_slice %5 {offsets = [0, 0], sizes = [64, 16], strides = [1, 1]} : vector<64x32xf32> to vector<64x16xf32>
    %7 = vector.extract_strided_slice %5 {offsets = [0, 16], sizes = [64, 16], strides = [1, 1]} : vector<64x32xf32> to vector<64x16xf32>
    %cst_5 = arith.constant 0.000000e+00 : f32
    %8 = vector.broadcast %cst_5 : f32 to vector<64x16xf32>
    %9 = arith.cmpf oge, %6, %8 : vector<64x16xf32>
    %cst_6 = arith.constant 2.000000e-01 : f32
    %10 = vector.broadcast %cst_6 : f32 to vector<64x16xf32>
    %11 = arith.mulf %10, %6 : vector<64x16xf32>
    %12 = arith.select %9, %6, %11 : vector<64x16xi1>, vector<64x16xf32>
    %cst_7 = arith.constant 0.000000e+00 : f32
    %13 = vector.broadcast %cst_7 : f32 to vector<64x16xf32>
    %14 = arith.subf %13, %7 : vector<64x16xf32>
    %15 = math.exp %14 : vector<64x16xf32>
    %cst_8 = arith.constant 1.000000e+00 : f32
    %16 = vector.broadcast %cst_8 : f32 to vector<64x16xf32>
    %17 = arith.addf %16, %15 : vector<64x16xf32>
    %18 = tpu.reciprocal %17 {approx = true} : vector<64x16xf32> -> vector<64x16xf32>
    %19 = arith.mulf %12, %18 : vector<64x16xf32>
    %20 = arith.truncf %19 : vector<64x16xf32> to vector<64x16xbf16>
    %c0_9 = arith.constant 0 : index
    %c0_10 = arith.constant 0 : index
    %21 = vector.load %arg4[%c0_9, %c0_10] : memref<64x16xbf16, #tpu.memory_space<vmem>>, vector<64x16xbf16>
    tpu.vector_store %arg4[%c0_9, %c0_10], %20 {strides = array<i32>} : memref<64x16xbf16, #tpu.memory_space<vmem>>, vector<64x16xbf16>,
    return
  }
  func.func @transform_0(%arg0: i32) -> (i32, i32) {
    %c0_i32 = arith.constant 0 : i32
    %c0_i32_0 = arith.constant 0 : i32
    return %arg0, %c0_i32 : i32, i32
  }
  func.func @transform_1(%arg0: i32) -> (i32, i32) {
    %c0_i32 = arith.constant 0 : i32
    %c0_i32_0 = arith.constant 0 : i32
    %c0_i32_1 = arith.constant 0 : i32
    return %c0_i32, %c0_i32_0 : i32, i32
  }
  func.func @transform_2(%arg0: i32) -> (i32, i32) {
    %c0_i32 = arith.constant 0 : i32
    %c0_i32_0 = arith.constant 0 : i32
    %c0_i32_1 = arith.constant 0 : i32
    return %c0_i32, %c0_i32_0 : i32, i32
  }
  func.func @transform_3(%arg0: i32) -> (i32, i32) {
    %c0_i32 = arith.constant 0 : i32
    %c0_i32_0 = arith.constant 0 : i32
    return %arg0, %c0_i32 : i32, i32
  }
}

module attributes {stable_mosaic.version = 11 : i64} {
  func.func @_gated_conv_kernel(%arg0: i32, %arg1: memref<16x1200xbf16, #tpu.memory_space<vmem>>, %arg2: memref<1200x32xbf16, #tpu.memory_space<vmem>>, %arg3: memref<1x32xf32, #tpu.memory_space<vmem>>, %arg4: memref<16x16xbf16, #tpu.memory_space<vmem>>) attributes {dimension_semantics = [#tpu.dimension_semantics<parallel>], iteration_bounds = array<i64: 1>, scalar_prefetch = 0 : i64, scratch_operands = 0 : i64, tpu.core_type = #tpu.core_type<tc>, window_params = [{transform_indices = @transform_0, window_bounds = array<i64: 16, 1200>}, {pipeline_mode = #tpu.pipeline_mode<synchronous>, transform_indices = @transform_1, window_bounds = array<i64: 1200, 32>}, {pipeline_mode = #tpu.pipeline_mode<synchronous>, transform_indices = @transform_2, window_bounds = array<i64: 1, 32>}, {transform_indices = @transform_3, window_bounds = array<i64: 16, 16>}]} {
    %c0 = arith.constant 0 : index
    %c0_0 = arith.constant 0 : index
    %0 = vector.load %arg1[%c0, %c0_0] : memref<16x1200xbf16, #tpu.memory_space<vmem>>, vector<16x1200xbf16>
    %c0_1 = arith.constant 0 : index
    %c0_2 = arith.constant 0 : index
    %1 = vector.load %arg2[%c0_1, %c0_2] : memref<1200x32xbf16, #tpu.memory_space<vmem>>, vector<1200x32xbf16>
    %cst = arith.constant dense<0.000000e+00> : vector<16x32xf32>
    %2 = tpu.matmul %0, %1, %cst {dimension_numbers = #tpu.dot_dimension_numbers<[1], [0], [0], [1], [0, 0, 1, 1], [], []>} : vector<16x1200xbf16>, vector<1200x32xbf16>, vector<16x32xf32> -> vector<16x32xf32>
    %c0_3 = arith.constant 0 : index
    %c0_4 = arith.constant 0 : index
    %3 = vector.load %arg3[%c0_3, %c0_4] : memref<1x32xf32, #tpu.memory_space<vmem>>, vector<1x32xf32>
    %4 = vector.broadcast %3 : vector<1x32xf32> to vector<16x32xf32>
    %5 = arith.addf %2, %4 : vector<16x32xf32>
    %6 = vector.extract_strided_slice %5 {offsets = [0, 0], sizes = [16, 16], strides = [1, 1]} : vector<16x32xf32> to vector<16x16xf32>
    %7 = vector.extract_strided_slice %5 {offsets = [0, 16], sizes = [16, 16], strides = [1, 1]} : vector<16x32xf32> to vector<16x16xf32>
    %cst_5 = arith.constant 0.000000e+00 : f32
    %8 = vector.broadcast %cst_5 : f32 to vector<16x16xf32>
    %9 = arith.cmpf oge, %6, %8 : vector<16x16xf32>
    %cst_6 = arith.constant 2.000000e-01 : f32
    %10 = vector.broadcast %cst_6 : f32 to vector<16x16xf32>
    %11 = arith.mulf %10, %6 : vector<16x16xf32>
    %12 = arith.select %9, %6, %11 : vector<16x16xi1>, vector<16x16xf32>
    %cst_7 = arith.constant 0.000000e+00 : f32
    %13 = vector.broadcast %cst_7 : f32 to vector<16x16xf32>
    %14 = arith.subf %13, %7 : vector<16x16xf32>
    %15 = math.exp %14 : vector<16x16xf32>
    %cst_8 = arith.constant 1.000000e+00 : f32
    %16 = vector.broadcast %cst_8 : f32 to vector<16x16xf32>
    %17 = arith.addf %16, %15 : vector<16x16xf32>
    %18 = tpu.reciprocal %17 {approx = true} : vector<16x16xf32> -> vector<16x16xf32>
    %19 = arith.mulf %12, %18 : vector<16x16xf32>
    %20 = arith.truncf %19 : vector<16x16xf32> to vector<16x16xbf16>
    %c0_9 = arith.constant 0 : index
    %c0_10 = arith.constant 0 : index
    %21 = vector.load %arg4[%c0_9, %c0_10] : memref<16x16xbf16, #tpu.memory_space<vmem>>, vector<16x16xbf16>
    tpu.vector_store %arg4[%c0_9, %c0_10], %20 {strides = array<i32>} : memref<16x16xbf16, #tpu.memory_space<vmem>>, vector<16x16xbf16>,
    return
  }
  func.func @transform_0(%arg0: i32) -> (i32, i32) {
    %c0_i32 = arith.constant 0 : i32
    %c0_i32_0 = arith.constant 0 : i32
    return %arg0, %c0_i32 : i32, i32
  }
  func.func @transform_1(%arg0: i32) -> (i32, i32) {
    %c0_i32 = arith.constant 0 : i32
    %c0_i32_0 = arith.constant 0 : i32
    %c0_i32_1 = arith.constant 0 : i32
    return %c0_i32, %c0_i32_0 : i32, i32
  }
  func.func @transform_2(%arg0: i32) -> (i32, i32) {
    %c0_i32 = arith.constant 0 : i32
    %c0_i32_0 = arith.constant 0 : i32
    %c0_i32_1 = arith.constant 0 : i32
    return %c0_i32, %c0_i32_0 : i32, i32
  }
  func.func @transform_3(%arg0: i32) -> (i32, i32) {
    %c0_i32 = arith.constant 0 : i32
    %c0_i32_0 = arith.constant 0 : i32
    return %arg0, %c0_i32 : i32, i32
  }
}

module attributes {stable_mosaic.version = 11 : i64} {
  func.func @_gated_conv_kernel(%arg0: i32, %arg1: memref<16x1200xbf16, #tpu.memory_space<vmem>>, %arg2: memref<1200x32xbf16, #tpu.memory_space<vmem>>, %arg3: memref<1x32xf32, #tpu.memory_space<vmem>>, %arg4: memref<16x16xf32, #tpu.memory_space<vmem>>) attributes {dimension_semantics = [#tpu.dimension_semantics<parallel>], iteration_bounds = array<i64: 1>, scalar_prefetch = 0 : i64, scratch_operands = 0 : i64, tpu.core_type = #tpu.core_type<tc>, window_params = [{transform_indices = @transform_0, window_bounds = array<i64: 16, 1200>}, {pipeline_mode = #tpu.pipeline_mode<synchronous>, transform_indices = @transform_1, window_bounds = array<i64: 1200, 32>}, {pipeline_mode = #tpu.pipeline_mode<synchronous>, transform_indices = @transform_2, window_bounds = array<i64: 1, 32>}, {transform_indices = @transform_3, window_bounds = array<i64: 16, 16>}]} {
    %c0 = arith.constant 0 : index
    %c0_0 = arith.constant 0 : index
    %0 = vector.load %arg1[%c0, %c0_0] : memref<16x1200xbf16, #tpu.memory_space<vmem>>, vector<16x1200xbf16>
    %c0_1 = arith.constant 0 : index
    %c0_2 = arith.constant 0 : index
    %1 = vector.load %arg2[%c0_1, %c0_2] : memref<1200x32xbf16, #tpu.memory_space<vmem>>, vector<1200x32xbf16>
    %cst = arith.constant dense<0.000000e+00> : vector<16x32xf32>
    %2 = tpu.matmul %0, %1, %cst {dimension_numbers = #tpu.dot_dimension_numbers<[1], [0], [0], [1], [0, 0, 1, 1], [], []>} : vector<16x1200xbf16>, vector<1200x32xbf16>, vector<16x32xf32> -> vector<16x32xf32>
    %c0_3 = arith.constant 0 : index
    %c0_4 = arith.constant 0 : index
    %3 = vector.load %arg3[%c0_3, %c0_4] : memref<1x32xf32, #tpu.memory_space<vmem>>, vector<1x32xf32>
    %4 = vector.broadcast %3 : vector<1x32xf32> to vector<16x32xf32>
    %5 = arith.addf %2, %4 : vector<16x32xf32>
    %6 = vector.extract_strided_slice %5 {offsets = [0, 0], sizes = [16, 16], strides = [1, 1]} : vector<16x32xf32> to vector<16x16xf32>
    %7 = vector.extract_strided_slice %5 {offsets = [0, 16], sizes = [16, 16], strides = [1, 1]} : vector<16x32xf32> to vector<16x16xf32>
    %cst_5 = arith.constant 0.000000e+00 : f32
    %8 = vector.broadcast %cst_5 : f32 to vector<16x16xf32>
    %9 = arith.cmpf oge, %6, %8 : vector<16x16xf32>
    %cst_6 = arith.constant 2.000000e-01 : f32
    %10 = vector.broadcast %cst_6 : f32 to vector<16x16xf32>
    %11 = arith.mulf %10, %6 : vector<16x16xf32>
    %12 = arith.select %9, %6, %11 : vector<16x16xi1>, vector<16x16xf32>
    %cst_7 = arith.constant 0.000000e+00 : f32
    %13 = vector.broadcast %cst_7 : f32 to vector<16x16xf32>
    %14 = arith.subf %13, %7 : vector<16x16xf32>
    %15 = math.exp %14 : vector<16x16xf32>
    %cst_8 = arith.constant 1.000000e+00 : f32
    %16 = vector.broadcast %cst_8 : f32 to vector<16x16xf32>
    %17 = arith.addf %16, %15 : vector<16x16xf32>
    %18 = tpu.reciprocal %17 {approx = true} : vector<16x16xf32> -> vector<16x16xf32>
    %19 = arith.mulf %12, %18 : vector<16x16xf32>
    %cst_9 = arith.constant 0.000000e+00 : f32
    %20 = vector.broadcast %cst_9 : f32 to vector<16x16xf32>
    %21 = arith.subf %20, %19 : vector<16x16xf32>
    %22 = math.exp %21 : vector<16x16xf32>
    %cst_10 = arith.constant 1.000000e+00 : f32
    %23 = vector.broadcast %cst_10 : f32 to vector<16x16xf32>
    %24 = arith.addf %23, %22 : vector<16x16xf32>
    %cst_11 = arith.constant 1.000000e+00 : f32
    %25 = vector.broadcast %cst_11 : f32 to vector<16x16xf32>
    %26 = arith.divf %25, %24 : vector<16x16xf32>
    %c0_12 = arith.constant 0 : index
    %c0_13 = arith.constant 0 : index
    %27 = vector.load %arg4[%c0_12, %c0_13] : memref<16x16xf32, #tpu.memory_space<vmem>>, vector<16x16xf32>
    tpu.vector_store %arg4[%c0_12, %c0_13], %26 {strides = array<i32>} : memref<16x16xf32, #tpu.memory_space<vmem>>, vector<16x16xf32>,
    return
  }
  func.func @transform_0(%arg0: i32) -> (i32, i32) {
    %c0_i32 = arith.constant 0 : i32
    %c0_i32_0 = arith.constant 0 : i32
    return %arg0, %c0_i32 : i32, i32
  }
  func.func @transform_1(%arg0: i32) -> (i32, i32) {
    %c0_i32 = arith.constant 0 : i32
    %c0_i32_0 = arith.constant 0 : i32
    %c0_i32_1 = arith.constant 0 : i32
    return %c0_i32, %c0_i32_0 : i32, i32
  }
  func.func @transform_2(%arg0: i32) -> (i32, i32) {
    %c0_i32 = arith.constant 0 : i32
    %c0_i32_0 = arith.constant 0 : i32
    %c0_i32_1 = arith.constant 0 : i32
    return %c0_i32, %c0_i32_0 : i32, i32
  }
  func.func @transform_3(%arg0: i32) -> (i32, i32) {
    %c0_i32 = arith.constant 0 : i32
    %c0_i32_0 = arith.constant 0 : i32
    return %arg0, %c0_i32 : i32, i32
  }
}

</mosaic_0001>

<llo_original>
// kernel: discriminator_forward.5
$region0: #{discriminator_forward.5}
  #allocation0 [shape = 'u32[]', space=smem, size = 0x4, offset = 0x4, fixed_abs, tag = 'smem constant byte address 0x4 - core index']
  #allocation1 [shape = 'u32[144,128]{1,0:T(1,128)}', space=vmem, size = 0x12000, scoped, tag = 'internal scratch']
  %s0 = inlined_call_operand.vmem [shape: bf16[1024,600], index: 0, kind: input, shape index: {}]
  %s1 = inlined_call_operand.vmem [shape: bf16[600,16], index: 1, kind: input, shape index: {}]
  %s2 = inlined_call_operand.vmem [shape: f32[1,16], index: 2, kind: input, shape index: {}]
  %s3 = inlined_call_operand.vmem [shape: bf16[1024,8], index: 3, kind: output, shape index: {}]
  %s4 = sld [smem:[#allocation0]]
  $region45: #{discriminator_forward.5} parent=0
    _
  %s6 = ssub.s32 1, %s4
  %s7 = scalar_select 0, %s6, %s4
  loop: start=0, step=1, limit=4
  $region2: #{discriminator_forward.5} parent=0 // loop_pre_header
    _
  $region3: #{discriminator_forward.5} parent=0 // loop_header
    %s9 = sphi 0, %s13
    %p10 = scmp.ge.s32.totalorder %s9, 4
    %s19 = sphi 0, %s21
    %s22 = sphi 0, %s19
    %s23 = sphi 0, %s22
    %s39 = sphi 0, %s23
    %s43 = sphi 0, %s43
    %s45 = sphi 0, %s43
    %s46 = sphi 0, %s45
    %s60 = sphi 0, %s46
    %s64 = sphi 0, %s64
    %s66 = sphi 0, %s64
    %s67 = sphi 0, %s66
    %s81 = sphi 0, %s67
    %s87 = sphi 0, %s89
    %s90 = sphi 0, %s87
    %s91 = sphi 0, %s90
    %s107 = sphi 0, %s91
  $region4: #{discriminator_forward.5} parent=0 // loop_header_branch
    %12 = sbr.rel (%p10) target = $region8
  $region5: #{discriminator_forward.5} parent=0 // loop_body
    %s14 = ssub.s32 %s9, 1
    %s15 = ssub.s32 %s9, 2
    %s16 = sadd.s32 %s9, 1
    %s17 = ssub.s32 %s9, %s16
    %p18 = scmp.eq.s32.totalorder %s17, 0
    %s20 = sadd.s32 %s19, 1
    %s21 = scalar_select %p18, %s19, %s20
    %p24 = pneg %p18
    %p25 = scmp.eq.s32.totalorder %s9, 1
    %p26 = por %p24, %p25
    %p27 = scmp.ne.s32.totalorder %s19, %s22
    %p28 = scmp.eq.s32.totalorder %s9, 0
    %p29 = por %p27, %p28
    %p30 = scmp.ne.s32.totalorder %s19, %s22
    %p31 = scmp.eq.s32.totalorder %s14, 1
    %p32 = por %p30, %p31
    %p33 = scmp.ne.s32.totalorder %s22, %s23
    %p34 = scmp.eq.s32.totalorder %s14, 0
    %p35 = por %p33, %p34
    %p36 = scmp.ne.s32.totalorder %s22, %s23
    %p37 = scmp.eq.s32.totalorder %s15, 1
    %p38 = por %p36, %p37
    %p40 = scmp.ne.s32.totalorder %s23, %s39
    %p41 = scmp.eq.s32.totalorder %s15, 0
    %p42 = por %p40, %p41
    %s44 = sadd.s32 %s43, 1
    %p47 = scmp.eq.s32.totalorder %s9, 1
    %p48 = scmp.ne.s32.totalorder %s43, %s45
    %p49 = scmp.eq.s32.totalorder %s9, 0
    %p50 = por %p48, %p49
    %p51 = scmp.ne.s32.totalorder %s43, %s45
    %p52 = scmp.eq.s32.totalorder %s14, 1
    %p53 = por %p51, %p52
    %p54 = scmp.ne.s32.totalorder %s45, %s46
    %p55 = scmp.eq.s32.totalorder %s14, 0
    %p56 = por %p54, %p55
    %p57 = scmp.ne.s32.totalorder %s45, %s46
    %p58 = scmp.eq.s32.totalorder %s15, 1
    %p59 = por %p57, %p58
    %p61 = scmp.ne.s32.totalorder %s46, %s60
    %p62 = scmp.eq.s32.totalorder %s15, 0
    %p63 = por %p61, %p62
    %s65 = sadd.s32 %s64, 1
    %p68 = scmp.eq.s32.totalorder %s9, 1
    %p69 = scmp.ne.s32.totalorder %s64, %s66
    %p70 = scmp.eq.s32.totalorder %s9, 0
    %p71 = por %p69, %p70
    %p72 = scmp.ne.s32.totalorder %s64, %s66
    %p73 = scmp.eq.s32.totalorder %s14, 1
    %p74 = por %p72, %p73
    %p75 = scmp.ne.s32.totalorder %s66, %s67
    %p76 = scmp.eq.s32.totalorder %s14, 0
    %p77 = por %p75, %p76
    %p78 = scmp.ne.s32.totalorder %s66, %s67
    %p79 = scmp.eq.s32.totalorder %s15, 1
    %p80 = por %p78, %p79
    %p82 = scmp.ne.s32.totalorder %s67, %s81
    %p83 = scmp.eq.s32.totalorder %s15, 0
    %p84 = por %p82, %p83
    %s85 = ssub.s32 %s9, %s16
    %p86 = scmp.eq.s32.totalorder %s85, 0
    %s88 = sadd.s32 %s87, 1
    %s89 = scalar_select %p86, %s87, %s88
    %p92 = pneg %p86
    %p93 = scmp.eq.s32.totalorder %s9, 1
    %p94 = por %p92, %p93
    %p95 = scmp.ne.s32.totalorder %s87, %s90
    %p96 = scmp.eq.s32.totalorder %s9, 0
    %p97 = por %p95, %p96
    %p98 = scmp.ne.s32.totalorder %s87, %s90
    %p99 = scmp.eq.s32.totalorder %s14, 1
    %p100 = por %p98, %p99
    %p101 = scmp.ne.s32.totalorder %s90, %s91
    %p102 = scmp.eq.s32.totalorder %s14, 0
    %p103 = por %p101, %p102
    %p104 = scmp.ne.s32.totalorder %s90, %s91
    %p105 = scmp.eq.s32.totalorder %s15, 1
    %p106 = por %p104, %p105
    %p108 = scmp.ne.s32.totalorder %s91, %s107
    %p109 = scmp.eq.s32.totalorder %s15, 0
    %p110 = por %p108, %p109
    %p111 = scmp.le.s32.totalorder 1, %s9
    %p112 = scmp.lt.s32.totalorder %s9, 3
    %p113 = pnand %p111, %p112
    %p114 = pneg %p113
    // Predicated region
    $region9: #{discriminator_forward.5} parent=5 // pred_check
      _
    $region10: #{discriminator_forward.5} parent=5 // pred_check_branch
      %116 = sbr.rel (%p113) target = $region12
    $region11: #{discriminator_forward.5} parent=5 // pred_region
      %s117 = ssub.s32 %s9, 1
      // Predicated region
      $region13: #{discriminator_forward.5} parent=11 // pred_check
        %p118 = pneg %p56
      $region14: #{discriminator_forward.5} parent=11 // pred_check_branch
        %120 = sbr.rel (%p118) target = $region16
      $region15: #{discriminator_forward.5} parent=11 // pred_region
        _
      $region16: #{discriminator_forward.5} parent=11 // pred_fallthru
        _
      // Predicated region
      $region17: #{discriminator_forward.5} parent=11 // pred_check
        %p121 = pneg %p77
      $region18: #{discriminator_forward.5} parent=11 // pred_check_branch
        %123 = sbr.rel (%p121) target = $region20
      $region19: #{discriminator_forward.5} parent=11 // pred_region
        _
      $region20: #{discriminator_forward.5} parent=11 // pred_fallthru
        _
    $region12: #{discriminator_forward.5} parent=5 // pred_fallthru
      _
    %p124 = scmp.lt.s32.totalorder %s9, 2
    // Predicated region
    $region21: #{discriminator_forward.5} parent=5 // pred_check
      %p125 = pneg %p124
    $region22: #{discriminator_forward.5} parent=5 // pred_check_branch
      %127 = sbr.rel (%p125) target = $region24
    $region23: #{discriminator_forward.5} parent=5 // pred_region
      // Predicated region
      $region25: #{discriminator_forward.5} parent=23 // pred_check
        %p128 = pneg %p29
      $region26: #{discriminator_forward.5} parent=23 // pred_check_branch
        %130 = sbr.rel (%p128) target = $region28
      $region27: #{discriminator_forward.5} parent=23 // pred_region
        %s131 = smul.u32 64, %s9
        %p132 = scmp.lt.s32.totalorder %s131, 127
        %s133 = scalar_select %p132, %s131, 127
        %s134 = smul.addr %s133, 5
        %s135 = smul.addr %s134, 4
        %s136 = scalar_lea.vmem %s0, %s135
        %s137 = smul.u32 64, %s9
      $region28: #{discriminator_forward.5} parent=23 // pred_fallthru
        _
    $region24: #{discriminator_forward.5} parent=5 // pred_fallthru
      _
    %p138 = scmp.le.s32.totalorder 1, %s9
    %p139 = scmp.lt.s32.totalorder %s9, 3
    %p140 = pnand %p138, %p139
    %p141 = pneg %p140
    // Predicated region
    $region29: #{discriminator_forward.5} parent=5 // pred_check
      _
    $region30: #{discriminator_forward.5} parent=5 // pred_check_branch
      %143 = sbr.rel (%p140) target = $region32
    $region31: #{discriminator_forward.5} parent=5 // pred_region
      %s144 = ssub.s32 %s9, 1
      %s145 = smul.u32 64, %s14
      %p146 = scmp.lt.s32.totalorder %s145, 127
      %s147 = scalar_select %p146, %s145, 127
      %s148 = smul.addr %s147, 5
      %s149 = smul.addr %s148, 4
      %s150 = scalar_lea.vmem %s0, %s149
      %p151 = pneg %p35
      %p152 = pneg %p32
      %p153 = pneg %p56
      %p154 = pneg %p53
      %p155 = pneg %p77
      %p156 = pneg %p74
      %p157 = pneg %p103
      %p158 = pneg %p100
      %s159 = smul.u32 64, %s14
      %p160 = scmp.lt.s32.totalorder %s159, 127
      %s161 = scalar_select %p160, %s159, 127
      %s162 = smul.addr %s161, 4
      %s163 = scalar_lea.vmem %s3, %s162
      %s164 = smul.u32 64, %s14
      %p165 = scmp.lt.s32.totalorder %s164, 127
      %s166 = scalar_select %p165, %s164, 127
      %s167 = smul.addr %s166, 5
      %s168 = smul.addr %s167, 4
      %s169 = scalar_lea.vmem %s0, %s168
      %s170 = smul.u32 64, %s14
      %s171 = smul.u32 64, %s14
      %p172 = scmp.lt.s32.totalorder %s171, 127
      %s173 = scalar_select %p172, %s171, 127
      %s174 = smul.addr %s173, 4
      %s175 = scalar_lea.vmem %s3, %s174
      %s176 = smul.u32 64, %s14
      %v178 = vld [vmem:[%s169] sm:$0xff]
      %v179 = vld [vmem:[%s169 + $0x8] sm:$0xff]
      %v180 = vld [vmem:[%s169 + $0x10] sm:$0xf]
      %v181 = vld [vmem:[%s169 + $0x14] sm:$0xff]
      %v182 = vld [vmem:[%s169 + $0x1c] sm:$0xff]
      %v183 = vld [vmem:[%s169 + $0x24] sm:$0xf]
      %v184 = vld [vmem:[%s169 + $0x28] sm:$0xff]
      %v185 = vld [vmem:[%s169 + $0x30] sm:$0xff]
      %v186 = vld [vmem:[%s169 + $0x38] sm:$0xf]
      %v187 = vld [vmem:[%s169 + $0x3c] sm:$0xff]
      %v188 = vld [vmem:[%s169 + $0x44] sm:$0xff]
      %v189 = vld [vmem:[%s169 + $0x4c] sm:$0xf]
      %v190 = vld [vmem:[%s169 + $0x50] sm:$0xff]
      %v191 = vld [vmem:[%s169 + $0x58] sm:$0xff]
      %v192 = vld [vmem:[%s169 + $0x60] sm:$0xf]
      %v193 = vld [vmem:[%s169 + $0x64] sm:$0xff]
      %v194 = vld [vmem:[%s169 + $0x6c] sm:$0xff]
      %v195 = vld [vmem:[%s169 + $0x74] sm:$0xf]
      %v196 = vld [vmem:[%s169 + $0x78] sm:$0xff]
      %v197 = vld [vmem:[%s169 + $0x80] sm:$0xff]
      %v198 = vld [vmem:[%s169 + $0x88] sm:$0xf]
      %v199 = vld [vmem:[%s169 + $0x8c] sm:$0xff]
      %v200 = vld [vmem:[%s169 + $0x94] sm:$0xff]
      %v201 = vld [vmem:[%s169 + $0x9c] sm:$0xf]
      %v202 = vld [vmem:[%s169 + $0xa0] sm:$0xff]
      %v203 = vld [vmem:[%s169 + $0xa8] sm:$0xff]
      %v204 = vld [vmem:[%s169 + $0xb0] sm:$0xf]
      %v205 = vld [vmem:[%s169 + $0xb4] sm:$0xff]
      %v206 = vld [vmem:[%s169 + $0xbc] sm:$0xff]
      %v207 = vld [vmem:[%s169 + $0xc4] sm:$0xf]
      %v208 = vld [vmem:[%s169 + $0xc8] sm:$0xff]
      %v209 = vld [vmem:[%s169 + $0xd0] sm:$0xff]
      %v210 = vld [vmem:[%s169 + $0xd8] sm:$0xf]
      %v211 = vld [vmem:[%s169 + $0xdc] sm:$0xff]
      %v212 = vld [vmem:[%s169 + $0xe4] sm:$0xff]
      %v213 = vld [vmem:[%s169 + $0xec] sm:$0xf]
      %v214 = vld [vmem:[%s169 + $0xf0] sm:$0xff]
      %v215 = vld [vmem:[%s169 + $0xf8] sm:$0xff]
      %v216 = vld [vmem:[%s169 + $0x100] sm:$0xf]
      %v217 = vld [vmem:[%s169 + $0x104] sm:$0xff]
      %v218 = vld [vmem:[%s169 + $0x10c] sm:$0xff]
      %v219 = vld [vmem:[%s169 + $0x114] sm:$0xf]
      %v220 = vld [vmem:[%s169 + $0x118] sm:$0xff]
      %v221 = vld [vmem:[%s169 + $0x120] sm:$0xff]
      %v222 = vld [vmem:[%s169 + $0x128] sm:$0xf]
      %v223 = vld [vmem:[%s169 + $0x12c] sm:$0xff]
      %v224 = vld [vmem:[%s169 + $0x134] sm:$0xff]
      %v225 = vld [vmem:[%s169 + $0x13c] sm:$0xf]
      %v226 = vld [vmem:[%s169 + $0x140] sm:$0xff]
      %v227 = vld [vmem:[%s169 + $0x148] sm:$0xff]
      %v228 = vld [vmem:[%s169 + $0x150] sm:$0xf]
      %v229 = vld [vmem:[%s169 + $0x154] sm:$0xff]
      %v230 = vld [vmem:[%s169 + $0x15c] sm:$0xff]
      %v231 = vld [vmem:[%s169 + $0x164] sm:$0xf]
      %v232 = vld [vmem:[%s169 + $0x168] sm:$0xff]
      %v233 = vld [vmem:[%s169 + $0x170] sm:$0xff]
      %v234 = vld [vmem:[%s169 + $0x178] sm:$0xf]
      %v235 = vld [vmem:[%s169 + $0x17c] sm:$0xff]
      %v236 = vld [vmem:[%s169 + $0x184] sm:$0xff]
      %v237 = vld [vmem:[%s169 + $0x18c] sm:$0xf]
      %v238 = vld [vmem:[%s169 + $0x190] sm:$0xff]
      %v239 = vld [vmem:[%s169 + $0x198] sm:$0xff]
      %v240 = vld [vmem:[%s169 + $0x1a0] sm:$0xf]
      %v241 = vld [vmem:[%s169 + $0x1a4] sm:$0xff]
      %v242 = vld [vmem:[%s169 + $0x1ac] sm:$0xff]
      %v243 = vld [vmem:[%s169 + $0x1b4] sm:$0xf]
      %v244 = vld [vmem:[%s169 + $0x1b8] sm:$0xff]
      %v245 = vld [vmem:[%s169 + $0x1c0] sm:$0xff]
      %v246 = vld [vmem:[%s169 + $0x1c8] sm:$0xf]
      %v247 = vld [vmem:[%s169 + $0x1cc] sm:$0xff]
      %v248 = vld [vmem:[%s169 + $0x1d4] sm:$0xff]
      %v249 = vld [vmem:[%s169 + $0x1dc] sm:$0xf]
      %v250 = vld [vmem:[%s169 + $0x1e0] sm:$0xff]
      %v251 = vld [vmem:[%s169 + $0x1e8] sm:$0xff]
      %v252 = vld [vmem:[%s169 + $0x1f0] sm:$0xf]
      %v253 = vld [vmem:[%s169 + $0x1f4] sm:$0xff]
      %v254 = vld [vmem:[%s169 + $0x1fc] sm:$0xff]
      %v255 = vld [vmem:[%s169 + $0x204] sm:$0xf]
      %v256 = vld [vmem:[%s169 + $0x208] sm:$0xff]
      %v257 = vld [vmem:[%s169 + $0x210] sm:$0xff]
      %v258 = vld [vmem:[%s169 + $0x218] sm:$0xf]
      %v259 = vld [vmem:[%s169 + $0x21c] sm:$0xff]
      %v260 = vld [vmem:[%s169 + $0x224] sm:$0xff]
      %v261 = vld [vmem:[%s169 + $0x22c] sm:$0xf]
      %v262 = vld [vmem:[%s169 + $0x230] sm:$0xff]
      %v263 = vld [vmem:[%s169 + $0x238] sm:$0xff]
      %v264 = vld [vmem:[%s169 + $0x240] sm:$0xf]
      %v265 = vld [vmem:[%s169 + $0x244] sm:$0xff]
      %v266 = vld [vmem:[%s169 + $0x24c] sm:$0xff]
      %v267 = vld [vmem:[%s169 + $0x254] sm:$0xf]
      %v268 = vld [vmem:[%s169 + $0x258] sm:$0xff]
      %v269 = vld [vmem:[%s169 + $0x260] sm:$0xff]
      %v270 = vld [vmem:[%s169 + $0x268] sm:$0xf]
      %v271 = vld [vmem:[%s169 + $0x26c] sm:$0xff]
      %v272 = vld [vmem:[%s169 + $0x274] sm:$0xff]
      %v273 = vld [vmem:[%s169 + $0x27c] sm:$0xf]
      %v274 = vld [vmem:[%s169 + $0x280] sm:$0xff]
      %v275 = vld [vmem:[%s169 + $0x288] sm:$0xff]
      %v276 = vld [vmem:[%s169 + $0x290] sm:$0xf]
      %v277 = vld [vmem:[%s169 + $0x294] sm:$0xff]
      %v278 = vld [vmem:[%s169 + $0x29c] sm:$0xff]
      %v279 = vld [vmem:[%s169 + $0x2a4] sm:$0xf]
      %v280 = vld [vmem:[%s169 + $0x2a8] sm:$0xff]
      %v281 = vld [vmem:[%s169 + $0x2b0] sm:$0xff]
      %v282 = vld [vmem:[%s169 + $0x2b8] sm:$0xf]
      %v283 = vld [vmem:[%s169 + $0x2bc] sm:$0xff]
      %v284 = vld [vmem:[%s169 + $0x2c4] sm:$0xff]
      %v285 = vld [vmem:[%s169 + $0x2cc] sm:$0xf]
      %v286 = vld [vmem:[%s169 + $0x2d0] sm:$0xff]
      %v287 = vld [vmem:[%s169 + $0x2d8] sm:$0xff]
      %v288 = vld [vmem:[%s169 + $0x2e0] sm:$0xf]
      %v289 = vld [vmem:[%s169 + $0x2e4] sm:$0xff]
      %v290 = vld [vmem:[%s169 + $0x2ec] sm:$0xff]
      %v291 = vld [vmem:[%s169 + $0x2f4] sm:$0xf]
      %v292 = vld [vmem:[%s169 + $0x2f8] sm:$0xff]
      %v293 = vld [vmem:[%s169 + $0x300] sm:$0xff]
      %v294 = vld [vmem:[%s169 + $0x308] sm:$0xf]
      %v295 = vld [vmem:[%s169 + $0x30c] sm:$0xff]
      %v296 = vld [vmem:[%s169 + $0x314] sm:$0xff]
      %v297 = vld [vmem:[%s169 + $0x31c] sm:$0xf]
      %v298 = vld [vmem:[%s169 + $0x320] sm:$0xff]
      %v299 = vld [vmem:[%s169 + $0x328] sm:$0xff]
      %v300 = vld [vmem:[%s169 + $0x330] sm:$0xf]
      %v301 = vld [vmem:[%s169 + $0x334] sm:$0xff]
      %v302 = vld [vmem:[%s169 + $0x33c] sm:$0xff]
      %v303 = vld [vmem:[%s169 + $0x344] sm:$0xf]
      %v304 = vld [vmem:[%s169 + $0x348] sm:$0xff]
      %v305 = vld [vmem:[%s169 + $0x350] sm:$0xff]
      %v306 = vld [vmem:[%s169 + $0x358] sm:$0xf]
      %v307 = vld [vmem:[%s169 + $0x35c] sm:$0xff]
      %v308 = vld [vmem:[%s169 + $0x364] sm:$0xff]
      %v309 = vld [vmem:[%s169 + $0x36c] sm:$0xf]
      %v310 = vld [vmem:[%s169 + $0x370] sm:$0xff]
      %v311 = vld [vmem:[%s169 + $0x378] sm:$0xff]
      %v312 = vld [vmem:[%s169 + $0x380] sm:$0xf]
      %v313 = vld [vmem:[%s169 + $0x384] sm:$0xff]
      %v314 = vld [vmem:[%s169 + $0x38c] sm:$0xff]
      %v315 = vld [vmem:[%s169 + $0x394] sm:$0xf]
      %v316 = vld [vmem:[%s169 + $0x398] sm:$0xff]
      %v317 = vld [vmem:[%s169 + $0x3a0] sm:$0xff]
      %v318 = vld [vmem:[%s169 + $0x3a8] sm:$0xf]
      %v319 = vld [vmem:[%s169 + $0x3ac] sm:$0xff]
      %v320 = vld [vmem:[%s169 + $0x3b4] sm:$0xff]
      %v321 = vld [vmem:[%s169 + $0x3bc] sm:$0xf]
      %v322 = vld [vmem:[%s169 + $0x3c0] sm:$0xff]
      %v323 = vld [vmem:[%s169 + $0x3c8] sm:$0xff]
      %v324 = vld [vmem:[%s169 + $0x3d0] sm:$0xf]
      %v325 = vld [vmem:[%s169 + $0x3d4] sm:$0xff]
      %v326 = vld [vmem:[%s169 + $0x3dc] sm:$0xff]
      %v327 = vld [vmem:[%s169 + $0x3e4] sm:$0xf]
      %v328 = vld [vmem:[%s169 + $0x3e8] sm:$0xff]
      %v329 = vld [vmem:[%s169 + $0x3f0] sm:$0xff]
      %v330 = vld [vmem:[%s169 + $0x3f8] sm:$0xf]
      %v331 = vld [vmem:[%s169 + $0x3fc] sm:$0xff]
      %v332 = vld [vmem:[%s169 + $0x404] sm:$0xff]
      %v333 = vld [vmem:[%s169 + $0x40c] sm:$0xf]
      %v334 = vld [vmem:[%s169 + $0x410] sm:$0xff]
      %v335 = vld [vmem:[%s169 + $0x418] sm:$0xff]
      %v336 = vld [vmem:[%s169 + $0x420] sm:$0xf]
      %v337 = vld [vmem:[%s169 + $0x424] sm:$0xff]
      %v338 = vld [vmem:[%s169 + $0x42c] sm:$0xff]
      %v339 = vld [vmem:[%s169 + $0x434] sm:$0xf]
      %v340 = vld [vmem:[%s169 + $0x438] sm:$0xff]
      %v341 = vld [vmem:[%s169 + $0x440] sm:$0xff]
      %v342 = vld [vmem:[%s169 + $0x448] sm:$0xf]
      %v343 = vld [vmem:[%s169 + $0x44c] sm:$0xff]
      %v344 = vld [vmem:[%s169 + $0x454] sm:$0xff]
      %v345 = vld [vmem:[%s169 + $0x45c] sm:$0xf]
      %v346 = vld [vmem:[%s169 + $0x460] sm:$0xff]
      %v347 = vld [vmem:[%s169 + $0x468] sm:$0xff]
      %v348 = vld [vmem:[%s169 + $0x470] sm:$0xf]
      %v349 = vld [vmem:[%s169 + $0x474] sm:$0xff]
      %v350 = vld [vmem:[%s169 + $0x47c] sm:$0xff]
      %v351 = vld [vmem:[%s169 + $0x484] sm:$0xf]
      %v352 = vld [vmem:[%s169 + $0x488] sm:$0xff]
      %v353 = vld [vmem:[%s169 + $0x490] sm:$0xff]
      %v354 = vld [vmem:[%s169 + $0x498] sm:$0xf]
      %v355 = vld [vmem:[%s169 + $0x49c] sm:$0xff]
      %v356 = vld [vmem:[%s169 + $0x4a4] sm:$0xff]
      %v357 = vld [vmem:[%s169 + $0x4ac] sm:$0xf]
      %v358 = vld [vmem:[%s169 + $0x4b0] sm:$0xff]
      %v359 = vld [vmem:[%s169 + $0x4b8] sm:$0xff]
      %v360 = vld [vmem:[%s169 + $0x4c0] sm:$0xf]
      %v361 = vld [vmem:[%s169 + $0x4c4] sm:$0xff]
      %v362 = vld [vmem:[%s169 + $0x4cc] sm:$0xff]
      %v363 = vld [vmem:[%s169 + $0x4d4] sm:$0xf]
      %v364 = vld [vmem:[%s169 + $0x4d8] sm:$0xff]
      %v365 = vld [vmem:[%s169 + $0x4e0] sm:$0xff]
      %v366 = vld [vmem:[%s169 + $0x4e8] sm:$0xf]
      %v367 = vld [vmem:[%s169 + $0x4ec] sm:$0xff]
      %v368 = vld [vmem:[%s169 + $0x4f4] sm:$0xff]
      %v369 = vld [vmem:[%s169 + $0x4fc] sm:$0xf]
      %v370 = vld [vmem:[%s1] sm:$0xf]
      %v371 = vld [vmem:[%s1 + $0x4] sm:$0xf]
      %v372 = vld [vmem:[%s1 + $0x8] sm:$0xf]
      %v373 = vld [vmem:[%s1 + $0xc] sm:$0xf]
      %v374 = vld [vmem:[%s1 + $0x10] sm:$0xf]
      %v375 = vld [vmem:[%s1 + $0x14] sm:$0xf]
      %v376 = vld [vmem:[%s1 + $0x18] sm:$0xf]
      %v377 = vld [vmem:[%s1 + $0x1c] sm:$0xf]
      %v378 = vld [vmem:[%s1 + $0x20] sm:$0xf]
      %v379 = vld [vmem:[%s1 + $0x24] sm:$0xf]
      %v380 = vld [vmem:[%s1 + $0x28] sm:$0xf]
      %v381 = vld [vmem:[%s1 + $0x2c] sm:$0xf]
      %v382 = vld [vmem:[%s1 + $0x30] sm:$0xf]
      %v383 = vld [vmem:[%s1 + $0x34] sm:$0xf]
      %v384 = vld [vmem:[%s1 + $0x38] sm:$0xf]
      %v385 = vld [vmem:[%s1 + $0x3c] sm:$0xf]
      %v386 = vld [vmem:[%s1 + $0x40] sm:$0xf]
      %v387 = vld [vmem:[%s1 + $0x44] sm:$0xf]
      %v388 = vld [vmem:[%s1 + $0x48] sm:$0xf]
      %v389 = vld [vmem:[%s1 + $0x4c] sm:$0xf]
      %v390 = vld [vmem:[%s1 + $0x50] sm:$0xf]
      %v391 = vld [vmem:[%s1 + $0x54] sm:$0xf]
      %v392 = vld [vmem:[%s1 + $0x58] sm:$0xf]
      %v393 = vld [vmem:[%s1 + $0x5c] sm:$0xf]
      %v394 = vld [vmem:[%s1 + $0x60] sm:$0xf]
      %v395 = vld [vmem:[%s1 + $0x64] sm:$0xf]
      %v396 = vld [vmem:[%s1 + $0x68] sm:$0xf]
      %v397 = vld [vmem:[%s1 + $0x6c] sm:$0xf]
      %v398 = vld [vmem:[%s1 + $0x70] sm:$0xf]
      %v399 = vld [vmem:[%s1 + $0x74] sm:$0xf]
      %v400 = vld [vmem:[%s1 + $0x78] sm:$0xf]
      %v401 = vld [vmem:[%s1 + $0x7c] sm:$0xf]
      %v402 = vld [vmem:[%s1 + $0x80] sm:$0xf]
      %v403 = vld [vmem:[%s1 + $0x84] sm:$0xf]
      %v404 = vld [vmem:[%s1 + $0x88] sm:$0xf]
      %v405 = vld [vmem:[%s1 + $0x8c] sm:$0xf]
      %v406 = vld [vmem:[%s1 + $0x90] sm:$0xf]
      %v407 = vld [vmem:[%s1 + $0x94] sm:$0xf]
      %v408 = vld [vmem:[%s1 + $0x98] sm:$0xf]
      %v409 = vld [vmem:[%s1 + $0x9c] sm:$0xf]
      %v410 = vld [vmem:[%s1 + $0xa0] sm:$0xf]
      %v411 = vld [vmem:[%s1 + $0xa4] sm:$0xf]
      %v412 = vld [vmem:[%s1 + $0xa8] sm:$0xf]
      %v413 = vld [vmem:[%s1 + $0xac] sm:$0xf]
      %v414 = vld [vmem:[%s1 + $0xb0] sm:$0xf]
      %v415 = vld [vmem:[%s1 + $0xb4] sm:$0xf]
      %v416 = vld [vmem:[%s1 + $0xb8] sm:$0xf]
      %v417 = vld [vmem:[%s1 + $0xbc] sm:$0xf]
      %v418 = vld [vmem:[%s1 + $0xc0] sm:$0xf]
      %v419 = vld [vmem:[%s1 + $0xc4] sm:$0xf]
      %v420 = vld [vmem:[%s1 + $0xc8] sm:$0xf]
      %v421 = vld [vmem:[%s1 + $0xcc] sm:$0xf]
      %v422 = vld [vmem:[%s1 + $0xd0] sm:$0xf]
      %v423 = vld [vmem:[%s1 + $0xd4] sm:$0xf]
      %v424 = vld [vmem:[%s1 + $0xd8] sm:$0xf]
      %v425 = vld [vmem:[%s1 + $0xdc] sm:$0xf]
      %v426 = vld [vmem:[%s1 + $0xe0] sm:$0xf]
      %v427 = vld [vmem:[%s1 + $0xe4] sm:$0xf]
      %v428 = vld [vmem:[%s1 + $0xe8] sm:$0xf]
      %v429 = vld [vmem:[%s1 + $0xec] sm:$0xf]
      %v430 = vld [vmem:[%s1 + $0xf0] sm:$0xf]
      %v431 = vld [vmem:[%s1 + $0xf4] sm:$0xf]
      %v432 = vld [vmem:[%s1 + $0xf8] sm:$0xf]
      %v433 = vld [vmem:[%s1 + $0xfc] sm:$0xf]
      %v434 = vld [vmem:[%s1 + $0x100] sm:$0xf]
      %v435 = vld [vmem:[%s1 + $0x104] sm:$0xf]
      %v436 = vld [vmem:[%s1 + $0x108] sm:$0xf]
      %v437 = vld [vmem:[%s1 + $0x10c] sm:$0xf]
      %v438 = vld [vmem:[%s1 + $0x110] sm:$0xf]
      %v439 = vld [vmem:[%s1 + $0x114] sm:$0xf]
      %v440 = vld [vmem:[%s1 + $0x118] sm:$0xf]
      %v441 = vld [vmem:[%s1 + $0x11c] sm:$0xf]
      %v442 = vld [vmem:[%s1 + $0x120] sm:$0xf]
      %v443 = vld [vmem:[%s1 + $0x124] sm:$0xf]
      %v444 = vld [vmem:[%s1 + $0x128] sm:$0xf]
      %v445 = vld [vmem:[%s2] sm:$0x1]
      %v447 = vlaneseq
      %v448 = vshrl.u32 %v447, 7
      %v449 = vsub.s32 0, %v448
      %v450 = vrot.slane %v445, %v449
      %v644 = vunpack.c.l.b16 %v178
      %v645 = vunpack.c.h.b16 %v178
      %v646 = vunpack.c.l.b16 %v179
      %v647 = vunpack.c.h.b16 %v179
      %v648 = vunpack.c.l.b16 %v180
      %v649 = vunpack.c.l.b16 %v181
      %v650 = vunpack.c.h.b16 %v181
      %v651 = vunpack.c.l.b16 %v182
      %v652 = vunpack.c.h.b16 %v182
      %v653 = vunpack.c.l.b16 %v183
      %v654 = vunpack.c.l.b16 %v184
      %v655 = vunpack.c.h.b16 %v184
      %v656 = vunpack.c.l.b16 %v185
      %v657 = vunpack.c.h.b16 %v185
      %v658 = vunpack.c.l.b16 %v186
      %v659 = vunpack.c.l.b16 %v187
      %v660 = vunpack.c.h.b16 %v187
      %v661 = vunpack.c.l.b16 %v188
      %v662 = vunpack.c.h.b16 %v188
      %v663 = vunpack.c.l.b16 %v189
      %v664 = vunpack.c.l.b16 %v190
      %v665 = vunpack.c.h.b16 %v190
      %v666 = vunpack.c.l.b16 %v191
      %v667 = vunpack.c.h.b16 %v191
      %v668 = vunpack.c.l.b16 %v192
      %v669 = vunpack.c.l.b16 %v193
      %v670 = vunpack.c.h.b16 %v193
      %v671 = vunpack.c.l.b16 %v194
      %v672 = vunpack.c.h.b16 %v194
      %v673 = vunpack.c.l.b16 %v195
      %v674 = vunpack.c.l.b16 %v196
      %v675 = vunpack.c.h.b16 %v196
      %v676 = vunpack.c.l.b16 %v197
      %v677 = vunpack.c.h.b16 %v197
      %v678 = vunpack.c.l.b16 %v198
      %v679 = vunpack.c.l.b16 %v199
      %v680 = vunpack.c.h.b16 %v199
      %v681 = vunpack.c.l.b16 %v200
      %v682 = vunpack.c.h.b16 %v200
      %v683 = vunpack.c.l.b16 %v201
      %v684 = vunpack.c.l.b16 %v202
      %v685 = vunpack.c.h.b16 %v202
      %v686 = vunpack.c.l.b16 %v203
      %v687 = vunpack.c.h.b16 %v203
      %v688 = vunpack.c.l.b16 %v204
      %v689 = vunpack.c.l.b16 %v205
      %v690 = vunpack.c.h.b16 %v205
      %v691 = vunpack.c.l.b16 %v206
      %v692 = vunpack.c.h.b16 %v206
      %v693 = vunpack.c.l.b16 %v207
      %v694 = vunpack.c.l.b16 %v208
      %v695 = vunpack.c.h.b16 %v208
      %v696 = vunpack.c.l.b16 %v209
      %v697 = vunpack.c.h.b16 %v209
      %v698 = vunpack.c.l.b16 %v210
      %v699 = vunpack.c.l.b16 %v211
      %v700 = vunpack.c.h.b16 %v211
      %v701 = vunpack.c.l.b16 %v212
      %v702 = vunpack.c.h.b16 %v212
      %v703 = vunpack.c.l.b16 %v213
      %v704 = vunpack.c.l.b16 %v214
      %v705 = vunpack.c.h.b16 %v214
      %v706 = vunpack.c.l.b16 %v215
      %v707 = vunpack.c.h.b16 %v215
      %v708 = vunpack.c.l.b16 %v216
      %v709 = vunpack.c.l.b16 %v217
      %v710 = vunpack.c.h.b16 %v217
      %v711 = vunpack.c.l.b16 %v218
      %v712 = vunpack.c.h.b16 %v218
      %v713 = vunpack.c.l.b16 %v219
      %v714 = vunpack.c.l.b16 %v220
      %v715 = vunpack.c.h.b16 %v220
      %v716 = vunpack.c.l.b16 %v221
      %v717 = vunpack.c.h.b16 %v221
      %v718 = vunpack.c.l.b16 %v222
      %v719 = vunpack.c.l.b16 %v223
      %v720 = vunpack.c.h.b16 %v223
      %v721 = vunpack.c.l.b16 %v224
      %v722 = vunpack.c.h.b16 %v224
      %v723 = vunpack.c.l.b16 %v225
      %v724 = vunpack.c.l.b16 %v226
      %v725 = vunpack.c.h.b16 %v226
      %v726 = vunpack.c.l.b16 %v227
      %v727 = vunpack.c.h.b16 %v227
      %v728 = vunpack.c.l.b16 %v228
      %v729 = vunpack.c.l.b16 %v229
      %v730 = vunpack.c.h.b16 %v229
      %v731 = vunpack.c.l.b16 %v230
      %v732 = vunpack.c.h.b16 %v230
      %v733 = vunpack.c.l.b16 %v231
      %v734 = vunpack.c.l.b16 %v232
      %v735 = vunpack.c.h.b16 %v232
      %v736 = vunpack.c.l.b16 %v233
      %v737 = vunpack.c.h.b16 %v233
      %v738 = vunpack.c.l.b16 %v234
      %v739 = vunpack.c.l.b16 %v235
      %v740 = vunpack.c.h.b16 %v235
      %v741 = vunpack.c.l.b16 %v236
      %v742 = vunpack.c.h.b16 %v236
      %v743 = vunpack.c.l.b16 %v237
      %v744 = vunpack.c.l.b16 %v238
      %v745 = vunpack.c.h.b16 %v238
      %v746 = vunpack.c.l.b16 %v239
      %v747 = vunpack.c.h.b16 %v239
      %v748 = vunpack.c.l.b16 %v240
      %v749 = vunpack.c.l.b16 %v241
      %v750 = vunpack.c.h.b16 %v241
      %v751 = vunpack.c.l.b16 %v242
      %v752 = vunpack.c.h.b16 %v242
      %v753 = vunpack.c.l.b16 %v243
      %v754 = vunpack.c.l.b16 %v244
      %v755 = vunpack.c.h.b16 %v244
      %v756 = vunpack.c.l.b16 %v245
      %v757 = vunpack.c.h.b16 %v245
      %v758 = vunpack.c.l.b16 %v246
      %v759 = vunpack.c.l.b16 %v247
      %v760 = vunpack.c.h.b16 %v247
      %v761 = vunpack.c.l.b16 %v248
      %v762 = vunpack.c.h.b16 %v248
      %v763 = vunpack.c.l.b16 %v249
      %v764 = vunpack.c.l.b16 %v250
      %v765 = vunpack.c.h.b16 %v250
      %v766 = vunpack.c.l.b16 %v251
      %v767 = vunpack.c.h.b16 %v251
      %v768 = vunpack.c.l.b16 %v252
      %v769 = vunpack.c.l.b16 %v253
      %v770 = vunpack.c.h.b16 %v253
      %v771 = vunpack.c.l.b16 %v254
      %v772 = vunpack.c.h.b16 %v254
      %v773 = vunpack.c.l.b16 %v255
      %v774 = vunpack.c.l.b16 %v256
      %v775 = vunpack.c.h.b16 %v256
      %v776 = vunpack.c.l.b16 %v257
      %v777 = vunpack.c.h.b16 %v257
      %v778 = vunpack.c.l.b16 %v258
      %v779 = vunpack.c.l.b16 %v259
      %v780 = vunpack.c.h.b16 %v259
      %v781 = vunpack.c.l.b16 %v260
      %v782 = vunpack.c.h.b16 %v260
      %v783 = vunpack.c.l.b16 %v261
      %v784 = vunpack.c.l.b16 %v262
      %v785 = vunpack.c.h.b16 %v262
      %v786 = vunpack.c.l.b16 %v263
      %v787 = vunpack.c.h.b16 %v263
      %v788 = vunpack.c.l.b16 %v264
      %v789 = vunpack.c.l.b16 %v265
      %v790 = vunpack.c.h.b16 %v265
      %v791 = vunpack.c.l.b16 %v266
      %v792 = vunpack.c.h.b16 %v266
      %v793 = vunpack.c.l.b16 %v267
      %v794 = vunpack.c.l.b16 %v268
      %v795 = vunpack.c.h.b16 %v268
      %v796 = vunpack.c.l.b16 %v269
      %v797 = vunpack.c.h.b16 %v269
      %v798 = vunpack.c.l.b16 %v270
      %v799 = vunpack.c.l.b16 %v271
      %v800 = vunpack.c.h.b16 %v271
      %v801 = vunpack.c.l.b16 %v272
      %v802 = vunpack.c.h.b16 %v272
      %v803 = vunpack.c.l.b16 %v273
      %v804 = vunpack.c.l.b16 %v274
      %v805 = vunpack.c.h.b16 %v274
      %v806 = vunpack.c.l.b16 %v275
      %v807 = vunpack.c.h.b16 %v275
      %v808 = vunpack.c.l.b16 %v276
      %v809 = vunpack.c.l.b16 %v277
      %v810 = vunpack.c.h.b16 %v277
      %v811 = vunpack.c.l.b16 %v278
      %v812 = vunpack.c.h.b16 %v278
      %v813 = vunpack.c.l.b16 %v279
      %v814 = vunpack.c.l.b16 %v280
      %v815 = vunpack.c.h.b16 %v280
      %v816 = vunpack.c.l.b16 %v281
      %v817 = vunpack.c.h.b16 %v281
      %v818 = vunpack.c.l.b16 %v282
      %v819 = vunpack.c.l.b16 %v283
      %v820 = vunpack.c.h.b16 %v283
      %v821 = vunpack.c.l.b16 %v284
      %v822 = vunpack.c.h.b16 %v284
      %v823 = vunpack.c.l.b16 %v285
      %v824 = vunpack.c.l.b16 %v286
      %v825 = vunpack.c.h.b16 %v286
      %v826 = vunpack.c.l.b16 %v287
      %v827 = vunpack.c.h.b16 %v287
      %v828 = vunpack.c.l.b16 %v288
      %v829 = vunpack.c.l.b16 %v289
      %v830 = vunpack.c.h.b16 %v289
      %v831 = vunpack.c.l.b16 %v290
      %v832 = vunpack.c.h.b16 %v290
      %v833 = vunpack.c.l.b16 %v291
      %v834 = vunpack.c.l.b16 %v292
      %v835 = vunpack.c.h.b16 %v292
      %v836 = vunpack.c.l.b16 %v293
      %v837 = vunpack.c.h.b16 %v293
      %v838 = vunpack.c.l.b16 %v294
      %v839 = vunpack.c.l.b16 %v295
      %v840 = vunpack.c.h.b16 %v295
      %v841 = vunpack.c.l.b16 %v296
      %v842 = vunpack.c.h.b16 %v296
      %v843 = vunpack.c.l.b16 %v297
      %v844 = vunpack.c.l.b16 %v298
      %v845 = vunpack.c.h.b16 %v298
      %v846 = vunpack.c.l.b16 %v299
      %v847 = vunpack.c.h.b16 %v299
      %v848 = vunpack.c.l.b16 %v300
      %v849 = vunpack.c.l.b16 %v301
      %v850 = vunpack.c.h.b16 %v301
      %v851 = vunpack.c.l.b16 %v302
      %v852 = vunpack.c.h.b16 %v302
      %v853 = vunpack.c.l.b16 %v303
      %v854 = vunpack.c.l.b16 %v304
      %v855 = vunpack.c.h.b16 %v304
      %v856 = vunpack.c.l.b16 %v305
      %v857 = vunpack.c.h.b16 %v305
      %v858 = vunpack.c.l.b16 %v306
      %v859 = vunpack.c.l.b16 %v307
      %v860 = vunpack.c.h.b16 %v307
      %v861 = vunpack.c.l.b16 %v308
      %v862 = vunpack.c.h.b16 %v308
      %v863 = vunpack.c.l.b16 %v309
      %v864 = vunpack.c.l.b16 %v310
      %v865 = vunpack.c.h.b16 %v310
      %v866 = vunpack.c.l.b16 %v311
      %v867 = vunpack.c.h.b16 %v311
      %v868 = vunpack.c.l.b16 %v312
      %v869 = vunpack.c.l.b16 %v313
      %v870 = vunpack.c.h.b16 %v313
      %v871 = vunpack.c.l.b16 %v314
      %v872 = vunpack.c.h.b16 %v314
      %v873 = vunpack.c.l.b16 %v315
      %v874 = vunpack.c.l.b16 %v316
      %v875 = vunpack.c.h.b16 %v316
      %v876 = vunpack.c.l.b16 %v317
      %v877 = vunpack.c.h.b16 %v317
      %v878 = vunpack.c.l.b16 %v318
      %v879 = vunpack.c.l.b16 %v319
      %v880 = vunpack.c.h.b16 %v319
      %v881 = vunpack.c.l.b16 %v320
      %v882 = vunpack.c.h.b16 %v320
      %v883 = vunpack.c.l.b16 %v321
      %v884 = vunpack.c.l.b16 %v322
      %v885 = vunpack.c.h.b16 %v322
      %v886 = vunpack.c.l.b16 %v323
      %v887 = vunpack.c.h.b16 %v323
      %v888 = vunpack.c.l.b16 %v324
      %v889 = vunpack.c.l.b16 %v325
      %v890 = vunpack.c.h.b16 %v325
      %v891 = vunpack.c.l.b16 %v326
      %v892 = vunpack.c.h.b16 %v326
      %v893 = vunpack.c.l.b16 %v327
      %v894 = vunpack.c.l.b16 %v328
      %v895 = vunpack.c.h.b16 %v328
      %v896 = vunpack.c.l.b16 %v329
      %v897 = vunpack.c.h.b16 %v329
      %v898 = vunpack.c.l.b16 %v330
      %v899 = vunpack.c.l.b16 %v331
      %v900 = vunpack.c.h.b16 %v331
      %v901 = vunpack.c.l.b16 %v332
      %v902 = vunpack.c.h.b16 %v332
      %v903 = vunpack.c.l.b16 %v333
      %v904 = vunpack.c.l.b16 %v334
      %v905 = vunpack.c.h.b16 %v334
      %v906 = vunpack.c.l.b16 %v335
      %v907 = vunpack.c.h.b16 %v335
      %v908 = vunpack.c.l.b16 %v336
      %v909 = vunpack.c.l.b16 %v337
      %v910 = vunpack.c.h.b16 %v337
      %v911 = vunpack.c.l.b16 %v338
      %v912 = vunpack.c.h.b16 %v338
      %v913 = vunpack.c.l.b16 %v339
      %v914 = vunpack.c.l.b16 %v340
      %v915 = vunpack.c.h.b16 %v340
      %v916 = vunpack.c.l.b16 %v341
      %v917 = vunpack.c.h.b16 %v341
      %v918 = vunpack.c.l.b16 %v342
      %v919 = vunpack.c.l.b16 %v343
      %v920 = vunpack.c.h.b16 %v343
      %v921 = vunpack.c.l.b16 %v344
      %v922 = vunpack.c.h.b16 %v344
      %v923 = vunpack.c.l.b16 %v345
      %v924 = vunpack.c.l.b16 %v346
      %v925 = vunpack.c.h.b16 %v346
      %v926 = vunpack.c.l.b16 %v347
      %v927 = vunpack.c.h.b16 %v347
      %v928 = vunpack.c.l.b16 %v348
      %v929 = vunpack.c.l.b16 %v349
      %v930 = vunpack.c.h.b16 %v349
      %v931 = vunpack.c.l.b16 %v350
      %v932 = vunpack.c.h.b16 %v350
      %v933 = vunpack.c.l.b16 %v351
      %v934 = vunpack.c.l.b16 %v352
      %v935 = vunpack.c.h.b16 %v352
      %v936 = vunpack.c.l.b16 %v353
      %v937 = vunpack.c.h.b16 %v353
      %v938 = vunpack.c.l.b16 %v354
      %v939 = vunpack.c.l.b16 %v355
      %v940 = vunpack.c.h.b16 %v355
      %v941 = vunpack.c.l.b16 %v356
      %v942 = vunpack.c.h.b16 %v356
      %v943 = vunpack.c.l.b16 %v357
      %v944 = vunpack.c.l.b16 %v358
      %v945 = vunpack.c.h.b16 %v358
      %v946 = vunpack.c.l.b16 %v359
      %v947 = vunpack.c.h.b16 %v359
      %v948 = vunpack.c.l.b16 %v360
      %v949 = vunpack.c.l.b16 %v361
      %v950 = vunpack.c.h.b16 %v361
      %v951 = vunpack.c.l.b16 %v362
      %v952 = vunpack.c.h.b16 %v362
      %v953 = vunpack.c.l.b16 %v363
      %v954 = vunpack.c.l.b16 %v364
      %v955 = vunpack.c.h.b16 %v364
      %v956 = vunpack.c.l.b16 %v365
      %v957 = vunpack.c.h.b16 %v365
      %v958 = vunpack.c.l.b16 %v366
      %v959 = vunpack.c.l.b16 %v367
      %v960 = vunpack.c.h.b16 %v367
      %v961 = vunpack.c.l.b16 %v368
      %v962 = vunpack.c.h.b16 %v368
      %v963 = vunpack.c.l.b16 %v369
      %v964 = vpack.c.b16 %v649, %v644
      %v965 = vpack.c.b16 %v650, %v645
      %v966 = vpack.c.b16 %v651, %v646
      %v967 = vpack.c.b16 %v652, %v647
      %v968 = vpack.c.b16 %v653, %v648
      %v969 = vpack.c.b16 %v659, %v654
      %v970 = vpack.c.b16 %v660, %v655
      %v971 = vpack.c.b16 %v661, %v656
      %v972 = vpack.c.b16 %v662, %v657
      %v973 = vpack.c.b16 %v663, %v658
      %v974 = vpack.c.b16 %v669, %v664
      %v975 = vpack.c.b16 %v670, %v665
      %v976 = vpack.c.b16 %v671, %v666
      %v977 = vpack.c.b16 %v672, %v667
      %v978 = vpack.c.b16 %v673, %v668
      %v979 = vpack.c.b16 %v679, %v674
      %v980 = vpack.c.b16 %v680, %v675
      %v981 = vpack.c.b16 %v681, %v676
      %v982 = vpack.c.b16 %v682, %v677
      %v983 = vpack.c.b16 %v683, %v678
      %v984 = vpack.c.b16 %v689, %v684
      %v985 = vpack.c.b16 %v690, %v685
      %v986 = vpack.c.b16 %v691, %v686
      %v987 = vpack.c.b16 %v692, %v687
      %v988 = vpack.c.b16 %v693, %v688
      %v989 = vpack.c.b16 %v699, %v694
      %v990 = vpack.c.b16 %v700, %v695
      %v991 = vpack.c.b16 %v701, %v696
      %v992 = vpack.c.b16 %v702, %v697
      %v993 = vpack.c.b16 %v703, %v698
      %v994 = vpack.c.b16 %v709, %v704
      %v995 = vpack.c.b16 %v710, %v705
      %v996 = vpack.c.b16 %v711, %v706
      %v997 = vpack.c.b16 %v712, %v707
      %v998 = vpack.c.b16 %v713, %v708
      %v999 = vpack.c.b16 %v719, %v714
      %v1000 = vpack.c.b16 %v720, %v715
      %v1001 = vpack.c.b16 %v721, %v716
      %v1002 = vpack.c.b16 %v722, %v717
      %v1003 = vpack.c.b16 %v723, %v718
      %v1004 = vpack.c.b16 %v729, %v724
      %v1005 = vpack.c.b16 %v730, %v725
      %v1006 = vpack.c.b16 %v731, %v726
      %v1007 = vpack.c.b16 %v732, %v727
      %v1008 = vpack.c.b16 %v733, %v728
      %v1009 = vpack.c.b16 %v739, %v734
      %v1010 = vpack.c.b16 %v740, %v735
      %v1011 = vpack.c.b16 %v741, %v736
      %v1012 = vpack.c.b16 %v742, %v737
      %v1013 = vpack.c.b16 %v743, %v738
      %v1014 = vpack.c.b16 %v749, %v744
      %v1015 = vpack.c.b16 %v750, %v745
      %v1016 = vpack.c.b16 %v751, %v746
      %v1017 = vpack.c.b16 %v752, %v747
      %v1018 = vpack.c.b16 %v753, %v748
      %v1019 = vpack.c.b16 %v759, %v754
      %v1020 = vpack.c.b16 %v760, %v755
      %v1021 = vpack.c.b16 %v761, %v756
      %v1022 = vpack.c.b16 %v762, %v757
      %v1023 = vpack.c.b16 %v763, %v758
      %v1024 = vpack.c.b16 %v769, %v764
      %v1025 = vpack.c.b16 %v770, %v765
      %v1026 = vpack.c.b16 %v771, %v766
      %v1027 = vpack.c.b16 %v772, %v767
      %v1028 = vpack.c.b16 %v773, %v768
      %v1029 = vpack.c.b16 %v779, %v774
      %v1030 = vpack.c.b16 %v780, %v775
      %v1031 = vpack.c.b16 %v781, %v776
      %v1032 = vpack.c.b16 %v782, %v777
      %v1033 = vpack.c.b16 %v783, %v778
      %v1034 = vpack.c.b16 %v789, %v784
      %v1035 = vpack.c.b16 %v790, %v785
      %v1036 = vpack.c.b16 %v791, %v786
      %v1037 = vpack.c.b16 %v792, %v787
      %v1038 = vpack.c.b16 %v793, %v788
      %v1039 = vpack.c.b16 %v799, %v794
      %v1040 = vpack.c.b16 %v800, %v795
      %v1041 = vpack.c.b16 %v801, %v796
      %v1042 = vpack.c.b16 %v802, %v797
      %v1043 = vpack.c.b16 %v803, %v798
      %v1044 = vpack.c.b16 %v809, %v804
      %v1045 = vpack.c.b16 %v810, %v805
      %v1046 = vpack.c.b16 %v811, %v806
      %v1047 = vpack.c.b16 %v812, %v807
      %v1048 = vpack.c.b16 %v813, %v808
      %v1049 = vpack.c.b16 %v819, %v814
      %v1050 = vpack.c.b16 %v820, %v815
      %v1051 = vpack.c.b16 %v821, %v816
      %v1052 = vpack.c.b16 %v822, %v817
      %v1053 = vpack.c.b16 %v823, %v818
      %v1054 = vpack.c.b16 %v829, %v824
      %v1055 = vpack.c.b16 %v830, %v825
      %v1056 = vpack.c.b16 %v831, %v826
      %v1057 = vpack.c.b16 %v832, %v827
      %v1058 = vpack.c.b16 %v833, %v828
      %v1059 = vpack.c.b16 %v839, %v834
      %v1060 = vpack.c.b16 %v840, %v835
      %v1061 = vpack.c.b16 %v841, %v836
      %v1062 = vpack.c.b16 %v842, %v837
      %v1063 = vpack.c.b16 %v843, %v838
      %v1064 = vpack.c.b16 %v849, %v844
      %v1065 = vpack.c.b16 %v850, %v845
      %v1066 = vpack.c.b16 %v851, %v846
      %v1067 = vpack.c.b16 %v852, %v847
      %v1068 = vpack.c.b16 %v853, %v848
      %v1069 = vpack.c.b16 %v859, %v854
      %v1070 = vpack.c.b16 %v860, %v855
      %v1071 = vpack.c.b16 %v861, %v856
      %v1072 = vpack.c.b16 %v862, %v857
      %v1073 = vpack.c.b16 %v863, %v858
      %v1074 = vpack.c.b16 %v869, %v864
      %v1075 = vpack.c.b16 %v870, %v865
      %v1076 = vpack.c.b16 %v871, %v866
      %v1077 = vpack.c.b16 %v872, %v867
      %v1078 = vpack.c.b16 %v873, %v868
      %v1079 = vpack.c.b16 %v879, %v874
      %v1080 = vpack.c.b16 %v880, %v875
      %v1081 = vpack.c.b16 %v881, %v876
      %v1082 = vpack.c.b16 %v882, %v877
      %v1083 = vpack.c.b16 %v883, %v878
      %v1084 = vpack.c.b16 %v889, %v884
      %v1085 = vpack.c.b16 %v890, %v885
      %v1086 = vpack.c.b16 %v891, %v886
      %v1087 = vpack.c.b16 %v892, %v887
      %v1088 = vpack.c.b16 %v893, %v888
      %v1089 = vpack.c.b16 %v899, %v894
      %v1090 = vpack.c.b16 %v900, %v895
      %v1091 = vpack.c.b16 %v901, %v896
      %v1092 = vpack.c.b16 %v902, %v897
      %v1093 = vpack.c.b16 %v903, %v898
      %v1094 = vpack.c.b16 %v909, %v904
      %v1095 = vpack.c.b16 %v910, %v905
      %v1096 = vpack.c.b16 %v911, %v906
      %v1097 = vpack.c.b16 %v912, %v907
      %v1098 = vpack.c.b16 %v913, %v908
      %v1099 = vpack.c.b16 %v919, %v914
      %v1100 = vpack.c.b16 %v920, %v915
      %v1101 = vpack.c.b16 %v921, %v916
      %v1102 = vpack.c.b16 %v922, %v917
      %v1103 = vpack.c.b16 %v923, %v918
      %v1104 = vpack.c.b16 %v929, %v924
      %v1105 = vpack.c.b16 %v930, %v925
      %v1106 = vpack.c.b16 %v931, %v926
      %v1107 = vpack.c.b16 %v932, %v927
      %v1108 = vpack.c.b16 %v933, %v928
      %v1109 = vpack.c.b16 %v939, %v934
      %v1110 = vpack.c.b16 %v940, %v935
      %v1111 = vpack.c.b16 %v941, %v936
      %v1112 = vpack.c.b16 %v942, %v937
      %v1113 = vpack.c.b16 %v943, %v938
      %v1114 = vpack.c.b16 %v949, %v944
      %v1115 = vpack.c.b16 %v950, %v945
      %v1116 = vpack.c.b16 %v951, %v946
      %v1117 = vpack.c.b16 %v952, %v947
      %v1118 = vpack.c.b16 %v953, %v948
      %v1119 = vpack.c.b16 %v959, %v954
      %v1120 = vpack.c.b16 %v960, %v955
      %v1121 = vpack.c.b16 %v961, %v956
      %v1122 = vpack.c.b16 %v962, %v957
      %v1123 = vpack.c.b16 %v963, %v958
      %v1327 = vunpack.c.l.b16 %v370
      %v1328 = vunpack.c.l.b16 %v371
      %v1329 = vunpack.c.l.b16 %v372
      %v1330 = vunpack.c.l.b16 %v373
      %v1331 = vunpack.c.l.b16 %v374
      %v1332 = vunpack.c.l.b16 %v375
      %v1333 = vunpack.c.l.b16 %v376
      %v1334 = vunpack.c.l.b16 %v377
      %v1335 = vunpack.c.l.b16 %v378
      %v1336 = vunpack.c.l.b16 %v379
      %v1337 = vunpack.c.l.b16 %v380
      %v1338 = vunpack.c.l.b16 %v381
      %v1339 = vunpack.c.l.b16 %v382
      %v1340 = vunpack.c.l.b16 %v383
      %v1341 = vunpack.c.l.b16 %v384
      %v1342 = vunpack.c.l.b16 %v385
      %v1343 = vunpack.c.l.b16 %v386
      %v1344 = vunpack.c.l.b16 %v387
      %v1345 = vunpack.c.l.b16 %v388
      %v1346 = vunpack.c.l.b16 %v389
      %v1347 = vunpack.c.l.b16 %v390
      %v1348 = vunpack.c.l.b16 %v391
      %v1349 = vunpack.c.l.b16 %v392
      %v1350 = vunpack.c.l.b16 %v393
      %v1351 = vunpack.c.l.b16 %v394
      %v1352 = vunpack.c.l.b16 %v395
      %v1353 = vunpack.c.l.b16 %v396
      %v1354 = vunpack.c.l.b16 %v397
      %v1355 = vunpack.c.l.b16 %v398
      %v1356 = vunpack.c.l.b16 %v399
      %v1357 = vunpack.c.l.b16 %v400
      %v1358 = vunpack.c.l.b16 %v401
      %v1359 = vunpack.c.l.b16 %v402
      %v1360 = vunpack.c.l.b16 %v403
      %v1361 = vunpack.c.l.b16 %v404
      %v1362 = vunpack.c.l.b16 %v405
      %v1363 = vunpack.c.l.b16 %v406
      %v1364 = vunpack.c.l.b16 %v407
      %v1365 = vunpack.c.l.b16 %v408
      %v1366 = vunpack.c.l.b16 %v409
      %v1367 = vunpack.c.l.b16 %v410
      %v1368 = vunpack.c.l.b16 %v411
      %v1369 = vunpack.c.l.b16 %v412
      %v1370 = vunpack.c.l.b16 %v413
      %v1371 = vunpack.c.l.b16 %v414
      %v1372 = vunpack.c.l.b16 %v415
      %v1373 = vunpack.c.l.b16 %v416
      %v1374 = vunpack.c.l.b16 %v417
      %v1375 = vunpack.c.l.b16 %v418
      %v1376 = vunpack.c.l.b16 %v419
      %v1377 = vunpack.c.l.b16 %v420
      %v1378 = vunpack.c.l.b16 %v421
      %v1379 = vunpack.c.l.b16 %v422
      %v1380 = vunpack.c.l.b16 %v423
      %v1381 = vunpack.c.l.b16 %v424
      %v1382 = vunpack.c.l.b16 %v425
      %v1383 = vunpack.c.l.b16 %v426
      %v1384 = vunpack.c.l.b16 %v427
      %v1385 = vunpack.c.l.b16 %v428
      %v1386 = vunpack.c.l.b16 %v429
      %v1387 = vunpack.c.l.b16 %v430
      %v1388 = vunpack.c.l.b16 %v431
      %v1389 = vunpack.c.l.b16 %v432
      %v1390 = vunpack.c.l.b16 %v433
      %v1391 = vunpack.c.l.b16 %v434
      %v1392 = vunpack.c.l.b16 %v435
      %v1393 = vunpack.c.l.b16 %v436
      %v1394 = vunpack.c.l.b16 %v437
      %v1395 = vunpack.c.l.b16 %v438
      %v1396 = vunpack.c.l.b16 %v439
      %v1397 = vunpack.c.l.b16 %v440
      %v1398 = vunpack.c.l.b16 %v441
      %v1399 = vunpack.c.l.b16 %v442
      %v1400 = vunpack.c.l.b16 %v443
      %v1401 = vunpack.c.l.b16 %v444
      %v1402 = vpack.c.b16 %v1328, %v1327
      %v1403 = vpack.c.b16 %v1330, %v1329
      %v1404 = vpack.c.b16 %v1332, %v1331
      %v1405 = vpack.c.b16 %v1334, %v1333
      %v1406 = vpack.c.b16 %v1336, %v1335
      %v1407 = vpack.c.b16 %v1338, %v1337
      %v1408 = vpack.c.b16 %v1340, %v1339
      %v1409 = vpack.c.b16 %v1342, %v1341
      %v1410 = vpack.c.b16 %v1344, %v1343
      %v1411 = vpack.c.b16 %v1346, %v1345
      %v1412 = vpack.c.b16 %v1348, %v1347
      %v1413 = vpack.c.b16 %v1350, %v1349
      %v1414 = vpack.c.b16 %v1352, %v1351
      %v1415 = vpack.c.b16 %v1354, %v1353
      %v1416 = vpack.c.b16 %v1356, %v1355
      %v1417 = vpack.c.b16 %v1358, %v1357
      %v1418 = vpack.c.b16 %v1360, %v1359
      %v1419 = vpack.c.b16 %v1362, %v1361
      %v1420 = vpack.c.b16 %v1364, %v1363
      %v1421 = vpack.c.b16 %v1366, %v1365
      %v1422 = vpack.c.b16 %v1368, %v1367
      %v1423 = vpack.c.b16 %v1370, %v1369
      %v1424 = vpack.c.b16 %v1372, %v1371
      %v1425 = vpack.c.b16 %v1374, %v1373
      %v1426 = vpack.c.b16 %v1376, %v1375
      %v1427 = vpack.c.b16 %v1378, %v1377
      %v1428 = vpack.c.b16 %v1380, %v1379
      %v1429 = vpack.c.b16 %v1382, %v1381
      %v1430 = vpack.c.b16 %v1384, %v1383
      %v1431 = vpack.c.b16 %v1386, %v1385
      %v1432 = vpack.c.b16 %v1388, %v1387
      %v1433 = vpack.c.b16 %v1390, %v1389
      %v1434 = vpack.c.b16 %v1392, %v1391
      %v1435 = vpack.c.b16 %v1394, %v1393
      %v1436 = vpack.c.b16 %v1396, %v1395
      %v1437 = vpack.c.b16 %v1398, %v1397
      %v1438 = vpack.c.b16 %v1400, %v1399
      %v1439 = vpack.c.b16 %v1401, %v1401
      %vm1477 = vcmask 719872
      %v1479 = vsel %vm1477, %v968, 0
      %v1482 = vsel %vm1477, %v973, 0
      %v1485 = vsel %vm1477, %v978, 0
      %v1488 = vsel %vm1477, %v983, 0
      %v1491 = vsel %vm1477, %v988, 0
      %v1494 = vsel %vm1477, %v993, 0
      %v1497 = vsel %vm1477, %v998, 0
      %v1500 = vsel %vm1477, %v1003, 0
      %v1503 = vsel %vm1477, %v1008, 0
      %v1506 = vsel %vm1477, %v1013, 0
      %v1509 = vsel %vm1477, %v1018, 0
      %v1512 = vsel %vm1477, %v1023, 0
      %v1515 = vsel %vm1477, %v1028, 0
      %v1518 = vsel %vm1477, %v1033, 0
      %v1521 = vsel %vm1477, %v1038, 0
      %v1524 = vsel %vm1477, %v1043, 0
      %v1527 = vsel %vm1477, %v1048, 0
      %v1530 = vsel %vm1477, %v1053, 0
      %v1533 = vsel %vm1477, %v1058, 0
      %v1536 = vsel %vm1477, %v1063, 0
      %v1539 = vsel %vm1477, %v1068, 0
      %v1542 = vsel %vm1477, %v1073, 0
      %v1545 = vsel %vm1477, %v1078, 0
      %v1548 = vsel %vm1477, %v1083, 0
      %v1551 = vsel %vm1477, %v1088, 0
      %v1554 = vsel %vm1477, %v1093, 0
      %v1557 = vsel %vm1477, %v1098, 0
      %v1560 = vsel %vm1477, %v1103, 0
      %v1563 = vsel %vm1477, %v1108, 0
      %v1566 = vsel %vm1477, %v1113, 0
      %v1569 = vsel %vm1477, %v1118, 0
      %v1572 = vsel %vm1477, %v1123, 0
      %vm1574 = vcmask 1043456
      %v1576 = vsel %vm1574, %v1439, 0
      %1578 = vmatprep.subr.bf16.mxu0 0
      %1579 = vmatpush1.bf16.msra.mxu0 %v1402
      %1580 = vmatprep.subr.bf16.mxu0 0
      %1581 = vmatpush1.bf16.msra.mxu0 %v1403
      %1582 = vmatprep.subr.bf16.mxu0 0
      %1583 = vmatpush1.bf16.msra.mxu0 %v1404
      %1584 = vmatprep.subr.bf16.mxu0 0
      %1585 = vmatpush1.bf16.msra.mxu0 %v1405
      %1586 = vmatprep.subr.bf16.mxu0 0
      %1587 = vmatpush1.bf16.msra.mxu0 %v1406
      %1588 = vmatprep.subr.bf16.mxu0 0
      %1589 = vmatpush1.bf16.msra.mxu0 %v1407
      %1590 = vmatprep.subr.bf16.mxu0 0
      %1591 = vmatpush1.bf16.msra.mxu0 %v1408
      %1592 = vmatprep.subr.bf16.mxu0 0
      %1593 = vmatpush1.bf16.msra.mxu0 %v1409
      %1594 = vmatprep.subr.bf16.mxu0 0
      %1595 = vmatpush1.bf16.msra.mxu0 %v1410
      %1596 = vmatprep.subr.bf16.mxu0 0
      %1597 = vmatpush1.bf16.msra.mxu0 %v1411
      %1598 = vmatprep.subr.bf16.mxu0 0
      %1599 = vmatpush1.bf16.msra.mxu0 %v1412
      %1600 = vmatprep.subr.bf16.mxu0 0
      %1601 = vmatpush1.bf16.msra.mxu0 %v1413
      %1602 = vmatprep.subr.bf16.mxu0 0
      %1603 = vmatpush1.bf16.msra.mxu0 %v1414
      %1604 = vmatprep.subr.bf16.mxu0 0
      %1605 = vmatpush1.bf16.msra.mxu0 %v1415
      %1606 = vmatprep.subr.bf16.mxu0 0
      %1607 = vmatpush1.bf16.msra.mxu0 %v1416
      %1608 = vmatprep.subr.bf16.mxu0 0
      %1609 = vmatpush1.bf16.msra.mxu0 %v1417
      %1610 = vmatprep.mubr.bf16.mxu0 %v965
      %1611 = vmatmul.mubr.bf16.gmra.mrb[0].mxu0 %v964
      %v1612 = vpop.f32.mrb[0].mxu0
      %v1613 = vadd.f32 %v450, %v1612
      %v1614 = vpop.f32.mrb[0].mxu0
      %v1615 = vpop.f32.mrb[0].mxu0
      %v1616 = vadd.f32 %v450, %v1615
      %v1617 = vpop.f32.mrb[0].mxu0
      %1618 = vmatprep.mubr.bf16.mxu0 %v970
      %1619 = vmatmul.mubr.bf16.gmra.mrb[0].mxu0 %v969
      %v1620 = vpop.f32.mrb[0].mxu0
      %v1621 = vadd.f32 %v450, %v1620
      %v1622 = vpop.f32.mrb[0].mxu0
      %v1623 = vpop.f32.mrb[0].mxu0
      %v1624 = vadd.f32 %v450, %v1623
      %v1625 = vpop.f32.mrb[0].mxu0
      %1626 = vmatprep.mubr.bf16.mxu0 %v975
      %1627 = vmatmul.mubr.bf16.gmra.mrb[0].mxu0 %v974
      %v1628 = vpop.f32.mrb[0].mxu0
      %v1629 = vadd.f32 %v450, %v1628
      %v1630 = vpop.f32.mrb[0].mxu0
      %v1631 = vpop.f32.mrb[0].mxu0
      %v1632 = vadd.f32 %v450, %v1631
      %v1633 = vpop.f32.mrb[0].mxu0
      %1634 = vmatprep.mubr.bf16.mxu0 %v980
      %1635 = vmatmul.mubr.bf16.gmra.mrb[0].mxu0 %v979
      %v1636 = vpop.f32.mrb[0].mxu0
      %v1637 = vadd.f32 %v450, %v1636
      %v1638 = vpop.f32.mrb[0].mxu0
      %v1639 = vpop.f32.mrb[0].mxu0
      %v1640 = vadd.f32 %v450, %v1639
      %v1641 = vpop.f32.mrb[0].mxu0
      %1642 = vmatprep.mubr.bf16.mxu0 %v985
      %1643 = vmatmul.mubr.bf16.gmra.mrb[0].mxu0 %v984
      %v1644 = vpop.f32.mrb[0].mxu0
      %v1645 = vadd.f32 %v450, %v1644
      %v1646 = vpop.f32.mrb[0].mxu0
      %v1647 = vpop.f32.mrb[0].mxu0
      %v1648 = vadd.f32 %v450, %v1647
      %v1649 = vpop.f32.mrb[0].mxu0
      %1650 = vmatprep.mubr.bf16.mxu0 %v990
      %1651 = vmatmul.mubr.bf16.gmra.mrb[0].mxu0 %v989
      %v1652 = vpop.f32.mrb[0].mxu0
      %v1653 = vadd.f32 %v450, %v1652
      %v1654 = vpop.f32.mrb[0].mxu0
      %v1655 = vpop.f32.mrb[0].mxu0
      %v1656 = vadd.f32 %v450, %v1655
      %v1657 = vpop.f32.mrb[0].mxu0
      %1658 = vmatprep.mubr.bf16.mxu0 %v995
      %1659 = vmatmul.mubr.bf16.gmra.mrb[0].mxu0 %v994
      %v1660 = vpop.f32.mrb[0].mxu0
      %v1661 = vadd.f32 %v450, %v1660
      %v1662 = vpop.f32.mrb[0].mxu0
      %v1663 = vpop.f32.mrb[0].mxu0
      %v1664 = vadd.f32 %v450, %v1663
      %v1665 = vpop.f32.mrb[0].mxu0
      %1666 = vmatprep.mubr.bf16.mxu0 %v1000
      %1667 = vmatmul.mubr.bf16.gmra.mrb[0].mxu0 %v999
      %v1668 = vpop.f32.mrb[0].mxu0
      %v1669 = vadd.f32 %v450, %v1668
      %v1670 = vpop.f32.mrb[0].mxu0
      %v1671 = vpop.f32.mrb[0].mxu0
      %v1672 = vadd.f32 %v450, %v1671
      %v1673 = vpop.f32.mrb[0].mxu0
      %1674 = vmatprep.mubr.bf16.mxu0 %v1005
      %1675 = vmatmul.mubr.bf16.gmra.mrb[0].mxu0 %v1004
      %v1676 = vpop.f32.mrb[0].mxu0
      %v1677 = vadd.f32 %v450, %v1676
      %v1678 = vpop.f32.mrb[0].mxu0
      %v1679 = vpop.f32.mrb[0].mxu0
      %v1680 = vadd.f32 %v450, %v1679
      %v1681 = vpop.f32.mrb[0].mxu0
      %1682 = vmatprep.mubr.bf16.mxu0 %v1010
      %1683 = vmatmul.mubr.bf16.gmra.mrb[0].mxu0 %v1009
      %v1684 = vpop.f32.mrb[0].mxu0
      %v1685 = vadd.f32 %v450, %v1684
      %v1686 = vpop.f32.mrb[0].mxu0
      %v1687 = vpop.f32.mrb[0].mxu0
      %v1688 = vadd.f32 %v450, %v1687
      %v1689 = vpop.f32.mrb[0].mxu0
      %1690 = vmatprep.mubr.bf16.mxu0 %v1015
      %1691 = vmatmul.mubr.bf16.gmra.mrb[0].mxu0 %v1014
      %v1692 = vpop.f32.mrb[0].mxu0
      %v1693 = vadd.f32 %v450, %v1692
      %v1694 = vpop.f32.mrb[0].mxu0
      %v1695 = vpop.f32.mrb[0].mxu0
      %v1696 = vadd.f32 %v450, %v1695
      %v1697 = vpop.f32.mrb[0].mxu0
      %1698 = vmatprep.mubr.bf16.mxu0 %v1020
      %1699 = vmatmul.mubr.bf16.gmra.mrb[0].mxu0 %v1019
      %v1700 = vpop.f32.mrb[0].mxu0
      %v1701 = vadd.f32 %v450, %v1700
      %v1702 = vpop.f32.mrb[0].mxu0
      %v1703 = vpop.f32.mrb[0].mxu0
      %v1704 = vadd.f32 %v450, %v1703
      %v1705 = vpop.f32.mrb[0].mxu0
      %1706 = vmatprep.mubr.bf16.mxu0 %v1025
      %1707 = vmatmul.mubr.bf16.gmra.mrb[0].mxu0 %v1024
      %v1708 = vpop.f32.mrb[0].mxu0
      %v1709 = vadd.f32 %v450, %v1708
      %v1710 = vpop.f32.mrb[0].mxu0
      %v1711 = vpop.f32.mrb[0].mxu0
      %v1712 = vadd.f32 %v450, %v1711
      %v1713 = vpop.f32.mrb[0].mxu0
      %1714 = vmatprep.mubr.bf16.mxu0 %v1030
      %1715 = vmatmul.mubr.bf16.gmra.mrb[0].mxu0 %v1029
      %v1716 = vpop.f32.mrb[0].mxu0
      %v1717 = vadd.f32 %v450, %v1716
      %v1718 = vpop.f32.mrb[0].mxu0
      %v1719 = vpop.f32.mrb[0].mxu0
      %v1720 = vadd.f32 %v450, %v1719
      %v1721 = vpop.f32.mrb[0].mxu0
      %1722 = vmatprep.mubr.bf16.mxu0 %v1035
      %1723 = vmatmul.mubr.bf16.gmra.mrb[0].mxu0 %v1034
      %v1724 = vpop.f32.mrb[0].mxu0
      %v1725 = vadd.f32 %v450, %v1724
      %v1726 = vpop.f32.mrb[0].mxu0
      %v1727 = vpop.f32.mrb[0].mxu0
      %v1728 = vadd.f32 %v450, %v1727
      %v1729 = vpop.f32.mrb[0].mxu0
      %1730 = vmatprep.mubr.bf16.mxu0 %v1040
      %1731 = vmatmul.mubr.bf16.gmra.mrb[0].mxu0 %v1039
      %v1732 = vpop.f32.mrb[0].mxu0
      %v1733 = vadd.f32 %v450, %v1732
      %v1734 = vpop.f32.mrb[0].mxu0
      %v1735 = vpop.f32.mrb[0].mxu0
      %v1736 = vadd.f32 %v450, %v1735
      %v1737 = vpop.f32.mrb[0].mxu0
      %1738 = vmatprep.mubr.bf16.mxu0 %v1045
      %1739 = vmatmul.mubr.bf16.gmra.mrb[0].mxu0 %v1044
      %v1740 = vpop.f32.mrb[0].mxu0
      %v1741 = vadd.f32 %v450, %v1740
      %v1742 = vpop.f32.mrb[0].mxu0
      %v1743 = vpop.f32.mrb[0].mxu0
      %v1744 = vadd.f32 %v450, %v1743
      %v1745 = vpop.f32.mrb[0].mxu0
      %1746 = vmatprep.mubr.bf16.mxu0 %v1050
      %1747 = vmatmul.mubr.bf16.gmra.mrb[0].mxu0 %v1049
      %v1748 = vpop.f32.mrb[0].mxu0
      %v1749 = vadd.f32 %v450, %v1748
      %v1750 = vpop.f32.mrb[0].mxu0
      %v1751 = vpop.f32.mrb[0].mxu0
      %v1752 = vadd.f32 %v450, %v1751
      %v1753 = vpop.f32.mrb[0].mxu0
      %1754 = vmatprep.mubr.bf16.mxu0 %v1055
      %1755 = vmatmul.mubr.bf16.gmra.mrb[0].mxu0 %v1054
      %v1756 = vpop.f32.mrb[0].mxu0
      %v1757 = vadd.f32 %v450, %v1756
      %v1758 = vpop.f32.mrb[0].mxu0
      %v1759 = vpop.f32.mrb[0].mxu0
      %v1760 = vadd.f32 %v450, %v1759
      %v1761 = vpop.f32.mrb[0].mxu0
      %1762 = vmatprep.mubr.bf16.mxu0 %v1060
      %1763 = vmatmul.mubr.bf16.gmra.mrb[0].mxu0 %v1059
      %v1764 = vpop.f32.mrb[0].mxu0
      %v1765 = vadd.f32 %v450, %v1764
      %v1766 = vpop.f32.mrb[0].mxu0
      %v1767 = vpop.f32.mrb[0].mxu0
      %v1768 = vadd.f32 %v450, %v1767
      %v1769 = vpop.f32.mrb[0].mxu0
      %1770 = vmatprep.mubr.bf16.mxu0 %v1065
      %1771 = vmatmul.mubr.bf16.gmra.mrb[0].mxu0 %v1064
      %v1772 = vpop.f32.mrb[0].mxu0
      %v1773 = vadd.f32 %v450, %v1772
      %v1774 = vpop.f32.mrb[0].mxu0
      %v1775 = vpop.f32.mrb[0].mxu0
      %v1776 = vadd.f32 %v450, %v1775
      %v1777 = vpop.f32.mrb[0].mxu0
      %1778 = vmatprep.mubr.bf16.mxu0 %v1070
      %1779 = vmatmul.mubr.bf16.gmra.mrb[0].mxu0 %v1069
      %v1780 = vpop.f32.mrb[0].mxu0
      %v1781 = vadd.f32 %v450, %v1780
      %v1782 = vpop.f32.mrb[0].mxu0
      %v1783 = vpop.f32.mrb[0].mxu0
      %v1784 = vadd.f32 %v450, %v1783
      %v1785 = vpop.f32.mrb[0].mxu0
      %1786 = vmatprep.mubr.bf16.mxu0 %v1075
      %1787 = vmatmul.mubr.bf16.gmra.mrb[0].mxu0 %v1074
      %v1788 = vpop.f32.mrb[0].mxu0
      %v1789 = vadd.f32 %v450, %v1788
      %v1790 = vpop.f32.mrb[0].mxu0
      %v1791 = vpop.f32.mrb[0].mxu0
      %v1792 = vadd.f32 %v450, %v1791
      %v1793 = vpop.f32.mrb[0].mxu0
      %1794 = vmatprep.mubr.bf16.mxu0 %v1080
      %1795 = vmatmul.mubr.bf16.gmra.mrb[0].mxu0 %v1079
      %v1796 = vpop.f32.mrb[0].mxu0
      %v1797 = vadd.f32 %v450, %v1796
      %v1798 = vpop.f32.mrb[0].mxu0
      %v1799 = vpop.f32.mrb[0].mxu0
      %v1800 = vadd.f32 %v450, %v1799
      %v1801 = vpop.f32.mrb[0].mxu0
      %1802 = vmatprep.mubr.bf16.mxu0 %v1085
      %1803 = vmatmul.mubr.bf16.gmra.mrb[0].mxu0 %v1084
      %v1804 = vpop.f32.mrb[0].mxu0
      %v1805 = vadd.f32 %v450, %v1804
      %v1806 = vpop.f32.mrb[0].mxu0
      %v1807 = vpop.f32.mrb[0].mxu0
      %v1808 = vadd.f32 %v450, %v1807
      %v1809 = vpop.f32.mrb[0].mxu0
      %1810 = vmatprep.mubr.bf16.mxu0 %v1090
      %1811 = vmatmul.mubr.bf16.gmra.mrb[0].mxu0 %v1089
      %v1812 = vpop.f32.mrb[0].mxu0
      %v1813 = vadd.f32 %v450, %v1812
      %v1814 = vpop.f32.mrb[0].mxu0
      %v1815 = vpop.f32.mrb[0].mxu0
      %v1816 = vadd.f32 %v450, %v1815
      %v1817 = vpop.f32.mrb[0].mxu0
      %1818 = vmatprep.mubr.bf16.mxu0 %v1095
      %1819 = vmatmul.mubr.bf16.gmra.mrb[0].mxu0 %v1094
      %v1820 = vpop.f32.mrb[0].mxu0
      %v1821 = vadd.f32 %v450, %v1820
      %v1822 = vpop.f32.mrb[0].mxu0
      %v1823 = vpop.f32.mrb[0].mxu0
      %v1824 = vadd.f32 %v450, %v1823
      %v1825 = vpop.f32.mrb[0].mxu0
      %1826 = vmatprep.mubr.bf16.mxu0 %v1100
      %1827 = vmatmul.mubr.bf16.gmra.mrb[0].mxu0 %v1099
      %v1828 = vpop.f32.mrb[0].mxu0
      %v1829 = vadd.f32 %v450, %v1828
      %v1830 = vpop.f32.mrb[0].mxu0
      %v1831 = vpop.f32.mrb[0].mxu0
      %v1832 = vadd.f32 %v450, %v1831
      %v1833 = vpop.f32.mrb[0].mxu0
      %1834 = vmatprep.mubr.bf16.mxu0 %v1105
      %1835 = vmatmul.mubr.bf16.gmra.mrb[0].mxu0 %v1104
      %v1836 = vpop.f32.mrb[0].mxu0
      %v1837 = vadd.f32 %v450, %v1836
      %v1838 = vpop.f32.mrb[0].mxu0
      %v1839 = vpop.f32.mrb[0].mxu0
      %v1840 = vadd.f32 %v450, %v1839
      %v1841 = vpop.f32.mrb[0].mxu0
      %1842 = vmatprep.mubr.bf16.mxu0 %v1110
      %1843 = vmatmul.mubr.bf16.gmra.mrb[0].mxu0 %v1109
      %v1844 = vpop.f32.mrb[0].mxu0
      %v1845 = vadd.f32 %v450, %v1844
      %v1846 = vpop.f32.mrb[0].mxu0
      %v1847 = vpop.f32.mrb[0].mxu0
      %v1848 = vadd.f32 %v450, %v1847
      %v1849 = vpop.f32.mrb[0].mxu0
      %1850 = vmatprep.mubr.bf16.mxu0 %v1115
      %1851 = vmatmul.mubr.bf16.gmra.mrb[0].mxu0 %v1114
      %v1852 = vpop.f32.mrb[0].mxu0
      %v1853 = vadd.f32 %v450, %v1852
      %v1854 = vpop.f32.mrb[0].mxu0
      %v1855 = vpop.f32.mrb[0].mxu0
      %v1856 = vadd.f32 %v450, %v1855
      %v1857 = vpop.f32.mrb[0].mxu0
      %1858 = vmatprep.mubr.bf16.mxu0 %v1120
      %1859 = vmatmul.mubr.bf16.gmra.mrb[0].mxu0 %v1119
      %v1860 = vpop.f32.mrb[0].mxu0
      %v1861 = vadd.f32 %v450, %v1860
      %v1862 = vpop.f32.mrb[0].mxu0
      %v1863 = vpop.f32.mrb[0].mxu0
      %v1864 = vadd.f32 %v450, %v1863
      %v1865 = vpop.f32.mrb[0].mxu0
      %1866 = vdwg.mxu0
      %1867 = vmatprep.subr.bf16.mxu0 0
      %1868 = vmatpush1.bf16.msra.mxu0 %v1418
      %1869 = vmatprep.subr.bf16.mxu0 0
      %1870 = vmatpush1.bf16.msra.mxu0 %v1419
      %1871 = vmatprep.subr.bf16.mxu0 0
      %1872 = vmatpush1.bf16.msra.mxu0 %v1420
      %1873 = vmatprep.subr.bf16.mxu0 0
      %1874 = vmatpush1.bf16.msra.mxu0 %v1421
      %1875 = vmatprep.subr.bf16.mxu0 0
      %1876 = vmatpush1.bf16.msra.mxu0 %v1422
      %1877 = vmatprep.subr.bf16.mxu0 0
      %1878 = vmatpush1.bf16.msra.mxu0 %v1423
      %1879 = vmatprep.subr.bf16.mxu0 0
      %1880 = vmatpush1.bf16.msra.mxu0 %v1424
      %1881 = vmatprep.subr.bf16.mxu0 0
      %1882 = vmatpush1.bf16.msra.mxu0 %v1425
      %1883 = vmatprep.subr.bf16.mxu0 0
      %1884 = vmatpush1.bf16.msra.mxu0 %v1426
      %1885 = vmatprep.subr.bf16.mxu0 0
      %1886 = vmatpush1.bf16.msra.mxu0 %v1427
      %1887 = vmatprep.subr.bf16.mxu0 0
      %1888 = vmatpush1.bf16.msra.mxu0 %v1428
      %1889 = vmatprep.subr.bf16.mxu0 0
      %1890 = vmatpush1.bf16.msra.mxu0 %v1429
      %1891 = vmatprep.subr.bf16.mxu0 0
      %1892 = vmatpush1.bf16.msra.mxu0 %v1430
      %1893 = vmatprep.subr.bf16.mxu0 0
      %1894 = vmatpush1.bf16.msra.mxu0 %v1431
      %1895 = vmatprep.subr.bf16.mxu0 0
      %1896 = vmatpush1.bf16.msra.mxu0 %v1432
      %1897 = vmatprep.subr.bf16.mxu0 0
      %1898 = vmatpush1.bf16.msra.mxu0 %v1433
      %1899 = vmatprep.mubr.bf16.mxu0 %v967
      %1900 = vmatmul.mubr.bf16.gmra.mrb[0].mxu0 %v966
      %v1901 = vpop.f32.mrb[0].mxu0
      %v1902 = vadd.f32 %v1613, %v1901
      %v1903 = vpop.f32.mrb[0].mxu0
      %v1904 = vpop.f32.mrb[0].mxu0
      %v1905 = vadd.f32 %v1616, %v1904
      %v1906 = vpop.f32.mrb[0].mxu0
      %1907 = vmatprep.mubr.bf16.mxu0 %v972
      %1908 = vmatmul.mubr.bf16.gmra.mrb[0].mxu0 %v971
      %v1909 = vpop.f32.mrb[0].mxu0
      %v1910 = vadd.f32 %v1621, %v1909
      %v1911 = vpop.f32.mrb[0].mxu0
      %v1912 = vpop.f32.mrb[0].mxu0
      %v1913 = vadd.f32 %v1624, %v1912
      %v1914 = vpop.f32.mrb[0].mxu0
      %1915 = vmatprep.mubr.bf16.mxu0 %v977
      %1916 = vmatmul.mubr.bf16.gmra.mrb[0].mxu0 %v976
      %v1917 = vpop.f32.mrb[0].mxu0
      %v1918 = vadd.f32 %v1629, %v1917
      %v1919 = vpop.f32.mrb[0].mxu0
      %v1920 = vpop.f32.mrb[0].mxu0
      %v1921 = vadd.f32 %v1632, %v1920
      %v1922 = vpop.f32.mrb[0].mxu0
      %1923 = vmatprep.mubr.bf16.mxu0 %v982
      %1924 = vmatmul.mubr.bf16.gmra.mrb[0].mxu0 %v981
      %v1925 = vpop.f32.mrb[0].mxu0
      %v1926 = vadd.f32 %v1637, %v1925
      %v1927 = vpop.f32.mrb[0].mxu0
      %v1928 = vpop.f32.mrb[0].mxu0
      %v1929 = vadd.f32 %v1640, %v1928
      %v1930 = vpop.f32.mrb[0].mxu0
      %1931 = vmatprep.mubr.bf16.mxu0 %v987
      %1932 = vmatmul.mubr.bf16.gmra.mrb[0].mxu0 %v986
      %v1933 = vpop.f32.mrb[0].mxu0
      %v1934 = vadd.f32 %v1645, %v1933
      %v1935 = vpop.f32.mrb[0].mxu0
      %v1936 = vpop.f32.mrb[0].mxu0
      %v1937 = vadd.f32 %v1648, %v1936
      %v1938 = vpop.f32.mrb[0].mxu0
      %1939 = vmatprep.mubr.bf16.mxu0 %v992
      %1940 = vmatmul.mubr.bf16.gmra.mrb[0].mxu0 %v991
      %v1941 = vpop.f32.mrb[0].mxu0
      %v1942 = vadd.f32 %v1653, %v1941
      %v1943 = vpop.f32.mrb[0].mxu0
      %v1944 = vpop.f32.mrb[0].mxu0
      %v1945 = vadd.f32 %v1656, %v1944
      %v1946 = vpop.f32.mrb[0].mxu0
      %1947 = vmatprep.mubr.bf16.mxu0 %v997
      %1948 = vmatmul.mubr.bf16.gmra.mrb[0].mxu0 %v996
      %v1949 = vpop.f32.mrb[0].mxu0
      %v1950 = vadd.f32 %v1661, %v1949
      %v1951 = vpop.f32.mrb[0].mxu0
      %v1952 = vpop.f32.mrb[0].mxu0
      %v1953 = vadd.f32 %v1664, %v1952
      %v1954 = vpop.f32.mrb[0].mxu0
      %1955 = vmatprep.mubr.bf16.mxu0 %v1002
      %1956 = vmatmul.mubr.bf16.gmra.mrb[0].mxu0 %v1001
      %v1957 = vpop.f32.mrb[0].mxu0
      %v1958 = vadd.f32 %v1669, %v1957
      %v1959 = vpop.f32.mrb[0].mxu0
      %v1960 = vpop.f32.mrb[0].mxu0
      %v1961 = vadd.f32 %v1672, %v1960
      %v1962 = vpop.f32.mrb[0].mxu0
      %1963 = vmatprep.mubr.bf16.mxu0 %v1007
      %1964 = vmatmul.mubr.bf16.gmra.mrb[0].mxu0 %v1006
      %v1965 = vpop.f32.mrb[0].mxu0
      %v1966 = vadd.f32 %v1677, %v1965
      %v1967 = vpop.f32.mrb[0].mxu0
      %v1968 = vpop.f32.mrb[0].mxu0
      %v1969 = vadd.f32 %v1680, %v1968
      %v1970 = vpop.f32.mrb[0].mxu0
      %1971 = vmatprep.mubr.bf16.mxu0 %v1012
      %1972 = vmatmul.mubr.bf16.gmra.mrb[0].mxu0 %v1011
      %v1973 = vpop.f32.mrb[0].mxu0
      %v1974 = vadd.f32 %v1685, %v1973
      %v1975 = vpop.f32.mrb[0].mxu0
      %v1976 = vpop.f32.mrb[0].mxu0
      %v1977 = vadd.f32 %v1688, %v1976
      %v1978 = vpop.f32.mrb[0].mxu0
      %1979 = vmatprep.mubr.bf16.mxu0 %v1017
      %1980 = vmatmul.mubr.bf16.gmra.mrb[0].mxu0 %v1016
      %v1981 = vpop.f32.mrb[0].mxu0
      %v1982 = vadd.f32 %v1693, %v1981
      %v1983 = vpop.f32.mrb[0].mxu0
      %v1984 = vpop.f32.mrb[0].mxu0
      %v1985 = vadd.f32 %v1696, %v1984
      %v1986 = vpop.f32.mrb[0].mxu0
      %1987 = vmatprep.mubr.bf16.mxu0 %v1022
      %1988 = vmatmul.mubr.bf16.gmra.mrb[0].mxu0 %v1021
      %v1989 = vpop.f32.mrb[0].mxu0
      %v1990 = vadd.f32 %v1701, %v1989
      %v1991 = vpop.f32.mrb[0].mxu0
      %v1992 = vpop.f32.mrb[0].mxu0
      %v1993 = vadd.f32 %v1704, %v1992
      %v1994 = vpop.f32.mrb[0].mxu0
      %1995 = vmatprep.mubr.bf16.mxu0 %v1027
      %1996 = vmatmul.mubr.bf16.gmra.mrb[0].mxu0 %v1026
      %v1997 = vpop.f32.mrb[0].mxu0
      %v1998 = vadd.f32 %v1709, %v1997
      %v1999 = vpop.f32.mrb[0].mxu0
      %v2000 = vpop.f32.mrb[0].mxu0
      %v2001 = vadd.f32 %v1712, %v2000
      %v2002 = vpop.f32.mrb[0].mxu0
      %2003 = vmatprep.mubr.bf16.mxu0 %v1032
      %2004 = vmatmul.mubr.bf16.gmra.mrb[0].mxu0 %v1031
      %v2005 = vpop.f32.mrb[0].mxu0
      %v2006 = vadd.f32 %v1717, %v2005
      %v2007 = vpop.f32.mrb[0].mxu0
      %v2008 = vpop.f32.mrb[0].mxu0
      %v2009 = vadd.f32 %v1720, %v2008
      %v2010 = vpop.f32.mrb[0].mxu0
      %2011 = vmatprep.mubr.bf16.mxu0 %v1037
      %2012 = vmatmul.mubr.bf16.gmra.mrb[0].mxu0 %v1036
      %v2013 = vpop.f32.mrb[0].mxu0
      %v2014 = vadd.f32 %v1725, %v2013
      %v2015 = vpop.f32.mrb[0].mxu0
      %v2016 = vpop.f32.mrb[0].mxu0
      %v2017 = vadd.f32 %v1728, %v2016
      %v2018 = vpop.f32.mrb[0].mxu0
      %2019 = vmatprep.mubr.bf16.mxu0 %v1042
      %2020 = vmatmul.mubr.bf16.gmra.mrb[0].mxu0 %v1041
      %v2021 = vpop.f32.mrb[0].mxu0
      %v2022 = vadd.f32 %v1733, %v2021
      %v2023 = vpop.f32.mrb[0].mxu0
      %v2024 = vpop.f32.mrb[0].mxu0
      %v2025 = vadd.f32 %v1736, %v2024
      %v2026 = vpop.f32.mrb[0].mxu0
      %2027 = vmatprep.mubr.bf16.mxu0 %v1047
      %2028 = vmatmul.mubr.bf16.gmra.mrb[0].mxu0 %v1046
      %v2029 = vpop.f32.mrb[0].mxu0
      %v2030 = vadd.f32 %v1741, %v2029
      %v2031 = vpop.f32.mrb[0].mxu0
      %v2032 = vpop.f32.mrb[0].mxu0
      %v2033 = vadd.f32 %v1744, %v2032
      %v2034 = vpop.f32.mrb[0].mxu0
      %2035 = vmatprep.mubr.bf16.mxu0 %v1052
      %2036 = vmatmul.mubr.bf16.gmra.mrb[0].mxu0 %v1051
      %v2037 = vpop.f32.mrb[0].mxu0
      %v2038 = vadd.f32 %v1749, %v2037
      %v2039 = vpop.f32.mrb[0].mxu0
      %v2040 = vpop.f32.mrb[0].mxu0
      %v2041 = vadd.f32 %v1752, %v2040
      %v2042 = vpop.f32.mrb[0].mxu0
      %2043 = vmatprep.mubr.bf16.mxu0 %v1057
      %2044 = vmatmul.mubr.bf16.gmra.mrb[0].mxu0 %v1056
      %v2045 = vpop.f32.mrb[0].mxu0
      %v2046 = vadd.f32 %v1757, %v2045
      %v2047 = vpop.f32.mrb[0].mxu0
      %v2048 = vpop.f32.mrb[0].mxu0
      %v2049 = vadd.f32 %v1760, %v2048
      %v2050 = vpop.f32.mrb[0].mxu0
      %2051 = vmatprep.mubr.bf16.mxu0 %v1062
      %2052 = vmatmul.mubr.bf16.gmra.mrb[0].mxu0 %v1061
      %v2053 = vpop.f32.mrb[0].mxu0
      %v2054 = vadd.f32 %v1765, %v2053
      %v2055 = vpop.f32.mrb[0].mxu0
      %v2056 = vpop.f32.mrb[0].mxu0
      %v2057 = vadd.f32 %v1768, %v2056
      %v2058 = vpop.f32.mrb[0].mxu0
      %2059 = vmatprep.mubr.bf16.mxu0 %v1067
      %2060 = vmatmul.mubr.bf16.gmra.mrb[0].mxu0 %v1066
      %v2061 = vpop.f32.mrb[0].mxu0
      %v2062 = vadd.f32 %v1773, %v2061
      %v2063 = vpop.f32.mrb[0].mxu0
      %v2064 = vpop.f32.mrb[0].mxu0
      %v2065 = vadd.f32 %v1776, %v2064
      %v2066 = vpop.f32.mrb[0].mxu0
      %2067 = vmatprep.mubr.bf16.mxu0 %v1072
      %2068 = vmatmul.mubr.bf16.gmra.mrb[0].mxu0 %v1071
      %v2069 = vpop.f32.mrb[0].mxu0
      %v2070 = vadd.f32 %v1781, %v2069
      %v2071 = vpop.f32.mrb[0].mxu0
      %v2072 = vpop.f32.mrb[0].mxu0
      %v2073 = vadd.f32 %v1784, %v2072
      %v2074 = vpop.f32.mrb[0].mxu0
      %2075 = vmatprep.mubr.bf16.mxu0 %v1077
      %2076 = vmatmul.mubr.bf16.gmra.mrb[0].mxu0 %v1076
      %v2077 = vpop.f32.mrb[0].mxu0
      %v2078 = vadd.f32 %v1789, %v2077
      %v2079 = vpop.f32.mrb[0].mxu0
      %v2080 = vpop.f32.mrb[0].mxu0
      %v2081 = vadd.f32 %v1792, %v2080
      %v2082 = vpop.f32.mrb[0].mxu0
      %2083 = vmatprep.mubr.bf16.mxu0 %v1082
      %2084 = vmatmul.mubr.bf16.gmra.mrb[0].mxu0 %v1081
      %v2085 = vpop.f32.mrb[0].mxu0
      %v2086 = vadd.f32 %v1797, %v2085
      %v2087 = vpop.f32.mrb[0].mxu0
      %v2088 = vpop.f32.mrb[0].mxu0
      %v2089 = vadd.f32 %v1800, %v2088
      %v2090 = vpop.f32.mrb[0].mxu0
      %2091 = vmatprep.mubr.bf16.mxu0 %v1087
      %2092 = vmatmul.mubr.bf16.gmra.mrb[0].mxu0 %v1086
      %v2093 = vpop.f32.mrb[0].mxu0
      %v2094 = vadd.f32 %v1805, %v2093
      %v2095 = vpop.f32.mrb[0].mxu0
      %v2096 = vpop.f32.mrb[0].mxu0
      %v2097 = vadd.f32 %v1808, %v2096
      %v2098 = vpop.f32.mrb[0].mxu0
      %2099 = vmatprep.mubr.bf16.mxu0 %v1092
      %2100 = vmatmul.mubr.bf16.gmra.mrb[0].mxu0 %v1091
      %v2101 = vpop.f32.mrb[0].mxu0
      %v2102 = vadd.f32 %v1813, %v2101
      %v2103 = vpop.f32.mrb[0].mxu0
      %v2104 = vpop.f32.mrb[0].mxu0
      %v2105 = vadd.f32 %v1816, %v2104
      %v2106 = vpop.f32.mrb[0].mxu0
      %2107 = vmatprep.mubr.bf16.mxu0 %v1097
      %2108 = vmatmul.mubr.bf16.gmra.mrb[0].mxu0 %v1096
      %v2109 = vpop.f32.mrb[0].mxu0
      %v2110 = vadd.f32 %v1821, %v2109
      %v2111 = vpop.f32.mrb[0].mxu0
      %v2112 = vpop.f32.mrb[0].mxu0
      %v2113 = vadd.f32 %v1824, %v2112
      %v2114 = vpop.f32.mrb[0].mxu0
      %2115 = vmatprep.mubr.bf16.mxu0 %v1102
      %2116 = vmatmul.mubr.bf16.gmra.mrb[0].mxu0 %v1101
      %v2117 = vpop.f32.mrb[0].mxu0
      %v2118 = vadd.f32 %v1829, %v2117
      %v2119 = vpop.f32.mrb[0].mxu0
      %v2120 = vpop.f32.mrb[0].mxu0
      %v2121 = vadd.f32 %v1832, %v2120
      %v2122 = vpop.f32.mrb[0].mxu0
      %2123 = vmatprep.mubr.bf16.mxu0 %v1107
      %2124 = vmatmul.mubr.bf16.gmra.mrb[0].mxu0 %v1106
      %v2125 = vpop.f32.mrb[0].mxu0
      %v2126 = vadd.f32 %v1837, %v2125
      %v2127 = vpop.f32.mrb[0].mxu0
      %v2128 = vpop.f32.mrb[0].mxu0
      %v2129 = vadd.f32 %v1840, %v2128
      %v2130 = vpop.f32.mrb[0].mxu0
      %2131 = vmatprep.mubr.bf16.mxu0 %v1112
      %2132 = vmatmul.mubr.bf16.gmra.mrb[0].mxu0 %v1111
      %v2133 = vpop.f32.mrb[0].mxu0
      %v2134 = vadd.f32 %v1845, %v2133
      %v2135 = vpop.f32.mrb[0].mxu0
      %v2136 = vpop.f32.mrb[0].mxu0
      %v2137 = vadd.f32 %v1848, %v2136
      %v2138 = vpop.f32.mrb[0].mxu0
      %2139 = vmatprep.mubr.bf16.mxu0 %v1117
      %2140 = vmatmul.mubr.bf16.gmra.mrb[0].mxu0 %v1116
      %v2141 = vpop.f32.mrb[0].mxu0
      %v2142 = vadd.f32 %v1853, %v2141
      %v2143 = vpop.f32.mrb[0].mxu0
      %v2144 = vpop.f32.mrb[0].mxu0
      %v2145 = vadd.f32 %v1856, %v2144
      %v2146 = vpop.f32.mrb[0].mxu0
      %2147 = vmatprep.mubr.bf16.mxu0 %v1122
      %2148 = vmatmul.mubr.bf16.gmra.mrb[0].mxu0 %v1121
      %v2149 = vpop.f32.mrb[0].mxu0
      %v2150 = vadd.f32 %v1861, %v2149
      %v2151 = vpop.f32.mrb[0].mxu0
      %v2152 = vpop.f32.mrb[0].mxu0
      %v2153 = vadd.f32 %v1864, %v2152
      %v2154 = vpop.f32.mrb[0].mxu0
      %2155 = vdwg.mxu0
      %2156 = vmatprep.subr.bf16.mxu0 0
      %2157 = vmatpush1.bf16.msra.mxu0 %v1434
      %2158 = vmatprep.subr.bf16.mxu0 0
      %2159 = vmatpush1.bf16.msra.mxu0 %v1435
      %2160 = vmatprep.subr.bf16.mxu0 0
      %2161 = vmatpush1.bf16.msra.mxu0 %v1436
      %2162 = vmatprep.subr.bf16.mxu0 0
      %2163 = vmatpush1.bf16.msra.mxu0 %v1437
      %2164 = vmatprep.subr.bf16.mxu0 0
      %2165 = vmatpush1.bf16.msra.mxu0 %v1438
      %2166 = vmatprep.subr.bf16.mxu0 0
      %2167 = vmatpush1.bf16.msra.mxu0 %v1576
      %2168 = vmatprep.subr.bf16.mxu0 0
      %2169 = vmatpush1.bf16.msra.mxu0 0
      %2170 = vmatprep.subr.bf16.mxu0 0
      %2171 = vmatpush1.bf16.msra.mxu0 0
      %2172 = vmatprep.subr.bf16.mxu0 0
      %2173 = vmatpush1.bf16.msra.mxu0 0
      %2174 = vmatprep.subr.bf16.mxu0 0
      %2175 = vmatpush1.bf16.msra.mxu0 0
      %2176 = vmatprep.subr.bf16.mxu0 0
      %2177 = vmatpush1.bf16.msra.mxu0 0
      %2178 = vmatprep.subr.bf16.mxu0 0
      %2179 = vmatpush1.bf16.msra.mxu0 0
      %2180 = vmatprep.subr.bf16.mxu0 0
      %2181 = vmatpush1.bf16.msra.mxu0 0
      %2182 = vmatprep.subr.bf16.mxu0 0
      %2183 = vmatpush1.bf16.msra.mxu0 0
      %2184 = vmatprep.subr.bf16.mxu0 0
      %2185 = vmatpush1.bf16.msra.mxu0 0
      %2186 = vmatprep.subr.bf16.mxu0 0
      %2187 = vmatpush1.bf16.msra.mxu0 0
      %2188 = vmatprep.mubr.bf16.mxu0 0
      %2189 = vmatmul.mubr.bf16.gmra.mrb[0].mxu0 %v1479
      %v2190 = vpop.f32.mrb[0].mxu0
      %v2191 = vadd.f32 %v1902, %v2190
      %v2192 = vpop.f32.mrb[0].mxu0
      %v2193 = vpop.f32.mrb[0].mxu0
      %v2194 = vadd.f32 %v1905, %v2193
      %v2195 = vpop.f32.mrb[0].mxu0
      %2196 = vmatprep.mubr.bf16.mxu0 0
      %2197 = vmatmul.mubr.bf16.gmra.mrb[0].mxu0 %v1482
      %v2198 = vpop.f32.mrb[0].mxu0
      %v2199 = vadd.f32 %v1910, %v2198
      %v2200 = vpop.f32.mrb[0].mxu0
      %v2201 = vpop.f32.mrb[0].mxu0
      %v2202 = vadd.f32 %v1913, %v2201
      %v2203 = vpop.f32.mrb[0].mxu0
      %2204 = vmatprep.mubr.bf16.mxu0 0
      %2205 = vmatmul.mubr.bf16.gmra.mrb[0].mxu0 %v1485
      %v2206 = vpop.f32.mrb[0].mxu0
      %v2207 = vadd.f32 %v1918, %v2206
      %v2208 = vpop.f32.mrb[0].mxu0
      %v2209 = vpop.f32.mrb[0].mxu0
      %v2210 = vadd.f32 %v1921, %v2209
      %v2211 = vpop.f32.mrb[0].mxu0
      %2212 = vmatprep.mubr.bf16.mxu0 0
      %2213 = vmatmul.mubr.bf16.gmra.mrb[0].mxu0 %v1488
      %v2214 = vpop.f32.mrb[0].mxu0
      %v2215 = vadd.f32 %v1926, %v2214
      %v2216 = vpop.f32.mrb[0].mxu0
      %v2217 = vpop.f32.mrb[0].mxu0
      %v2218 = vadd.f32 %v1929, %v2217
      %v2219 = vpop.f32.mrb[0].mxu0
      %2220 = vmatprep.mubr.bf16.mxu0 0
      %2221 = vmatmul.mubr.bf16.gmra.mrb[0].mxu0 %v1491
      %v2222 = vpop.f32.mrb[0].mxu0
      %v2223 = vadd.f32 %v1934, %v2222
      %v2224 = vpop.f32.mrb[0].mxu0
      %v2225 = vpop.f32.mrb[0].mxu0
      %v2226 = vadd.f32 %v1937, %v2225
      %v2227 = vpop.f32.mrb[0].mxu0
      %2228 = vmatprep.mubr.bf16.mxu0 0
      %2229 = vmatmul.mubr.bf16.gmra.mrb[0].mxu0 %v1494
      %v2230 = vpop.f32.mrb[0].mxu0
      %v2231 = vadd.f32 %v1942, %v2230
      %v2232 = vpop.f32.mrb[0].mxu0
      %v2233 = vpop.f32.mrb[0].mxu0
      %v2234 = vadd.f32 %v1945, %v2233
      %v2235 = vpop.f32.mrb[0].mxu0
      %2236 = vmatprep.mubr.bf16.mxu0 0
      %2237 = vmatmul.mubr.bf16.gmra.mrb[0].mxu0 %v1497
      %v2238 = vpop.f32.mrb[0].mxu0
      %v2239 = vadd.f32 %v1950, %v2238
      %v2240 = vpop.f32.mrb[0].mxu0
      %v2241 = vpop.f32.mrb[0].mxu0
      %v2242 = vadd.f32 %v1953, %v2241
      %v2243 = vpop.f32.mrb[0].mxu0
      %2244 = vmatprep.mubr.bf16.mxu0 0
      %2245 = vmatmul.mubr.bf16.gmra.mrb[0].mxu0 %v1500
      %v2246 = vpop.f32.mrb[0].mxu0
      %v2247 = vadd.f32 %v1958, %v2246
      %v2248 = vpop.f32.mrb[0].mxu0
      %v2249 = vpop.f32.mrb[0].mxu0
      %v2250 = vadd.f32 %v1961, %v2249
      %v2251 = vpop.f32.mrb[0].mxu0
      %2252 = vmatprep.mubr.bf16.mxu0 0
      %2253 = vmatmul.mubr.bf16.gmra.mrb[0].mxu0 %v1503
      %v2254 = vpop.f32.mrb[0].mxu0
      %v2255 = vadd.f32 %v1966, %v2254
      %v2256 = vpop.f32.mrb[0].mxu0
      %v2257 = vpop.f32.mrb[0].mxu0
      %v2258 = vadd.f32 %v1969, %v2257
      %v2259 = vpop.f32.mrb[0].mxu0
      %2260 = vmatprep.mubr.bf16.mxu0 0
      %2261 = vmatmul.mubr.bf16.gmra.mrb[0].mxu0 %v1506
      %v2262 = vpop.f32.mrb[0].mxu0
      %v2263 = vadd.f32 %v1974, %v2262
      %v2264 = vpop.f32.mrb[0].mxu0
      %v2265 = vpop.f32.mrb[0].mxu0
      %v2266 = vadd.f32 %v1977, %v2265
      %v2267 = vpop.f32.mrb[0].mxu0
      %2268 = vmatprep.mubr.bf16.mxu0 0
      %2269 = vmatmul.mubr.bf16.gmra.mrb[0].mxu0 %v1509
      %v2270 = vpop.f32.mrb[0].mxu0
      %v2271 = vadd.f32 %v1982, %v2270
      %v2272 = vpop.f32.mrb[0].mxu0
      %v2273 = vpop.f32.mrb[0].mxu0
      %v2274 = vadd.f32 %v1985, %v2273
      %v2275 = vpop.f32.mrb[0].mxu0
      %2276 = vmatprep.mubr.bf16.mxu0 0
      %2277 = vmatmul.mubr.bf16.gmra.mrb[0].mxu0 %v1512
      %v2278 = vpop.f32.mrb[0].mxu0
      %v2279 = vadd.f32 %v1990, %v2278
      %v2280 = vpop.f32.mrb[0].mxu0
      %v2281 = vpop.f32.mrb[0].mxu0
      %v2282 = vadd.f32 %v1993, %v2281
      %v2283 = vpop.f32.mrb[0].mxu0
      %2284 = vmatprep.mubr.bf16.mxu0 0
      %2285 = vmatmul.mubr.bf16.gmra.mrb[0].mxu0 %v1515
      %v2286 = vpop.f32.mrb[0].mxu0
      %v2287 = vadd.f32 %v1998, %v2286
      %v2288 = vpop.f32.mrb[0].mxu0
      %v2289 = vpop.f32.mrb[0].mxu0
      %v2290 = vadd.f32 %v2001, %v2289
      %v2291 = vpop.f32.mrb[0].mxu0
      %2292 = vmatprep.mubr.bf16.mxu0 0
      %2293 = vmatmul.mubr.bf16.gmra.mrb[0].mxu0 %v1518
      %v2294 = vpop.f32.mrb[0].mxu0
      %v2295 = vadd.f32 %v2006, %v2294
      %v2296 = vpop.f32.mrb[0].mxu0
      %v2297 = vpop.f32.mrb[0].mxu0
      %v2298 = vadd.f32 %v2009, %v2297
      %v2299 = vpop.f32.mrb[0].mxu0
      %2300 = vmatprep.mubr.bf16.mxu0 0
      %2301 = vmatmul.mubr.bf16.gmra.mrb[0].mxu0 %v1521
      %v2302 = vpop.f32.mrb[0].mxu0
      %v2303 = vadd.f32 %v2014, %v2302
      %v2304 = vpop.f32.mrb[0].mxu0
      %v2305 = vpop.f32.mrb[0].mxu0
      %v2306 = vadd.f32 %v2017, %v2305
      %v2307 = vpop.f32.mrb[0].mxu0
      %2308 = vmatprep.mubr.bf16.mxu0 0
      %2309 = vmatmul.mubr.bf16.gmra.mrb[0].mxu0 %v1524
      %v2310 = vpop.f32.mrb[0].mxu0
      %v2311 = vadd.f32 %v2022, %v2310
      %v2312 = vpop.f32.mrb[0].mxu0
      %v2313 = vpop.f32.mrb[0].mxu0
      %v2314 = vadd.f32 %v2025, %v2313
      %v2315 = vpop.f32.mrb[0].mxu0
      %2316 = vmatprep.mubr.bf16.mxu0 0
      %2317 = vmatmul.mubr.bf16.gmra.mrb[0].mxu0 %v1527
      %v2318 = vpop.f32.mrb[0].mxu0
      %v2319 = vadd.f32 %v2030, %v2318
      %v2320 = vpop.f32.mrb[0].mxu0
      %v2321 = vpop.f32.mrb[0].mxu0
      %v2322 = vadd.f32 %v2033, %v2321
      %v2323 = vpop.f32.mrb[0].mxu0
      %2324 = vmatprep.mubr.bf16.mxu0 0
      %2325 = vmatmul.mubr.bf16.gmra.mrb[0].mxu0 %v1530
      %v2326 = vpop.f32.mrb[0].mxu0
      %v2327 = vadd.f32 %v2038, %v2326
      %v2328 = vpop.f32.mrb[0].mxu0
      %v2329 = vpop.f32.mrb[0].mxu0
      %v2330 = vadd.f32 %v2041, %v2329
      %v2331 = vpop.f32.mrb[0].mxu0
      %2332 = vmatprep.mubr.bf16.mxu0 0
      %2333 = vmatmul.mubr.bf16.gmra.mrb[0].mxu0 %v1533
      %v2334 = vpop.f32.mrb[0].mxu0
      %v2335 = vadd.f32 %v2046, %v2334
      %v2336 = vpop.f32.mrb[0].mxu0
      %v2337 = vpop.f32.mrb[0].mxu0
      %v2338 = vadd.f32 %v2049, %v2337
      %v2339 = vpop.f32.mrb[0].mxu0
      %2340 = vmatprep.mubr.bf16.mxu0 0
      %2341 = vmatmul.mubr.bf16.gmra.mrb[0].mxu0 %v1536
      %v2342 = vpop.f32.mrb[0].mxu0
      %v2343 = vadd.f32 %v2054, %v2342
      %v2344 = vpop.f32.mrb[0].mxu0
      %v2345 = vpop.f32.mrb[0].mxu0
      %v2346 = vadd.f32 %v2057, %v2345
      %v2347 = vpop.f32.mrb[0].mxu0
      %2348 = vmatprep.mubr.bf16.mxu0 0
      %2349 = vmatmul.mubr.bf16.gmra.mrb[0].mxu0 %v1539
      %v2350 = vpop.f32.mrb[0].mxu0
      %v2351 = vadd.f32 %v2062, %v2350
      %v2352 = vpop.f32.mrb[0].mxu0
      %v2353 = vpop.f32.mrb[0].mxu0
      %v2354 = vadd.f32 %v2065, %v2353
      %v2355 = vpop.f32.mrb[0].mxu0
      %2356 = vmatprep.mubr.bf16.mxu0 0
      %2357 = vmatmul.mubr.bf16.gmra.mrb[0].mxu0 %v1542
      %v2358 = vpop.f32.mrb[0].mxu0
      %v2359 = vadd.f32 %v2070, %v2358
      %v2360 = vpop.f32.mrb[0].mxu0
      %v2361 = vpop.f32.mrb[0].mxu0
      %v2362 = vadd.f32 %v2073, %v2361
      %v2363 = vpop.f32.mrb[0].mxu0
      %2364 = vmatprep.mubr.bf16.mxu0 0
      %2365 = vmatmul.mubr.bf16.gmra.mrb[0].mxu0 %v1545
      %v2366 = vpop.f32.mrb[0].mxu0
      %v2367 = vadd.f32 %v2078, %v2366
      %v2368 = vpop.f32.mrb[0].mxu0
      %v2369 = vpop.f32.mrb[0].mxu0
      %v2370 = vadd.f32 %v2081, %v2369
      %v2371 = vpop.f32.mrb[0].mxu0
      %2372 = vmatprep.mubr.bf16.mxu0 0
      %2373 = vmatmul.mubr.bf16.gmra.mrb[0].mxu0 %v1548
      %v2374 = vpop.f32.mrb[0].mxu0
      %v2375 = vadd.f32 %v2086, %v2374
      %v2376 = vpop.f32.mrb[0].mxu0
      %v2377 = vpop.f32.mrb[0].mxu0
      %v2378 = vadd.f32 %v2089, %v2377
      %v2379 = vpop.f32.mrb[0].mxu0
      %2380 = vmatprep.mubr.bf16.mxu0 0
      %2381 = vmatmul.mubr.bf16.gmra.mrb[0].mxu0 %v1551
      %v2382 = vpop.f32.mrb[0].mxu0
      %v2383 = vadd.f32 %v2094, %v2382
      %v2384 = vpop.f32.mrb[0].mxu0
      %v2385 = vpop.f32.mrb[0].mxu0
      %v2386 = vadd.f32 %v2097, %v2385
      %v2387 = vpop.f32.mrb[0].mxu0
      %2388 = vmatprep.mubr.bf16.mxu0 0
      %2389 = vmatmul.mubr.bf16.gmra.mrb[0].mxu0 %v1554
      %v2390 = vpop.f32.mrb[0].mxu0
      %v2391 = vadd.f32 %v2102, %v2390
      %v2392 = vpop.f32.mrb[0].mxu0
      %v2393 = vpop.f32.mrb[0].mxu0
      %v2394 = vadd.f32 %v2105, %v2393
      %v2395 = vpop.f32.mrb[0].mxu0
      %2396 = vmatprep.mubr.bf16.mxu0 0
      %2397 = vmatmul.mubr.bf16.gmra.mrb[0].mxu0 %v1557
      %v2398 = vpop.f32.mrb[0].mxu0
      %v2399 = vadd.f32 %v2110, %v2398
      %v2400 = vpop.f32.mrb[0].mxu0
      %v2401 = vpop.f32.mrb[0].mxu0
      %v2402 = vadd.f32 %v2113, %v2401
      %v2403 = vpop.f32.mrb[0].mxu0
      %2404 = vmatprep.mubr.bf16.mxu0 0
      %2405 = vmatmul.mubr.bf16.gmra.mrb[0].mxu0 %v1560
      %v2406 = vpop.f32.mrb[0].mxu0
      %v2407 = vadd.f32 %v2118, %v2406
      %v2408 = vpop.f32.mrb[0].mxu0
      %v2409 = vpop.f32.mrb[0].mxu0
      %v2410 = vadd.f32 %v2121, %v2409
      %v2411 = vpop.f32.mrb[0].mxu0
      %2412 = vmatprep.mubr.bf16.mxu0 0
      %2413 = vmatmul.mubr.bf16.gmra.mrb[0].mxu0 %v1563
      %v2414 = vpop.f32.mrb[0].mxu0
      %v2415 = vadd.f32 %v2126, %v2414
      %v2416 = vpop.f32.mrb[0].mxu0
      %v2417 = vpop.f32.mrb[0].mxu0
      %v2418 = vadd.f32 %v2129, %v2417
      %v2419 = vpop.f32.mrb[0].mxu0
      %2420 = vmatprep.mubr.bf16.mxu0 0
      %2421 = vmatmul.mubr.bf16.gmra.mrb[0].mxu0 %v1566
      %v2422 = vpop.f32.mrb[0].mxu0
      %v2423 = vadd.f32 %v2134, %v2422
      %v2424 = vpop.f32.mrb[0].mxu0
      %v2425 = vpop.f32.mrb[0].mxu0
      %v2426 = vadd.f32 %v2137, %v2425
      %v2427 = vpop.f32.mrb[0].mxu0
      %2428 = vmatprep.mubr.bf16.mxu0 0
      %2429 = vmatmul.mubr.bf16.gmra.mrb[0].mxu0 %v1569
      %v2430 = vpop.f32.mrb[0].mxu0
      %v2431 = vadd.f32 %v2142, %v2430
      %v2432 = vpop.f32.mrb[0].mxu0
      %v2433 = vpop.f32.mrb[0].mxu0
      %v2434 = vadd.f32 %v2145, %v2433
      %v2435 = vpop.f32.mrb[0].mxu0
      %2436 = vmatprep.mubr.bf16.mxu0 0
      %2437 = vmatmul.mubr.bf16.gmra.mrb[0].mxu0 %v1572
      %v2438 = vpop.f32.mrb[0].mxu0
      %v2439 = vadd.f32 %v2150, %v2438
      %v2440 = vpop.f32.mrb[0].mxu0
      %v2441 = vpop.f32.mrb[0].mxu0
      %v2442 = vadd.f32 %v2153, %v2441
      %v2443 = vpop.f32.mrb[0].mxu0
      %2444 = vdwg.mxu0
      %vm2445 = vcmp.ge.f32.partialorder %v2191, 0.0
      %vm2446 = vcmp.ge.f32.partialorder %v2194, 0.0
      %vm2447 = vcmp.ge.f32.partialorder %v2199, 0.0
      %vm2448 = vcmp.ge.f32.partialorder %v2202, 0.0
      %vm2449 = vcmp.ge.f32.partialorder %v2207, 0.0
      %vm2450 = vcmp.ge.f32.partialorder %v2210, 0.0
      %vm2451 = vcmp.ge.f32.partialorder %v2215, 0.0
      %vm2452 = vcmp.ge.f32.partialorder %v2218, 0.0
      %vm2453 = vcmp.ge.f32.partialorder %v2223, 0.0
      %vm2454 = vcmp.ge.f32.partialorder %v2226, 0.0
      %vm2455 = vcmp.ge.f32.partialorder %v2231, 0.0
      %vm2456 = vcmp.ge.f32.partialorder %v2234, 0.0
      %vm2457 = vcmp.ge.f32.partialorder %v2239, 0.0
      %vm2458 = vcmp.ge.f32.partialorder %v2242, 0.0
      %vm2459 = vcmp.ge.f32.partialorder %v2247, 0.0
      %vm2460 = vcmp.ge.f32.partialorder %v2250, 0.0
      %vm2461 = vcmp.ge.f32.partialorder %v2255, 0.0
      %vm2462 = vcmp.ge.f32.partialorder %v2258, 0.0
      %vm2463 = vcmp.ge.f32.partialorder %v2263, 0.0
      %vm2464 = vcmp.ge.f32.partialorder %v2266, 0.0
      %vm2465 = vcmp.ge.f32.partialorder %v2271, 0.0
      %vm2466 = vcmp.ge.f32.partialorder %v2274, 0.0
      %vm2467 = vcmp.ge.f32.partialorder %v2279, 0.0
      %vm2468 = vcmp.ge.f32.partialorder %v2282, 0.0
      %vm2469 = vcmp.ge.f32.partialorder %v2287, 0.0
      %vm2470 = vcmp.ge.f32.partialorder %v2290, 0.0
      %vm2471 = vcmp.ge.f32.partialorder %v2295, 0.0
      %vm2472 = vcmp.ge.f32.partialorder %v2298, 0.0
      %vm2473 = vcmp.ge.f32.partialorder %v2303, 0.0
      %vm2474 = vcmp.ge.f32.partialorder %v2306, 0.0
      %vm2475 = vcmp.ge.f32.partialorder %v2311, 0.0
      %vm2476 = vcmp.ge.f32.partialorder %v2314, 0.0
      %vm2477 = vcmp.ge.f32.partialorder %v2319, 0.0
      %vm2478 = vcmp.ge.f32.partialorder %v2322, 0.0
      %vm2479 = vcmp.ge.f32.partialorder %v2327, 0.0
      %vm2480 = vcmp.ge.f32.partialorder %v2330, 0.0
      %vm2481 = vcmp.ge.f32.partialorder %v2335, 0.0
      %vm2482 = vcmp.ge.f32.partialorder %v2338, 0.0
      %vm2483 = vcmp.ge.f32.partialorder %v2343, 0.0
      %vm2484 = vcmp.ge.f32.partialorder %v2346, 0.0
      %vm2485 = vcmp.ge.f32.partialorder %v2351, 0.0
      %vm2486 = vcmp.ge.f32.partialorder %v2354, 0.0
      %vm2487 = vcmp.ge.f32.partialorder %v2359, 0.0
      %vm2488 = vcmp.ge.f32.partialorder %v2362, 0.0
      %vm2489 = vcmp.ge.f32.partialorder %v2367, 0.0
      %vm2490 = vcmp.ge.f32.partialorder %v2370, 0.0
      %vm2491 = vcmp.ge.f32.partialorder %v2375, 0.0
      %vm2492 = vcmp.ge.f32.partialorder %v2378, 0.0
      %vm2493 = vcmp.ge.f32.partialorder %v2383, 0.0
      %vm2494 = vcmp.ge.f32.partialorder %v2386, 0.0
      %vm2495 = vcmp.ge.f32.partialorder %v2391, 0.0
      %vm2496 = vcmp.ge.f32.partialorder %v2394, 0.0
      %vm2497 = vcmp.ge.f32.partialorder %v2399, 0.0
      %vm2498 = vcmp.ge.f32.partialorder %v2402, 0.0
      %vm2499 = vcmp.ge.f32.partialorder %v2407, 0.0
      %vm2500 = vcmp.ge.f32.partialorder %v2410, 0.0
      %vm2501 = vcmp.ge.f32.partialorder %v2415, 0.0
      %vm2502 = vcmp.ge.f32.partialorder %v2418, 0.0
      %vm2503 = vcmp.ge.f32.partialorder %v2423, 0.0
      %vm2504 = vcmp.ge.f32.partialorder %v2426, 0.0
      %vm2505 = vcmp.ge.f32.partialorder %v2431, 0.0
      %vm2506 = vcmp.ge.f32.partialorder %v2434, 0.0
      %vm2507 = vcmp.ge.f32.partialorder %v2439, 0.0
      %vm2508 = vcmp.ge.f32.partialorder %v2442, 0.0
      %v2509 = vmul.f32 %v2191, 0.2
      %v2510 = vmul.f32 %v2194, 0.2
      %v2511 = vmul.f32 %v2199, 0.2
      %v2512 = vmul.f32 %v2202, 0.2
      %v2513 = vmul.f32 %v2207, 0.2
      %v2514 = vmul.f32 %v2210, 0.2
      %v2515 = vmul.f32 %v2215, 0.2
      %v2516 = vmul.f32 %v2218, 0.2
      %v2517 = vmul.f32 %v2223, 0.2
      %v2518 = vmul.f32 %v2226, 0.2
      %v2519 = vmul.f32 %v2231, 0.2
      %v2520 = vmul.f32 %v2234, 0.2
      %v2521 = vmul.f32 %v2239, 0.2
      %v2522 = vmul.f32 %v2242, 0.2
      %v2523 = vmul.f32 %v2247, 0.2
      %v2524 = vmul.f32 %v2250, 0.2
      %v2525 = vmul.f32 %v2255, 0.2
      %v2526 = vmul.f32 %v2258, 0.2
      %v2527 = vmul.f32 %v2263, 0.2
      %v2528 = vmul.f32 %v2266, 0.2
      %v2529 = vmul.f32 %v2271, 0.2
      %v2530 = vmul.f32 %v2274, 0.2
      %v2531 = vmul.f32 %v2279, 0.2
      %v2532 = vmul.f32 %v2282, 0.2
      %v2533 = vmul.f32 %v2287, 0.2
      %v2534 = vmul.f32 %v2290, 0.2
      %v2535 = vmul.f32 %v2295, 0.2
      %v2536 = vmul.f32 %v2298, 0.2
      %v2537 = vmul.f32 %v2303, 0.2
      %v2538 = vmul.f32 %v2306, 0.2
      %v2539 = vmul.f32 %v2311, 0.2
      %v2540 = vmul.f32 %v2314, 0.2
      %v2541 = vmul.f32 %v2319, 0.2
      %v2542 = vmul.f32 %v2322, 0.2
      %v2543 = vmul.f32 %v2327, 0.2
      %v2544 = vmul.f32 %v2330, 0.2
      %v2545 = vmul.f32 %v2335, 0.2
      %v2546 = vmul.f32 %v2338, 0.2
      %v2547 = vmul.f32 %v2343, 0.2
      %v2548 = vmul.f32 %v2346, 0.2
      %v2549 = vmul.f32 %v2351, 0.2
      %v2550 = vmul.f32 %v2354, 0.2
      %v2551 = vmul.f32 %v2359, 0.2
      %v2552 = vmul.f32 %v2362, 0.2
      %v2553 = vmul.f32 %v2367, 0.2
      %v2554 = vmul.f32 %v2370, 0.2
      %v2555 = vmul.f32 %v2375, 0.2
      %v2556 = vmul.f32 %v2378, 0.2
      %v2557 = vmul.f32 %v2383, 0.2
      %v2558 = vmul.f32 %v2386, 0.2
      %v2559 = vmul.f32 %v2391, 0.2
      %v2560 = vmul.f32 %v2394, 0.2
      %v2561 = vmul.f32 %v2399, 0.2
      %v2562 = vmul.f32 %v2402, 0.2
      %v2563 = vmul.f32 %v2407, 0.2
      %v2564 = vmul.f32 %v2410, 0.2
      %v2565 = vmul.f32 %v2415, 0.2
      %v2566 = vmul.f32 %v2418, 0.2
      %v2567 = vmul.f32 %v2423, 0.2
      %v2568 = vmul.f32 %v2426, 0.2
      %v2569 = vmul.f32 %v2431, 0.2
      %v2570 = vmul.f32 %v2434, 0.2
      %v2571 = vmul.f32 %v2439, 0.2
      %v2572 = vmul.f32 %v2442, 0.2
      %v2573 = vsel %vm2445, %v2191, %v2509
      %v2574 = vsel %vm2446, %v2194, %v2510
      %v2575 = vsel %vm2447, %v2199, %v2511
      %v2576 = vsel %vm2448, %v2202, %v2512
      %v2577 = vsel %vm2449, %v2207, %v2513
      %v2578 = vsel %vm2450, %v2210, %v2514
      %v2579 = vsel %vm2451, %v2215, %v2515
      %v2580 = vsel %vm2452, %v2218, %v2516
      %v2581 = vsel %vm2453, %v2223, %v2517
      %v2582 = vsel %vm2454, %v2226, %v2518
      %v2583 = vsel %vm2455, %v2231, %v2519
      %v2584 = vsel %vm2456, %v2234, %v2520
      %v2585 = vsel %vm2457, %v2239, %v2521
      %v2586 = vsel %vm2458, %v2242, %v2522
      %v2587 = vsel %vm2459, %v2247, %v2523
      %v2588 = vsel %vm2460, %v2250, %v2524
      %v2589 = vsel %vm2461, %v2255, %v2525
      %v2590 = vsel %vm2462, %v2258, %v2526
      %v2591 = vsel %vm2463, %v2263, %v2527
      %v2592 = vsel %vm2464, %v2266, %v2528
      %v2593 = vsel %vm2465, %v2271, %v2529
      %v2594 = vsel %vm2466, %v2274, %v2530
      %v2595 = vsel %vm2467, %v2279, %v2531
      %v2596 = vsel %vm2468, %v2282, %v2532
      %v2597 = vsel %vm2469, %v2287, %v2533
      %v2598 = vsel %vm2470, %v2290, %v2534
      %v2599 = vsel %vm2471, %v2295, %v2535
      %v2600 = vsel %vm2472, %v2298, %v2536
      %v2601 = vsel %vm2473, %v2303, %v2537
      %v2602 = vsel %vm2474, %v2306, %v2538
      %v2603 = vsel %vm2475, %v2311, %v2539
      %v2604 = vsel %vm2476, %v2314, %v2540
      %v2605 = vsel %vm2477, %v2319, %v2541
      %v2606 = vsel %vm2478, %v2322, %v2542
      %v2607 = vsel %vm2479, %v2327, %v2543
      %v2608 = vsel %vm2480, %v2330, %v2544
      %v2609 = vsel %vm2481, %v2335, %v2545
      %v2610 = vsel %vm2482, %v2338, %v2546
      %v2611 = vsel %vm2483, %v2343, %v2547
      %v2612 = vsel %vm2484, %v2346, %v2548
      %v2613 = vsel %vm2485, %v2351, %v2549
      %v2614 = vsel %vm2486, %v2354, %v2550
      %v2615 = vsel %vm2487, %v2359, %v2551
      %v2616 = vsel %vm2488, %v2362, %v2552
      %v2617 = vsel %vm2489, %v2367, %v2553
      %v2618 = vsel %vm2490, %v2370, %v2554
      %v2619 = vsel %vm2491, %v2375, %v2555
      %v2620 = vsel %vm2492, %v2378, %v2556
      %v2621 = vsel %vm2493, %v2383, %v2557
      %v2622 = vsel %vm2494, %v2386, %v2558
      %v2623 = vsel %vm2495, %v2391, %v2559
      %v2624 = vsel %vm2496, %v2394, %v2560
      %v2625 = vsel %vm2497, %v2399, %v2561
      %v2626 = vsel %vm2498, %v2402, %v2562
      %v2627 = vsel %vm2499, %v2407, %v2563
      %v2628 = vsel %vm2500, %v2410, %v2564
      %v2629 = vsel %vm2501, %v2415, %v2565
      %v2630 = vsel %vm2502, %v2418, %v2566
      %v2631 = vsel %vm2503, %v2423, %v2567
      %v2632 = vsel %vm2504, %v2426, %v2568
      %v2633 = vsel %vm2505, %v2431, %v2569
      %v2634 = vsel %vm2506, %v2434, %v2570
      %v2635 = vsel %vm2507, %v2439, %v2571
      %v2636 = vsel %vm2508, %v2442, %v2572
      %v2637 = vsub.f32 0.0, %v2191
      %v2638 = vsub.f32 0.0, %v2194
      %v2639 = vsub.f32 0.0, %v2199
      %v2640 = vsub.f32 0.0, %v2202
      %v2641 = vsub.f32 0.0, %v2207
      %v2642 = vsub.f32 0.0, %v2210
      %v2643 = vsub.f32 0.0, %v2215
      %v2644 = vsub.f32 0.0, %v2218
      %v2645 = vsub.f32 0.0, %v2223
      %v2646 = vsub.f32 0.0, %v2226
      %v2647 = vsub.f32 0.0, %v2231
      %v2648 = vsub.f32 0.0, %v2234
      %v2649 = vsub.f32 0.0, %v2239
      %v2650 = vsub.f32 0.0, %v2242
      %v2651 = vsub.f32 0.0, %v2247
      %v2652 = vsub.f32 0.0, %v2250
      %v2653 = vsub.f32 0.0, %v2255
      %v2654 = vsub.f32 0.0, %v2258
      %v2655 = vsub.f32 0.0, %v2263
      %v2656 = vsub.f32 0.0, %v2266
      %v2657 = vsub.f32 0.0, %v2271
      %v2658 = vsub.f32 0.0, %v2274
      %v2659 = vsub.f32 0.0, %v2279
      %v2660 = vsub.f32 0.0, %v2282
      %v2661 = vsub.f32 0.0, %v2287
      %v2662 = vsub.f32 0.0, %v2290
      %v2663 = vsub.f32 0.0, %v2295
      %v2664 = vsub.f32 0.0, %v2298
      %v2665 = vsub.f32 0.0, %v2303
      %v2666 = vsub.f32 0.0, %v2306
      %v2667 = vsub.f32 0.0, %v2311
      %v2668 = vsub.f32 0.0, %v2314
      %v2669 = vsub.f32 0.0, %v2319
      %v2670 = vsub.f32 0.0, %v2322
      %v2671 = vsub.f32 0.0, %v2327
      %v2672 = vsub.f32 0.0, %v2330
      %v2673 = vsub.f32 0.0, %v2335
      %v2674 = vsub.f32 0.0, %v2338
      %v2675 = vsub.f32 0.0, %v2343
      %v2676 = vsub.f32 0.0, %v2346
      %v2677 = vsub.f32 0.0, %v2351
      %v2678 = vsub.f32 0.0, %v2354
      %v2679 = vsub.f32 0.0, %v2359
      %v2680 = vsub.f32 0.0, %v2362
      %v2681 = vsub.f32 0.0, %v2367
      %v2682 = vsub.f32 0.0, %v2370
      %v2683 = vsub.f32 0.0, %v2375
      %v2684 = vsub.f32 0.0, %v2378
      %v2685 = vsub.f32 0.0, %v2383
      %v2686 = vsub.f32 0.0, %v2386
      %v2687 = vsub.f32 0.0, %v2391
      %v2688 = vsub.f32 0.0, %v2394
      %v2689 = vsub.f32 0.0, %v2399
      %v2690 = vsub.f32 0.0, %v2402
      %v2691 = vsub.f32 0.0, %v2407
      %v2692 = vsub.f32 0.0, %v2410
      %v2693 = vsub.f32 0.0, %v2415
      %v2694 = vsub.f32 0.0, %v2418
      %v2695 = vsub.f32 0.0, %v2423
      %v2696 = vsub.f32 0.0, %v2426
      %v2697 = vsub.f32 0.0, %v2431
      %v2698 = vsub.f32 0.0, %v2434
      %v2699 = vsub.f32 0.0, %v2439
      %v2700 = vsub.f32 0.0, %v2442
      %v2701 = vmul.f32 %v2637, 1.442695
      %v2702 = vpow.pop %v2701
      %v2703 = vmul.f32 %v2638, 1.442695
      %v2704 = vpow.pop %v2703
      %v2705 = vmul.f32 %v2639, 1.442695
      %v2706 = vpow.pop %v2705
      %v2707 = vmul.f32 %v2640, 1.442695
      %v2708 = vpow.pop %v2707
      %v2709 = vmul.f32 %v2641, 1.442695
      %v2710 = vpow.pop %v2709
      %v2711 = vmul.f32 %v2642, 1.442695
      %v2712 = vpow.pop %v2711
      %v2713 = vmul.f32 %v2643, 1.442695
      %v2714 = vpow.pop %v2713
      %v2715 = vmul.f32 %v2644, 1.442695
      %v2716 = vpow.pop %v2715
      %v2717 = vmul.f32 %v2645, 1.442695
      %v2718 = vpow.pop %v2717
      %v2719 = vmul.f32 %v2646, 1.442695
      %v2720 = vpow.pop %v2719
      %v2721 = vmul.f32 %v2647, 1.442695
      %v2722 = vpow.pop %v2721
      %v2723 = vmul.f32 %v2648, 1.442695
      %v2724 = vpow.pop %v2723
      %v2725 = vmul.f32 %v2649, 1.442695
      %v2726 = vpow.pop %v2725
      %v2727 = vmul.f32 %v2650, 1.442695
      %v2728 = vpow.pop %v2727
      %v2729 = vmul.f32 %v2651, 1.442695
      %v2730 = vpow.pop %v2729
      %v2731 = vmul.f32 %v2652, 1.442695
      %v2732 = vpow.pop %v2731
      %v2733 = vmul.f32 %v2653, 1.442695
      %v2734 = vpow.pop %v2733
      %v2735 = vmul.f32 %v2654, 1.442695
      %v2736 = vpow.pop %v2735
      %v2737 = vmul.f32 %v2655, 1.442695
      %v2738 = vpow.pop %v2737
      %v2739 = vmul.f32 %v2656, 1.442695
      %v2740 = vpow.pop %v2739
      %v2741 = vmul.f32 %v2657, 1.442695
      %v2742 = vpow.pop %v2741
      %v2743 = vmul.f32 %v2658, 1.442695
      %v2744 = vpow.pop %v2743
      %v2745 = vmul.f32 %v2659, 1.442695
      %v2746 = vpow.pop %v2745
      %v2747 = vmul.f32 %v2660, 1.442695
      %v2748 = vpow.pop %v2747
      %v2749 = vmul.f32 %v2661, 1.442695
      %v2750 = vpow.pop %v2749
      %v2751 = vmul.f32 %v2662, 1.442695
      %v2752 = vpow.pop %v2751
      %v2753 = vmul.f32 %v2663, 1.442695
      %v2754 = vpow.pop %v2753
      %v2755 = vmul.f32 %v2664, 1.442695
      %v2756 = vpow.pop %v2755
      %v2757 = vmul.f32 %v2665, 1.442695
      %v2758 = vpow.pop %v2757
      %v2759 = vmul.f32 %v2666, 1.442695
      %v2760 = vpow.pop %v2759
      %v2761 = vmul.f32 %v2667, 1.442695
      %v2762 = vpow.pop %v2761
      %v2763 = vmul.f32 %v2668, 1.442695
      %v2764 = vpow.pop %v2763
      %v2765 = vmul.f32 %v2669, 1.442695
      %v2766 = vpow.pop %v2765
      %v2767 = vmul.f32 %v2670, 1.442695
      %v2768 = vpow.pop %v2767
      %v2769 = vmul.f32 %v2671, 1.442695
      %v2770 = vpow.pop %v2769
      %v2771 = vmul.f32 %v2672, 1.442695
      %v2772 = vpow.pop %v2771
      %v2773 = vmul.f32 %v2673, 1.442695
      %v2774 = vpow.pop %v2773
      %v2775 = vmul.f32 %v2674, 1.442695
      %v2776 = vpow.pop %v2775
      %v2777 = vmul.f32 %v2675, 1.442695
      %v2778 = vpow.pop %v2777
      %v2779 = vmul.f32 %v2676, 1.442695
      %v2780 = vpow.pop %v2779
      %v2781 = vmul.f32 %v2677, 1.442695
      %v2782 = vpow.pop %v2781
      %v2783 = vmul.f32 %v2678, 1.442695
      %v2784 = vpow.pop %v2783
      %v2785 = vmul.f32 %v2679, 1.442695
      %v2786 = vpow.pop %v2785
      %v2787 = vmul.f32 %v2680, 1.442695
      %v2788 = vpow.pop %v2787
      %v2789 = vmul.f32 %v2681, 1.442695
      %v2790 = vpow.pop %v2789
      %v2791 = vmul.f32 %v2682, 1.442695
      %v2792 = vpow.pop %v2791
      %v2793 = vmul.f32 %v2683, 1.442695
      %v2794 = vpow.pop %v2793
      %v2795 = vmul.f32 %v2684, 1.442695
      %v2796 = vpow.pop %v2795
      %v2797 = vmul.f32 %v2685, 1.442695
      %v2798 = vpow.pop %v2797
      %v2799 = vmul.f32 %v2686, 1.442695
      %v2800 = vpow.pop %v2799
      %v2801 = vmul.f32 %v2687, 1.442695
      %v2802 = vpow.pop %v2801
      %v2803 = vmul.f32 %v2688, 1.442695
      %v2804 = vpow.pop %v2803
      %v2805 = vmul.f32 %v2689, 1.442695
      %v2806 = vpow.pop %v2805
      %v2807 = vmul.f32 %v2690, 1.442695
      %v2808 = vpow.pop %v2807
      %v2809 = vmul.f32 %v2691, 1.442695
      %v2810 = vpow.pop %v2809
      %v2811 = vmul.f32 %v2692, 1.442695
      %v2812 = vpow.pop %v2811
      %v2813 = vmul.f32 %v2693, 1.442695
      %v2814 = vpow.pop %v2813
      %v2815 = vmul.f32 %v2694, 1.442695
      %v2816 = vpow.pop %v2815
      %v2817 = vmul.f32 %v2695, 1.442695
      %v2818 = vpow.pop %v2817
      %v2819 = vmul.f32 %v2696, 1.442695
      %v2820 = vpow.pop %v2819
      %v2821 = vmul.f32 %v2697, 1.442695
      %v2822 = vpow.pop %v2821
      %v2823 = vmul.f32 %v2698, 1.442695
      %v2824 = vpow.pop %v2823
      %v2825 = vmul.f32 %v2699, 1.442695
      %v2826 = vpow.pop %v2825
      %v2827 = vmul.f32 %v2700, 1.442695
      %v2828 = vpow.pop %v2827
      %v2829 = vadd.f32 %v2702, 1.0
      %v2830 = vadd.f32 %v2704, 1.0
      %v2831 = vadd.f32 %v2706, 1.0
      %v2832 = vadd.f32 %v2708, 1.0
      %v2833 = vadd.f32 %v2710, 1.0
      %v2834 = vadd.f32 %v2712, 1.0
      %v2835 = vadd.f32 %v2714, 1.0
      %v2836 = vadd.f32 %v2716, 1.0
      %v2837 = vadd.f32 %v2718, 1.0
      %v2838 = vadd.f32 %v2720, 1.0
      %v2839 = vadd.f32 %v2722, 1.0
      %v2840 = vadd.f32 %v2724, 1.0
      %v2841 = vadd.f32 %v2726, 1.0
      %v2842 = vadd.f32 %v2728, 1.0
      %v2843 = vadd.f32 %v2730, 1.0
      %v2844 = vadd.f32 %v2732, 1.0
      %v2845 = vadd.f32 %v2734, 1.0
      %v2846 = vadd.f32 %v2736, 1.0
      %v2847 = vadd.f32 %v2738, 1.0
      %v2848 = vadd.f32 %v2740, 1.0
      %v2849 = vadd.f32 %v2742, 1.0
      %v2850 = vadd.f32 %v2744, 1.0
      %v2851 = vadd.f32 %v2746, 1.0
      %v2852 = vadd.f32 %v2748, 1.0
      %v2853 = vadd.f32 %v2750, 1.0
      %v2854 = vadd.f32 %v2752, 1.0
      %v2855 = vadd.f32 %v2754, 1.0
      %v2856 = vadd.f32 %v2756, 1.0
      %v2857 = vadd.f32 %v2758, 1.0
      %v2858 = vadd.f32 %v2760, 1.0
      %v2859 = vadd.f32 %v2762, 1.0
      %v2860 = vadd.f32 %v2764, 1.0
      %v2861 = vadd.f32 %v2766, 1.0
      %v2862 = vadd.f32 %v2768, 1.0
      %v2863 = vadd.f32 %v2770, 1.0
      %v2864 = vadd.f32 %v2772, 1.0
      %v2865 = vadd.f32 %v2774, 1.0
      %v2866 = vadd.f32 %v2776, 1.0
      %v2867 = vadd.f32 %v2778, 1.0
      %v2868 = vadd.f32 %v2780, 1.0
      %v2869 = vadd.f32 %v2782, 1.0
      %v2870 = vadd.f32 %v2784, 1.0
      %v2871 = vadd.f32 %v2786, 1.0
      %v2872 = vadd.f32 %v2788, 1.0
      %v2873 = vadd.f32 %v2790, 1.0
      %v2874 = vadd.f32 %v2792, 1.0
      %v2875 = vadd.f32 %v2794, 1.0
      %v2876 = vadd.f32 %v2796, 1.0
      %v2877 = vadd.f32 %v2798, 1.0
      %v2878 = vadd.f32 %v2800, 1.0
      %v2879 = vadd.f32 %v2802, 1.0
      %v2880 = vadd.f32 %v2804, 1.0
      %v2881 = vadd.f32 %v2806, 1.0
      %v2882 = vadd.f32 %v2808, 1.0
      %v2883 = vadd.f32 %v2810, 1.0
      %v2884 = vadd.f32 %v2812, 1.0
      %v2885 = vadd.f32 %v2814, 1.0
      %v2886 = vadd.f32 %v2816, 1.0
      %v2887 = vadd.f32 %v2818, 1.0
      %v2888 = vadd.f32 %v2820, 1.0
      %v2889 = vadd.f32 %v2822, 1.0
      %v2890 = vadd.f32 %v2824, 1.0
      %v2891 = vadd.f32 %v2826, 1.0
      %v2892 = vadd.f32 %v2828, 1.0
      %v2893 = vrcp.pop %v2829
      %v2894 = vrcp.pop %v2830
      %v2895 = vrcp.pop %v2831
      %v2896 = vrcp.pop %v2832
      %v2897 = vrcp.pop %v2833
      %v2898 = vrcp.pop %v2834
      %v2899 = vrcp.pop %v2835
      %v2900 = vrcp.pop %v2836
      %v2901 = vrcp.pop %v2837
      %v2902 = vrcp.pop %v2838
      %v2903 = vrcp.pop %v2839
      %v2904 = vrcp.pop %v2840
      %v2905 = vrcp.pop %v2841
      %v2906 = vrcp.pop %v2842
      %v2907 = vrcp.pop %v2843
      %v2908 = vrcp.pop %v2844
      %v2909 = vrcp.pop %v2845
      %v2910 = vrcp.pop %v2846
      %v2911 = vrcp.pop %v2847
      %v2912 = vrcp.pop %v2848
      %v2913 = vrcp.pop %v2849
      %v2914 = vrcp.pop %v2850
      %v2915 = vrcp.pop %v2851
      %v2916 = vrcp.pop %v2852
      %v2917 = vrcp.pop %v2853
      %v2918 = vrcp.pop %v2854
      %v2919 = vrcp.pop %v2855
      %v2920 = vrcp.pop %v2856
      %v2921 = vrcp.pop %v2857
      %v2922 = vrcp.pop %v2858
      %v2923 = vrcp.pop %v2859
      %v2924 = vrcp.pop %v2860
      %v2925 = vrcp.pop %v2861
      %v2926 = vrcp.pop %v2862
      %v2927 = vrcp.pop %v2863
      %v2928 = vrcp.pop %v2864
      %v2929 = vrcp.pop %v2865
      %v2930 = vrcp.pop %v2866
      %v2931 = vrcp.pop %v2867
      %v2932 = vrcp.pop %v2868
      %v2933 = vrcp.pop %v2869
      %v2934 = vrcp.pop %v2870
      %v2935 = vrcp.pop %v2871
      %v2936 = vrcp.pop %v2872
      %v2937 = vrcp.pop %v2873
      %v2938 = vrcp.pop %v2874
      %v2939 = vrcp.pop %v2875
      %v2940 = vrcp.pop %v2876
      %v2941 = vrcp.pop %v2877
      %v2942 = vrcp.pop %v2878
      %v2943 = vrcp.pop %v2879
      %v2944 = vrcp.pop %v2880
      %v2945 = vrcp.pop %v2881
      %v2946 = vrcp.pop %v2882
      %v2947 = vrcp.pop %v2883
      %v2948 = vrcp.pop %v2884
      %v2949 = vrcp.pop %v2885
      %v2950 = vrcp.pop %v2886
      %v2951 = vrcp.pop %v2887
      %v2952 = vrcp.pop %v2888
      %v2953 = vrcp.pop %v2889
      %v2954 = vrcp.pop %v2890
      %v2955 = vrcp.pop %v2891
      %v2956 = vrcp.pop %v2892
      %3021 = vrot.lane.b32.xlu0 %v2893, 120
      %v3022 = vpop.permute.xlu0 %3021
      %3023 = vrot.lane.b32.xlu0 %v2894, 120
      %v3024 = vpop.permute.xlu0 %3023
      %3025 = vrot.lane.b32.xlu0 %v2895, 120
      %v3026 = vpop.permute.xlu0 %3025
      %3027 = vrot.lane.b32.xlu0 %v2896, 120
      %v3028 = vpop.permute.xlu0 %3027
      %3029 = vrot.lane.b32.xlu0 %v2897, 120
      %v3030 = vpop.permute.xlu0 %3029
      %3031 = vrot.lane.b32.xlu0 %v2898, 120
      %v3032 = vpop.permute.xlu0 %3031
      %3033 = vrot.lane.b32.xlu0 %v2899, 120
      %v3034 = vpop.permute.xlu0 %3033
      %3035 = vrot.lane.b32.xlu0 %v2900, 120
      %v3036 = vpop.permute.xlu0 %3035
      %3037 = vrot.lane.b32.xlu0 %v2901, 120
      %v3038 = vpop.permute.xlu0 %3037
      %3039 = vrot.lane.b32.xlu0 %v2902, 120
      %v3040 = vpop.permute.xlu0 %3039
      %3041 = vrot.lane.b32.xlu0 %v2903, 120
      %v3042 = vpop.permute.xlu0 %3041
      %3043 = vrot.lane.b32.xlu0 %v2904, 120
      %v3044 = vpop.permute.xlu0 %3043
      %3045 = vrot.lane.b32.xlu0 %v2905, 120
      %v3046 = vpop.permute.xlu0 %3045
      %3047 = vrot.lane.b32.xlu0 %v2906, 120
      %v3048 = vpop.permute.xlu0 %3047
      %3049 = vrot.lane.b32.xlu0 %v2907, 120
      %v3050 = vpop.permute.xlu0 %3049
      %3051 = vrot.lane.b32.xlu0 %v2908, 120
      %v3052 = vpop.permute.xlu0 %3051
      %3053 = vrot.lane.b32.xlu0 %v2909, 120
      %v3054 = vpop.permute.xlu0 %3053
      %3055 = vrot.lane.b32.xlu0 %v2910, 120
      %v3056 = vpop.permute.xlu0 %3055
      %3057 = vrot.lane.b32.xlu0 %v2911, 120
      %v3058 = vpop.permute.xlu0 %3057
      %3059 = vrot.lane.b32.xlu0 %v2912, 120
      %v3060 = vpop.permute.xlu0 %3059
      %3061 = vrot.lane.b32.xlu0 %v2913, 120
      %v3062 = vpop.permute.xlu0 %3061
      %3063 = vrot.lane.b32.xlu0 %v2914, 120
      %v3064 = vpop.permute.xlu0 %3063
      %3065 = vrot.lane.b32.xlu0 %v2915, 120
      %v3066 = vpop.permute.xlu0 %3065
      %3067 = vrot.lane.b32.xlu0 %v2916, 120
      %v3068 = vpop.permute.xlu0 %3067
      %3069 = vrot.lane.b32.xlu0 %v2917, 120
      %v3070 = vpop.permute.xlu0 %3069
      %3071 = vrot.lane.b32.xlu0 %v2918, 120
      %v3072 = vpop.permute.xlu0 %3071
      %3073 = vrot.lane.b32.xlu0 %v2919, 120
      %v3074 = vpop.permute.xlu0 %3073
      %3075 = vrot.lane.b32.xlu0 %v2920, 120
      %v3076 = vpop.permute.xlu0 %3075
      %3077 = vrot.lane.b32.xlu0 %v2921, 120
      %v3078 = vpop.permute.xlu0 %3077
      %3079 = vrot.lane.b32.xlu0 %v2922, 120
      %v3080 = vpop.permute.xlu0 %3079
      %3081 = vrot.lane.b32.xlu0 %v2923, 120
      %v3082 = vpop.permute.xlu0 %3081
      %3083 = vrot.lane.b32.xlu0 %v2924, 120
      %v3084 = vpop.permute.xlu0 %3083
      %3085 = vrot.lane.b32.xlu0 %v2925, 120
      %v3086 = vpop.permute.xlu0 %3085
      %3087 = vrot.lane.b32.xlu0 %v2926, 120
      %v3088 = vpop.permute.xlu0 %3087
      %3089 = vrot.lane.b32.xlu0 %v2927, 120
      %v3090 = vpop.permute.xlu0 %3089
      %3091 = vrot.lane.b32.xlu0 %v2928, 120
      %v3092 = vpop.permute.xlu0 %3091
      %3093 = vrot.lane.b32.xlu0 %v2929, 120
      %v3094 = vpop.permute.xlu0 %3093
      %3095 = vrot.lane.b32.xlu0 %v2930, 120
      %v3096 = vpop.permute.xlu0 %3095
      %3097 = vrot.lane.b32.xlu0 %v2931, 120
      %v3098 = vpop.permute.xlu0 %3097
      %3099 = vrot.lane.b32.xlu0 %v2932, 120
      %v3100 = vpop.permute.xlu0 %3099
      %3101 = vrot.lane.b32.xlu0 %v2933, 120
      %v3102 = vpop.permute.xlu0 %3101
      %3103 = vrot.lane.b32.xlu0 %v2934, 120
      %v3104 = vpop.permute.xlu0 %3103
      %3105 = vrot.lane.b32.xlu0 %v2935, 120
      %v3106 = vpop.permute.xlu0 %3105
      %3107 = vrot.lane.b32.xlu0 %v2936, 120
      %v3108 = vpop.permute.xlu0 %3107
      %3109 = vrot.lane.b32.xlu0 %v2937, 120
      %v3110 = vpop.permute.xlu0 %3109
      %3111 = vrot.lane.b32.xlu0 %v2938, 120
      %v3112 = vpop.permute.xlu0 %3111
      %3113 = vrot.lane.b32.xlu0 %v2939, 120
      %v3114 = vpop.permute.xlu0 %3113
      %3115 = vrot.lane.b32.xlu0 %v2940, 120
      %v3116 = vpop.permute.xlu0 %3115
      %3117 = vrot.lane.b32.xlu0 %v2941, 120
      %v3118 = vpop.permute.xlu0 %3117
      %3119 = vrot.lane.b32.xlu0 %v2942, 120
      %v3120 = vpop.permute.xlu0 %3119
      %3121 = vrot.lane.b32.xlu0 %v2943, 120
      %v3122 = vpop.permute.xlu0 %3121
      %3123 = vrot.lane.b32.xlu0 %v2944, 120
      %v3124 = vpop.permute.xlu0 %3123
      %3125 = vrot.lane.b32.xlu0 %v2945, 120
      %v3126 = vpop.permute.xlu0 %3125
      %3127 = vrot.lane.b32.xlu0 %v2946, 120
      %v3128 = vpop.permute.xlu0 %3127
      %3129 = vrot.lane.b32.xlu0 %v2947, 120
      %v3130 = vpop.permute.xlu0 %3129
      %3131 = vrot.lane.b32.xlu0 %v2948, 120
      %v3132 = vpop.permute.xlu0 %3131
      %3133 = vrot.lane.b32.xlu0 %v2949, 120
      %v3134 = vpop.permute.xlu0 %3133
      %3135 = vrot.lane.b32.xlu0 %v2950, 120
      %v3136 = vpop.permute.xlu0 %3135
      %3137 = vrot.lane.b32.xlu0 %v2951, 120
      %v3138 = vpop.permute.xlu0 %3137
      %3139 = vrot.lane.b32.xlu0 %v2952, 120
      %v3140 = vpop.permute.xlu0 %3139
      %3141 = vrot.lane.b32.xlu0 %v2953, 120
      %v3142 = vpop.permute.xlu0 %3141
      %3143 = vrot.lane.b32.xlu0 %v2954, 120
      %v3144 = vpop.permute.xlu0 %3143
      %3145 = vrot.lane.b32.xlu0 %v2955, 120
      %v3146 = vpop.permute.xlu0 %3145
      %3147 = vrot.lane.b32.xlu0 %v2956, 120
      %v3148 = vpop.permute.xlu0 %3147
      %v3213 = vmul.f32 %v2573, %v3022
      %v3214 = vmul.f32 %v2574, %v3024
      %v3215 = vmul.f32 %v2575, %v3026
      %v3216 = vmul.f32 %v2576, %v3028
      %v3217 = vmul.f32 %v2577, %v3030
      %v3218 = vmul.f32 %v2578, %v3032
      %v3219 = vmul.f32 %v2579, %v3034
      %v3220 = vmul.f32 %v2580, %v3036
      %v3221 = vmul.f32 %v2581, %v3038
      %v3222 = vmul.f32 %v2582, %v3040
      %v3223 = vmul.f32 %v2583, %v3042
      %v3224 = vmul.f32 %v2584, %v3044
      %v3225 = vmul.f32 %v2585, %v3046
      %v3226 = vmul.f32 %v2586, %v3048
      %v3227 = vmul.f32 %v2587, %v3050
      %v3228 = vmul.f32 %v2588, %v3052
      %v3229 = vmul.f32 %v2589, %v3054
      %v3230 = vmul.f32 %v2590, %v3056
      %v3231 = vmul.f32 %v2591, %v3058
      %v3232 = vmul.f32 %v2592, %v3060
      %v3233 = vmul.f32 %v2593, %v3062
      %v3234 = vmul.f32 %v2594, %v3064
      %v3235 = vmul.f32 %v2595, %v3066
      %v3236 = vmul.f32 %v2596, %v3068
      %v3237 = vmul.f32 %v2597, %v3070
      %v3238 = vmul.f32 %v2598, %v3072
      %v3239 = vmul.f32 %v2599, %v3074
      %v3240 = vmul.f32 %v2600, %v3076
      %v3241 = vmul.f32 %v2601, %v3078
      %v3242 = vmul.f32 %v2602, %v3080
      %v3243 = vmul.f32 %v2603, %v3082
      %v3244 = vmul.f32 %v2604, %v3084
      %v3245 = vmul.f32 %v2605, %v3086
      %v3246 = vmul.f32 %v2606, %v3088
      %v3247 = vmul.f32 %v2607, %v3090
      %v3248 = vmul.f32 %v2608, %v3092
      %v3249 = vmul.f32 %v2609, %v3094
      %v3250 = vmul.f32 %v2610, %v3096
      %v3251 = vmul.f32 %v2611, %v3098
      %v3252 = vmul.f32 %v2612, %v3100
      %v3253 = vmul.f32 %v2613, %v3102
      %v3254 = vmul.f32 %v2614, %v3104
      %v3255 = vmul.f32 %v2615, %v3106
      %v3256 = vmul.f32 %v2616, %v3108
      %v3257 = vmul.f32 %v2617, %v3110
      %v3258 = vmul.f32 %v2618, %v3112
      %v3259 = vmul.f32 %v2619, %v3114
      %v3260 = vmul.f32 %v2620, %v3116
      %v3261 = vmul.f32 %v2621, %v3118
      %v3262 = vmul.f32 %v2622, %v3120
      %v3263 = vmul.f32 %v2623, %v3122
      %v3264 = vmul.f32 %v2624, %v3124
      %v3265 = vmul.f32 %v2625, %v3126
      %v3266 = vmul.f32 %v2626, %v3128
      %v3267 = vmul.f32 %v2627, %v3130
      %v3268 = vmul.f32 %v2628, %v3132
      %v3269 = vmul.f32 %v2629, %v3134
      %v3270 = vmul.f32 %v2630, %v3136
      %v3271 = vmul.f32 %v2631, %v3138
      %v3272 = vmul.f32 %v2632, %v3140
      %v3273 = vmul.f32 %v2633, %v3142
      %v3274 = vmul.f32 %v2634, %v3144
      %v3275 = vmul.f32 %v2635, %v3146
      %v3276 = vmul.f32 %v2636, %v3148
      %v3277 = vpack.c.bf16 %v3214, %v3213
      %v3278 = vpack.c.bf16 %v3216, %v3215
      %v3279 = vpack.c.bf16 %v3218, %v3217
      %v3280 = vpack.c.bf16 %v3220, %v3219
      %v3281 = vpack.c.bf16 %v3222, %v3221
      %v3282 = vpack.c.bf16 %v3224, %v3223
      %v3283 = vpack.c.bf16 %v3226, %v3225
      %v3284 = vpack.c.bf16 %v3228, %v3227
      %v3285 = vpack.c.bf16 %v3230, %v3229
      %v3286 = vpack.c.bf16 %v3232, %v3231
      %v3287 = vpack.c.bf16 %v3234, %v3233
      %v3288 = vpack.c.bf16 %v3236, %v3235
      %v3289 = vpack.c.bf16 %v3238, %v3237
      %v3290 = vpack.c.bf16 %v3240, %v3239
      %v3291 = vpack.c.bf16 %v3242, %v3241
      %v3292 = vpack.c.bf16 %v3244, %v3243
      %v3293 = vpack.c.bf16 %v3246, %v3245
      %v3294 = vpack.c.bf16 %v3248, %v3247
      %v3295 = vpack.c.bf16 %v3250, %v3249
      %v3296 = vpack.c.bf16 %v3252, %v3251
      %v3297 = vpack.c.bf16 %v3254, %v3253
      %v3298 = vpack.c.bf16 %v3256, %v3255
      %v3299 = vpack.c.bf16 %v3258, %v3257
      %v3300 = vpack.c.bf16 %v3260, %v3259
      %v3301 = vpack.c.bf16 %v3262, %v3261
      %v3302 = vpack.c.bf16 %v3264, %v3263
      %v3303 = vpack.c.bf16 %v3266, %v3265
      %v3304 = vpack.c.bf16 %v3268, %v3267
      %v3305 = vpack.c.bf16 %v3270, %v3269
      %v3306 = vpack.c.bf16 %v3272, %v3271
      %v3307 = vpack.c.bf16 %v3274, %v3273
      %v3308 = vpack.c.bf16 %v3276, %v3275
      %v3341 = vunpack.c.l.b16 %v3277
      %v3342 = vunpack.c.h.b16 %v3277
      %v3343 = vunpack.c.l.b16 %v3278
      %v3344 = vunpack.c.h.b16 %v3278
      %v3345 = vunpack.c.l.b16 %v3279
      %v3346 = vunpack.c.h.b16 %v3279
      %v3347 = vunpack.c.l.b16 %v3280
      %v3348 = vunpack.c.h.b16 %v3280
      %v3349 = vunpack.c.l.b16 %v3281
      %v3350 = vunpack.c.h.b16 %v3281
      %v3351 = vunpack.c.l.b16 %v3282
      %v3352 = vunpack.c.h.b16 %v3282
      %v3353 = vunpack.c.l.b16 %v3283
      %v3354 = vunpack.c.h.b16 %v3283
      %v3355 = vunpack.c.l.b16 %v3284
      %v3356 = vunpack.c.h.b16 %v3284
      %v3357 = vunpack.c.l.b16 %v3285
      %v3358 = vunpack.c.h.b16 %v3285
      %v3359 = vunpack.c.l.b16 %v3286
      %v3360 = vunpack.c.h.b16 %v3286
      %v3361 = vunpack.c.l.b16 %v3287
      %v3362 = vunpack.c.h.b16 %v3287
      %v3363 = vunpack.c.l.b16 %v3288
      %v3364 = vunpack.c.h.b16 %v3288
      %v3365 = vunpack.c.l.b16 %v3289
      %v3366 = vunpack.c.h.b16 %v3289
      %v3367 = vunpack.c.l.b16 %v3290
      %v3368 = vunpack.c.h.b16 %v3290
      %v3369 = vunpack.c.l.b16 %v3291
      %v3370 = vunpack.c.h.b16 %v3291
      %v3371 = vunpack.c.l.b16 %v3292
      %v3372 = vunpack.c.h.b16 %v3292
      %v3373 = vunpack.c.l.b16 %v3293
      %v3374 = vunpack.c.h.b16 %v3293
      %v3375 = vunpack.c.l.b16 %v3294
      %v3376 = vunpack.c.h.b16 %v3294
      %v3377 = vunpack.c.l.b16 %v3295
      %v3378 = vunpack.c.h.b16 %v3295
      %v3379 = vunpack.c.l.b16 %v3296
      %v3380 = vunpack.c.h.b16 %v3296
      %v3381 = vunpack.c.l.b16 %v3297
      %v3382 = vunpack.c.h.b16 %v3297
      %v3383 = vunpack.c.l.b16 %v3298
      %v3384 = vunpack.c.h.b16 %v3298
      %v3385 = vunpack.c.l.b16 %v3299
      %v3386 = vunpack.c.h.b16 %v3299
      %v3387 = vunpack.c.l.b16 %v3300
      %v3388 = vunpack.c.h.b16 %v3300
      %v3389 = vunpack.c.l.b16 %v3301
      %v3390 = vunpack.c.h.b16 %v3301
      %v3391 = vunpack.c.l.b16 %v3302
      %v3392 = vunpack.c.h.b16 %v3302
      %v3393 = vunpack.c.l.b16 %v3303
      %v3394 = vunpack.c.h.b16 %v3303
      %v3395 = vunpack.c.l.b16 %v3304
      %v3396 = vunpack.c.h.b16 %v3304
      %v3397 = vunpack.c.l.b16 %v3305
      %v3398 = vunpack.c.h.b16 %v3305
      %v3399 = vunpack.c.l.b16 %v3306
      %v3400 = vunpack.c.h.b16 %v3306
      %v3401 = vunpack.c.l.b16 %v3307
      %v3402 = vunpack.c.h.b16 %v3307
      %v3403 = vunpack.c.l.b16 %v3308
      %v3404 = vunpack.c.h.b16 %v3308
      %v3405 = vpack.c.b16 %v3341, %v3341
      %v3406 = vpack.c.b16 %v3342, %v3342
      %v3407 = vpack.c.b16 %v3343, %v3343
      %v3408 = vpack.c.b16 %v3344, %v3344
      %v3409 = vpack.c.b16 %v3345, %v3345
      %v3410 = vpack.c.b16 %v3346, %v3346
      %v3411 = vpack.c.b16 %v3347, %v3347
      %v3412 = vpack.c.b16 %v3348, %v3348
      %v3413 = vpack.c.b16 %v3349, %v3349
      %v3414 = vpack.c.b16 %v3350, %v3350
      %v3415 = vpack.c.b16 %v3351, %v3351
      %v3416 = vpack.c.b16 %v3352, %v3352
      %v3417 = vpack.c.b16 %v3353, %v3353
      %v3418 = vpack.c.b16 %v3354, %v3354
      %v3419 = vpack.c.b16 %v3355, %v3355
      %v3420 = vpack.c.b16 %v3356, %v3356
      %v3421 = vpack.c.b16 %v3357, %v3357
      %v3422 = vpack.c.b16 %v3358, %v3358
      %v3423 = vpack.c.b16 %v3359, %v3359
      %v3424 = vpack.c.b16 %v3360, %v3360
      %v3425 = vpack.c.b16 %v3361, %v3361
      %v3426 = vpack.c.b16 %v3362, %v3362
      %v3427 = vpack.c.b16 %v3363, %v3363
      %v3428 = vpack.c.b16 %v3364, %v3364
      %v3429 = vpack.c.b16 %v3365, %v3365
      %v3430 = vpack.c.b16 %v3366, %v3366
      %v3431 = vpack.c.b16 %v3367, %v3367
      %v3432 = vpack.c.b16 %v3368, %v3368
      %v3433 = vpack.c.b16 %v3369, %v3369
      %v3434 = vpack.c.b16 %v3370, %v3370
      %v3435 = vpack.c.b16 %v3371, %v3371
      %v3436 = vpack.c.b16 %v3372, %v3372
      %v3437 = vpack.c.b16 %v3373, %v3373
      %v3438 = vpack.c.b16 %v3374, %v3374
      %v3439 = vpack.c.b16 %v3375, %v3375
      %v3440 = vpack.c.b16 %v3376, %v3376
      %v3441 = vpack.c.b16 %v3377, %v3377
      %v3442 = vpack.c.b16 %v3378, %v3378
      %v3443 = vpack.c.b16 %v3379, %v3379
      %v3444 = vpack.c.b16 %v3380, %v3380
      %v3445 = vpack.c.b16 %v3381, %v3381
      %v3446 = vpack.c.b16 %v3382, %v3382
      %v3447 = vpack.c.b16 %v3383, %v3383
      %v3448 = vpack.c.b16 %v3384, %v3384
      %v3449 = vpack.c.b16 %v3385, %v3385
      %v3450 = vpack.c.b16 %v3386, %v3386
      %v3451 = vpack.c.b16 %v3387, %v3387
      %v3452 = vpack.c.b16 %v3388, %v3388
      %v3453 = vpack.c.b16 %v3389, %v3389
      %v3454 = vpack.c.b16 %v3390, %v3390
      %v3455 = vpack.c.b16 %v3391, %v3391
      %v3456 = vpack.c.b16 %v3392, %v3392
      %v3457 = vpack.c.b16 %v3393, %v3393
      %v3458 = vpack.c.b16 %v3394, %v3394
      %v3459 = vpack.c.b16 %v3395, %v3395
      %v3460 = vpack.c.b16 %v3396, %v3396
      %v3461 = vpack.c.b16 %v3397, %v3397
      %v3462 = vpack.c.b16 %v3398, %v3398
      %v3463 = vpack.c.b16 %v3399, %v3399
      %v3464 = vpack.c.b16 %v3400, %v3400
      %v3465 = vpack.c.b16 %v3401, %v3401
      %v3466 = vpack.c.b16 %v3402, %v3402
      %v3467 = vpack.c.b16 %v3403, %v3403
      %v3468 = vpack.c.b16 %v3404, %v3404
      %vm3533 = vcmask 60416
      %3534 = vst.msk [vmem:[%s175] sm:$0xf] %vm3533, %v3405
      %3535 = vst.msk [vmem:[%s175 + $0x4] sm:$0xf] %vm3533, %v3406
      %3536 = vst.msk [vmem:[%s175 + $0x8] sm:$0xf] %vm3533, %v3407
      %3537 = vst.msk [vmem:[%s175 + $0xc] sm:$0xf] %vm3533, %v3408
      %3538 = vst.msk [vmem:[%s175 + $0x10] sm:$0xf] %vm3533, %v3409
      %3539 = vst.msk [vmem:[%s175 + $0x14] sm:$0xf] %vm3533, %v3410
      %3540 = vst.msk [vmem:[%s175 + $0x18] sm:$0xf] %vm3533, %v3411
      %3541 = vst.msk [vmem:[%s175 + $0x1c] sm:$0xf] %vm3533, %v3412
      %3542 = vst.msk [vmem:[%s175 + $0x20] sm:$0xf] %vm3533, %v3413
      %3543 = vst.msk [vmem:[%s175 + $0x24] sm:$0xf] %vm3533, %v3414
      %3544 = vst.msk [vmem:[%s175 + $0x28] sm:$0xf] %vm3533, %v3415
      %3545 = vst.msk [vmem:[%s175 + $0x2c] sm:$0xf] %vm3533, %v3416
      %3546 = vst.msk [vmem:[%s175 + $0x30] sm:$0xf] %vm3533, %v3417
      %3547 = vst.msk [vmem:[%s175 + $0x34] sm:$0xf] %vm3533, %v3418
      %3548 = vst.msk [vmem:[%s175 + $0x38] sm:$0xf] %vm3533, %v3419
      %3549 = vst.msk [vmem:[%s175 + $0x3c] sm:$0xf] %vm3533, %v3420
      %3550 = vst.msk [vmem:[%s175 + $0x40] sm:$0xf] %vm3533, %v3421
      %3551 = vst.msk [vmem:[%s175 + $0x44] sm:$0xf] %vm3533, %v3422
      %3552 = vst.msk [vmem:[%s175 + $0x48] sm:$0xf] %vm3533, %v3423
      %3553 = vst.msk [vmem:[%s175 + $0x4c] sm:$0xf] %vm3533, %v3424
      %3554 = vst.msk [vmem:[%s175 + $0x50] sm:$0xf] %vm3533, %v3425
      %3555 = vst.msk [vmem:[%s175 + $0x54] sm:$0xf] %vm3533, %v3426
      %3556 = vst.msk [vmem:[%s175 + $0x58] sm:$0xf] %vm3533, %v3427
      %3557 = vst.msk [vmem:[%s175 + $0x5c] sm:$0xf] %vm3533, %v3428
      %3558 = vst.msk [vmem:[%s175 + $0x60] sm:$0xf] %vm3533, %v3429
      %3559 = vst.msk [vmem:[%s175 + $0x64] sm:$0xf] %vm3533, %v3430
      %3560 = vst.msk [vmem:[%s175 + $0x68] sm:$0xf] %vm3533, %v3431
      %3561 = vst.msk [vmem:[%s175 + $0x6c] sm:$0xf] %vm3533, %v3432
      %3562 = vst.msk [vmem:[%s175 + $0x70] sm:$0xf] %vm3533, %v3433
      %3563 = vst.msk [vmem:[%s175 + $0x74] sm:$0xf] %vm3533, %v3434
      %3564 = vst.msk [vmem:[%s175 + $0x78] sm:$0xf] %vm3533, %v3435
      %3565 = vst.msk [vmem:[%s175 + $0x7c] sm:$0xf] %vm3533, %v3436
      %3566 = vst.msk [vmem:[%s175 + $0x80] sm:$0xf] %vm3533, %v3437
      %3567 = vst.msk [vmem:[%s175 + $0x84] sm:$0xf] %vm3533, %v3438
      %3568 = vst.msk [vmem:[%s175 + $0x88] sm:$0xf] %vm3533, %v3439
      %3569 = vst.msk [vmem:[%s175 + $0x8c] sm:$0xf] %vm3533, %v3440
      %3570 = vst.msk [vmem:[%s175 + $0x90] sm:$0xf] %vm3533, %v3441
      %3571 = vst.msk [vmem:[%s175 + $0x94] sm:$0xf] %vm3533, %v3442
      %3572 = vst.msk [vmem:[%s175 + $0x98] sm:$0xf] %vm3533, %v3443
      %3573 = vst.msk [vmem:[%s175 + $0x9c] sm:$0xf] %vm3533, %v3444
      %3574 = vst.msk [vmem:[%s175 + $0xa0] sm:$0xf] %vm3533, %v3445
      %3575 = vst.msk [vmem:[%s175 + $0xa4] sm:$0xf] %vm3533, %v3446
      %3576 = vst.msk [vmem:[%s175 + $0xa8] sm:$0xf] %vm3533, %v3447
      %3577 = vst.msk [vmem:[%s175 + $0xac] sm:$0xf] %vm3533, %v3448
      %3578 = vst.msk [vmem:[%s175 + $0xb0] sm:$0xf] %vm3533, %v3449
      %3579 = vst.msk [vmem:[%s175 + $0xb4] sm:$0xf] %vm3533, %v3450
      %3580 = vst.msk [vmem:[%s175 + $0xb8] sm:$0xf] %vm3533, %v3451
      %3581 = vst.msk [vmem:[%s175 + $0xbc] sm:$0xf] %vm3533, %v3452
      %3582 = vst.msk [vmem:[%s175 + $0xc0] sm:$0xf] %vm3533, %v3453
      %3583 = vst.msk [vmem:[%s175 + $0xc4] sm:$0xf] %vm3533, %v3454
      %3584 = vst.msk [vmem:[%s175 + $0xc8] sm:$0xf] %vm3533, %v3455
      %3585 = vst.msk [vmem:[%s175 + $0xcc] sm:$0xf] %vm3533, %v3456
      %3586 = vst.msk [vmem:[%s175 + $0xd0] sm:$0xf] %vm3533, %v3457
      %3587 = vst.msk [vmem:[%s175 + $0xd4] sm:$0xf] %vm3533, %v3458
      %3588 = vst.msk [vmem:[%s175 + $0xd8] sm:$0xf] %vm3533, %v3459
      %3589 = vst.msk [vmem:[%s175 + $0xdc] sm:$0xf] %vm3533, %v3460
      %3590 = vst.msk [vmem:[%s175 + $0xe0] sm:$0xf] %vm3533, %v3461
      %3591 = vst.msk [vmem:[%s175 + $0xe4] sm:$0xf] %vm3533, %v3462
      %3592 = vst.msk [vmem:[%s175 + $0xe8] sm:$0xf] %vm3533, %v3463
      %3593 = vst.msk [vmem:[%s175 + $0xec] sm:$0xf] %vm3533, %v3464
      %3594 = vst.msk [vmem:[%s175 + $0xf0] sm:$0xf] %vm3533, %v3465
      %3595 = vst.msk [vmem:[%s175 + $0xf4] sm:$0xf] %vm3533, %v3466
      %3596 = vst.msk [vmem:[%s175 + $0xf8] sm:$0xf] %vm3533, %v3467
      %3597 = vst.msk [vmem:[%s175 + $0xfc] sm:$0xf] %vm3533, %v3468
      %s3598 = smul.u32 64, %s14
      %p3599 = scmp.lt.s32.totalorder %s3598, 127
      %s3600 = scalar_select %p3599, %s3598, 127
      %s3601 = smul.addr %s3600, 4
      %s3602 = scalar_lea.vmem %s3, %s3601
      // Predicated region
      $region33: #{discriminator_forward.5} parent=31 // pred_check
        %p3603 = pneg %p100
      $region34: #{discriminator_forward.5} parent=31 // pred_check_branch
        %3605 = sbr.rel (%p3603) target = $region36
      $region35: #{discriminator_forward.5} parent=31 // pred_region
        %s3606 = smul.u32 64, %s14
      $region36: #{discriminator_forward.5} parent=31 // pred_fallthru
        _
    $region32: #{discriminator_forward.5} parent=5 // pred_fallthru
      _
    %p3607 = scmp.le.s32.totalorder 2, %s9
    // Predicated region
    $region37: #{discriminator_forward.5} parent=5 // pred_check
      %p3608 = pneg %p3607
    $region38: #{discriminator_forward.5} parent=5 // pred_check_branch
      %3610 = sbr.rel (%p3608) target = $region40
    $region39: #{discriminator_forward.5} parent=5 // pred_region
      %s3611 = ssub.s32 %s9, 2
      // Predicated region
      $region41: #{discriminator_forward.5} parent=39 // pred_check
        %p3612 = pneg %p106
      $region42: #{discriminator_forward.5} parent=39 // pred_check_branch
        %3614 = sbr.rel (%p3612) target = $region44
      $region43: #{discriminator_forward.5} parent=39 // pred_region
        %s3615 = smul.u32 64, %s15
        %p3616 = scmp.lt.s32.totalorder %s3615, 127
        %s3617 = scalar_select %p3616, %s3615, 127
        %s3618 = smul.addr %s3617, 4
        %s3619 = scalar_lea.vmem %s3, %s3618
      $region44: #{discriminator_forward.5} parent=39 // pred_fallthru
        _
    $region40: #{discriminator_forward.5} parent=5 // pred_fallthru
      _
  $region6: #{discriminator_forward.5} parent=0 // loop_footer
    %s13 = sadd.s32 1, %s9
  $region7: #{discriminator_forward.5} parent=0 // loop_footer_branch
    %8 = sbr.rel target = $region3
  $region8: #{discriminator_forward.5} parent=0 // loop_exit
    _

// kernel: discriminator_forward.6
$region0: #{discriminator_forward.6}
  #allocation0 [shape = 'u32[]', space=smem, size = 0x4, offset = 0x4, fixed_abs, tag = 'smem constant byte address 0x4 - core index']
  #allocation1 [shape = 'u32[144,128]{1,0:T(1,128)}', space=vmem, size = 0x12000, scoped, tag = 'internal scratch']
  %s0 = inlined_call_operand.vmem [shape: bf16[256,600], index: 0, kind: input, shape index: {}]
  %s1 = inlined_call_operand.vmem [shape: bf16[600,16], index: 1, kind: input, shape index: {}]
  %s2 = inlined_call_operand.vmem [shape: f32[1,16], index: 2, kind: input, shape index: {}]
  %s3 = inlined_call_operand.vmem [shape: bf16[256,8], index: 3, kind: output, shape index: {}]
  %s4 = sld [smem:[#allocation0]]
  $region22: #{discriminator_forward.6} parent=0
    _
  %s6 = ssub.s32 1, %s4
  %s7 = scalar_select 0, %s6, %s4
  // Predicated region
  $region2: #{discriminator_forward.6} parent=0 // pred_check
    _
  $region3: #{discriminator_forward.6} parent=0 // pred_check_branch
    %9 = sbr.rel (0) target = $region5
  $region4: #{discriminator_forward.6} parent=0 // pred_region
    _
  $region5: #{discriminator_forward.6} parent=0 // pred_fallthru
    _
  // Predicated region
  $region6: #{discriminator_forward.6} parent=0 // pred_check
    _
  $region7: #{discriminator_forward.6} parent=0 // pred_check_branch
    %11 = sbr.rel (0) target = $region9
  $region8: #{discriminator_forward.6} parent=0 // pred_region
    _
  $region9: #{discriminator_forward.6} parent=0 // pred_fallthru
    _
  // Predicated region
  $region10: #{discriminator_forward.6} parent=0 // pred_check
    _
  $region11: #{discriminator_forward.6} parent=0 // pred_check_branch
    %13 = sbr.rel (0) target = $region13
  $region12: #{discriminator_forward.6} parent=0 // pred_region
    _
  $region13: #{discriminator_forward.6} parent=0 // pred_fallthru
    _
  %v15 = vld [vmem:[%s0] sm:$0xff]
  %v16 = vld [vmem:[%s0 + $0x8] sm:$0xff]
  %v17 = vld [vmem:[%s0 + $0x10] sm:$0xf]
  %v18 = vld [vmem:[%s0 + $0x14] sm:$0xff]
  %v19 = vld [vmem:[%s0 + $0x1c] sm:$0xff]
  %v20 = vld [vmem:[%s0 + $0x24] sm:$0xf]
  %v21 = vld [vmem:[%s0 + $0x28] sm:$0xff]
  %v22 = vld [vmem:[%s0 + $0x30] sm:$0xff]
  %v23 = vld [vmem:[%s0 + $0x38] sm:$0xf]
  %v24 = vld [vmem:[%s0 + $0x3c] sm:$0xff]
  %v25 = vld [vmem:[%s0 + $0x44] sm:$0xff]
  %v26 = vld [vmem:[%s0 + $0x4c] sm:$0xf]
  %v27 = vld [vmem:[%s0 + $0x50] sm:$0xff]
  %v28 = vld [vmem:[%s0 + $0x58] sm:$0xff]
  %v29 = vld [vmem:[%s0 + $0x60] sm:$0xf]
  %v30 = vld [vmem:[%s0 + $0x64] sm:$0xff]
  %v31 = vld [vmem:[%s0 + $0x6c] sm:$0xff]
  %v32 = vld [vmem:[%s0 + $0x74] sm:$0xf]
  %v33 = vld [vmem:[%s0 + $0x78] sm:$0xff]
  %v34 = vld [vmem:[%s0 + $0x80] sm:$0xff]
  %v35 = vld [vmem:[%s0 + $0x88] sm:$0xf]
  %v36 = vld [vmem:[%s0 + $0x8c] sm:$0xff]
  %v37 = vld [vmem:[%s0 + $0x94] sm:$0xff]
  %v38 = vld [vmem:[%s0 + $0x9c] sm:$0xf]
  %v39 = vld [vmem:[%s0 + $0xa0] sm:$0xff]
  %v40 = vld [vmem:[%s0 + $0xa8] sm:$0xff]
  %v41 = vld [vmem:[%s0 + $0xb0] sm:$0xf]
  %v42 = vld [vmem:[%s0 + $0xb4] sm:$0xff]
  %v43 = vld [vmem:[%s0 + $0xbc] sm:$0xff]
  %v44 = vld [vmem:[%s0 + $0xc4] sm:$0xf]
  %v45 = vld [vmem:[%s0 + $0xc8] sm:$0xff]
  %v46 = vld [vmem:[%s0 + $0xd0] sm:$0xff]
  %v47 = vld [vmem:[%s0 + $0xd8] sm:$0xf]
  %v48 = vld [vmem:[%s0 + $0xdc] sm:$0xff]
  %v49 = vld [vmem:[%s0 + $0xe4] sm:$0xff]
  %v50 = vld [vmem:[%s0 + $0xec] sm:$0xf]
  %v51 = vld [vmem:[%s0 + $0xf0] sm:$0xff]
  %v52 = vld [vmem:[%s0 + $0xf8] sm:$0xff]
  %v53 = vld [vmem:[%s0 + $0x100] sm:$0xf]
  %v54 = vld [vmem:[%s0 + $0x104] sm:$0xff]
  %v55 = vld [vmem:[%s0 + $0x10c] sm:$0xff]
  %v56 = vld [vmem:[%s0 + $0x114] sm:$0xf]
  %v57 = vld [vmem:[%s0 + $0x118] sm:$0xff]
  %v58 = vld [vmem:[%s0 + $0x120] sm:$0xff]
  %v59 = vld [vmem:[%s0 + $0x128] sm:$0xf]
  %v60 = vld [vmem:[%s0 + $0x12c] sm:$0xff]
  %v61 = vld [vmem:[%s0 + $0x134] sm:$0xff]
  %v62 = vld [vmem:[%s0 + $0x13c] sm:$0xf]
  %v63 = vld [vmem:[%s0 + $0x140] sm:$0xff]
  %v64 = vld [vmem:[%s0 + $0x148] sm:$0xff]
  %v65 = vld [vmem:[%s0 + $0x150] sm:$0xf]
  %v66 = vld [vmem:[%s0 + $0x154] sm:$0xff]
  %v67 = vld [vmem:[%s0 + $0x15c] sm:$0xff]
  %v68 = vld [vmem:[%s0 + $0x164] sm:$0xf]
  %v69 = vld [vmem:[%s0 + $0x168] sm:$0xff]
  %v70 = vld [vmem:[%s0 + $0x170] sm:$0xff]
  %v71 = vld [vmem:[%s0 + $0x178] sm:$0xf]
  %v72 = vld [vmem:[%s0 + $0x17c] sm:$0xff]
  %v73 = vld [vmem:[%s0 + $0x184] sm:$0xff]
  %v74 = vld [vmem:[%s0 + $0x18c] sm:$0xf]
  %v75 = vld [vmem:[%s0 + $0x190] sm:$0xff]
  %v76 = vld [vmem:[%s0 + $0x198] sm:$0xff]
  %v77 = vld [vmem:[%s0 + $0x1a0] sm:$0xf]
  %v78 = vld [vmem:[%s0 + $0x1a4] sm:$0xff]
  %v79 = vld [vmem:[%s0 + $0x1ac] sm:$0xff]
  %v80 = vld [vmem:[%s0 + $0x1b4] sm:$0xf]
  %v81 = vld [vmem:[%s0 + $0x1b8] sm:$0xff]
  %v82 = vld [vmem:[%s0 + $0x1c0] sm:$0xff]
  %v83 = vld [vmem:[%s0 + $0x1c8] sm:$0xf]
  %v84 = vld [vmem:[%s0 + $0x1cc] sm:$0xff]
  %v85 = vld [vmem:[%s0 + $0x1d4] sm:$0xff]
  %v86 = vld [vmem:[%s0 + $0x1dc] sm:$0xf]
  %v87 = vld [vmem:[%s0 + $0x1e0] sm:$0xff]
  %v88 = vld [vmem:[%s0 + $0x1e8] sm:$0xff]
  %v89 = vld [vmem:[%s0 + $0x1f0] sm:$0xf]
  %v90 = vld [vmem:[%s0 + $0x1f4] sm:$0xff]
  %v91 = vld [vmem:[%s0 + $0x1fc] sm:$0xff]
  %v92 = vld [vmem:[%s0 + $0x204] sm:$0xf]
  %v93 = vld [vmem:[%s0 + $0x208] sm:$0xff]
  %v94 = vld [vmem:[%s0 + $0x210] sm:$0xff]
  %v95 = vld [vmem:[%s0 + $0x218] sm:$0xf]
  %v96 = vld [vmem:[%s0 + $0x21c] sm:$0xff]
  %v97 = vld [vmem:[%s0 + $0x224] sm:$0xff]
  %v98 = vld [vmem:[%s0 + $0x22c] sm:$0xf]
  %v99 = vld [vmem:[%s0 + $0x230] sm:$0xff]
  %v100 = vld [vmem:[%s0 + $0x238] sm:$0xff]
  %v101 = vld [vmem:[%s0 + $0x240] sm:$0xf]
  %v102 = vld [vmem:[%s0 + $0x244] sm:$0xff]
  %v103 = vld [vmem:[%s0 + $0x24c] sm:$0xff]
  %v104 = vld [vmem:[%s0 + $0x254] sm:$0xf]
  %v105 = vld [vmem:[%s0 + $0x258] sm:$0xff]
  %v106 = vld [vmem:[%s0 + $0x260] sm:$0xff]
  %v107 = vld [vmem:[%s0 + $0x268] sm:$0xf]
  %v108 = vld [vmem:[%s0 + $0x26c] sm:$0xff]
  %v109 = vld [vmem:[%s0 + $0x274] sm:$0xff]
  %v110 = vld [vmem:[%s0 + $0x27c] sm:$0xf]
  %v111 = vld [vmem:[%s1] sm:$0xf]
  %v112 = vld [vmem:[%s1 + $0x4] sm:$0xf]
  %v113 = vld [vmem:[%s1 + $0x8] sm:$0xf]
  %v114 = vld [vmem:[%s1 + $0xc] sm:$0xf]
  %v115 = vld [vmem:[%s1 + $0x10] sm:$0xf]
  %v116 = vld [vmem:[%s1 + $0x14] sm:$0xf]
  %v117 = vld [vmem:[%s1 + $0x18] sm:$0xf]
  %v118 = vld [vmem:[%s1 + $0x1c] sm:$0xf]
  %v119 = vld [vmem:[%s1 + $0x20] sm:$0xf]
  %v120 = vld [vmem:[%s1 + $0x24] sm:$0xf]
  %v121 = vld [vmem:[%s1 + $0x28] sm:$0xf]
  %v122 = vld [vmem:[%s1 + $0x2c] sm:$0xf]
  %v123 = vld [vmem:[%s1 + $0x30] sm:$0xf]
  %v124 = vld [vmem:[%s1 + $0x34] sm:$0xf]
  %v125 = vld [vmem:[%s1 + $0x38] sm:$0xf]
  %v126 = vld [vmem:[%s1 + $0x3c] sm:$0xf]
  %v127 = vld [vmem:[%s1 + $0x40] sm:$0xf]
  %v128 = vld [vmem:[%s1 + $0x44] sm:$0xf]
  %v129 = vld [vmem:[%s1 + $0x48] sm:$0xf]
  %v130 = vld [vmem:[%s1 + $0x4c] sm:$0xf]
  %v131 = vld [vmem:[%s1 + $0x50] sm:$0xf]
  %v132 = vld [vmem:[%s1 + $0x54] sm:$0xf]
  %v133 = vld [vmem:[%s1 + $0x58] sm:$0xf]
  %v134 = vld [vmem:[%s1 + $0x5c] sm:$0xf]
  %v135 = vld [vmem:[%s1 + $0x60] sm:$0xf]
  %v136 = vld [vmem:[%s1 + $0x64] sm:$0xf]
  %v137 = vld [vmem:[%s1 + $0x68] sm:$0xf]
  %v138 = vld [vmem:[%s1 + $0x6c] sm:$0xf]
  %v139 = vld [vmem:[%s1 + $0x70] sm:$0xf]
  %v140 = vld [vmem:[%s1 + $0x74] sm:$0xf]
  %v141 = vld [vmem:[%s1 + $0x78] sm:$0xf]
  %v142 = vld [vmem:[%s1 + $0x7c] sm:$0xf]
  %v143 = vld [vmem:[%s1 + $0x80] sm:$0xf]
  %v144 = vld [vmem:[%s1 + $0x84] sm:$0xf]
  %v145 = vld [vmem:[%s1 + $0x88] sm:$0xf]
  %v146 = vld [vmem:[%s1 + $0x8c] sm:$0xf]
  %v147 = vld [vmem:[%s1 + $0x90] sm:$0xf]
  %v148 = vld [vmem:[%s1 + $0x94] sm:$0xf]
  %v149 = vld [vmem:[%s1 + $0x98] sm:$0xf]
  %v150 = vld [vmem:[%s1 + $0x9c] sm:$0xf]
  %v151 = vld [vmem:[%s1 + $0xa0] sm:$0xf]
  %v152 = vld [vmem:[%s1 + $0xa4] sm:$0xf]
  %v153 = vld [vmem:[%s1 + $0xa8] sm:$0xf]
  %v154 = vld [vmem:[%s1 + $0xac] sm:$0xf]
  %v155 = vld [vmem:[%s1 + $0xb0] sm:$0xf]
  %v156 = vld [vmem:[%s1 + $0xb4] sm:$0xf]
  %v157 = vld [vmem:[%s1 + $0xb8] sm:$0xf]
  %v158 = vld [vmem:[%s1 + $0xbc] sm:$0xf]
  %v159 = vld [vmem:[%s1 + $0xc0] sm:$0xf]
  %v160 = vld [vmem:[%s1 + $0xc4] sm:$0xf]
  %v161 = vld [vmem:[%s1 + $0xc8] sm:$0xf]
  %v162 = vld [vmem:[%s1 + $0xcc] sm:$0xf]
  %v163 = vld [vmem:[%s1 + $0xd0] sm:$0xf]
  %v164 = vld [vmem:[%s1 + $0xd4] sm:$0xf]
  %v165 = vld [vmem:[%s1 + $0xd8] sm:$0xf]
  %v166 = vld [vmem:[%s1 + $0xdc] sm:$0xf]
  %v167 = vld [vmem:[%s1 + $0xe0] sm:$0xf]
  %v168 = vld [vmem:[%s1 + $0xe4] sm:$0xf]
  %v169 = vld [vmem:[%s1 + $0xe8] sm:$0xf]
  %v170 = vld [vmem:[%s1 + $0xec] sm:$0xf]
  %v171 = vld [vmem:[%s1 + $0xf0] sm:$0xf]
  %v172 = vld [vmem:[%s1 + $0xf4] sm:$0xf]
  %v173 = vld [vmem:[%s1 + $0xf8] sm:$0xf]
  %v174 = vld [vmem:[%s1 + $0xfc] sm:$0xf]
  %v175 = vld [vmem:[%s1 + $0x100] sm:$0xf]
  %v176 = vld [vmem:[%s1 + $0x104] sm:$0xf]
  %v177 = vld [vmem:[%s1 + $0x108] sm:$0xf]
  %v178 = vld [vmem:[%s1 + $0x10c] sm:$0xf]
  %v179 = vld [vmem:[%s1 + $0x110] sm:$0xf]
  %v180 = vld [vmem:[%s1 + $0x114] sm:$0xf]
  %v181 = vld [vmem:[%s1 + $0x118] sm:$0xf]
  %v182 = vld [vmem:[%s1 + $0x11c] sm:$0xf]
  %v183 = vld [vmem:[%s1 + $0x120] sm:$0xf]
  %v184 = vld [vmem:[%s1 + $0x124] sm:$0xf]
  %v185 = vld [vmem:[%s1 + $0x128] sm:$0xf]
  %v186 = vld [vmem:[%s2] sm:$0x1]
  %v188 = vlaneseq
  %v189 = vshrl.u32 %v188, 7
  %v190 = vsub.s32 0, %v189
  %v191 = vrot.slane %v186, %v190
  %v289 = vunpack.c.l.b16 %v15
  %v290 = vunpack.c.h.b16 %v15
  %v291 = vunpack.c.l.b16 %v16
  %v292 = vunpack.c.h.b16 %v16
  %v293 = vunpack.c.l.b16 %v17
  %v294 = vunpack.c.l.b16 %v18
  %v295 = vunpack.c.h.b16 %v18
  %v296 = vunpack.c.l.b16 %v19
  %v297 = vunpack.c.h.b16 %v19
  %v298 = vunpack.c.l.b16 %v20
  %v299 = vunpack.c.l.b16 %v21
  %v300 = vunpack.c.h.b16 %v21
  %v301 = vunpack.c.l.b16 %v22
  %v302 = vunpack.c.h.b16 %v22
  %v303 = vunpack.c.l.b16 %v23
  %v304 = vunpack.c.l.b16 %v24
  %v305 = vunpack.c.h.b16 %v24
  %v306 = vunpack.c.l.b16 %v25
  %v307 = vunpack.c.h.b16 %v25
  %v308 = vunpack.c.l.b16 %v26
  %v309 = vunpack.c.l.b16 %v27
  %v310 = vunpack.c.h.b16 %v27
  %v311 = vunpack.c.l.b16 %v28
  %v312 = vunpack.c.h.b16 %v28
  %v313 = vunpack.c.l.b16 %v29
  %v314 = vunpack.c.l.b16 %v30
  %v315 = vunpack.c.h.b16 %v30
  %v316 = vunpack.c.l.b16 %v31
  %v317 = vunpack.c.h.b16 %v31
  %v318 = vunpack.c.l.b16 %v32
  %v319 = vunpack.c.l.b16 %v33
  %v320 = vunpack.c.h.b16 %v33
  %v321 = vunpack.c.l.b16 %v34
  %v322 = vunpack.c.h.b16 %v34
  %v323 = vunpack.c.l.b16 %v35
  %v324 = vunpack.c.l.b16 %v36
  %v325 = vunpack.c.h.b16 %v36
  %v326 = vunpack.c.l.b16 %v37
  %v327 = vunpack.c.h.b16 %v37
  %v328 = vunpack.c.l.b16 %v38
  %v329 = vunpack.c.l.b16 %v39
  %v330 = vunpack.c.h.b16 %v39
  %v331 = vunpack.c.l.b16 %v40
  %v332 = vunpack.c.h.b16 %v40
  %v333 = vunpack.c.l.b16 %v41
  %v334 = vunpack.c.l.b16 %v42
  %v335 = vunpack.c.h.b16 %v42
  %v336 = vunpack.c.l.b16 %v43
  %v337 = vunpack.c.h.b16 %v43
  %v338 = vunpack.c.l.b16 %v44
  %v339 = vunpack.c.l.b16 %v45
  %v340 = vunpack.c.h.b16 %v45
  %v341 = vunpack.c.l.b16 %v46
  %v342 = vunpack.c.h.b16 %v46
  %v343 = vunpack.c.l.b16 %v47
  %v344 = vunpack.c.l.b16 %v48
  %v345 = vunpack.c.h.b16 %v48
  %v346 = vunpack.c.l.b16 %v49
  %v347 = vunpack.c.h.b16 %v49
  %v348 = vunpack.c.l.b16 %v50
  %v349 = vunpack.c.l.b16 %v51
  %v350 = vunpack.c.h.b16 %v51
  %v351 = vunpack.c.l.b16 %v52
  %v352 = vunpack.c.h.b16 %v52
  %v353 = vunpack.c.l.b16 %v53
  %v354 = vunpack.c.l.b16 %v54
  %v355 = vunpack.c.h.b16 %v54
  %v356 = vunpack.c.l.b16 %v55
  %v357 = vunpack.c.h.b16 %v55
  %v358 = vunpack.c.l.b16 %v56
  %v359 = vunpack.c.l.b16 %v57
  %v360 = vunpack.c.h.b16 %v57
  %v361 = vunpack.c.l.b16 %v58
  %v362 = vunpack.c.h.b16 %v58
  %v363 = vunpack.c.l.b16 %v59
  %v364 = vunpack.c.l.b16 %v60
  %v365 = vunpack.c.h.b16 %v60
  %v366 = vunpack.c.l.b16 %v61
  %v367 = vunpack.c.h.b16 %v61
  %v368 = vunpack.c.l.b16 %v62
  %v369 = vunpack.c.l.b16 %v63
  %v370 = vunpack.c.h.b16 %v63
  %v371 = vunpack.c.l.b16 %v64
  %v372 = vunpack.c.h.b16 %v64
  %v373 = vunpack.c.l.b16 %v65
  %v374 = vunpack.c.l.b16 %v66
  %v375 = vunpack.c.h.b16 %v66
  %v376 = vunpack.c.l.b16 %v67
  %v377 = vunpack.c.h.b16 %v67
  %v378 = vunpack.c.l.b16 %v68
  %v379 = vunpack.c.l.b16 %v69
  %v380 = vunpack.c.h.b16 %v69
  %v381 = vunpack.c.l.b16 %v70
  %v382 = vunpack.c.h.b16 %v70
  %v383 = vunpack.c.l.b16 %v71
  %v384 = vunpack.c.l.b16 %v72
  %v385 = vunpack.c.h.b16 %v72
  %v386 = vunpack.c.l.b16 %v73
  %v387 = vunpack.c.h.b16 %v73
  %v388 = vunpack.c.l.b16 %v74
  %v389 = vunpack.c.l.b16 %v75
  %v390 = vunpack.c.h.b16 %v75
  %v391 = vunpack.c.l.b16 %v76
  %v392 = vunpack.c.h.b16 %v76
  %v393 = vunpack.c.l.b16 %v77
  %v394 = vunpack.c.l.b16 %v78
  %v395 = vunpack.c.h.b16 %v78
  %v396 = vunpack.c.l.b16 %v79
  %v397 = vunpack.c.h.b16 %v79
  %v398 = vunpack.c.l.b16 %v80
  %v399 = vunpack.c.l.b16 %v81
  %v400 = vunpack.c.h.b16 %v81
  %v401 = vunpack.c.l.b16 %v82
  %v402 = vunpack.c.h.b16 %v82
  %v403 = vunpack.c.l.b16 %v83
  %v404 = vunpack.c.l.b16 %v84
  %v405 = vunpack.c.h.b16 %v84
  %v406 = vunpack.c.l.b16 %v85
  %v407 = vunpack.c.h.b16 %v85
  %v408 = vunpack.c.l.b16 %v86
  %v409 = vunpack.c.l.b16 %v87
  %v410 = vunpack.c.h.b16 %v87
  %v411 = vunpack.c.l.b16 %v88
  %v412 = vunpack.c.h.b16 %v88
  %v413 = vunpack.c.l.b16 %v89
  %v414 = vunpack.c.l.b16 %v90
  %v415 = vunpack.c.h.b16 %v90
  %v416 = vunpack.c.l.b16 %v91
  %v417 = vunpack.c.h.b16 %v91
  %v418 = vunpack.c.l.b16 %v92
  %v419 = vunpack.c.l.b16 %v93
  %v420 = vunpack.c.h.b16 %v93
  %v421 = vunpack.c.l.b16 %v94
  %v422 = vunpack.c.h.b16 %v94
  %v423 = vunpack.c.l.b16 %v95
  %v424 = vunpack.c.l.b16 %v96
  %v425 = vunpack.c.h.b16 %v96
  %v426 = vunpack.c.l.b16 %v97
  %v427 = vunpack.c.h.b16 %v97
  %v428 = vunpack.c.l.b16 %v98
  %v429 = vunpack.c.l.b16 %v99
  %v430 = vunpack.c.h.b16 %v99
  %v431 = vunpack.c.l.b16 %v100
  %v432 = vunpack.c.h.b16 %v100
  %v433 = vunpack.c.l.b16 %v101
  %v434 = vunpack.c.l.b16 %v102
  %v435 = vunpack.c.h.b16 %v102
  %v436 = vunpack.c.l.b16 %v103
  %v437 = vunpack.c.h.b16 %v103
  %v438 = vunpack.c.l.b16 %v104
  %v439 = vunpack.c.l.b16 %v105
  %v440 = vunpack.c.h.b16 %v105
  %v441 = vunpack.c.l.b16 %v106
  %v442 = vunpack.c.h.b16 %v106
  %v443 = vunpack.c.l.b16 %v107
  %v444 = vunpack.c.l.b16 %v108
  %v445 = vunpack.c.h.b16 %v108
  %v446 = vunpack.c.l.b16 %v109
  %v447 = vunpack.c.h.b16 %v109
  %v448 = vunpack.c.l.b16 %v110
  %v449 = vpack.c.b16 %v294, %v289
  %v450 = vpack.c.b16 %v295, %v290
  %v451 = vpack.c.b16 %v296, %v291
  %v452 = vpack.c.b16 %v297, %v292
  %v453 = vpack.c.b16 %v298, %v293
  %v454 = vpack.c.b16 %v304, %v299
  %v455 = vpack.c.b16 %v305, %v300
  %v456 = vpack.c.b16 %v306, %v301
  %v457 = vpack.c.b16 %v307, %v302
  %v458 = vpack.c.b16 %v308, %v303
  %v459 = vpack.c.b16 %v314, %v309
  %v460 = vpack.c.b16 %v315, %v310
  %v461 = vpack.c.b16 %v316, %v311
  %v462 = vpack.c.b16 %v317, %v312
  %v463 = vpack.c.b16 %v318, %v313
  %v464 = vpack.c.b16 %v324, %v319
  %v465 = vpack.c.b16 %v325, %v320
  %v466 = vpack.c.b16 %v326, %v321
  %v467 = vpack.c.b16 %v327, %v322
  %v468 = vpack.c.b16 %v328, %v323
  %v469 = vpack.c.b16 %v334, %v329
  %v470 = vpack.c.b16 %v335, %v330
  %v471 = vpack.c.b16 %v336, %v331
  %v472 = vpack.c.b16 %v337, %v332
  %v473 = vpack.c.b16 %v338, %v333
  %v474 = vpack.c.b16 %v344, %v339
  %v475 = vpack.c.b16 %v345, %v340
  %v476 = vpack.c.b16 %v346, %v341
  %v477 = vpack.c.b16 %v347, %v342
  %v478 = vpack.c.b16 %v348, %v343
  %v479 = vpack.c.b16 %v354, %v349
  %v480 = vpack.c.b16 %v355, %v350
  %v481 = vpack.c.b16 %v356, %v351
  %v482 = vpack.c.b16 %v357, %v352
  %v483 = vpack.c.b16 %v358, %v353
  %v484 = vpack.c.b16 %v364, %v359
  %v485 = vpack.c.b16 %v365, %v360
  %v486 = vpack.c.b16 %v366, %v361
  %v487 = vpack.c.b16 %v367, %v362
  %v488 = vpack.c.b16 %v368, %v363
  %v489 = vpack.c.b16 %v374, %v369
  %v490 = vpack.c.b16 %v375, %v370
  %v491 = vpack.c.b16 %v376, %v371
  %v492 = vpack.c.b16 %v377, %v372
  %v493 = vpack.c.b16 %v378, %v373
  %v494 = vpack.c.b16 %v384, %v379
  %v495 = vpack.c.b16 %v385, %v380
  %v496 = vpack.c.b16 %v386, %v381
  %v497 = vpack.c.b16 %v387, %v382
  %v498 = vpack.c.b16 %v388, %v383
  %v499 = vpack.c.b16 %v394, %v389
  %v500 = vpack.c.b16 %v395, %v390
  %v501 = vpack.c.b16 %v396, %v391
  %v502 = vpack.c.b16 %v397, %v392
  %v503 = vpack.c.b16 %v398, %v393
  %v504 = vpack.c.b16 %v404, %v399
  %v505 = vpack.c.b16 %v405, %v400
  %v506 = vpack.c.b16 %v406, %v401
  %v507 = vpack.c.b16 %v407, %v402
  %v508 = vpack.c.b16 %v408, %v403
  %v509 = vpack.c.b16 %v414, %v409
  %v510 = vpack.c.b16 %v415, %v410
  %v511 = vpack.c.b16 %v416, %v411
  %v512 = vpack.c.b16 %v417, %v412
  %v513 = vpack.c.b16 %v418, %v413
  %v514 = vpack.c.b16 %v424, %v419
  %v515 = vpack.c.b16 %v425, %v420
  %v516 = vpack.c.b16 %v426, %v421
  %v517 = vpack.c.b16 %v427, %v422
  %v518 = vpack.c.b16 %v428, %v423
  %v519 = vpack.c.b16 %v434, %v429
  %v520 = vpack.c.b16 %v435, %v430
  %v521 = vpack.c.b16 %v436, %v431
  %v522 = vpack.c.b16 %v437, %v432
  %v523 = vpack.c.b16 %v438, %v433
  %v524 = vpack.c.b16 %v444, %v439
  %v525 = vpack.c.b16 %v445, %v440
  %v526 = vpack.c.b16 %v446, %v441
  %v527 = vpack.c.b16 %v447, %v442
  %v528 = vpack.c.b16 %v448, %v443
  %v668 = vunpack.c.l.b16 %v111
  %v669 = vunpack.c.l.b16 %v112
  %v670 = vunpack.c.l.b16 %v113
  %v671 = vunpack.c.l.b16 %v114
  %v672 = vunpack.c.l.b16 %v115
  %v673 = vunpack.c.l.b16 %v116
  %v674 = vunpack.c.l.b16 %v117
  %v675 = vunpack.c.l.b16 %v118
  %v676 = vunpack.c.l.b16 %v119
  %v677 = vunpack.c.l.b16 %v120
  %v678 = vunpack.c.l.b16 %v121
  %v679 = vunpack.c.l.b16 %v122
  %v680 = vunpack.c.l.b16 %v123
  %v681 = vunpack.c.l.b16 %v124
  %v682 = vunpack.c.l.b16 %v125
  %v683 = vunpack.c.l.b16 %v126
  %v684 = vunpack.c.l.b16 %v127
  %v685 = vunpack.c.l.b16 %v128
  %v686 = vunpack.c.l.b16 %v129
  %v687 = vunpack.c.l.b16 %v130
  %v688 = vunpack.c.l.b16 %v131
  %v689 = vunpack.c.l.b16 %v132
  %v690 = vunpack.c.l.b16 %v133
  %v691 = vunpack.c.l.b16 %v134
  %v692 = vunpack.c.l.b16 %v135
  %v693 = vunpack.c.l.b16 %v136
  %v694 = vunpack.c.l.b16 %v137
  %v695 = vunpack.c.l.b16 %v138
  %v696 = vunpack.c.l.b16 %v139
  %v697 = vunpack.c.l.b16 %v140
  %v698 = vunpack.c.l.b16 %v141
  %v699 = vunpack.c.l.b16 %v142
  %v700 = vunpack.c.l.b16 %v143
  %v701 = vunpack.c.l.b16 %v144
  %v702 = vunpack.c.l.b16 %v145
  %v703 = vunpack.c.l.b16 %v146
  %v704 = vunpack.c.l.b16 %v147
  %v705 = vunpack.c.l.b16 %v148
  %v706 = vunpack.c.l.b16 %v149
  %v707 = vunpack.c.l.b16 %v150
  %v708 = vunpack.c.l.b16 %v151
  %v709 = vunpack.c.l.b16 %v152
  %v710 = vunpack.c.l.b16 %v153
  %v711 = vunpack.c.l.b16 %v154
  %v712 = vunpack.c.l.b16 %v155
  %v713 = vunpack.c.l.b16 %v156
  %v714 = vunpack.c.l.b16 %v157
  %v715 = vunpack.c.l.b16 %v158
  %v716 = vunpack.c.l.b16 %v159
  %v717 = vunpack.c.l.b16 %v160
  %v718 = vunpack.c.l.b16 %v161
  %v719 = vunpack.c.l.b16 %v162
  %v720 = vunpack.c.l.b16 %v163
  %v721 = vunpack.c.l.b16 %v164
  %v722 = vunpack.c.l.b16 %v165
  %v723 = vunpack.c.l.b16 %v166
  %v724 = vunpack.c.l.b16 %v167
  %v725 = vunpack.c.l.b16 %v168
  %v726 = vunpack.c.l.b16 %v169
  %v727 = vunpack.c.l.b16 %v170
  %v728 = vunpack.c.l.b16 %v171
  %v729 = vunpack.c.l.b16 %v172
  %v730 = vunpack.c.l.b16 %v173
  %v731 = vunpack.c.l.b16 %v174
  %v732 = vunpack.c.l.b16 %v175
  %v733 = vunpack.c.l.b16 %v176
  %v734 = vunpack.c.l.b16 %v177
  %v735 = vunpack.c.l.b16 %v178
  %v736 = vunpack.c.l.b16 %v179
  %v737 = vunpack.c.l.b16 %v180
  %v738 = vunpack.c.l.b16 %v181
  %v739 = vunpack.c.l.b16 %v182
  %v740 = vunpack.c.l.b16 %v183
  %v741 = vunpack.c.l.b16 %v184
  %v742 = vunpack.c.l.b16 %v185
  %v743 = vpack.c.b16 %v669, %v668
  %v744 = vpack.c.b16 %v671, %v670
  %v745 = vpack.c.b16 %v673, %v672
  %v746 = vpack.c.b16 %v675, %v674
  %v747 = vpack.c.b16 %v677, %v676
  %v748 = vpack.c.b16 %v679, %v678
  %v749 = vpack.c.b16 %v681, %v680
  %v750 = vpack.c.b16 %v683, %v682
  %v751 = vpack.c.b16 %v685, %v684
  %v752 = vpack.c.b16 %v687, %v686
  %v753 = vpack.c.b16 %v689, %v688
  %v754 = vpack.c.b16 %v691, %v690
  %v755 = vpack.c.b16 %v693, %v692
  %v756 = vpack.c.b16 %v695, %v694
  %v757 = vpack.c.b16 %v697, %v696
  %v758 = vpack.c.b16 %v699, %v698
  %v759 = vpack.c.b16 %v701, %v700
  %v760 = vpack.c.b16 %v703, %v702
  %v761 = vpack.c.b16 %v705, %v704
  %v762 = vpack.c.b16 %v707, %v706
  %v763 = vpack.c.b16 %v709, %v708
  %v764 = vpack.c.b16 %v711, %v710
  %v765 = vpack.c.b16 %v713, %v712
  %v766 = vpack.c.b16 %v715, %v714
  %v767 = vpack.c.b16 %v717, %v716
  %v768 = vpack.c.b16 %v719, %v718
  %v769 = vpack.c.b16 %v721, %v720
  %v770 = vpack.c.b16 %v723, %v722
  %v771 = vpack.c.b16 %v725, %v724
  %v772 = vpack.c.b16 %v727, %v726
  %v773 = vpack.c.b16 %v729, %v728
  %v774 = vpack.c.b16 %v731, %v730
  %v775 = vpack.c.b16 %v733, %v732
  %v776 = vpack.c.b16 %v735, %v734
  %v777 = vpack.c.b16 %v737, %v736
  %v778 = vpack.c.b16 %v739, %v738
  %v779 = vpack.c.b16 %v741, %v740
  %v780 = vpack.c.b16 %v742, %v742
  %vm818 = vcmask 719872
  %v820 = vsel %vm818, %v453, 0
  %v823 = vsel %vm818, %v458, 0
  %v826 = vsel %vm818, %v463, 0
  %v829 = vsel %vm818, %v468, 0
  %v832 = vsel %vm818, %v473, 0
  %v835 = vsel %vm818, %v478, 0
  %v838 = vsel %vm818, %v483, 0
  %v841 = vsel %vm818, %v488, 0
  %v844 = vsel %vm818, %v493, 0
  %v847 = vsel %vm818, %v498, 0
  %v850 = vsel %vm818, %v503, 0
  %v853 = vsel %vm818, %v508, 0
  %v856 = vsel %vm818, %v513, 0
  %v859 = vsel %vm818, %v518, 0
  %v862 = vsel %vm818, %v523, 0
  %v865 = vsel %vm818, %v528, 0
  %vm867 = vcmask 1043456
  %v869 = vsel %vm867, %v780, 0
  %871 = vmatprep.subr.bf16.mxu0 0
  %872 = vmatpush1.bf16.msra.mxu0 %v743
  %873 = vmatprep.subr.bf16.mxu0 0
  %874 = vmatpush1.bf16.msra.mxu0 %v744
  %875 = vmatprep.subr.bf16.mxu0 0
  %876 = vmatpush1.bf16.msra.mxu0 %v745
  %877 = vmatprep.subr.bf16.mxu0 0
  %878 = vmatpush1.bf16.msra.mxu0 %v746
  %879 = vmatprep.subr.bf16.mxu0 0
  %880 = vmatpush1.bf16.msra.mxu0 %v747
  %881 = vmatprep.subr.bf16.mxu0 0
  %882 = vmatpush1.bf16.msra.mxu0 %v748
  %883 = vmatprep.subr.bf16.mxu0 0
  %884 = vmatpush1.bf16.msra.mxu0 %v749
  %885 = vmatprep.subr.bf16.mxu0 0
  %886 = vmatpush1.bf16.msra.mxu0 %v750
  %887 = vmatprep.subr.bf16.mxu0 0
  %888 = vmatpush1.bf16.msra.mxu0 %v751
  %889 = vmatprep.subr.bf16.mxu0 0
  %890 = vmatpush1.bf16.msra.mxu0 %v752
  %891 = vmatprep.subr.bf16.mxu0 0
  %892 = vmatpush1.bf16.msra.mxu0 %v753
  %893 = vmatprep.subr.bf16.mxu0 0
  %894 = vmatpush1.bf16.msra.mxu0 %v754
  %895 = vmatprep.subr.bf16.mxu0 0
  %896 = vmatpush1.bf16.msra.mxu0 %v755
  %897 = vmatprep.subr.bf16.mxu0 0
  %898 = vmatpush1.bf16.msra.mxu0 %v756
  %899 = vmatprep.subr.bf16.mxu0 0
  %900 = vmatpush1.bf16.msra.mxu0 %v757
  %901 = vmatprep.subr.bf16.mxu0 0
  %902 = vmatpush1.bf16.msra.mxu0 %v758
  %903 = vmatprep.mubr.bf16.mxu0 %v450
  %904 = vmatmul.mubr.bf16.gmra.mrb[0].mxu0 %v449
  %v905 = vpop.f32.mrb[0].mxu0
  %v906 = vadd.f32 %v191, %v905
  %v907 = vpop.f32.mrb[0].mxu0
  %v908 = vpop.f32.mrb[0].mxu0
  %v909 = vadd.f32 %v191, %v908
  %v910 = vpop.f32.mrb[0].mxu0
  %911 = vmatprep.mubr.bf16.mxu0 %v455
  %912 = vmatmul.mubr.bf16.gmra.mrb[0].mxu0 %v454
  %v913 = vpop.f32.mrb[0].mxu0
  %v914 = vadd.f32 %v191, %v913
  %v915 = vpop.f32.mrb[0].mxu0
  %v916 = vpop.f32.mrb[0].mxu0
  %v917 = vadd.f32 %v191, %v916
  %v918 = vpop.f32.mrb[0].mxu0
  %919 = vmatprep.mubr.bf16.mxu0 %v460
  %920 = vmatmul.mubr.bf16.gmra.mrb[0].mxu0 %v459
  %v921 = vpop.f32.mrb[0].mxu0
  %v922 = vadd.f32 %v191, %v921
  %v923 = vpop.f32.mrb[0].mxu0
  %v924 = vpop.f32.mrb[0].mxu0
  %v925 = vadd.f32 %v191, %v924
  %v926 = vpop.f32.mrb[0].mxu0
  %927 = vmatprep.mubr.bf16.mxu0 %v465
  %928 = vmatmul.mubr.bf16.gmra.mrb[0].mxu0 %v464
  %v929 = vpop.f32.mrb[0].mxu0
  %v930 = vadd.f32 %v191, %v929
  %v931 = vpop.f32.mrb[0].mxu0
  %v932 = vpop.f32.mrb[0].mxu0
  %v933 = vadd.f32 %v191, %v932
  %v934 = vpop.f32.mrb[0].mxu0
  %935 = vmatprep.mubr.bf16.mxu0 %v470
  %936 = vmatmul.mubr.bf16.gmra.mrb[0].mxu0 %v469
  %v937 = vpop.f32.mrb[0].mxu0
  %v938 = vadd.f32 %v191, %v937
  %v939 = vpop.f32.mrb[0].mxu0
  %v940 = vpop.f32.mrb[0].mxu0
  %v941 = vadd.f32 %v191, %v940
  %v942 = vpop.f32.mrb[0].mxu0
  %943 = vmatprep.mubr.bf16.mxu0 %v475
  %944 = vmatmul.mubr.bf16.gmra.mrb[0].mxu0 %v474
  %v945 = vpop.f32.mrb[0].mxu0
  %v946 = vadd.f32 %v191, %v945
  %v947 = vpop.f32.mrb[0].mxu0
  %v948 = vpop.f32.mrb[0].mxu0
  %v949 = vadd.f32 %v191, %v948
  %v950 = vpop.f32.mrb[0].mxu0
  %951 = vmatprep.mubr.bf16.mxu0 %v480
  %952 = vmatmul.mubr.bf16.gmra.mrb[0].mxu0 %v479
  %v953 = vpop.f32.mrb[0].mxu0
  %v954 = vadd.f32 %v191, %v953
  %v955 = vpop.f32.mrb[0].mxu0
  %v956 = vpop.f32.mrb[0].mxu0
  %v957 = vadd.f32 %v191, %v956
  %v958 = vpop.f32.mrb[0].mxu0
  %959 = vmatprep.mubr.bf16.mxu0 %v485
  %960 = vmatmul.mubr.bf16.gmra.mrb[0].mxu0 %v484
  %v961 = vpop.f32.mrb[0].mxu0
  %v962 = vadd.f32 %v191, %v961
  %v963 = vpop.f32.mrb[0].mxu0
  %v964 = vpop.f32.mrb[0].mxu0
  %v965 = vadd.f32 %v191, %v964
  %v966 = vpop.f32.mrb[0].mxu0
  %967 = vmatprep.mubr.bf16.mxu0 %v490
  %968 = vmatmul.mubr.bf16.gmra.mrb[0].mxu0 %v489
  %v969 = vpop.f32.mrb[0].mxu0
  %v970 = vadd.f32 %v191, %v969
  %v971 = vpop.f32.mrb[0].mxu0
  %v972 = vpop.f32.mrb[0].mxu0
  %v973 = vadd.f32 %v191, %v972
  %v974 = vpop.f32.mrb[0].mxu0
  %975 = vmatprep.mubr.bf16.mxu0 %v495
  %976 = vmatmul.mubr.bf16.gmra.mrb[0].mxu0 %v494
  %v977 = vpop.f32.mrb[0].mxu0
  %v978 = vadd.f32 %v191, %v977
  %v979 = vpop.f32.mrb[0].mxu0
  %v980 = vpop.f32.mrb[0].mxu0
  %v981 = vadd.f32 %v191, %v980
  %v982 = vpop.f32.mrb[0].mxu0
  %983 = vmatprep.mubr.bf16.mxu0 %v500
  %984 = vmatmul.mubr.bf16.gmra.mrb[0].mxu0 %v499
  %v985 = vpop.f32.mrb[0].mxu0
  %v986 = vadd.f32 %v191, %v985
  %v987 = vpop.f32.mrb[0].mxu0
  %v988 = vpop.f32.mrb[0].mxu0
  %v989 = vadd.f32 %v191, %v988
  %v990 = vpop.f32.mrb[0].mxu0
  %991 = vmatprep.mubr.bf16.mxu0 %v505
  %992 = vmatmul.mubr.bf16.gmra.mrb[0].mxu0 %v504
  %v993 = vpop.f32.mrb[0].mxu0
  %v994 = vadd.f32 %v191, %v993
  %v995 = vpop.f32.mrb[0].mxu0
  %v996 = vpop.f32.mrb[0].mxu0
  %v997 = vadd.f32 %v191, %v996
  %v998 = vpop.f32.mrb[0].mxu0
  %999 = vmatprep.mubr.bf16.mxu0 %v510
  %1000 = vmatmul.mubr.bf16.gmra.mrb[0].mxu0 %v509
  %v1001 = vpop.f32.mrb[0].mxu0
  %v1002 = vadd.f32 %v191, %v1001
  %v1003 = vpop.f32.mrb[0].mxu0
  %v1004 = vpop.f32.mrb[0].mxu0
  %v1005 = vadd.f32 %v191, %v1004
  %v1006 = vpop.f32.mrb[0].mxu0
  %1007 = vmatprep.mubr.bf16.mxu0 %v515
  %1008 = vmatmul.mubr.bf16.gmra.mrb[0].mxu0 %v514
  %v1009 = vpop.f32.mrb[0].mxu0
  %v1010 = vadd.f32 %v191, %v1009
  %v1011 = vpop.f32.mrb[0].mxu0
  %v1012 = vpop.f32.mrb[0].mxu0
  %v1013 = vadd.f32 %v191, %v1012
  %v1014 = vpop.f32.mrb[0].mxu0
  %1015 = vmatprep.mubr.bf16.mxu0 %v520
  %1016 = vmatmul.mubr.bf16.gmra.mrb[0].mxu0 %v519
  %v1017 = vpop.f32.mrb[0].mxu0
  %v1018 = vadd.f32 %v191, %v1017
  %v1019 = vpop.f32.mrb[0].mxu0
  %v1020 = vpop.f32.mrb[0].mxu0
  %v1021 = vadd.f32 %v191, %v1020
  %v1022 = vpop.f32.mrb[0].mxu0
  %1023 = vmatprep.mubr.bf16.mxu0 %v525
  %1024 = vmatmul.mubr.bf16.gmra.mrb[0].mxu0 %v524
  %v1025 = vpop.f32.mrb[0].mxu0
  %v1026 = vadd.f32 %v191, %v1025
  %v1027 = vpop.f32.mrb[0].mxu0
  %v1028 = vpop.f32.mrb[0].mxu0
  %v1029 = vadd.f32 %v191, %v1028
  %v1030 = vpop.f32.mrb[0].mxu0
  %1031 = vdwg.mxu0
  %1032 = vmatprep.subr.bf16.mxu0 0
  %1033 = vmatpush1.bf16.msra.mxu0 %v759
  %1034 = vmatprep.subr.bf16.mxu0 0
  %1035 = vmatpush1.bf16.msra.mxu0 %v760
  %1036 = vmatprep.subr.bf16.mxu0 0
  %1037 = vmatpush1.bf16.msra.mxu0 %v761
  %1038 = vmatprep.subr.bf16.mxu0 0
  %1039 = vmatpush1.bf16.msra.mxu0 %v762
  %1040 = vmatprep.subr.bf16.mxu0 0
  %1041 = vmatpush1.bf16.msra.mxu0 %v763
  %1042 = vmatprep.subr.bf16.mxu0 0
  %1043 = vmatpush1.bf16.msra.mxu0 %v764
  %1044 = vmatprep.subr.bf16.mxu0 0
  %1045 = vmatpush1.bf16.msra.mxu0 %v765
  %1046 = vmatprep.subr.bf16.mxu0 0
  %1047 = vmatpush1.bf16.msra.mxu0 %v766
  %1048 = vmatprep.subr.bf16.mxu0 0
  %1049 = vmatpush1.bf16.msra.mxu0 %v767
  %1050 = vmatprep.subr.bf16.mxu0 0
  %1051 = vmatpush1.bf16.msra.mxu0 %v768
  %1052 = vmatprep.subr.bf16.mxu0 0
  %1053 = vmatpush1.bf16.msra.mxu0 %v769
  %1054 = vmatprep.subr.bf16.mxu0 0
  %1055 = vmatpush1.bf16.msra.mxu0 %v770
  %1056 = vmatprep.subr.bf16.mxu0 0
  %1057 = vmatpush1.bf16.msra.mxu0 %v771
  %1058 = vmatprep.subr.bf16.mxu0 0
  %1059 = vmatpush1.bf16.msra.mxu0 %v772
  %1060 = vmatprep.subr.bf16.mxu0 0
  %1061 = vmatpush1.bf16.msra.mxu0 %v773
  %1062 = vmatprep.subr.bf16.mxu0 0
  %1063 = vmatpush1.bf16.msra.mxu0 %v774
  %1064 = vmatprep.mubr.bf16.mxu0 %v452
  %1065 = vmatmul.mubr.bf16.gmra.mrb[0].mxu0 %v451
  %v1066 = vpop.f32.mrb[0].mxu0
  %v1067 = vadd.f32 %v906, %v1066
  %v1068 = vpop.f32.mrb[0].mxu0
  %v1069 = vpop.f32.mrb[0].mxu0
  %v1070 = vadd.f32 %v909, %v1069
  %v1071 = vpop.f32.mrb[0].mxu0
  %1072 = vmatprep.mubr.bf16.mxu0 %v457
  %1073 = vmatmul.mubr.bf16.gmra.mrb[0].mxu0 %v456
  %v1074 = vpop.f32.mrb[0].mxu0
  %v1075 = vadd.f32 %v914, %v1074
  %v1076 = vpop.f32.mrb[0].mxu0
  %v1077 = vpop.f32.mrb[0].mxu0
  %v1078 = vadd.f32 %v917, %v1077
  %v1079 = vpop.f32.mrb[0].mxu0
  %1080 = vmatprep.mubr.bf16.mxu0 %v462
  %1081 = vmatmul.mubr.bf16.gmra.mrb[0].mxu0 %v461
  %v1082 = vpop.f32.mrb[0].mxu0
  %v1083 = vadd.f32 %v922, %v1082
  %v1084 = vpop.f32.mrb[0].mxu0
  %v1085 = vpop.f32.mrb[0].mxu0
  %v1086 = vadd.f32 %v925, %v1085
  %v1087 = vpop.f32.mrb[0].mxu0
  %1088 = vmatprep.mubr.bf16.mxu0 %v467
  %1089 = vmatmul.mubr.bf16.gmra.mrb[0].mxu0 %v466
  %v1090 = vpop.f32.mrb[0].mxu0
  %v1091 = vadd.f32 %v930, %v1090
  %v1092 = vpop.f32.mrb[0].mxu0
  %v1093 = vpop.f32.mrb[0].mxu0
  %v1094 = vadd.f32 %v933, %v1093
  %v1095 = vpop.f32.mrb[0].mxu0
  %1096 = vmatprep.mubr.bf16.mxu0 %v472
  %1097 = vmatmul.mubr.bf16.gmra.mrb[0].mxu0 %v471
  %v1098 = vpop.f32.mrb[0].mxu0
  %v1099 = vadd.f32 %v938, %v1098
  %v1100 = vpop.f32.mrb[0].mxu0
  %v1101 = vpop.f32.mrb[0].mxu0
  %v1102 = vadd.f32 %v941, %v1101
  %v1103 = vpop.f32.mrb[0].mxu0
  %1104 = vmatprep.mubr.bf16.mxu0 %v477
  %1105 = vmatmul.mubr.bf16.gmra.mrb[0].mxu0 %v476
  %v1106 = vpop.f32.mrb[0].mxu0
  %v1107 = vadd.f32 %v946, %v1106
  %v1108 = vpop.f32.mrb[0].mxu0
  %v1109 = vpop.f32.mrb[0].mxu0
  %v1110 = vadd.f32 %v949, %v1109
  %v1111 = vpop.f32.mrb[0].mxu0
  %1112 = vmatprep.mubr.bf16.mxu0 %v482
  %1113 = vmatmul.mubr.bf16.gmra.mrb[0].mxu0 %v481
  %v1114 = vpop.f32.mrb[0].mxu0
  %v1115 = vadd.f32 %v954, %v1114
  %v1116 = vpop.f32.mrb[0].mxu0
  %v1117 = vpop.f32.mrb[0].mxu0
  %v1118 = vadd.f32 %v957, %v1117
  %v1119 = vpop.f32.mrb[0].mxu0
  %1120 = vmatprep.mubr.bf16.mxu0 %v487
  %1121 = vmatmul.mubr.bf16.gmra.mrb[0].mxu0 %v486
  %v1122 = vpop.f32.mrb[0].mxu0
  %v1123 = vadd.f32 %v962, %v1122
  %v1124 = vpop.f32.mrb[0].mxu0
  %v1125 = vpop.f32.mrb[0].mxu0
  %v1126 = vadd.f32 %v965, %v1125
  %v1127 = vpop.f32.mrb[0].mxu0
  %1128 = vmatprep.mubr.bf16.mxu0 %v492
  %1129 = vmatmul.mubr.bf16.gmra.mrb[0].mxu0 %v491
  %v1130 = vpop.f32.mrb[0].mxu0
  %v1131 = vadd.f32 %v970, %v1130
  %v1132 = vpop.f32.mrb[0].mxu0
  %v1133 = vpop.f32.mrb[0].mxu0
  %v1134 = vadd.f32 %v973, %v1133
  %v1135 = vpop.f32.mrb[0].mxu0
  %1136 = vmatprep.mubr.bf16.mxu0 %v497
  %1137 = vmatmul.mubr.bf16.gmra.mrb[0].mxu0 %v496
  %v1138 = vpop.f32.mrb[0].mxu0
  %v1139 = vadd.f32 %v978, %v1138
  %v1140 = vpop.f32.mrb[0].mxu0
  %v1141 = vpop.f32.mrb[0].mxu0
  %v1142 = vadd.f32 %v981, %v1141
  %v1143 = vpop.f32.mrb[0].mxu0
  %1144 = vmatprep.mubr.bf16.mxu0 %v502
  %1145 = vmatmul.mubr.bf16.gmra.mrb[0].mxu0 %v501
  %v1146 = vpop.f32.mrb[0].mxu0
  %v1147 = vadd.f32 %v986, %v1146
  %v1148 = vpop.f32.mrb[0].mxu0
  %v1149 = vpop.f32.mrb[0].mxu0
  %v1150 = vadd.f32 %v989, %v1149
  %v1151 = vpop.f32.mrb[0].mxu0
  %1152 = vmatprep.mubr.bf16.mxu0 %v507
  %1153 = vmatmul.mubr.bf16.gmra.mrb[0].mxu0 %v506
  %v1154 = vpop.f32.mrb[0].mxu0
  %v1155 = vadd.f32 %v994, %v1154
  %v1156 = vpop.f32.mrb[0].mxu0
  %v1157 = vpop.f32.mrb[0].mxu0
  %v1158 = vadd.f32 %v997, %v1157
  %v1159 = vpop.f32.mrb[0].mxu0
  %1160 = vmatprep.mubr.bf16.mxu0 %v512
  %1161 = vmatmul.mubr.bf16.gmra.mrb[0].mxu0 %v511
  %v1162 = vpop.f32.mrb[0].mxu0
  %v1163 = vadd.f32 %v1002, %v1162
  %v1164 = vpop.f32.mrb[0].mxu0
  %v1165 = vpop.f32.mrb[0].mxu0
  %v1166 = vadd.f32 %v1005, %v1165
  %v1167 = vpop.f32.mrb[0].mxu0
  %1168 = vmatprep.mubr.bf16.mxu0 %v517
  %1169 = vmatmul.mubr.bf16.gmra.mrb[0].mxu0 %v516
  %v1170 = vpop.f32.mrb[0].mxu0
  %v1171 = vadd.f32 %v1010, %v1170
  %v1172 = vpop.f32.mrb[0].mxu0
  %v1173 = vpop.f32.mrb[0].mxu0
  %v1174 = vadd.f32 %v1013, %v1173
  %v1175 = vpop.f32.mrb[0].mxu0
  %1176 = vmatprep.mubr.bf16.mxu0 %v522
  %1177 = vmatmul.mubr.bf16.gmra.mrb[0].mxu0 %v521
  %v1178 = vpop.f32.mrb[0].mxu0
  %v1179 = vadd.f32 %v1018, %v1178
  %v1180 = vpop.f32.mrb[0].mxu0
  %v1181 = vpop.f32.mrb[0].mxu0
  %v1182 = vadd.f32 %v1021, %v1181
  %v1183 = vpop.f32.mrb[0].mxu0
  %1184 = vmatprep.mubr.bf16.mxu0 %v527
  %1185 = vmatmul.mubr.bf16.gmra.mrb[0].mxu0 %v526
  %v1186 = vpop.f32.mrb[0].mxu0
  %v1187 = vadd.f32 %v1026, %v1186
  %v1188 = vpop.f32.mrb[0].mxu0
  %v1189 = vpop.f32.mrb[0].mxu0
  %v1190 = vadd.f32 %v1029, %v1189
  %v1191 = vpop.f32.mrb[0].mxu0
  %1192 = vdwg.mxu0
  %1193 = vmatprep.subr.bf16.mxu0 0
  %1194 = vmatpush1.bf16.msra.mxu0 %v775
  %1195 = vmatprep.subr.bf16.mxu0 0
  %1196 = vmatpush1.bf16.msra.mxu0 %v776
  %1197 = vmatprep.subr.bf16.mxu0 0
  %1198 = vmatpush1.bf16.msra.mxu0 %v777
  %1199 = vmatprep.subr.bf16.mxu0 0
  %1200 = vmatpush1.bf16.msra.mxu0 %v778
  %1201 = vmatprep.subr.bf16.mxu0 0
  %1202 = vmatpush1.bf16.msra.mxu0 %v779
  %1203 = vmatprep.subr.bf16.mxu0 0
  %1204 = vmatpush1.bf16.msra.mxu0 %v869
  %1205 = vmatprep.subr.bf16.mxu0 0
  %1206 = vmatpush1.bf16.msra.mxu0 0
  %1207 = vmatprep.subr.bf16.mxu0 0
  %1208 = vmatpush1.bf16.msra.mxu0 0
  %1209 = vmatprep.subr.bf16.mxu0 0
  %1210 = vmatpush1.bf16.msra.mxu0 0
  %1211 = vmatprep.subr.bf16.mxu0 0
  %1212 = vmatpush1.bf16.msra.mxu0 0
  %1213 = vmatprep.subr.bf16.mxu0 0
  %1214 = vmatpush1.bf16.msra.mxu0 0
  %1215 = vmatprep.subr.bf16.mxu0 0
  %1216 = vmatpush1.bf16.msra.mxu0 0
  %1217 = vmatprep.subr.bf16.mxu0 0
  %1218 = vmatpush1.bf16.msra.mxu0 0
  %1219 = vmatprep.subr.bf16.mxu0 0
  %1220 = vmatpush1.bf16.msra.mxu0 0
  %1221 = vmatprep.subr.bf16.mxu0 0
  %1222 = vmatpush1.bf16.msra.mxu0 0
  %1223 = vmatprep.subr.bf16.mxu0 0
  %1224 = vmatpush1.bf16.msra.mxu0 0
  %1225 = vmatprep.mubr.bf16.mxu0 0
  %1226 = vmatmul.mubr.bf16.gmra.mrb[0].mxu0 %v820
  %v1227 = vpop.f32.mrb[0].mxu0
  %v1228 = vadd.f32 %v1067, %v1227
  %v1229 = vpop.f32.mrb[0].mxu0
  %v1230 = vpop.f32.mrb[0].mxu0
  %v1231 = vadd.f32 %v1070, %v1230
  %v1232 = vpop.f32.mrb[0].mxu0
  %1233 = vmatprep.mubr.bf16.mxu0 0
  %1234 = vmatmul.mubr.bf16.gmra.mrb[0].mxu0 %v823
  %v1235 = vpop.f32.mrb[0].mxu0
  %v1236 = vadd.f32 %v1075, %v1235
  %v1237 = vpop.f32.mrb[0].mxu0
  %v1238 = vpop.f32.mrb[0].mxu0
  %v1239 = vadd.f32 %v1078, %v1238
  %v1240 = vpop.f32.mrb[0].mxu0
  %1241 = vmatprep.mubr.bf16.mxu0 0
  %1242 = vmatmul.mubr.bf16.gmra.mrb[0].mxu0 %v826
  %v1243 = vpop.f32.mrb[0].mxu0
  %v1244 = vadd.f32 %v1083, %v1243
  %v1245 = vpop.f32.mrb[0].mxu0
  %v1246 = vpop.f32.mrb[0].mxu0
  %v1247 = vadd.f32 %v1086, %v1246
  %v1248 = vpop.f32.mrb[0].mxu0
  %1249 = vmatprep.mubr.bf16.mxu0 0
  %1250 = vmatmul.mubr.bf16.gmra.mrb[0].mxu0 %v829
  %v1251 = vpop.f32.mrb[0].mxu0
  %v1252 = vadd.f32 %v1091, %v1251
  %v1253 = vpop.f32.mrb[0].mxu0
  %v1254 = vpop.f32.mrb[0].mxu0
  %v1255 = vadd.f32 %v1094, %v1254
  %v1256 = vpop.f32.mrb[0].mxu0
  %1257 = vmatprep.mubr.bf16.mxu0 0
  %1258 = vmatmul.mubr.bf16.gmra.mrb[0].mxu0 %v832
  %v1259 = vpop.f32.mrb[0].mxu0
  %v1260 = vadd.f32 %v1099, %v1259
  %v1261 = vpop.f32.mrb[0].mxu0
  %v1262 = vpop.f32.mrb[0].mxu0
  %v1263 = vadd.f32 %v1102, %v1262
  %v1264 = vpop.f32.mrb[0].mxu0
  %1265 = vmatprep.mubr.bf16.mxu0 0
  %1266 = vmatmul.mubr.bf16.gmra.mrb[0].mxu0 %v835
  %v1267 = vpop.f32.mrb[0].mxu0
  %v1268 = vadd.f32 %v1107, %v1267
  %v1269 = vpop.f32.mrb[0].mxu0
  %v1270 = vpop.f32.mrb[0].mxu0
  %v1271 = vadd.f32 %v1110, %v1270
  %v1272 = vpop.f32.mrb[0].mxu0
  %1273 = vmatprep.mubr.bf16.mxu0 0
  %1274 = vmatmul.mubr.bf16.gmra.mrb[0].mxu0 %v838
  %v1275 = vpop.f32.mrb[0].mxu0
  %v1276 = vadd.f32 %v1115, %v1275
  %v1277 = vpop.f32.mrb[0].mxu0
  %v1278 = vpop.f32.mrb[0].mxu0
  %v1279 = vadd.f32 %v1118, %v1278
  %v1280 = vpop.f32.mrb[0].mxu0
  %1281 = vmatprep.mubr.bf16.mxu0 0
  %1282 = vmatmul.mubr.bf16.gmra.mrb[0].mxu0 %v841
  %v1283 = vpop.f32.mrb[0].mxu0
  %v1284 = vadd.f32 %v1123, %v1283
  %v1285 = vpop.f32.mrb[0].mxu0
  %v1286 = vpop.f32.mrb[0].mxu0
  %v1287 = vadd.f32 %v1126, %v1286
  %v1288 = vpop.f32.mrb[0].mxu0
  %1289 = vmatprep.mubr.bf16.mxu0 0
  %1290 = vmatmul.mubr.bf16.gmra.mrb[0].mxu0 %v844
  %v1291 = vpop.f32.mrb[0].mxu0
  %v1292 = vadd.f32 %v1131, %v1291
  %v1293 = vpop.f32.mrb[0].mxu0
  %v1294 = vpop.f32.mrb[0].mxu0
  %v1295 = vadd.f32 %v1134, %v1294
  %v1296 = vpop.f32.mrb[0].mxu0
  %1297 = vmatprep.mubr.bf16.mxu0 0
  %1298 = vmatmul.mubr.bf16.gmra.mrb[0].mxu0 %v847
  %v1299 = vpop.f32.mrb[0].mxu0
  %v1300 = vadd.f32 %v1139, %v1299
  %v1301 = vpop.f32.mrb[0].mxu0
  %v1302 = vpop.f32.mrb[0].mxu0
  %v1303 = vadd.f32 %v1142, %v1302
  %v1304 = vpop.f32.mrb[0].mxu0
  %1305 = vmatprep.mubr.bf16.mxu0 0
  %1306 = vmatmul.mubr.bf16.gmra.mrb[0].mxu0 %v850
  %v1307 = vpop.f32.mrb[0].mxu0
  %v1308 = vadd.f32 %v1147, %v1307
  %v1309 = vpop.f32.mrb[0].mxu0
  %v1310 = vpop.f32.mrb[0].mxu0
  %v1311 = vadd.f32 %v1150, %v1310
  %v1312 = vpop.f32.mrb[0].mxu0
  %1313 = vmatprep.mubr.bf16.mxu0 0
  %1314 = vmatmul.mubr.bf16.gmra.mrb[0].mxu0 %v853
  %v1315 = vpop.f32.mrb[0].mxu0
  %v1316 = vadd.f32 %v1155, %v1315
  %v1317 = vpop.f32.mrb[0].mxu0
  %v1318 = vpop.f32.mrb[0].mxu0
  %v1319 = vadd.f32 %v1158, %v1318
  %v1320 = vpop.f32.mrb[0].mxu0
  %1321 = vmatprep.mubr.bf16.mxu0 0
  %1322 = vmatmul.mubr.bf16.gmra.mrb[0].mxu0 %v856
  %v1323 = vpop.f32.mrb[0].mxu0
  %v1324 = vadd.f32 %v1163, %v1323
  %v1325 = vpop.f32.mrb[0].mxu0
  %v1326 = vpop.f32.mrb[0].mxu0
  %v1327 = vadd.f32 %v1166, %v1326
  %v1328 = vpop.f32.mrb[0].mxu0
  %1329 = vmatprep.mubr.bf16.mxu0 0
  %1330 = vmatmul.mubr.bf16.gmra.mrb[0].mxu0 %v859
  %v1331 = vpop.f32.mrb[0].mxu0
  %v1332 = vadd.f32 %v1171, %v1331
  %v1333 = vpop.f32.mrb[0].mxu0
  %v1334 = vpop.f32.mrb[0].mxu0
  %v1335 = vadd.f32 %v1174, %v1334
  %v1336 = vpop.f32.mrb[0].mxu0
  %1337 = vmatprep.mubr.bf16.mxu0 0
  %1338 = vmatmul.mubr.bf16.gmra.mrb[0].mxu0 %v862
  %v1339 = vpop.f32.mrb[0].mxu0
  %v1340 = vadd.f32 %v1179, %v1339
  %v1341 = vpop.f32.mrb[0].mxu0
  %v1342 = vpop.f32.mrb[0].mxu0
  %v1343 = vadd.f32 %v1182, %v1342
  %v1344 = vpop.f32.mrb[0].mxu0
  %1345 = vmatprep.mubr.bf16.mxu0 0
  %1346 = vmatmul.mubr.bf16.gmra.mrb[0].mxu0 %v865
  %v1347 = vpop.f32.mrb[0].mxu0
  %v1348 = vadd.f32 %v1187, %v1347
  %v1349 = vpop.f32.mrb[0].mxu0
  %v1350 = vpop.f32.mrb[0].mxu0
  %v1351 = vadd.f32 %v1190, %v1350
  %v1352 = vpop.f32.mrb[0].mxu0
  %1353 = vdwg.mxu0
  %vm1354 = vcmp.ge.f32.partialorder %v1228, 0.0
  %vm1355 = vcmp.ge.f32.partialorder %v1231, 0.0
  %vm1356 = vcmp.ge.f32.partialorder %v1236, 0.0
  %vm1357 = vcmp.ge.f32.partialorder %v1239, 0.0
  %vm1358 = vcmp.ge.f32.partialorder %v1244, 0.0
  %vm1359 = vcmp.ge.f32.partialorder %v1247, 0.0
  %vm1360 = vcmp.ge.f32.partialorder %v1252, 0.0
  %vm1361 = vcmp.ge.f32.partialorder %v1255, 0.0
  %vm1362 = vcmp.ge.f32.partialorder %v1260, 0.0
  %vm1363 = vcmp.ge.f32.partialorder %v1263, 0.0
  %vm1364 = vcmp.ge.f32.partialorder %v1268, 0.0
  %vm1365 = vcmp.ge.f32.partialorder %v1271, 0.0
  %vm1366 = vcmp.ge.f32.partialorder %v1276, 0.0
  %vm1367 = vcmp.ge.f32.partialorder %v1279, 0.0
  %vm1368 = vcmp.ge.f32.partialorder %v1284, 0.0
  %vm1369 = vcmp.ge.f32.partialorder %v1287, 0.0
  %vm1370 = vcmp.ge.f32.partialorder %v1292, 0.0
  %vm1371 = vcmp.ge.f32.partialorder %v1295, 0.0
  %vm1372 = vcmp.ge.f32.partialorder %v1300, 0.0
  %vm1373 = vcmp.ge.f32.partialorder %v1303, 0.0
  %vm1374 = vcmp.ge.f32.partialorder %v1308, 0.0
  %vm1375 = vcmp.ge.f32.partialorder %v1311, 0.0
  %vm1376 = vcmp.ge.f32.partialorder %v1316, 0.0
  %vm1377 = vcmp.ge.f32.partialorder %v1319, 0.0
  %vm1378 = vcmp.ge.f32.partialorder %v1324, 0.0
  %vm1379 = vcmp.ge.f32.partialorder %v1327, 0.0
  %vm1380 = vcmp.ge.f32.partialorder %v1332, 0.0
  %vm1381 = vcmp.ge.f32.partialorder %v1335, 0.0
  %vm1382 = vcmp.ge.f32.partialorder %v1340, 0.0
  %vm1383 = vcmp.ge.f32.partialorder %v1343, 0.0
  %vm1384 = vcmp.ge.f32.partialorder %v1348, 0.0
  %vm1385 = vcmp.ge.f32.partialorder %v1351, 0.0
  %v1386 = vmul.f32 %v1228, 0.2
  %v1387 = vmul.f32 %v1231, 0.2
  %v1388 = vmul.f32 %v1236, 0.2
  %v1389 = vmul.f32 %v1239, 0.2
  %v1390 = vmul.f32 %v1244, 0.2
  %v1391 = vmul.f32 %v1247, 0.2
  %v1392 = vmul.f32 %v1252, 0.2
  %v1393 = vmul.f32 %v1255, 0.2
  %v1394 = vmul.f32 %v1260, 0.2
  %v1395 = vmul.f32 %v1263, 0.2
  %v1396 = vmul.f32 %v1268, 0.2
  %v1397 = vmul.f32 %v1271, 0.2
  %v1398 = vmul.f32 %v1276, 0.2
  %v1399 = vmul.f32 %v1279, 0.2
  %v1400 = vmul.f32 %v1284, 0.2
  %v1401 = vmul.f32 %v1287, 0.2
  %v1402 = vmul.f32 %v1292, 0.2
  %v1403 = vmul.f32 %v1295, 0.2
  %v1404 = vmul.f32 %v1300, 0.2
  %v1405 = vmul.f32 %v1303, 0.2
  %v1406 = vmul.f32 %v1308, 0.2
  %v1407 = vmul.f32 %v1311, 0.2
  %v1408 = vmul.f32 %v1316, 0.2
  %v1409 = vmul.f32 %v1319, 0.2
  %v1410 = vmul.f32 %v1324, 0.2
  %v1411 = vmul.f32 %v1327, 0.2
  %v1412 = vmul.f32 %v1332, 0.2
  %v1413 = vmul.f32 %v1335, 0.2
  %v1414 = vmul.f32 %v1340, 0.2
  %v1415 = vmul.f32 %v1343, 0.2
  %v1416 = vmul.f32 %v1348, 0.2
  %v1417 = vmul.f32 %v1351, 0.2
  %v1418 = vsel %vm1354, %v1228, %v1386
  %v1419 = vsel %vm1355, %v1231, %v1387
  %v1420 = vsel %vm1356, %v1236, %v1388
  %v1421 = vsel %vm1357, %v1239, %v1389
  %v1422 = vsel %vm1358, %v1244, %v1390
  %v1423 = vsel %vm1359, %v1247, %v1391
  %v1424 = vsel %vm1360, %v1252, %v1392
  %v1425 = vsel %vm1361, %v1255, %v1393
  %v1426 = vsel %vm1362, %v1260, %v1394
  %v1427 = vsel %vm1363, %v1263, %v1395
  %v1428 = vsel %vm1364, %v1268, %v1396
  %v1429 = vsel %vm1365, %v1271, %v1397
  %v1430 = vsel %vm1366, %v1276, %v1398
  %v1431 = vsel %vm1367, %v1279, %v1399
  %v1432 = vsel %vm1368, %v1284, %v1400
  %v1433 = vsel %vm1369, %v1287, %v1401
  %v1434 = vsel %vm1370, %v1292, %v1402
  %v1435 = vsel %vm1371, %v1295, %v1403
  %v1436 = vsel %vm1372, %v1300, %v1404
  %v1437 = vsel %vm1373, %v1303, %v1405
  %v1438 = vsel %vm1374, %v1308, %v1406
  %v1439 = vsel %vm1375, %v1311, %v1407
  %v1440 = vsel %vm1376, %v1316, %v1408
  %v1441 = vsel %vm1377, %v1319, %v1409
  %v1442 = vsel %vm1378, %v1324, %v1410
  %v1443 = vsel %vm1379, %v1327, %v1411
  %v1444 = vsel %vm1380, %v1332, %v1412
  %v1445 = vsel %vm1381, %v1335, %v1413
  %v1446 = vsel %vm1382, %v1340, %v1414
  %v1447 = vsel %vm1383, %v1343, %v1415
  %v1448 = vsel %vm1384, %v1348, %v1416
  %v1449 = vsel %vm1385, %v1351, %v1417
  %v1450 = vsub.f32 0.0, %v1228
  %v1451 = vsub.f32 0.0, %v1231
  %v1452 = vsub.f32 0.0, %v1236
  %v1453 = vsub.f32 0.0, %v1239
  %v1454 = vsub.f32 0.0, %v1244
  %v1455 = vsub.f32 0.0, %v1247
  %v1456 = vsub.f32 0.0, %v1252
  %v1457 = vsub.f32 0.0, %v1255
  %v1458 = vsub.f32 0.0, %v1260
  %v1459 = vsub.f32 0.0, %v1263
  %v1460 = vsub.f32 0.0, %v1268
  %v1461 = vsub.f32 0.0, %v1271
  %v1462 = vsub.f32 0.0, %v1276
  %v1463 = vsub.f32 0.0, %v1279
  %v1464 = vsub.f32 0.0, %v1284
  %v1465 = vsub.f32 0.0, %v1287
  %v1466 = vsub.f32 0.0, %v1292
  %v1467 = vsub.f32 0.0, %v1295
  %v1468 = vsub.f32 0.0, %v1300
  %v1469 = vsub.f32 0.0, %v1303
  %v1470 = vsub.f32 0.0, %v1308
  %v1471 = vsub.f32 0.0, %v1311
  %v1472 = vsub.f32 0.0, %v1316
  %v1473 = vsub.f32 0.0, %v1319
  %v1474 = vsub.f32 0.0, %v1324
  %v1475 = vsub.f32 0.0, %v1327
  %v1476 = vsub.f32 0.0, %v1332
  %v1477 = vsub.f32 0.0, %v1335
  %v1478 = vsub.f32 0.0, %v1340
  %v1479 = vsub.f32 0.0, %v1343
  %v1480 = vsub.f32 0.0, %v1348
  %v1481 = vsub.f32 0.0, %v1351
  %v1482 = vmul.f32 %v1450, 1.442695
  %v1483 = vpow.pop %v1482
  %v1484 = vmul.f32 %v1451, 1.442695
  %v1485 = vpow.pop %v1484
  %v1486 = vmul.f32 %v1452, 1.442695
  %v1487 = vpow.pop %v1486
  %v1488 = vmul.f32 %v1453, 1.442695
  %v1489 = vpow.pop %v1488
  %v1490 = vmul.f32 %v1454, 1.442695
  %v1491 = vpow.pop %v1490
  %v1492 = vmul.f32 %v1455, 1.442695
  %v1493 = vpow.pop %v1492
  %v1494 = vmul.f32 %v1456, 1.442695
  %v1495 = vpow.pop %v1494
  %v1496 = vmul.f32 %v1457, 1.442695
  %v1497 = vpow.pop %v1496
  %v1498 = vmul.f32 %v1458, 1.442695
  %v1499 = vpow.pop %v1498
  %v1500 = vmul.f32 %v1459, 1.442695
  %v1501 = vpow.pop %v1500
  %v1502 = vmul.f32 %v1460, 1.442695
  %v1503 = vpow.pop %v1502
  %v1504 = vmul.f32 %v1461, 1.442695
  %v1505 = vpow.pop %v1504
  %v1506 = vmul.f32 %v1462, 1.442695
  %v1507 = vpow.pop %v1506
  %v1508 = vmul.f32 %v1463, 1.442695
  %v1509 = vpow.pop %v1508
  %v1510 = vmul.f32 %v1464, 1.442695
  %v1511 = vpow.pop %v1510
  %v1512 = vmul.f32 %v1465, 1.442695
  %v1513 = vpow.pop %v1512
  %v1514 = vmul.f32 %v1466, 1.442695
  %v1515 = vpow.pop %v1514
  %v1516 = vmul.f32 %v1467, 1.442695
  %v1517 = vpow.pop %v1516
  %v1518 = vmul.f32 %v1468, 1.442695
  %v1519 = vpow.pop %v1518
  %v1520 = vmul.f32 %v1469, 1.442695
  %v1521 = vpow.pop %v1520
  %v1522 = vmul.f32 %v1470, 1.442695
  %v1523 = vpow.pop %v1522
  %v1524 = vmul.f32 %v1471, 1.442695
  %v1525 = vpow.pop %v1524
  %v1526 = vmul.f32 %v1472, 1.442695
  %v1527 = vpow.pop %v1526
  %v1528 = vmul.f32 %v1473, 1.442695
  %v1529 = vpow.pop %v1528
  %v1530 = vmul.f32 %v1474, 1.442695
  %v1531 = vpow.pop %v1530
  %v1532 = vmul.f32 %v1475, 1.442695
  %v1533 = vpow.pop %v1532
  %v1534 = vmul.f32 %v1476, 1.442695
  %v1535 = vpow.pop %v1534
  %v1536 = vmul.f32 %v1477, 1.442695
  %v1537 = vpow.pop %v1536
  %v1538 = vmul.f32 %v1478, 1.442695
  %v1539 = vpow.pop %v1538
  %v1540 = vmul.f32 %v1479, 1.442695
  %v1541 = vpow.pop %v1540
  %v1542 = vmul.f32 %v1480, 1.442695
  %v1543 = vpow.pop %v1542
  %v1544 = vmul.f32 %v1481, 1.442695
  %v1545 = vpow.pop %v1544
  %v1546 = vadd.f32 %v1483, 1.0
  %v1547 = vadd.f32 %v1485, 1.0
  %v1548 = vadd.f32 %v1487, 1.0
  %v1549 = vadd.f32 %v1489, 1.0
  %v1550 = vadd.f32 %v1491, 1.0
  %v1551 = vadd.f32 %v1493, 1.0
  %v1552 = vadd.f32 %v1495, 1.0
  %v1553 = vadd.f32 %v1497, 1.0
  %v1554 = vadd.f32 %v1499, 1.0
  %v1555 = vadd.f32 %v1501, 1.0
  %v1556 = vadd.f32 %v1503, 1.0
  %v1557 = vadd.f32 %v1505, 1.0
  %v1558 = vadd.f32 %v1507, 1.0
  %v1559 = vadd.f32 %v1509, 1.0
  %v1560 = vadd.f32 %v1511, 1.0
  %v1561 = vadd.f32 %v1513, 1.0
  %v1562 = vadd.f32 %v1515, 1.0
  %v1563 = vadd.f32 %v1517, 1.0
  %v1564 = vadd.f32 %v1519, 1.0
  %v1565 = vadd.f32 %v1521, 1.0
  %v1566 = vadd.f32 %v1523, 1.0
  %v1567 = vadd.f32 %v1525, 1.0
  %v1568 = vadd.f32 %v1527, 1.0
  %v1569 = vadd.f32 %v1529, 1.0
  %v1570 = vadd.f32 %v1531, 1.0
  %v1571 = vadd.f32 %v1533, 1.0
  %v1572 = vadd.f32 %v1535, 1.0
  %v1573 = vadd.f32 %v1537, 1.0
  %v1574 = vadd.f32 %v1539, 1.0
  %v1575 = vadd.f32 %v1541, 1.0
  %v1576 = vadd.f32 %v1543, 1.0
  %v1577 = vadd.f32 %v1545, 1.0
  %v1578 = vrcp.pop %v1546
  %v1579 = vrcp.pop %v1547
  %v1580 = vrcp.pop %v1548
  %v1581 = vrcp.pop %v1549
  %v1582 = vrcp.pop %v1550
  %v1583 = vrcp.pop %v1551
  %v1584 = vrcp.pop %v1552
  %v1585 = vrcp.pop %v1553
  %v1586 = vrcp.pop %v1554
  %v1587 = vrcp.pop %v1555
  %v1588 = vrcp.pop %v1556
  %v1589 = vrcp.pop %v1557
  %v1590 = vrcp.pop %v1558
  %v1591 = vrcp.pop %v1559
  %v1592 = vrcp.pop %v1560
  %v1593 = vrcp.pop %v1561
  %v1594 = vrcp.pop %v1562
  %v1595 = vrcp.pop %v1563
  %v1596 = vrcp.pop %v1564
  %v1597 = vrcp.pop %v1565
  %v1598 = vrcp.pop %v1566
  %v1599 = vrcp.pop %v1567
  %v1600 = vrcp.pop %v1568
  %v1601 = vrcp.pop %v1569
  %v1602 = vrcp.pop %v1570
  %v1603 = vrcp.pop %v1571
  %v1604 = vrcp.pop %v1572
  %v1605 = vrcp.pop %v1573
  %v1606 = vrcp.pop %v1574
  %v1607 = vrcp.pop %v1575
  %v1608 = vrcp.pop %v1576
  %v1609 = vrcp.pop %v1577
  %1642 = vrot.lane.b32.xlu0 %v1578, 120
  %v1643 = vpop.permute.xlu0 %1642
  %1644 = vrot.lane.b32.xlu0 %v1579, 120
  %v1645 = vpop.permute.xlu0 %1644
  %1646 = vrot.lane.b32.xlu0 %v1580, 120
  %v1647 = vpop.permute.xlu0 %1646
  %1648 = vrot.lane.b32.xlu0 %v1581, 120
  %v1649 = vpop.permute.xlu0 %1648
  %1650 = vrot.lane.b32.xlu0 %v1582, 120
  %v1651 = vpop.permute.xlu0 %1650
  %1652 = vrot.lane.b32.xlu0 %v1583, 120
  %v1653 = vpop.permute.xlu0 %1652
  %1654 = vrot.lane.b32.xlu0 %v1584, 120
  %v1655 = vpop.permute.xlu0 %1654
  %1656 = vrot.lane.b32.xlu0 %v1585, 120
  %v1657 = vpop.permute.xlu0 %1656
  %1658 = vrot.lane.b32.xlu0 %v1586, 120
  %v1659 = vpop.permute.xlu0 %1658
  %1660 = vrot.lane.b32.xlu0 %v1587, 120
  %v1661 = vpop.permute.xlu0 %1660
  %1662 = vrot.lane.b32.xlu0 %v1588, 120
  %v1663 = vpop.permute.xlu0 %1662
  %1664 = vrot.lane.b32.xlu0 %v1589, 120
  %v1665 = vpop.permute.xlu0 %1664
  %1666 = vrot.lane.b32.xlu0 %v1590, 120
  %v1667 = vpop.permute.xlu0 %1666
  %1668 = vrot.lane.b32.xlu0 %v1591, 120
  %v1669 = vpop.permute.xlu0 %1668
  %1670 = vrot.lane.b32.xlu0 %v1592, 120
  %v1671 = vpop.permute.xlu0 %1670
  %1672 = vrot.lane.b32.xlu0 %v1593, 120
  %v1673 = vpop.permute.xlu0 %1672
  %1674 = vrot.lane.b32.xlu0 %v1594, 120
  %v1675 = vpop.permute.xlu0 %1674
  %1676 = vrot.lane.b32.xlu0 %v1595, 120
  %v1677 = vpop.permute.xlu0 %1676
  %1678 = vrot.lane.b32.xlu0 %v1596, 120
  %v1679 = vpop.permute.xlu0 %1678
  %1680 = vrot.lane.b32.xlu0 %v1597, 120
  %v1681 = vpop.permute.xlu0 %1680
  %1682 = vrot.lane.b32.xlu0 %v1598, 120
  %v1683 = vpop.permute.xlu0 %1682
  %1684 = vrot.lane.b32.xlu0 %v1599, 120
  %v1685 = vpop.permute.xlu0 %1684
  %1686 = vrot.lane.b32.xlu0 %v1600, 120
  %v1687 = vpop.permute.xlu0 %1686
  %1688 = vrot.lane.b32.xlu0 %v1601, 120
  %v1689 = vpop.permute.xlu0 %1688
  %1690 = vrot.lane.b32.xlu0 %v1602, 120
  %v1691 = vpop.permute.xlu0 %1690
  %1692 = vrot.lane.b32.xlu0 %v1603, 120
  %v1693 = vpop.permute.xlu0 %1692
  %1694 = vrot.lane.b32.xlu0 %v1604, 120
  %v1695 = vpop.permute.xlu0 %1694
  %1696 = vrot.lane.b32.xlu0 %v1605, 120
  %v1697 = vpop.permute.xlu0 %1696
  %1698 = vrot.lane.b32.xlu0 %v1606, 120
  %v1699 = vpop.permute.xlu0 %1698
  %1700 = vrot.lane.b32.xlu0 %v1607, 120
  %v1701 = vpop.permute.xlu0 %1700
  %1702 = vrot.lane.b32.xlu0 %v1608, 120
  %v1703 = vpop.permute.xlu0 %1702
  %1704 = vrot.lane.b32.xlu0 %v1609, 120
  %v1705 = vpop.permute.xlu0 %1704
  %v1738 = vmul.f32 %v1418, %v1643
  %v1739 = vmul.f32 %v1419, %v1645
  %v1740 = vmul.f32 %v1420, %v1647
  %v1741 = vmul.f32 %v1421, %v1649
  %v1742 = vmul.f32 %v1422, %v1651
  %v1743 = vmul.f32 %v1423, %v1653
  %v1744 = vmul.f32 %v1424, %v1655
  %v1745 = vmul.f32 %v1425, %v1657
  %v1746 = vmul.f32 %v1426, %v1659
  %v1747 = vmul.f32 %v1427, %v1661
  %v1748 = vmul.f32 %v1428, %v1663
  %v1749 = vmul.f32 %v1429, %v1665
  %v1750 = vmul.f32 %v1430, %v1667
  %v1751 = vmul.f32 %v1431, %v1669
  %v1752 = vmul.f32 %v1432, %v1671
  %v1753 = vmul.f32 %v1433, %v1673
  %v1754 = vmul.f32 %v1434, %v1675
  %v1755 = vmul.f32 %v1435, %v1677
  %v1756 = vmul.f32 %v1436, %v1679
  %v1757 = vmul.f32 %v1437, %v1681
  %v1758 = vmul.f32 %v1438, %v1683
  %v1759 = vmul.f32 %v1439, %v1685
  %v1760 = vmul.f32 %v1440, %v1687
  %v1761 = vmul.f32 %v1441, %v1689
  %v1762 = vmul.f32 %v1442, %v1691
  %v1763 = vmul.f32 %v1443, %v1693
  %v1764 = vmul.f32 %v1444, %v1695
  %v1765 = vmul.f32 %v1445, %v1697
  %v1766 = vmul.f32 %v1446, %v1699
  %v1767 = vmul.f32 %v1447, %v1701
  %v1768 = vmul.f32 %v1448, %v1703
  %v1769 = vmul.f32 %v1449, %v1705
  %v1770 = vpack.c.bf16 %v1739, %v1738
  %v1771 = vpack.c.bf16 %v1741, %v1740
  %v1772 = vpack.c.bf16 %v1743, %v1742
  %v1773 = vpack.c.bf16 %v1745, %v1744
  %v1774 = vpack.c.bf16 %v1747, %v1746
  %v1775 = vpack.c.bf16 %v1749, %v1748
  %v1776 = vpack.c.bf16 %v1751, %v1750
  %v1777 = vpack.c.bf16 %v1753, %v1752
  %v1778 = vpack.c.bf16 %v1755, %v1754
  %v1779 = vpack.c.bf16 %v1757, %v1756
  %v1780 = vpack.c.bf16 %v1759, %v1758
  %v1781 = vpack.c.bf16 %v1761, %v1760
  %v1782 = vpack.c.bf16 %v1763, %v1762
  %v1783 = vpack.c.bf16 %v1765, %v1764
  %v1784 = vpack.c.bf16 %v1767, %v1766
  %v1785 = vpack.c.bf16 %v1769, %v1768
  %v1802 = vunpack.c.l.b16 %v1770
  %v1803 = vunpack.c.h.b16 %v1770
  %v1804 = vunpack.c.l.b16 %v1771
  %v1805 = vunpack.c.h.b16 %v1771
  %v1806 = vunpack.c.l.b16 %v1772
  %v1807 = vunpack.c.h.b16 %v1772
  %v1808 = vunpack.c.l.b16 %v1773
  %v1809 = vunpack.c.h.b16 %v1773
  %v1810 = vunpack.c.l.b16 %v1774
  %v1811 = vunpack.c.h.b16 %v1774
  %v1812 = vunpack.c.l.b16 %v1775
  %v1813 = vunpack.c.h.b16 %v1775
  %v1814 = vunpack.c.l.b16 %v1776
  %v1815 = vunpack.c.h.b16 %v1776
  %v1816 = vunpack.c.l.b16 %v1777
  %v1817 = vunpack.c.h.b16 %v1777
  %v1818 = vunpack.c.l.b16 %v1778
  %v1819 = vunpack.c.h.b16 %v1778
  %v1820 = vunpack.c.l.b16 %v1779
  %v1821 = vunpack.c.h.b16 %v1779
  %v1822 = vunpack.c.l.b16 %v1780
  %v1823 = vunpack.c.h.b16 %v1780
  %v1824 = vunpack.c.l.b16 %v1781
  %v1825 = vunpack.c.h.b16 %v1781
  %v1826 = vunpack.c.l.b16 %v1782
  %v1827 = vunpack.c.h.b16 %v1782
  %v1828 = vunpack.c.l.b16 %v1783
  %v1829 = vunpack.c.h.b16 %v1783
  %v1830 = vunpack.c.l.b16 %v1784
  %v1831 = vunpack.c.h.b16 %v1784
  %v1832 = vunpack.c.l.b16 %v1785
  %v1833 = vunpack.c.h.b16 %v1785
  %v1834 = vpack.c.b16 %v1802, %v1802
  %v1835 = vpack.c.b16 %v1803, %v1803
  %v1836 = vpack.c.b16 %v1804, %v1804
  %v1837 = vpack.c.b16 %v1805, %v1805
  %v1838 = vpack.c.b16 %v1806, %v1806
  %v1839 = vpack.c.b16 %v1807, %v1807
  %v1840 = vpack.c.b16 %v1808, %v1808
  %v1841 = vpack.c.b16 %v1809, %v1809
  %v1842 = vpack.c.b16 %v1810, %v1810
  %v1843 = vpack.c.b16 %v1811, %v1811
  %v1844 = vpack.c.b16 %v1812, %v1812
  %v1845 = vpack.c.b16 %v1813, %v1813
  %v1846 = vpack.c.b16 %v1814, %v1814
  %v1847 = vpack.c.b16 %v1815, %v1815
  %v1848 = vpack.c.b16 %v1816, %v1816
  %v1849 = vpack.c.b16 %v1817, %v1817
  %v1850 = vpack.c.b16 %v1818, %v1818
  %v1851 = vpack.c.b16 %v1819, %v1819
  %v1852 = vpack.c.b16 %v1820, %v1820
  %v1853 = vpack.c.b16 %v1821, %v1821
  %v1854 = vpack.c.b16 %v1822, %v1822
  %v1855 = vpack.c.b16 %v1823, %v1823
  %v1856 = vpack.c.b16 %v1824, %v1824
  %v1857 = vpack.c.b16 %v1825, %v1825
  %v1858 = vpack.c.b16 %v1826, %v1826
  %v1859 = vpack.c.b16 %v1827, %v1827
  %v1860 = vpack.c.b16 %v1828, %v1828
  %v1861 = vpack.c.b16 %v1829, %v1829
  %v1862 = vpack.c.b16 %v1830, %v1830
  %v1863 = vpack.c.b16 %v1831, %v1831
  %v1864 = vpack.c.b16 %v1832, %v1832
  %v1865 = vpack.c.b16 %v1833, %v1833
  %vm1898 = vcmask 60416
  %1899 = vst.msk [vmem:[%s3] sm:$0xf] %vm1898, %v1834
  %1900 = vst.msk [vmem:[%s3 + $0x4] sm:$0xf] %vm1898, %v1835
  %1901 = vst.msk [vmem:[%s3 + $0x8] sm:$0xf] %vm1898, %v1836
  %1902 = vst.msk [vmem:[%s3 + $0xc] sm:$0xf] %vm1898, %v1837
  %1903 = vst.msk [vmem:[%s3 + $0x10] sm:$0xf] %vm1898, %v1838
  %1904 = vst.msk [vmem:[%s3 + $0x14] sm:$0xf] %vm1898, %v1839
  %1905 = vst.msk [vmem:[%s3 + $0x18] sm:$0xf] %vm1898, %v1840
  %1906 = vst.msk [vmem:[%s3 + $0x1c] sm:$0xf] %vm1898, %v1841
  %1907 = vst.msk [vmem:[%s3 + $0x20] sm:$0xf] %vm1898, %v1842
  %1908 = vst.msk [vmem:[%s3 + $0x24] sm:$0xf] %vm1898, %v1843
  %1909 = vst.msk [vmem:[%s3 + $0x28] sm:$0xf] %vm1898, %v1844
  %1910 = vst.msk [vmem:[%s3 + $0x2c] sm:$0xf] %vm1898, %v1845
  %1911 = vst.msk [vmem:[%s3 + $0x30] sm:$0xf] %vm1898, %v1846
  %1912 = vst.msk [vmem:[%s3 + $0x34] sm:$0xf] %vm1898, %v1847
  %1913 = vst.msk [vmem:[%s3 + $0x38] sm:$0xf] %vm1898, %v1848
  %1914 = vst.msk [vmem:[%s3 + $0x3c] sm:$0xf] %vm1898, %v1849
  %1915 = vst.msk [vmem:[%s3 + $0x40] sm:$0xf] %vm1898, %v1850
  %1916 = vst.msk [vmem:[%s3 + $0x44] sm:$0xf] %vm1898, %v1851
  %1917 = vst.msk [vmem:[%s3 + $0x48] sm:$0xf] %vm1898, %v1852
  %1918 = vst.msk [vmem:[%s3 + $0x4c] sm:$0xf] %vm1898, %v1853
  %1919 = vst.msk [vmem:[%s3 + $0x50] sm:$0xf] %vm1898, %v1854
  %1920 = vst.msk [vmem:[%s3 + $0x54] sm:$0xf] %vm1898, %v1855
  %1921 = vst.msk [vmem:[%s3 + $0x58] sm:$0xf] %vm1898, %v1856
  %1922 = vst.msk [vmem:[%s3 + $0x5c] sm:$0xf] %vm1898, %v1857
  %1923 = vst.msk [vmem:[%s3 + $0x60] sm:$0xf] %vm1898, %v1858
  %1924 = vst.msk [vmem:[%s3 + $0x64] sm:$0xf] %vm1898, %v1859
  %1925 = vst.msk [vmem:[%s3 + $0x68] sm:$0xf] %vm1898, %v1860
  %1926 = vst.msk [vmem:[%s3 + $0x6c] sm:$0xf] %vm1898, %v1861
  %1927 = vst.msk [vmem:[%s3 + $0x70] sm:$0xf] %vm1898, %v1862
  %1928 = vst.msk [vmem:[%s3 + $0x74] sm:$0xf] %vm1898, %v1863
  %1929 = vst.msk [vmem:[%s3 + $0x78] sm:$0xf] %vm1898, %v1864
  %1930 = vst.msk [vmem:[%s3 + $0x7c] sm:$0xf] %vm1898, %v1865
  // Predicated region
  $region14: #{discriminator_forward.6} parent=0 // pred_check
    _
  $region15: #{discriminator_forward.6} parent=0 // pred_check_branch
    %1932 = sbr.rel (0) target = $region17
  $region16: #{discriminator_forward.6} parent=0 // pred_region
    _
  $region17: #{discriminator_forward.6} parent=0 // pred_fallthru
    _
  // Predicated region
  $region18: #{discriminator_forward.6} parent=0 // pred_check
    _
  $region19: #{discriminator_forward.6} parent=0 // pred_check_branch
    %1934 = sbr.rel (0) target = $region21
  $region20: #{discriminator_forward.6} parent=0 // pred_region
    _
  $region21: #{discriminator_forward.6} parent=0 // pred_fallthru
    _

// kernel: discriminator_forward.7
$region0: #{discriminator_forward.7}
  #allocation0 [shape = 'u32[]', space=smem, size = 0x4, offset = 0x4, fixed_abs, tag = 'smem constant byte address 0x4 - core index']
  #allocation1 [shape = 'u32[144,128]{1,0:T(1,128)}', space=vmem, size = 0x12000, scoped, tag = 'internal scratch']
  %s0 = inlined_call_operand.vmem [shape: bf16[64,600], index: 0, kind: input, shape index: {}]
  %s1 = inlined_call_operand.vmem [shape: bf16[600,32], index: 1, kind: input, shape index: {}]
  %s2 = inlined_call_operand.vmem [shape: f32[1,32], index: 2, kind: input, shape index: {}]
  %s3 = inlined_call_operand.vmem [shape: bf16[64,16], index: 3, kind: output, shape index: {}]
  %s4 = sld [smem:[#allocation0]]
  $region22: #{discriminator_forward.7} parent=0
    _
  %s6 = ssub.s32 1, %s4
  %s7 = scalar_select 0, %s6, %s4
  // Predicated region
  $region2: #{discriminator_forward.7} parent=0 // pred_check
    _
  $region3: #{discriminator_forward.7} parent=0 // pred_check_branch
    %9 = sbr.rel (0) target = $region5
  $region4: #{discriminator_forward.7} parent=0 // pred_region
    _
  $region5: #{discriminator_forward.7} parent=0 // pred_fallthru
    _
  // Predicated region
  $region6: #{discriminator_forward.7} parent=0 // pred_check
    _
  $region7: #{discriminator_forward.7} parent=0 // pred_check_branch
    %11 = sbr.rel (0) target = $region9
  $region8: #{discriminator_forward.7} parent=0 // pred_region
    _
  $region9: #{discriminator_forward.7} parent=0 // pred_fallthru
    _
  // Predicated region
  $region10: #{discriminator_forward.7} parent=0 // pred_check
    _
  $region11: #{discriminator_forward.7} parent=0 // pred_check_branch
    %13 = sbr.rel (0) target = $region13
  $region12: #{discriminator_forward.7} parent=0 // pred_region
    _
  $region13: #{discriminator_forward.7} parent=0 // pred_fallthru
    _
  %v15 = vld [vmem:[%s0] sm:$0xff]
  %v16 = vld [vmem:[%s0 + $0x8] sm:$0xff]
  %v17 = vld [vmem:[%s0 + $0x10] sm:$0xf]
  %v18 = vld [vmem:[%s0 + $0x14] sm:$0xff]
  %v19 = vld [vmem:[%s0 + $0x1c] sm:$0xff]
  %v20 = vld [vmem:[%s0 + $0x24] sm:$0xf]
  %v21 = vld [vmem:[%s0 + $0x28] sm:$0xff]
  %v22 = vld [vmem:[%s0 + $0x30] sm:$0xff]
  %v23 = vld [vmem:[%s0 + $0x38] sm:$0xf]
  %v24 = vld [vmem:[%s0 + $0x3c] sm:$0xff]
  %v25 = vld [vmem:[%s0 + $0x44] sm:$0xff]
  %v26 = vld [vmem:[%s0 + $0x4c] sm:$0xf]
  %v27 = vld [vmem:[%s0 + $0x50] sm:$0xff]
  %v28 = vld [vmem:[%s0 + $0x58] sm:$0xff]
  %v29 = vld [vmem:[%s0 + $0x60] sm:$0xf]
  %v30 = vld [vmem:[%s0 + $0x64] sm:$0xff]
  %v31 = vld [vmem:[%s0 + $0x6c] sm:$0xff]
  %v32 = vld [vmem:[%s0 + $0x74] sm:$0xf]
  %v33 = vld [vmem:[%s0 + $0x78] sm:$0xff]
  %v34 = vld [vmem:[%s0 + $0x80] sm:$0xff]
  %v35 = vld [vmem:[%s0 + $0x88] sm:$0xf]
  %v36 = vld [vmem:[%s0 + $0x8c] sm:$0xff]
  %v37 = vld [vmem:[%s0 + $0x94] sm:$0xff]
  %v38 = vld [vmem:[%s0 + $0x9c] sm:$0xf]
  %v39 = vld [vmem:[%s1] sm:$0xf]
  %v40 = vld [vmem:[%s1 + $0x4] sm:$0xf]
  %v41 = vld [vmem:[%s1 + $0x8] sm:$0xf]
  %v42 = vld [vmem:[%s1 + $0xc] sm:$0xf]
  %v43 = vld [vmem:[%s1 + $0x10] sm:$0xf]
  %v44 = vld [vmem:[%s1 + $0x14] sm:$0xf]
  %v45 = vld [vmem:[%s1 + $0x18] sm:$0xf]
  %v46 = vld [vmem:[%s1 + $0x1c] sm:$0xf]
  %v47 = vld [vmem:[%s1 + $0x20] sm:$0xf]
  %v48 = vld [vmem:[%s1 + $0x24] sm:$0xf]
  %v49 = vld [vmem:[%s1 + $0x28] sm:$0xf]
  %v50 = vld [vmem:[%s1 + $0x2c] sm:$0xf]
  %v51 = vld [vmem:[%s1 + $0x30] sm:$0xf]
  %v52 = vld [vmem:[%s1 + $0x34] sm:$0xf]
  %v53 = vld [vmem:[%s1 + $0x38] sm:$0xf]
  %v54 = vld [vmem:[%s1 + $0x3c] sm:$0xf]
  %v55 = vld [vmem:[%s1 + $0x40] sm:$0xf]
  %v56 = vld [vmem:[%s1 + $0x44] sm:$0xf]
  %v57 = vld [vmem:[%s1 + $0x48] sm:$0xf]
  %v58 = vld [vmem:[%s1 + $0x4c] sm:$0xf]
  %v59 = vld [vmem:[%s1 + $0x50] sm:$0xf]
  %v60 = vld [vmem:[%s1 + $0x54] sm:$0xf]
  %v61 = vld [vmem:[%s1 + $0x58] sm:$0xf]
  %v62 = vld [vmem:[%s1 + $0x5c] sm:$0xf]
  %v63 = vld [vmem:[%s1 + $0x60] sm:$0xf]
  %v64 = vld [vmem:[%s1 + $0x64] sm:$0xf]
  %v65 = vld [vmem:[%s1 + $0x68] sm:$0xf]
  %v66 = vld [vmem:[%s1 + $0x6c] sm:$0xf]
  %v67 = vld [vmem:[%s1 + $0x70] sm:$0xf]
  %v68 = vld [vmem:[%s1 + $0x74] sm:$0xf]
  %v69 = vld [vmem:[%s1 + $0x78] sm:$0xf]
  %v70 = vld [vmem:[%s1 + $0x7c] sm:$0xf]
  %v71 = vld [vmem:[%s1 + $0x80] sm:$0xf]
  %v72 = vld [vmem:[%s1 + $0x84] sm:$0xf]
  %v73 = vld [vmem:[%s1 + $0x88] sm:$0xf]
  %v74 = vld [vmem:[%s1 + $0x8c] sm:$0xf]
  %v75 = vld [vmem:[%s1 + $0x90] sm:$0xf]
  %v76 = vld [vmem:[%s1 + $0x94] sm:$0xf]
  %v77 = vld [vmem:[%s1 + $0x98] sm:$0xf]
  %v78 = vld [vmem:[%s1 + $0x9c] sm:$0xf]
  %v79 = vld [vmem:[%s1 + $0xa0] sm:$0xf]
  %v80 = vld [vmem:[%s1 + $0xa4] sm:$0xf]
  %v81 = vld [vmem:[%s1 + $0xa8] sm:$0xf]
  %v82 = vld [vmem:[%s1 + $0xac] sm:$0xf]
  %v83 = vld [vmem:[%s1 + $0xb0] sm:$0xf]
  %v84 = vld [vmem:[%s1 + $0xb4] sm:$0xf]
  %v85 = vld [vmem:[%s1 + $0xb8] sm:$0xf]
  %v86 = vld [vmem:[%s1 + $0xbc] sm:$0xf]
  %v87 = vld [vmem:[%s1 + $0xc0] sm:$0xf]
  %v88 = vld [vmem:[%s1 + $0xc4] sm:$0xf]
  %v89 = vld [vmem:[%s1 + $0xc8] sm:$0xf]
  %v90 = vld [vmem:[%s1 + $0xcc] sm:$0xf]
  %v91 = vld [vmem:[%s1 + $0xd0] sm:$0xf]
  %v92 = vld [vmem:[%s1 + $0xd4] sm:$0xf]
  %v93 = vld [vmem:[%s1 + $0xd8] sm:$0xf]
  %v94 = vld [vmem:[%s1 + $0xdc] sm:$0xf]
  %v95 = vld [vmem:[%s1 + $0xe0] sm:$0xf]
  %v96 = vld [vmem:[%s1 + $0xe4] sm:$0xf]
  %v97 = vld [vmem:[%s1 + $0xe8] sm:$0xf]
  %v98 = vld [vmem:[%s1 + $0xec] sm:$0xf]
  %v99 = vld [vmem:[%s1 + $0xf0] sm:$0xf]
  %v100 = vld [vmem:[%s1 + $0xf4] sm:$0xf]
  %v101 = vld [vmem:[%s1 + $0xf8] sm:$0xf]
  %v102 = vld [vmem:[%s1 + $0xfc] sm:$0xf]
  %v103 = vld [vmem:[%s1 + $0x100] sm:$0xf]
  %v104 = vld [vmem:[%s1 + $0x104] sm:$0xf]
  %v105 = vld [vmem:[%s1 + $0x108] sm:$0xf]
  %v106 = vld [vmem:[%s1 + $0x10c] sm:$0xf]
  %v107 = vld [vmem:[%s1 + $0x110] sm:$0xf]
  %v108 = vld [vmem:[%s1 + $0x114] sm:$0xf]
  %v109 = vld [vmem:[%s1 + $0x118] sm:$0xf]
  %v110 = vld [vmem:[%s1 + $0x11c] sm:$0xf]
  %v111 = vld [vmem:[%s1 + $0x120] sm:$0xf]
  %v112 = vld [vmem:[%s1 + $0x124] sm:$0xf]
  %v113 = vld [vmem:[%s1 + $0x128] sm:$0xf]
  %v114 = vld [vmem:[%s2] sm:$0x1]
  %v116 = vlaneseq
  %v117 = vshrl.u32 %v116, 7
  %v118 = vsub.s32 0, %v117
  %v119 = vrot.slane %v114, %v118
  %v145 = vunpack.c.l.b16 %v15
  %v146 = vunpack.c.h.b16 %v15
  %v147 = vunpack.c.l.b16 %v16
  %v148 = vunpack.c.h.b16 %v16
  %v149 = vunpack.c.l.b16 %v17
  %v150 = vunpack.c.l.b16 %v18
  %v151 = vunpack.c.h.b16 %v18
  %v152 = vunpack.c.l.b16 %v19
  %v153 = vunpack.c.h.b16 %v19
  %v154 = vunpack.c.l.b16 %v20
  %v155 = vunpack.c.l.b16 %v21
  %v156 = vunpack.c.h.b16 %v21
  %v157 = vunpack.c.l.b16 %v22
  %v158 = vunpack.c.h.b16 %v22
  %v159 = vunpack.c.l.b16 %v23
  %v160 = vunpack.c.l.b16 %v24
  %v161 = vunpack.c.h.b16 %v24
  %v162 = vunpack.c.l.b16 %v25
  %v163 = vunpack.c.h.b16 %v25
  %v164 = vunpack.c.l.b16 %v26
  %v165 = vunpack.c.l.b16 %v27
  %v166 = vunpack.c.h.b16 %v27
  %v167 = vunpack.c.l.b16 %v28
  %v168 = vunpack.c.h.b16 %v28
  %v169 = vunpack.c.l.b16 %v29
  %v170 = vunpack.c.l.b16 %v30
  %v171 = vunpack.c.h.b16 %v30
  %v172 = vunpack.c.l.b16 %v31
  %v173 = vunpack.c.h.b16 %v31
  %v174 = vunpack.c.l.b16 %v32
  %v175 = vunpack.c.l.b16 %v33
  %v176 = vunpack.c.h.b16 %v33
  %v177 = vunpack.c.l.b16 %v34
  %v178 = vunpack.c.h.b16 %v34
  %v179 = vunpack.c.l.b16 %v35
  %v180 = vunpack.c.l.b16 %v36
  %v181 = vunpack.c.h.b16 %v36
  %v182 = vunpack.c.l.b16 %v37
  %v183 = vunpack.c.h.b16 %v37
  %v184 = vunpack.c.l.b16 %v38
  %v185 = vpack.c.b16 %v150, %v145
  %v186 = vpack.c.b16 %v151, %v146
  %v187 = vpack.c.b16 %v152, %v147
  %v188 = vpack.c.b16 %v153, %v148
  %v189 = vpack.c.b16 %v154, %v149
  %v190 = vpack.c.b16 %v160, %v155
  %v191 = vpack.c.b16 %v161, %v156
  %v192 = vpack.c.b16 %v162, %v157
  %v193 = vpack.c.b16 %v163, %v158
  %v194 = vpack.c.b16 %v164, %v159
  %v195 = vpack.c.b16 %v170, %v165
  %v196 = vpack.c.b16 %v171, %v166
  %v197 = vpack.c.b16 %v172, %v167
  %v198 = vpack.c.b16 %v173, %v168
  %v199 = vpack.c.b16 %v174, %v169
  %v200 = vpack.c.b16 %v180, %v175
  %v201 = vpack.c.b16 %v181, %v176
  %v202 = vpack.c.b16 %v182, %v177
  %v203 = vpack.c.b16 %v183, %v178
  %v204 = vpack.c.b16 %v184, %v179
  %v296 = vunpack.c.l.b16 %v39
  %v297 = vunpack.c.l.b16 %v40
  %v298 = vunpack.c.l.b16 %v41
  %v299 = vunpack.c.l.b16 %v42
  %v300 = vunpack.c.l.b16 %v43
  %v301 = vunpack.c.l.b16 %v44
  %v302 = vunpack.c.l.b16 %v45
  %v303 = vunpack.c.l.b16 %v46
  %v304 = vunpack.c.l.b16 %v47
  %v305 = vunpack.c.l.b16 %v48
  %v306 = vunpack.c.l.b16 %v49
  %v307 = vunpack.c.l.b16 %v50
  %v308 = vunpack.c.l.b16 %v51
  %v309 = vunpack.c.l.b16 %v52
  %v310 = vunpack.c.l.b16 %v53
  %v311 = vunpack.c.l.b16 %v54
  %v312 = vunpack.c.l.b16 %v55
  %v313 = vunpack.c.l.b16 %v56
  %v314 = vunpack.c.l.b16 %v57
  %v315 = vunpack.c.l.b16 %v58
  %v316 = vunpack.c.l.b16 %v59
  %v317 = vunpack.c.l.b16 %v60
  %v318 = vunpack.c.l.b16 %v61
  %v319 = vunpack.c.l.b16 %v62
  %v320 = vunpack.c.l.b16 %v63
  %v321 = vunpack.c.l.b16 %v64
  %v322 = vunpack.c.l.b16 %v65
  %v323 = vunpack.c.l.b16 %v66
  %v324 = vunpack.c.l.b16 %v67
  %v325 = vunpack.c.l.b16 %v68
  %v326 = vunpack.c.l.b16 %v69
  %v327 = vunpack.c.l.b16 %v70
  %v328 = vunpack.c.l.b16 %v71
  %v329 = vunpack.c.l.b16 %v72
  %v330 = vunpack.c.l.b16 %v73
  %v331 = vunpack.c.l.b16 %v74
  %v332 = vunpack.c.l.b16 %v75
  %v333 = vunpack.c.l.b16 %v76
  %v334 = vunpack.c.l.b16 %v77
  %v335 = vunpack.c.l.b16 %v78
  %v336 = vunpack.c.l.b16 %v79
  %v337 = vunpack.c.l.b16 %v80
  %v338 = vunpack.c.l.b16 %v81
  %v339 = vunpack.c.l.b16 %v82
  %v340 = vunpack.c.l.b16 %v83
  %v341 = vunpack.c.l.b16 %v84
  %v342 = vunpack.c.l.b16 %v85
  %v343 = vunpack.c.l.b16 %v86
  %v344 = vunpack.c.l.b16 %v87
  %v345 = vunpack.c.l.b16 %v88
  %v346 = vunpack.c.l.b16 %v89
  %v347 = vunpack.c.l.b16 %v90
  %v348 = vunpack.c.l.b16 %v91
  %v349 = vunpack.c.l.b16 %v92
  %v350 = vunpack.c.l.b16 %v93
  %v351 = vunpack.c.l.b16 %v94
  %v352 = vunpack.c.l.b16 %v95
  %v353 = vunpack.c.l.b16 %v96
  %v354 = vunpack.c.l.b16 %v97
  %v355 = vunpack.c.l.b16 %v98
  %v356 = vunpack.c.l.b16 %v99
  %v357 = vunpack.c.l.b16 %v100
  %v358 = vunpack.c.l.b16 %v101
  %v359 = vunpack.c.l.b16 %v102
  %v360 = vunpack.c.l.b16 %v103
  %v361 = vunpack.c.l.b16 %v104
  %v362 = vunpack.c.l.b16 %v105
  %v363 = vunpack.c.l.b16 %v106
  %v364 = vunpack.c.l.b16 %v107
  %v365 = vunpack.c.l.b16 %v108
  %v366 = vunpack.c.l.b16 %v109
  %v367 = vunpack.c.l.b16 %v110
  %v368 = vunpack.c.l.b16 %v111
  %v369 = vunpack.c.l.b16 %v112
  %v370 = vunpack.c.l.b16 %v113
  %v371 = vpack.c.b16 %v297, %v296
  %v372 = vpack.c.b16 %v299, %v298
  %v373 = vpack.c.b16 %v301, %v300
  %v374 = vpack.c.b16 %v303, %v302
  %v375 = vpack.c.b16 %v305, %v304
  %v376 = vpack.c.b16 %v307, %v306
  %v377 = vpack.c.b16 %v309, %v308
  %v378 = vpack.c.b16 %v311, %v310
  %v379 = vpack.c.b16 %v313, %v312
  %v380 = vpack.c.b16 %v315, %v314
  %v381 = vpack.c.b16 %v317, %v316
  %v382 = vpack.c.b16 %v319, %v318
  %v383 = vpack.c.b16 %v321, %v320
  %v384 = vpack.c.b16 %v323, %v322
  %v385 = vpack.c.b16 %v325, %v324
  %v386 = vpack.c.b16 %v327, %v326
  %v387 = vpack.c.b16 %v329, %v328
  %v388 = vpack.c.b16 %v331, %v330
  %v389 = vpack.c.b16 %v333, %v332
  %v390 = vpack.c.b16 %v335, %v334
  %v391 = vpack.c.b16 %v337, %v336
  %v392 = vpack.c.b16 %v339, %v338
  %v393 = vpack.c.b16 %v341, %v340
  %v394 = vpack.c.b16 %v343, %v342
  %v395 = vpack.c.b16 %v345, %v344
  %v396 = vpack.c.b16 %v347, %v346
  %v397 = vpack.c.b16 %v349, %v348
  %v398 = vpack.c.b16 %v351, %v350
  %v399 = vpack.c.b16 %v353, %v352
  %v400 = vpack.c.b16 %v355, %v354
  %v401 = vpack.c.b16 %v357, %v356
  %v402 = vpack.c.b16 %v359, %v358
  %v403 = vpack.c.b16 %v361, %v360
  %v404 = vpack.c.b16 %v363, %v362
  %v405 = vpack.c.b16 %v365, %v364
  %v406 = vpack.c.b16 %v367, %v366
  %v407 = vpack.c.b16 %v369, %v368
  %v408 = vpack.c.b16 %v370, %v370
  %vm446 = vcmask 719872
  %v448 = vsel %vm446, %v189, 0
  %v451 = vsel %vm446, %v194, 0
  %v454 = vsel %vm446, %v199, 0
  %v457 = vsel %vm446, %v204, 0
  %vm459 = vcmask 1043456
  %v461 = vsel %vm459, %v408, 0
  %463 = vmatprep.subr.bf16.mxu0 0
  %464 = vmatpush1.bf16.msra.mxu0 %v371
  %465 = vmatprep.subr.bf16.mxu0 0
  %466 = vmatpush1.bf16.msra.mxu0 %v372
  %467 = vmatprep.subr.bf16.mxu0 0
  %468 = vmatpush1.bf16.msra.mxu0 %v373
  %469 = vmatprep.subr.bf16.mxu0 0
  %470 = vmatpush1.bf16.msra.mxu0 %v374
  %471 = vmatprep.subr.bf16.mxu0 0
  %472 = vmatpush1.bf16.msra.mxu0 %v375
  %473 = vmatprep.subr.bf16.mxu0 0
  %474 = vmatpush1.bf16.msra.mxu0 %v376
  %475 = vmatprep.subr.bf16.mxu0 0
  %476 = vmatpush1.bf16.msra.mxu0 %v377
  %477 = vmatprep.subr.bf16.mxu0 0
  %478 = vmatpush1.bf16.msra.mxu0 %v378
  %479 = vmatprep.subr.bf16.mxu0 0
  %480 = vmatpush1.bf16.msra.mxu0 %v379
  %481 = vmatprep.subr.bf16.mxu0 0
  %482 = vmatpush1.bf16.msra.mxu0 %v380
  %483 = vmatprep.subr.bf16.mxu0 0
  %484 = vmatpush1.bf16.msra.mxu0 %v381
  %485 = vmatprep.subr.bf16.mxu0 0
  %486 = vmatpush1.bf16.msra.mxu0 %v382
  %487 = vmatprep.subr.bf16.mxu0 0
  %488 = vmatpush1.bf16.msra.mxu0 %v383
  %489 = vmatprep.subr.bf16.mxu0 0
  %490 = vmatpush1.bf16.msra.mxu0 %v384
  %491 = vmatprep.subr.bf16.mxu0 0
  %492 = vmatpush1.bf16.msra.mxu0 %v385
  %493 = vmatprep.subr.bf16.mxu0 0
  %494 = vmatpush1.bf16.msra.mxu0 %v386
  %495 = vmatprep.mubr.bf16.mxu0 %v186
  %496 = vmatmul.mubr.bf16.gmra.mrb[0].mxu0 %v185
  %v497 = vpop.f32.mrb[0].mxu0
  %v498 = vadd.f32 %v119, %v497
  %v499 = vpop.f32.mrb[0].mxu0
  %v500 = vpop.f32.mrb[0].mxu0
  %v501 = vadd.f32 %v119, %v500
  %v502 = vpop.f32.mrb[0].mxu0
  %503 = vmatprep.mubr.bf16.mxu0 %v191
  %504 = vmatmul.mubr.bf16.gmra.mrb[0].mxu0 %v190
  %v505 = vpop.f32.mrb[0].mxu0
  %v506 = vadd.f32 %v119, %v505
  %v507 = vpop.f32.mrb[0].mxu0
  %v508 = vpop.f32.mrb[0].mxu0
  %v509 = vadd.f32 %v119, %v508
  %v510 = vpop.f32.mrb[0].mxu0
  %511 = vmatprep.mubr.bf16.mxu0 %v196
  %512 = vmatmul.mubr.bf16.gmra.mrb[0].mxu0 %v195
  %v513 = vpop.f32.mrb[0].mxu0
  %v514 = vadd.f32 %v119, %v513
  %v515 = vpop.f32.mrb[0].mxu0
  %v516 = vpop.f32.mrb[0].mxu0
  %v517 = vadd.f32 %v119, %v516
  %v518 = vpop.f32.mrb[0].mxu0
  %519 = vmatprep.mubr.bf16.mxu0 %v201
  %520 = vmatmul.mubr.bf16.gmra.mrb[0].mxu0 %v200
  %v521 = vpop.f32.mrb[0].mxu0
  %v522 = vadd.f32 %v119, %v521
  %v523 = vpop.f32.mrb[0].mxu0
  %v524 = vpop.f32.mrb[0].mxu0
  %v525 = vadd.f32 %v119, %v524
  %v526 = vpop.f32.mrb[0].mxu0
  %527 = vdwg.mxu0
  %528 = vmatprep.subr.bf16.mxu0 0
  %529 = vmatpush1.bf16.msra.mxu0 %v387
  %530 = vmatprep.subr.bf16.mxu0 0
  %531 = vmatpush1.bf16.msra.mxu0 %v388
  %532 = vmatprep.subr.bf16.mxu0 0
  %533 = vmatpush1.bf16.msra.mxu0 %v389
  %534 = vmatprep.subr.bf16.mxu0 0
  %535 = vmatpush1.bf16.msra.mxu0 %v390
  %536 = vmatprep.subr.bf16.mxu0 0
  %537 = vmatpush1.bf16.msra.mxu0 %v391
  %538 = vmatprep.subr.bf16.mxu0 0
  %539 = vmatpush1.bf16.msra.mxu0 %v392
  %540 = vmatprep.subr.bf16.mxu0 0
  %541 = vmatpush1.bf16.msra.mxu0 %v393
  %542 = vmatprep.subr.bf16.mxu0 0
  %543 = vmatpush1.bf16.msra.mxu0 %v394
  %544 = vmatprep.subr.bf16.mxu0 0
  %545 = vmatpush1.bf16.msra.mxu0 %v395
  %546 = vmatprep.subr.bf16.mxu0 0
  %547 = vmatpush1.bf16.msra.mxu0 %v396
  %548 = vmatprep.subr.bf16.mxu0 0
  %549 = vmatpush1.bf16.msra.mxu0 %v397
  %550 = vmatprep.subr.bf16.mxu0 0
  %551 = vmatpush1.bf16.msra.mxu0 %v398
  %552 = vmatprep.subr.bf16.mxu0 0
  %553 = vmatpush1.bf16.msra.mxu0 %v399
  %554 = vmatprep.subr.bf16.mxu0 0
  %555 = vmatpush1.bf16.msra.mxu0 %v400
  %556 = vmatprep.subr.bf16.mxu0 0
  %557 = vmatpush1.bf16.msra.mxu0 %v401
  %558 = vmatprep.subr.bf16.mxu0 0
  %559 = vmatpush1.bf16.msra.mxu0 %v402
  %560 = vmatprep.mubr.bf16.mxu0 %v188
  %561 = vmatmul.mubr.bf16.gmra.mrb[0].mxu0 %v187
  %v562 = vpop.f32.mrb[0].mxu0
  %v563 = vadd.f32 %v498, %v562
  %v564 = vpop.f32.mrb[0].mxu0
  %v565 = vpop.f32.mrb[0].mxu0
  %v566 = vadd.f32 %v501, %v565
  %v567 = vpop.f32.mrb[0].mxu0
  %568 = vmatprep.mubr.bf16.mxu0 %v193
  %569 = vmatmul.mubr.bf16.gmra.mrb[0].mxu0 %v192
  %v570 = vpop.f32.mrb[0].mxu0
  %v571 = vadd.f32 %v506, %v570
  %v572 = vpop.f32.mrb[0].mxu0
  %v573 = vpop.f32.mrb[0].mxu0
  %v574 = vadd.f32 %v509, %v573
  %v575 = vpop.f32.mrb[0].mxu0
  %576 = vmatprep.mubr.bf16.mxu0 %v198
  %577 = vmatmul.mubr.bf16.gmra.mrb[0].mxu0 %v197
  %v578 = vpop.f32.mrb[0].mxu0
  %v579 = vadd.f32 %v514, %v578
  %v580 = vpop.f32.mrb[0].mxu0
  %v581 = vpop.f32.mrb[0].mxu0
  %v582 = vadd.f32 %v517, %v581
  %v583 = vpop.f32.mrb[0].mxu0
  %584 = vmatprep.mubr.bf16.mxu0 %v203
  %585 = vmatmul.mubr.bf16.gmra.mrb[0].mxu0 %v202
  %v586 = vpop.f32.mrb[0].mxu0
  %v587 = vadd.f32 %v522, %v586
  %v588 = vpop.f32.mrb[0].mxu0
  %v589 = vpop.f32.mrb[0].mxu0
  %v590 = vadd.f32 %v525, %v589
  %v591 = vpop.f32.mrb[0].mxu0
  %592 = vdwg.mxu0
  %593 = vmatprep.subr.bf16.mxu0 0
  %594 = vmatpush1.bf16.msra.mxu0 %v403
  %595 = vmatprep.subr.bf16.mxu0 0
  %596 = vmatpush1.bf16.msra.mxu0 %v404
  %597 = vmatprep.subr.bf16.mxu0 0
  %598 = vmatpush1.bf16.msra.mxu0 %v405
  %599 = vmatprep.subr.bf16.mxu0 0
  %600 = vmatpush1.bf16.msra.mxu0 %v406
  %601 = vmatprep.subr.bf16.mxu0 0
  %602 = vmatpush1.bf16.msra.mxu0 %v407
  %603 = vmatprep.subr.bf16.mxu0 0
  %604 = vmatpush1.bf16.msra.mxu0 %v461
  %605 = vmatprep.subr.bf16.mxu0 0
  %606 = vmatpush1.bf16.msra.mxu0 0
  %607 = vmatprep.subr.bf16.mxu0 0
  %608 = vmatpush1.bf16.msra.mxu0 0
  %609 = vmatprep.subr.bf16.mxu0 0
  %610 = vmatpush1.bf16.msra.mxu0 0
  %611 = vmatprep.subr.bf16.mxu0 0
  %612 = vmatpush1.bf16.msra.mxu0 0
  %613 = vmatprep.subr.bf16.mxu0 0
  %614 = vmatpush1.bf16.msra.mxu0 0
  %615 = vmatprep.subr.bf16.mxu0 0
  %616 = vmatpush1.bf16.msra.mxu0 0
  %617 = vmatprep.subr.bf16.mxu0 0
  %618 = vmatpush1.bf16.msra.mxu0 0
  %619 = vmatprep.subr.bf16.mxu0 0
  %620 = vmatpush1.bf16.msra.mxu0 0
  %621 = vmatprep.subr.bf16.mxu0 0
  %622 = vmatpush1.bf16.msra.mxu0 0
  %623 = vmatprep.subr.bf16.mxu0 0
  %624 = vmatpush1.bf16.msra.mxu0 0
  %625 = vmatprep.mubr.bf16.mxu0 0
  %626 = vmatmul.mubr.bf16.gmra.mrb[0].mxu0 %v448
  %v627 = vpop.f32.mrb[0].mxu0
  %v628 = vadd.f32 %v563, %v627
  %v629 = vpop.f32.mrb[0].mxu0
  %v630 = vpop.f32.mrb[0].mxu0
  %v631 = vadd.f32 %v566, %v630
  %v632 = vpop.f32.mrb[0].mxu0
  %633 = vmatprep.mubr.bf16.mxu0 0
  %634 = vmatmul.mubr.bf16.gmra.mrb[0].mxu0 %v451
  %v635 = vpop.f32.mrb[0].mxu0
  %v636 = vadd.f32 %v571, %v635
  %v637 = vpop.f32.mrb[0].mxu0
  %v638 = vpop.f32.mrb[0].mxu0
  %v639 = vadd.f32 %v574, %v638
  %v640 = vpop.f32.mrb[0].mxu0
  %641 = vmatprep.mubr.bf16.mxu0 0
  %642 = vmatmul.mubr.bf16.gmra.mrb[0].mxu0 %v454
  %v643 = vpop.f32.mrb[0].mxu0
  %v644 = vadd.f32 %v579, %v643
  %v645 = vpop.f32.mrb[0].mxu0
  %v646 = vpop.f32.mrb[0].mxu0
  %v647 = vadd.f32 %v582, %v646
  %v648 = vpop.f32.mrb[0].mxu0
  %649 = vmatprep.mubr.bf16.mxu0 0
  %650 = vmatmul.mubr.bf16.gmra.mrb[0].mxu0 %v457
  %v651 = vpop.f32.mrb[0].mxu0
  %v652 = vadd.f32 %v587, %v651
  %v653 = vpop.f32.mrb[0].mxu0
  %v654 = vpop.f32.mrb[0].mxu0
  %v655 = vadd.f32 %v590, %v654
  %v656 = vpop.f32.mrb[0].mxu0
  %657 = vdwg.mxu0
  %vm658 = vcmp.ge.f32.partialorder %v628, 0.0
  %vm659 = vcmp.ge.f32.partialorder %v631, 0.0
  %vm660 = vcmp.ge.f32.partialorder %v636, 0.0
  %vm661 = vcmp.ge.f32.partialorder %v639, 0.0
  %vm662 = vcmp.ge.f32.partialorder %v644, 0.0
  %vm663 = vcmp.ge.f32.partialorder %v647, 0.0
  %vm664 = vcmp.ge.f32.partialorder %v652, 0.0
  %vm665 = vcmp.ge.f32.partialorder %v655, 0.0
  %v666 = vmul.f32 %v628, 0.2
  %v667 = vmul.f32 %v631, 0.2
  %v668 = vmul.f32 %v636, 0.2
  %v669 = vmul.f32 %v639, 0.2
  %v670 = vmul.f32 %v644, 0.2
  %v671 = vmul.f32 %v647, 0.2
  %v672 = vmul.f32 %v652, 0.2
  %v673 = vmul.f32 %v655, 0.2
  %v674 = vsel %vm658, %v628, %v666
  %v675 = vsel %vm659, %v631, %v667
  %v676 = vsel %vm660, %v636, %v668
  %v677 = vsel %vm661, %v639, %v669
  %v678 = vsel %vm662, %v644, %v670
  %v679 = vsel %vm663, %v647, %v671
  %v680 = vsel %vm664, %v652, %v672
  %v681 = vsel %vm665, %v655, %v673
  %v682 = vsub.f32 0.0, %v628
  %v683 = vsub.f32 0.0, %v631
  %v684 = vsub.f32 0.0, %v636
  %v685 = vsub.f32 0.0, %v639
  %v686 = vsub.f32 0.0, %v644
  %v687 = vsub.f32 0.0, %v647
  %v688 = vsub.f32 0.0, %v652
  %v689 = vsub.f32 0.0, %v655
  %v690 = vmul.f32 %v682, 1.442695
  %v691 = vpow.pop %v690
  %v692 = vmul.f32 %v683, 1.442695
  %v693 = vpow.pop %v692
  %v694 = vmul.f32 %v684, 1.442695
  %v695 = vpow.pop %v694
  %v696 = vmul.f32 %v685, 1.442695
  %v697 = vpow.pop %v696
  %v698 = vmul.f32 %v686, 1.442695
  %v699 = vpow.pop %v698
  %v700 = vmul.f32 %v687, 1.442695
  %v701 = vpow.pop %v700
  %v702 = vmul.f32 %v688, 1.442695
  %v703 = vpow.pop %v702
  %v704 = vmul.f32 %v689, 1.442695
  %v705 = vpow.pop %v704
  %v706 = vadd.f32 %v691, 1.0
  %v707 = vadd.f32 %v693, 1.0
  %v708 = vadd.f32 %v695, 1.0
  %v709 = vadd.f32 %v697, 1.0
  %v710 = vadd.f32 %v699, 1.0
  %v711 = vadd.f32 %v701, 1.0
  %v712 = vadd.f32 %v703, 1.0
  %v713 = vadd.f32 %v705, 1.0
  %v714 = vrcp.pop %v706
  %v715 = vrcp.pop %v707
  %v716 = vrcp.pop %v708
  %v717 = vrcp.pop %v709
  %v718 = vrcp.pop %v710
  %v719 = vrcp.pop %v711
  %v720 = vrcp.pop %v712
  %v721 = vrcp.pop %v713
  %730 = vrot.lane.b32.xlu0 %v714, 112
  %v731 = vpop.permute.xlu0 %730
  %732 = vrot.lane.b32.xlu0 %v715, 112
  %v733 = vpop.permute.xlu0 %732
  %734 = vrot.lane.b32.xlu0 %v716, 112
  %v735 = vpop.permute.xlu0 %734
  %736 = vrot.lane.b32.xlu0 %v717, 112
  %v737 = vpop.permute.xlu0 %736
  %738 = vrot.lane.b32.xlu0 %v718, 112
  %v739 = vpop.permute.xlu0 %738
  %740 = vrot.lane.b32.xlu0 %v719, 112
  %v741 = vpop.permute.xlu0 %740
  %742 = vrot.lane.b32.xlu0 %v720, 112
  %v743 = vpop.permute.xlu0 %742
  %744 = vrot.lane.b32.xlu0 %v721, 112
  %v745 = vpop.permute.xlu0 %744
  %v754 = vmul.f32 %v674, %v731
  %v755 = vmul.f32 %v675, %v733
  %v756 = vmul.f32 %v676, %v735
  %v757 = vmul.f32 %v677, %v737
  %v758 = vmul.f32 %v678, %v739
  %v759 = vmul.f32 %v679, %v741
  %v760 = vmul.f32 %v680, %v743
  %v761 = vmul.f32 %v681, %v745
  %v762 = vpack.c.bf16 %v755, %v754
  %v763 = vpack.c.bf16 %v757, %v756
  %v764 = vpack.c.bf16 %v759, %v758
  %v765 = vpack.c.bf16 %v761, %v760
  %v770 = vunpack.c.l.b16 %v762
  %v771 = vunpack.c.h.b16 %v762
  %v772 = vunpack.c.l.b16 %v763
  %v773 = vunpack.c.h.b16 %v763
  %v774 = vunpack.c.l.b16 %v764
  %v775 = vunpack.c.h.b16 %v764
  %v776 = vunpack.c.l.b16 %v765
  %v777 = vunpack.c.h.b16 %v765
  %v778 = vpack.c.b16 %v770, %v770
  %v779 = vpack.c.b16 %v771, %v771
  %v780 = vpack.c.b16 %v772, %v772
  %v781 = vpack.c.b16 %v773, %v773
  %v782 = vpack.c.b16 %v774, %v774
  %v783 = vpack.c.b16 %v775, %v775
  %v784 = vpack.c.b16 %v776, %v776
  %v785 = vpack.c.b16 %v777, %v777
  %vm794 = vcmask 125952
  %795 = vst.msk [vmem:[%s3] sm:$0xf] %vm794, %v778
  %796 = vst.msk [vmem:[%s3 + $0x4] sm:$0xf] %vm794, %v779
  %797 = vst.msk [vmem:[%s3 + $0x8] sm:$0xf] %vm794, %v780
  %798 = vst.msk [vmem:[%s3 + $0xc] sm:$0xf] %vm794, %v781
  %799 = vst.msk [vmem:[%s3 + $0x10] sm:$0xf] %vm794, %v782
  %800 = vst.msk [vmem:[%s3 + $0x14] sm:$0xf] %vm794, %v783
  %801 = vst.msk [vmem:[%s3 + $0x18] sm:$0xf] %vm794, %v784
  %802 = vst.msk [vmem:[%s3 + $0x1c] sm:$0xf] %vm794, %v785
  // Predicated region
  $region14: #{discriminator_forward.7} parent=0 // pred_check
    _
  $region15: #{discriminator_forward.7} parent=0 // pred_check_branch
    %804 = sbr.rel (0) target = $region17
  $region16: #{discriminator_forward.7} parent=0 // pred_region
    _
  $region17: #{discriminator_forward.7} parent=0 // pred_fallthru
    _
  // Predicated region
  $region18: #{discriminator_forward.7} parent=0 // pred_check
    _
  $region19: #{discriminator_forward.7} parent=0 // pred_check_branch
    %806 = sbr.rel (0) target = $region21
  $region20: #{discriminator_forward.7} parent=0 // pred_region
    _
  $region21: #{discriminator_forward.7} parent=0 // pred_fallthru
    _

// kernel: discriminator_forward.8
$region0: #{discriminator_forward.8}
  #allocation0 [shape = 'u32[]', space=smem, size = 0x4, offset = 0x4, fixed_abs, tag = 'smem constant byte address 0x4 - core index']
  #allocation1 [shape = 'u32[144,128]{1,0:T(1,128)}', space=vmem, size = 0x12000, scoped, tag = 'internal scratch']
  %s0 = inlined_call_operand.vmem [shape: bf16[16,1200], index: 0, kind: input, shape index: {}]
  %s1 = inlined_call_operand.vmem [shape: bf16[1200,32], index: 1, kind: input, shape index: {}]
  %s2 = inlined_call_operand.vmem [shape: f32[1,32], index: 2, kind: input, shape index: {}]
  %s3 = inlined_call_operand.vmem [shape: bf16[16,16], index: 3, kind: output, shape index: {}]
  %s4 = sld [smem:[#allocation0]]
  $region22: #{discriminator_forward.8} parent=0
    _
  %s6 = ssub.s32 1, %s4
  %s7 = scalar_select 0, %s6, %s4
  // Predicated region
  $region2: #{discriminator_forward.8} parent=0 // pred_check
    _
  $region3: #{discriminator_forward.8} parent=0 // pred_check_branch
    %9 = sbr.rel (0) target = $region5
  $region4: #{discriminator_forward.8} parent=0 // pred_region
    _
  $region5: #{discriminator_forward.8} parent=0 // pred_fallthru
    _
  // Predicated region
  $region6: #{discriminator_forward.8} parent=0 // pred_check
    _
  $region7: #{discriminator_forward.8} parent=0 // pred_check_branch
    %11 = sbr.rel (0) target = $region9
  $region8: #{discriminator_forward.8} parent=0 // pred_region
    _
  $region9: #{discriminator_forward.8} parent=0 // pred_fallthru
    _
  // Predicated region
  $region10: #{discriminator_forward.8} parent=0 // pred_check
    _
  $region11: #{discriminator_forward.8} parent=0 // pred_check_branch
    %13 = sbr.rel (0) target = $region13
  $region12: #{discriminator_forward.8} parent=0 // pred_region
    _
  $region13: #{discriminator_forward.8} parent=0 // pred_fallthru
    _
  %v15 = vld [vmem:[%s0] sm:$0xff]
  %v16 = vld [vmem:[%s0 + $0x8] sm:$0xff]
  %v17 = vld [vmem:[%s0 + $0x10] sm:$0xff]
  %v18 = vld [vmem:[%s0 + $0x18] sm:$0xff]
  %v19 = vld [vmem:[%s0 + $0x20] sm:$0xff]
  %v20 = vld [vmem:[%s0 + $0x28] sm:$0xff]
  %v21 = vld [vmem:[%s0 + $0x30] sm:$0xff]
  %v22 = vld [vmem:[%s0 + $0x38] sm:$0xff]
  %v23 = vld [vmem:[%s0 + $0x40] sm:$0xff]
  %v24 = vld [vmem:[%s0 + $0x48] sm:$0xff]
  %v25 = vld [vmem:[%s1] sm:$0xf]
  %v26 = vld [vmem:[%s1 + $0x4] sm:$0xf]
  %v27 = vld [vmem:[%s1 + $0x8] sm:$0xf]
  %v28 = vld [vmem:[%s1 + $0xc] sm:$0xf]
  %v29 = vld [vmem:[%s1 + $0x10] sm:$0xf]
  %v30 = vld [vmem:[%s1 + $0x14] sm:$0xf]
  %v31 = vld [vmem:[%s1 + $0x18] sm:$0xf]
  %v32 = vld [vmem:[%s1 + $0x1c] sm:$0xf]
  %v33 = vld [vmem:[%s1 + $0x20] sm:$0xf]
  %v34 = vld [vmem:[%s1 + $0x24] sm:$0xf]
  %v35 = vld [vmem:[%s1 + $0x28] sm:$0xf]
  %v36 = vld [vmem:[%s1 + $0x2c] sm:$0xf]
  %v37 = vld [vmem:[%s1 + $0x30] sm:$0xf]
  %v38 = vld [vmem:[%s1 + $0x34] sm:$0xf]
  %v39 = vld [vmem:[%s1 + $0x38] sm:$0xf]
  %v40 = vld [vmem:[%s1 + $0x3c] sm:$0xf]
  %v41 = vld [vmem:[%s1 + $0x40] sm:$0xf]
  %v42 = vld [vmem:[%s1 + $0x44] sm:$0xf]
  %v43 = vld [vmem:[%s1 + $0x48] sm:$0xf]
  %v44 = vld [vmem:[%s1 + $0x4c] sm:$0xf]
  %v45 = vld [vmem:[%s1 + $0x50] sm:$0xf]
  %v46 = vld [vmem:[%s1 + $0x54] sm:$0xf]
  %v47 = vld [vmem:[%s1 + $0x58] sm:$0xf]
  %v48 = vld [vmem:[%s1 + $0x5c] sm:$0xf]
  %v49 = vld [vmem:[%s1 + $0x60] sm:$0xf]
  %v50 = vld [vmem:[%s1 + $0x64] sm:$0xf]
  %v51 = vld [vmem:[%s1 + $0x68] sm:$0xf]
  %v52 = vld [vmem:[%s1 + $0x6c] sm:$0xf]
  %v53 = vld [vmem:[%s1 + $0x70] sm:$0xf]
  %v54 = vld [vmem:[%s1 + $0x74] sm:$0xf]
  %v55 = vld [vmem:[%s1 + $0x78] sm:$0xf]
  %v56 = vld [vmem:[%s1 + $0x7c] sm:$0xf]
  %v57 = vld [vmem:[%s1 + $0x80] sm:$0xf]
  %v58 = vld [vmem:[%s1 + $0x84] sm:$0xf]
  %v59 = vld [vmem:[%s1 + $0x88] sm:$0xf]
  %v60 = vld [vmem:[%s1 + $0x8c] sm:$0xf]
  %v61 = vld [vmem:[%s1 + $0x90] sm:$0xf]
  %v62 = vld [vmem:[%s1 + $0x94] sm:$0xf]
  %v63 = vld [vmem:[%s1 + $0x98] sm:$0xf]
  %v64 = vld [vmem:[%s1 + $0x9c] sm:$0xf]
  %v65 = vld [vmem:[%s1 + $0xa0] sm:$0xf]
  %v66 = vld [vmem:[%s1 + $0xa4] sm:$0xf]
  %v67 = vld [vmem:[%s1 + $0xa8] sm:$0xf]
  %v68 = vld [vmem:[%s1 + $0xac] sm:$0xf]
  %v69 = vld [vmem:[%s1 + $0xb0] sm:$0xf]
  %v70 = vld [vmem:[%s1 + $0xb4] sm:$0xf]
  %v71 = vld [vmem:[%s1 + $0xb8] sm:$0xf]
  %v72 = vld [vmem:[%s1 + $0xbc] sm:$0xf]
  %v73 = vld [vmem:[%s1 + $0xc0] sm:$0xf]
  %v74 = vld [vmem:[%s1 + $0xc4] sm:$0xf]
  %v75 = vld [vmem:[%s1 + $0xc8] sm:$0xf]
  %v76 = vld [vmem:[%s1 + $0xcc] sm:$0xf]
  %v77 = vld [vmem:[%s1 + $0xd0] sm:$0xf]
  %v78 = vld [vmem:[%s1 + $0xd4] sm:$0xf]
  %v79 = vld [vmem:[%s1 + $0xd8] sm:$0xf]
  %v80 = vld [vmem:[%s1 + $0xdc] sm:$0xf]
  %v81 = vld [vmem:[%s1 + $0xe0] sm:$0xf]
  %v82 = vld [vmem:[%s1 + $0xe4] sm:$0xf]
  %v83 = vld [vmem:[%s1 + $0xe8] sm:$0xf]
  %v84 = vld [vmem:[%s1 + $0xec] sm:$0xf]
  %v85 = vld [vmem:[%s1 + $0xf0] sm:$0xf]
  %v86 = vld [vmem:[%s1 + $0xf4] sm:$0xf]
  %v87 = vld [vmem:[%s1 + $0xf8] sm:$0xf]
  %v88 = vld [vmem:[%s1 + $0xfc] sm:$0xf]
  %v89 = vld [vmem:[%s1 + $0x100] sm:$0xf]
  %v90 = vld [vmem:[%s1 + $0x104] sm:$0xf]
  %v91 = vld [vmem:[%s1 + $0x108] sm:$0xf]
  %v92 = vld [vmem:[%s1 + $0x10c] sm:$0xf]
  %v93 = vld [vmem:[%s1 + $0x110] sm:$0xf]
  %v94 = vld [vmem:[%s1 + $0x114] sm:$0xf]
  %v95 = vld [vmem:[%s1 + $0x118] sm:$0xf]
  %v96 = vld [vmem:[%s1 + $0x11c] sm:$0xf]
  %v97 = vld [vmem:[%s1 + $0x120] sm:$0xf]
  %v98 = vld [vmem:[%s1 + $0x124] sm:$0xf]
  %v99 = vld [vmem:[%s1 + $0x128] sm:$0xf]
  %v100 = vld [vmem:[%s1 + $0x12c] sm:$0xf]
  %v101 = vld [vmem:[%s1 + $0x130] sm:$0xf]
  %v102 = vld [vmem:[%s1 + $0x134] sm:$0xf]
  %v103 = vld [vmem:[%s1 + $0x138] sm:$0xf]
  %v104 = vld [vmem:[%s1 + $0x13c] sm:$0xf]
  %v105 = vld [vmem:[%s1 + $0x140] sm:$0xf]
  %v106 = vld [vmem:[%s1 + $0x144] sm:$0xf]
  %v107 = vld [vmem:[%s1 + $0x148] sm:$0xf]
  %v108 = vld [vmem:[%s1 + $0x14c] sm:$0xf]
  %v109 = vld [vmem:[%s1 + $0x150] sm:$0xf]
  %v110 = vld [vmem:[%s1 + $0x154] sm:$0xf]
  %v111 = vld [vmem:[%s1 + $0x158] sm:$0xf]
  %v112 = vld [vmem:[%s1 + $0x15c] sm:$0xf]
  %v113 = vld [vmem:[%s1 + $0x160] sm:$0xf]
  %v114 = vld [vmem:[%s1 + $0x164] sm:$0xf]
  %v115 = vld [vmem:[%s1 + $0x168] sm:$0xf]
  %v116 = vld [vmem:[%s1 + $0x16c] sm:$0xf]
  %v117 = vld [vmem:[%s1 + $0x170] sm:$0xf]
  %v118 = vld [vmem:[%s1 + $0x174] sm:$0xf]
  %v119 = vld [vmem:[%s1 + $0x178] sm:$0xf]
  %v120 = vld [vmem:[%s1 + $0x17c] sm:$0xf]
  %v121 = vld [vmem:[%s1 + $0x180] sm:$0xf]
  %v122 = vld [vmem:[%s1 + $0x184] sm:$0xf]
  %v123 = vld [vmem:[%s1 + $0x188] sm:$0xf]
  %v124 = vld [vmem:[%s1 + $0x18c] sm:$0xf]
  %v125 = vld [vmem:[%s1 + $0x190] sm:$0xf]
  %v126 = vld [vmem:[%s1 + $0x194] sm:$0xf]
  %v127 = vld [vmem:[%s1 + $0x198] sm:$0xf]
  %v128 = vld [vmem:[%s1 + $0x19c] sm:$0xf]
  %v129 = vld [vmem:[%s1 + $0x1a0] sm:$0xf]
  %v130 = vld [vmem:[%s1 + $0x1a4] sm:$0xf]
  %v131 = vld [vmem:[%s1 + $0x1a8] sm:$0xf]
  %v132 = vld [vmem:[%s1 + $0x1ac] sm:$0xf]
  %v133 = vld [vmem:[%s1 + $0x1b0] sm:$0xf]
  %v134 = vld [vmem:[%s1 + $0x1b4] sm:$0xf]
  %v135 = vld [vmem:[%s1 + $0x1b8] sm:$0xf]
  %v136 = vld [vmem:[%s1 + $0x1bc] sm:$0xf]
  %v137 = vld [vmem:[%s1 + $0x1c0] sm:$0xf]
  %v138 = vld [vmem:[%s1 + $0x1c4] sm:$0xf]
  %v139 = vld [vmem:[%s1 + $0x1c8] sm:$0xf]
  %v140 = vld [vmem:[%s1 + $0x1cc] sm:$0xf]
  %v141 = vld [vmem:[%s1 + $0x1d0] sm:$0xf]
  %v142 = vld [vmem:[%s1 + $0x1d4] sm:$0xf]
  %v143 = vld [vmem:[%s1 + $0x1d8] sm:$0xf]
  %v144 = vld [vmem:[%s1 + $0x1dc] sm:$0xf]
  %v145 = vld [vmem:[%s1 + $0x1e0] sm:$0xf]
  %v146 = vld [vmem:[%s1 + $0x1e4] sm:$0xf]
  %v147 = vld [vmem:[%s1 + $0x1e8] sm:$0xf]
  %v148 = vld [vmem:[%s1 + $0x1ec] sm:$0xf]
  %v149 = vld [vmem:[%s1 + $0x1f0] sm:$0xf]
  %v150 = vld [vmem:[%s1 + $0x1f4] sm:$0xf]
  %v151 = vld [vmem:[%s1 + $0x1f8] sm:$0xf]
  %v152 = vld [vmem:[%s1 + $0x1fc] sm:$0xf]
  %v153 = vld [vmem:[%s1 + $0x200] sm:$0xf]
  %v154 = vld [vmem:[%s1 + $0x204] sm:$0xf]
  %v155 = vld [vmem:[%s1 + $0x208] sm:$0xf]
  %v156 = vld [vmem:[%s1 + $0x20c] sm:$0xf]
  %v157 = vld [vmem:[%s1 + $0x210] sm:$0xf]
  %v158 = vld [vmem:[%s1 + $0x214] sm:$0xf]
  %v159 = vld [vmem:[%s1 + $0x218] sm:$0xf]
  %v160 = vld [vmem:[%s1 + $0x21c] sm:$0xf]
  %v161 = vld [vmem:[%s1 + $0x220] sm:$0xf]
  %v162 = vld [vmem:[%s1 + $0x224] sm:$0xf]
  %v163 = vld [vmem:[%s1 + $0x228] sm:$0xf]
  %v164 = vld [vmem:[%s1 + $0x22c] sm:$0xf]
  %v165 = vld [vmem:[%s1 + $0x230] sm:$0xf]
  %v166 = vld [vmem:[%s1 + $0x234] sm:$0xf]
  %v167 = vld [vmem:[%s1 + $0x238] sm:$0xf]
  %v168 = vld [vmem:[%s1 + $0x23c] sm:$0xf]
  %v169 = vld [vmem:[%s1 + $0x240] sm:$0xf]
  %v170 = vld [vmem:[%s1 + $0x244] sm:$0xf]
  %v171 = vld [vmem:[%s1 + $0x248] sm:$0xf]
  %v172 = vld [vmem:[%s1 + $0x24c] sm:$0xf]
  %v173 = vld [vmem:[%s1 + $0x250] sm:$0xf]
  %v174 = vld [vmem:[%s1 + $0x254] sm:$0xf]
  %v175 = vld [vmem:[%s2] sm:$0x1]
  %v177 = vlaneseq
  %v178 = vshrl.u32 %v177, 7
  %v179 = vsub.s32 0, %v178
  %v180 = vrot.slane %v175, %v179
  %v192 = vunpack.c.l.b16 %v15
  %v193 = vunpack.c.h.b16 %v15
  %v194 = vunpack.c.l.b16 %v16
  %v195 = vunpack.c.h.b16 %v16
  %v196 = vunpack.c.l.b16 %v17
  %v197 = vunpack.c.h.b16 %v17
  %v198 = vunpack.c.l.b16 %v18
  %v199 = vunpack.c.h.b16 %v18
  %v200 = vunpack.c.l.b16 %v19
  %v201 = vunpack.c.h.b16 %v19
  %v202 = vunpack.c.l.b16 %v20
  %v203 = vunpack.c.h.b16 %v20
  %v204 = vunpack.c.l.b16 %v21
  %v205 = vunpack.c.h.b16 %v21
  %v206 = vunpack.c.l.b16 %v22
  %v207 = vunpack.c.h.b16 %v22
  %v208 = vunpack.c.l.b16 %v23
  %v209 = vunpack.c.h.b16 %v23
  %v210 = vunpack.c.l.b16 %v24
  %v211 = vunpack.c.h.b16 %v24
  %v212 = vpack.c.b16 %v202, %v192
  %v213 = vpack.c.b16 %v203, %v193
  %v214 = vpack.c.b16 %v204, %v194
  %v215 = vpack.c.b16 %v205, %v195
  %v216 = vpack.c.b16 %v206, %v196
  %v217 = vpack.c.b16 %v207, %v197
  %v218 = vpack.c.b16 %v208, %v198
  %v219 = vpack.c.b16 %v209, %v199
  %v220 = vpack.c.b16 %v210, %v200
  %v221 = vpack.c.b16 %v211, %v201
  %v381 = vunpack.c.l.b16 %v25
  %v382 = vunpack.c.l.b16 %v26
  %v383 = vunpack.c.l.b16 %v27
  %v384 = vunpack.c.l.b16 %v28
  %v385 = vunpack.c.l.b16 %v29
  %v386 = vunpack.c.l.b16 %v30
  %v387 = vunpack.c.l.b16 %v31
  %v388 = vunpack.c.l.b16 %v32
  %v389 = vunpack.c.l.b16 %v33
  %v390 = vunpack.c.l.b16 %v34
  %v391 = vunpack.c.l.b16 %v35
  %v392 = vunpack.c.l.b16 %v36
  %v393 = vunpack.c.l.b16 %v37
  %v394 = vunpack.c.l.b16 %v38
  %v395 = vunpack.c.l.b16 %v39
  %v396 = vunpack.c.l.b16 %v40
  %v397 = vunpack.c.l.b16 %v41
  %v398 = vunpack.c.l.b16 %v42
  %v399 = vunpack.c.l.b16 %v43
  %v400 = vunpack.c.l.b16 %v44
  %v401 = vunpack.c.l.b16 %v45
  %v402 = vunpack.c.l.b16 %v46
  %v403 = vunpack.c.l.b16 %v47
  %v404 = vunpack.c.l.b16 %v48
  %v405 = vunpack.c.l.b16 %v49
  %v406 = vunpack.c.l.b16 %v50
  %v407 = vunpack.c.l.b16 %v51
  %v408 = vunpack.c.l.b16 %v52
  %v409 = vunpack.c.l.b16 %v53
  %v410 = vunpack.c.l.b16 %v54
  %v411 = vunpack.c.l.b16 %v55
  %v412 = vunpack.c.l.b16 %v56
  %v413 = vunpack.c.l.b16 %v57
  %v414 = vunpack.c.l.b16 %v58
  %v415 = vunpack.c.l.b16 %v59
  %v416 = vunpack.c.l.b16 %v60
  %v417 = vunpack.c.l.b16 %v61
  %v418 = vunpack.c.l.b16 %v62
  %v419 = vunpack.c.l.b16 %v63
  %v420 = vunpack.c.l.b16 %v64
  %v421 = vunpack.c.l.b16 %v65
  %v422 = vunpack.c.l.b16 %v66
  %v423 = vunpack.c.l.b16 %v67
  %v424 = vunpack.c.l.b16 %v68
  %v425 = vunpack.c.l.b16 %v69
  %v426 = vunpack.c.l.b16 %v70
  %v427 = vunpack.c.l.b16 %v71
  %v428 = vunpack.c.l.b16 %v72
  %v429 = vunpack.c.l.b16 %v73
  %v430 = vunpack.c.l.b16 %v74
  %v431 = vunpack.c.l.b16 %v75
  %v432 = vunpack.c.l.b16 %v76
  %v433 = vunpack.c.l.b16 %v77
  %v434 = vunpack.c.l.b16 %v78
  %v435 = vunpack.c.l.b16 %v79
  %v436 = vunpack.c.l.b16 %v80
  %v437 = vunpack.c.l.b16 %v81
  %v438 = vunpack.c.l.b16 %v82
  %v439 = vunpack.c.l.b16 %v83
  %v440 = vunpack.c.l.b16 %v84
  %v441 = vunpack.c.l.b16 %v85
  %v442 = vunpack.c.l.b16 %v86
  %v443 = vunpack.c.l.b16 %v87
  %v444 = vunpack.c.l.b16 %v88
  %v445 = vunpack.c.l.b16 %v89
  %v446 = vunpack.c.l.b16 %v90
  %v447 = vunpack.c.l.b16 %v91
  %v448 = vunpack.c.l.b16 %v92
  %v449 = vunpack.c.l.b16 %v93
  %v450 = vunpack.c.l.b16 %v94
  %v451 = vunpack.c.l.b16 %v95
  %v452 = vunpack.c.l.b16 %v96
  %v453 = vunpack.c.l.b16 %v97
  %v454 = vunpack.c.l.b16 %v98
  %v455 = vunpack.c.l.b16 %v99
  %v456 = vunpack.c.l.b16 %v100
  %v457 = vunpack.c.l.b16 %v101
  %v458 = vunpack.c.l.b16 %v102
  %v459 = vunpack.c.l.b16 %v103
  %v460 = vunpack.c.l.b16 %v104
  %v461 = vunpack.c.l.b16 %v105
  %v462 = vunpack.c.l.b16 %v106
  %v463 = vunpack.c.l.b16 %v107
  %v464 = vunpack.c.l.b16 %v108
  %v465 = vunpack.c.l.b16 %v109
  %v466 = vunpack.c.l.b16 %v110
  %v467 = vunpack.c.l.b16 %v111
  %v468 = vunpack.c.l.b16 %v112
  %v469 = vunpack.c.l.b16 %v113
  %v470 = vunpack.c.l.b16 %v114
  %v471 = vunpack.c.l.b16 %v115
  %v472 = vunpack.c.l.b16 %v116
  %v473 = vunpack.c.l.b16 %v117
  %v474 = vunpack.c.l.b16 %v118
  %v475 = vunpack.c.l.b16 %v119
  %v476 = vunpack.c.l.b16 %v120
  %v477 = vunpack.c.l.b16 %v121
  %v478 = vunpack.c.l.b16 %v122
  %v479 = vunpack.c.l.b16 %v123
  %v480 = vunpack.c.l.b16 %v124
  %v481 = vunpack.c.l.b16 %v125
  %v482 = vunpack.c.l.b16 %v126
  %v483 = vunpack.c.l.b16 %v127
  %v484 = vunpack.c.l.b16 %v128
  %v485 = vunpack.c.l.b16 %v129
  %v486 = vunpack.c.l.b16 %v130
  %v487 = vunpack.c.l.b16 %v131
  %v488 = vunpack.c.l.b16 %v132
  %v489 = vunpack.c.l.b16 %v133
  %v490 = vunpack.c.l.b16 %v134
  %v491 = vunpack.c.l.b16 %v135
  %v492 = vunpack.c.l.b16 %v136
  %v493 = vunpack.c.l.b16 %v137
  %v494 = vunpack.c.l.b16 %v138
  %v495 = vunpack.c.l.b16 %v139
  %v496 = vunpack.c.l.b16 %v140
  %v497 = vunpack.c.l.b16 %v141
  %v498 = vunpack.c.l.b16 %v142
  %v499 = vunpack.c.l.b16 %v143
  %v500 = vunpack.c.l.b16 %v144
  %v501 = vunpack.c.l.b16 %v145
  %v502 = vunpack.c.l.b16 %v146
  %v503 = vunpack.c.l.b16 %v147
  %v504 = vunpack.c.l.b16 %v148
  %v505 = vunpack.c.l.b16 %v149
  %v506 = vunpack.c.l.b16 %v150
  %v507 = vunpack.c.l.b16 %v151
  %v508 = vunpack.c.l.b16 %v152
  %v509 = vunpack.c.l.b16 %v153
  %v510 = vunpack.c.l.b16 %v154
  %v511 = vunpack.c.l.b16 %v155
  %v512 = vunpack.c.l.b16 %v156
  %v513 = vunpack.c.l.b16 %v157
  %v514 = vunpack.c.l.b16 %v158
  %v515 = vunpack.c.l.b16 %v159
  %v516 = vunpack.c.l.b16 %v160
  %v517 = vunpack.c.l.b16 %v161
  %v518 = vunpack.c.l.b16 %v162
  %v519 = vunpack.c.l.b16 %v163
  %v520 = vunpack.c.l.b16 %v164
  %v521 = vunpack.c.l.b16 %v165
  %v522 = vunpack.c.l.b16 %v166
  %v523 = vunpack.c.l.b16 %v167
  %v524 = vunpack.c.l.b16 %v168
  %v525 = vunpack.c.l.b16 %v169
  %v526 = vunpack.c.l.b16 %v170
  %v527 = vunpack.c.l.b16 %v171
  %v528 = vunpack.c.l.b16 %v172
  %v529 = vunpack.c.l.b16 %v173
  %v530 = vunpack.c.l.b16 %v174
  %v531 = vpack.c.b16 %v382, %v381
  %v532 = vpack.c.b16 %v384, %v383
  %v533 = vpack.c.b16 %v386, %v385
  %v534 = vpack.c.b16 %v388, %v387
  %v535 = vpack.c.b16 %v390, %v389
  %v536 = vpack.c.b16 %v392, %v391
  %v537 = vpack.c.b16 %v394, %v393
  %v538 = vpack.c.b16 %v396, %v395
  %v539 = vpack.c.b16 %v398, %v397
  %v540 = vpack.c.b16 %v400, %v399
  %v541 = vpack.c.b16 %v402, %v401
  %v542 = vpack.c.b16 %v404, %v403
  %v543 = vpack.c.b16 %v406, %v405
  %v544 = vpack.c.b16 %v408, %v407
  %v545 = vpack.c.b16 %v410, %v409
  %v546 = vpack.c.b16 %v412, %v411
  %v547 = vpack.c.b16 %v414, %v413
  %v548 = vpack.c.b16 %v416, %v415
  %v549 = vpack.c.b16 %v418, %v417
  %v550 = vpack.c.b16 %v420, %v419
  %v551 = vpack.c.b16 %v422, %v421
  %v552 = vpack.c.b16 %v424, %v423
  %v553 = vpack.c.b16 %v426, %v425
  %v554 = vpack.c.b16 %v428, %v427
  %v555 = vpack.c.b16 %v430, %v429
  %v556 = vpack.c.b16 %v432, %v431
  %v557 = vpack.c.b16 %v434, %v433
  %v558 = vpack.c.b16 %v436, %v435
  %v559 = vpack.c.b16 %v438, %v437
  %v560 = vpack.c.b16 %v440, %v439
  %v561 = vpack.c.b16 %v442, %v441
  %v562 = vpack.c.b16 %v444, %v443
  %v563 = vpack.c.b16 %v446, %v445
  %v564 = vpack.c.b16 %v448, %v447
  %v565 = vpack.c.b16 %v450, %v449
  %v566 = vpack.c.b16 %v452, %v451
  %v567 = vpack.c.b16 %v454, %v453
  %v568 = vpack.c.b16 %v456, %v455
  %v569 = vpack.c.b16 %v458, %v457
  %v570 = vpack.c.b16 %v460, %v459
  %v571 = vpack.c.b16 %v462, %v461
  %v572 = vpack.c.b16 %v464, %v463
  %v573 = vpack.c.b16 %v466, %v465
  %v574 = vpack.c.b16 %v468, %v467
  %v575 = vpack.c.b16 %v470, %v469
  %v576 = vpack.c.b16 %v472, %v471
  %v577 = vpack.c.b16 %v474, %v473
  %v578 = vpack.c.b16 %v476, %v475
  %v579 = vpack.c.b16 %v478, %v477
  %v580 = vpack.c.b16 %v480, %v479
  %v581 = vpack.c.b16 %v482, %v481
  %v582 = vpack.c.b16 %v484, %v483
  %v583 = vpack.c.b16 %v486, %v485
  %v584 = vpack.c.b16 %v488, %v487
  %v585 = vpack.c.b16 %v490, %v489
  %v586 = vpack.c.b16 %v492, %v491
  %v587 = vpack.c.b16 %v494, %v493
  %v588 = vpack.c.b16 %v496, %v495
  %v589 = vpack.c.b16 %v498, %v497
  %v590 = vpack.c.b16 %v500, %v499
  %v591 = vpack.c.b16 %v502, %v501
  %v592 = vpack.c.b16 %v504, %v503
  %v593 = vpack.c.b16 %v506, %v505
  %v594 = vpack.c.b16 %v508, %v507
  %v595 = vpack.c.b16 %v510, %v509
  %v596 = vpack.c.b16 %v512, %v511
  %v597 = vpack.c.b16 %v514, %v513
  %v598 = vpack.c.b16 %v516, %v515
  %v599 = vpack.c.b16 %v518, %v517
  %v600 = vpack.c.b16 %v520, %v519
  %v601 = vpack.c.b16 %v522, %v521
  %v602 = vpack.c.b16 %v524, %v523
  %v603 = vpack.c.b16 %v526, %v525
  %v604 = vpack.c.b16 %v528, %v527
  %v605 = vpack.c.b16 %v530, %v529
  %vm681 = vcmask 392192
  %v683 = vsel %vm681, %v221, 0
  %685 = vmatprep.subr.bf16.mxu0 0
  %686 = vmatpush1.bf16.msra.mxu0 %v531
  %687 = vmatprep.subr.bf16.mxu0 0
  %688 = vmatpush1.bf16.msra.mxu0 %v532
  %689 = vmatprep.subr.bf16.mxu0 0
  %690 = vmatpush1.bf16.msra.mxu0 %v533
  %691 = vmatprep.subr.bf16.mxu0 0
  %692 = vmatpush1.bf16.msra.mxu0 %v534
  %693 = vmatprep.subr.bf16.mxu0 0
  %694 = vmatpush1.bf16.msra.mxu0 %v535
  %695 = vmatprep.subr.bf16.mxu0 0
  %696 = vmatpush1.bf16.msra.mxu0 %v536
  %697 = vmatprep.subr.bf16.mxu0 0
  %698 = vmatpush1.bf16.msra.mxu0 %v537
  %699 = vmatprep.subr.bf16.mxu0 0
  %700 = vmatpush1.bf16.msra.mxu0 %v538
  %701 = vmatprep.subr.bf16.mxu0 0
  %702 = vmatpush1.bf16.msra.mxu0 %v539
  %703 = vmatprep.subr.bf16.mxu0 0
  %704 = vmatpush1.bf16.msra.mxu0 %v540
  %705 = vmatprep.subr.bf16.mxu0 0
  %706 = vmatpush1.bf16.msra.mxu0 %v541
  %707 = vmatprep.subr.bf16.mxu0 0
  %708 = vmatpush1.bf16.msra.mxu0 %v542
  %709 = vmatprep.subr.bf16.mxu0 0
  %710 = vmatpush1.bf16.msra.mxu0 %v543
  %711 = vmatprep.subr.bf16.mxu0 0
  %712 = vmatpush1.bf16.msra.mxu0 %v544
  %713 = vmatprep.subr.bf16.mxu0 0
  %714 = vmatpush1.bf16.msra.mxu0 %v545
  %715 = vmatprep.subr.bf16.mxu0 0
  %716 = vmatpush1.bf16.msra.mxu0 %v546
  %717 = vmatprep.mubr.bf16.mxu0 %v213
  %718 = vmatmul.mubr.bf16.gmra.mrb[0].mxu0 %v212
  %v719 = vpop.f32.mrb[0].mxu0
  %v720 = vadd.f32 %v180, %v719
  %v721 = vpop.f32.mrb[0].mxu0
  %v722 = vpop.f32.mrb[0].mxu0
  %v723 = vadd.f32 %v180, %v722
  %v724 = vpop.f32.mrb[0].mxu0
  %725 = vdwg.mxu0
  %726 = vmatprep.subr.bf16.mxu0 0
  %727 = vmatpush1.bf16.msra.mxu0 %v547
  %728 = vmatprep.subr.bf16.mxu0 0
  %729 = vmatpush1.bf16.msra.mxu0 %v548
  %730 = vmatprep.subr.bf16.mxu0 0
  %731 = vmatpush1.bf16.msra.mxu0 %v549
  %732 = vmatprep.subr.bf16.mxu0 0
  %733 = vmatpush1.bf16.msra.mxu0 %v550
  %734 = vmatprep.subr.bf16.mxu0 0
  %735 = vmatpush1.bf16.msra.mxu0 %v551
  %736 = vmatprep.subr.bf16.mxu0 0
  %737 = vmatpush1.bf16.msra.mxu0 %v552
  %738 = vmatprep.subr.bf16.mxu0 0
  %739 = vmatpush1.bf16.msra.mxu0 %v553
  %740 = vmatprep.subr.bf16.mxu0 0
  %741 = vmatpush1.bf16.msra.mxu0 %v554
  %742 = vmatprep.subr.bf16.mxu0 0
  %743 = vmatpush1.bf16.msra.mxu0 %v555
  %744 = vmatprep.subr.bf16.mxu0 0
  %745 = vmatpush1.bf16.msra.mxu0 %v556
  %746 = vmatprep.subr.bf16.mxu0 0
  %747 = vmatpush1.bf16.msra.mxu0 %v557
  %748 = vmatprep.subr.bf16.mxu0 0
  %749 = vmatpush1.bf16.msra.mxu0 %v558
  %750 = vmatprep.subr.bf16.mxu0 0
  %751 = vmatpush1.bf16.msra.mxu0 %v559
  %752 = vmatprep.subr.bf16.mxu0 0
  %753 = vmatpush1.bf16.msra.mxu0 %v560
  %754 = vmatprep.subr.bf16.mxu0 0
  %755 = vmatpush1.bf16.msra.mxu0 %v561
  %756 = vmatprep.subr.bf16.mxu0 0
  %757 = vmatpush1.bf16.msra.mxu0 %v562
  %758 = vmatprep.mubr.bf16.mxu0 %v215
  %759 = vmatmul.mubr.bf16.gmra.mrb[0].mxu0 %v214
  %v760 = vpop.f32.mrb[0].mxu0
  %v761 = vadd.f32 %v720, %v760
  %v762 = vpop.f32.mrb[0].mxu0
  %v763 = vpop.f32.mrb[0].mxu0
  %v764 = vadd.f32 %v723, %v763
  %v765 = vpop.f32.mrb[0].mxu0
  %766 = vdwg.mxu0
  %767 = vmatprep.subr.bf16.mxu0 0
  %768 = vmatpush1.bf16.msra.mxu0 %v563
  %769 = vmatprep.subr.bf16.mxu0 0
  %770 = vmatpush1.bf16.msra.mxu0 %v564
  %771 = vmatprep.subr.bf16.mxu0 0
  %772 = vmatpush1.bf16.msra.mxu0 %v565
  %773 = vmatprep.subr.bf16.mxu0 0
  %774 = vmatpush1.bf16.msra.mxu0 %v566
  %775 = vmatprep.subr.bf16.mxu0 0
  %776 = vmatpush1.bf16.msra.mxu0 %v567
  %777 = vmatprep.subr.bf16.mxu0 0
  %778 = vmatpush1.bf16.msra.mxu0 %v568
  %779 = vmatprep.subr.bf16.mxu0 0
  %780 = vmatpush1.bf16.msra.mxu0 %v569
  %781 = vmatprep.subr.bf16.mxu0 0
  %782 = vmatpush1.bf16.msra.mxu0 %v570
  %783 = vmatprep.subr.bf16.mxu0 0
  %784 = vmatpush1.bf16.msra.mxu0 %v571
  %785 = vmatprep.subr.bf16.mxu0 0
  %786 = vmatpush1.bf16.msra.mxu0 %v572
  %787 = vmatprep.subr.bf16.mxu0 0
  %788 = vmatpush1.bf16.msra.mxu0 %v573
  %789 = vmatprep.subr.bf16.mxu0 0
  %790 = vmatpush1.bf16.msra.mxu0 %v574
  %791 = vmatprep.subr.bf16.mxu0 0
  %792 = vmatpush1.bf16.msra.mxu0 %v575
  %793 = vmatprep.subr.bf16.mxu0 0
  %794 = vmatpush1.bf16.msra.mxu0 %v576
  %795 = vmatprep.subr.bf16.mxu0 0
  %796 = vmatpush1.bf16.msra.mxu0 %v577
  %797 = vmatprep.subr.bf16.mxu0 0
  %798 = vmatpush1.bf16.msra.mxu0 %v578
  %799 = vmatprep.mubr.bf16.mxu0 %v217
  %800 = vmatmul.mubr.bf16.gmra.mrb[0].mxu0 %v216
  %v801 = vpop.f32.mrb[0].mxu0
  %v802 = vadd.f32 %v761, %v801
  %v803 = vpop.f32.mrb[0].mxu0
  %v804 = vpop.f32.mrb[0].mxu0
  %v805 = vadd.f32 %v764, %v804
  %v806 = vpop.f32.mrb[0].mxu0
  %807 = vdwg.mxu0
  %808 = vmatprep.subr.bf16.mxu0 0
  %809 = vmatpush1.bf16.msra.mxu0 %v579
  %810 = vmatprep.subr.bf16.mxu0 0
  %811 = vmatpush1.bf16.msra.mxu0 %v580
  %812 = vmatprep.subr.bf16.mxu0 0
  %813 = vmatpush1.bf16.msra.mxu0 %v581
  %814 = vmatprep.subr.bf16.mxu0 0
  %815 = vmatpush1.bf16.msra.mxu0 %v582
  %816 = vmatprep.subr.bf16.mxu0 0
  %817 = vmatpush1.bf16.msra.mxu0 %v583
  %818 = vmatprep.subr.bf16.mxu0 0
  %819 = vmatpush1.bf16.msra.mxu0 %v584
  %820 = vmatprep.subr.bf16.mxu0 0
  %821 = vmatpush1.bf16.msra.mxu0 %v585
  %822 = vmatprep.subr.bf16.mxu0 0
  %823 = vmatpush1.bf16.msra.mxu0 %v586
  %824 = vmatprep.subr.bf16.mxu0 0
  %825 = vmatpush1.bf16.msra.mxu0 %v587
  %826 = vmatprep.subr.bf16.mxu0 0
  %827 = vmatpush1.bf16.msra.mxu0 %v588
  %828 = vmatprep.subr.bf16.mxu0 0
  %829 = vmatpush1.bf16.msra.mxu0 %v589
  %830 = vmatprep.subr.bf16.mxu0 0
  %831 = vmatpush1.bf16.msra.mxu0 %v590
  %832 = vmatprep.subr.bf16.mxu0 0
  %833 = vmatpush1.bf16.msra.mxu0 %v591
  %834 = vmatprep.subr.bf16.mxu0 0
  %835 = vmatpush1.bf16.msra.mxu0 %v592
  %836 = vmatprep.subr.bf16.mxu0 0
  %837 = vmatpush1.bf16.msra.mxu0 %v593
  %838 = vmatprep.subr.bf16.mxu0 0
  %839 = vmatpush1.bf16.msra.mxu0 %v594
  %840 = vmatprep.mubr.bf16.mxu0 %v219
  %841 = vmatmul.mubr.bf16.gmra.mrb[0].mxu0 %v218
  %v842 = vpop.f32.mrb[0].mxu0
  %v843 = vadd.f32 %v802, %v842
  %v844 = vpop.f32.mrb[0].mxu0
  %v845 = vpop.f32.mrb[0].mxu0
  %v846 = vadd.f32 %v805, %v845
  %v847 = vpop.f32.mrb[0].mxu0
  %848 = vdwg.mxu0
  %849 = vmatprep.subr.bf16.mxu0 0
  %850 = vmatpush1.bf16.msra.mxu0 %v595
  %851 = vmatprep.subr.bf16.mxu0 0
  %852 = vmatpush1.bf16.msra.mxu0 %v596
  %853 = vmatprep.subr.bf16.mxu0 0
  %854 = vmatpush1.bf16.msra.mxu0 %v597
  %855 = vmatprep.subr.bf16.mxu0 0
  %856 = vmatpush1.bf16.msra.mxu0 %v598
  %857 = vmatprep.subr.bf16.mxu0 0
  %858 = vmatpush1.bf16.msra.mxu0 %v599
  %859 = vmatprep.subr.bf16.mxu0 0
  %860 = vmatpush1.bf16.msra.mxu0 %v600
  %861 = vmatprep.subr.bf16.mxu0 0
  %862 = vmatpush1.bf16.msra.mxu0 %v601
  %863 = vmatprep.subr.bf16.mxu0 0
  %864 = vmatpush1.bf16.msra.mxu0 %v602
  %865 = vmatprep.subr.bf16.mxu0 0
  %866 = vmatpush1.bf16.msra.mxu0 %v603
  %867 = vmatprep.subr.bf16.mxu0 0
  %868 = vmatpush1.bf16.msra.mxu0 %v604
  %869 = vmatprep.subr.bf16.mxu0 0
  %870 = vmatpush1.bf16.msra.mxu0 %v605
  %871 = vmatprep.subr.bf16.mxu0 0
  %872 = vmatpush1.bf16.msra.mxu0 0
  %873 = vmatprep.subr.bf16.mxu0 0
  %874 = vmatpush1.bf16.msra.mxu0 0
  %875 = vmatprep.subr.bf16.mxu0 0
  %876 = vmatpush1.bf16.msra.mxu0 0
  %877 = vmatprep.subr.bf16.mxu0 0
  %878 = vmatpush1.bf16.msra.mxu0 0
  %879 = vmatprep.subr.bf16.mxu0 0
  %880 = vmatpush1.bf16.msra.mxu0 0
  %881 = vmatprep.mubr.bf16.mxu0 %v683
  %882 = vmatmul.mubr.bf16.gmra.mrb[0].mxu0 %v220
  %v883 = vpop.f32.mrb[0].mxu0
  %v884 = vadd.f32 %v843, %v883
  %v885 = vpop.f32.mrb[0].mxu0
  %v886 = vpop.f32.mrb[0].mxu0
  %v887 = vadd.f32 %v846, %v886
  %v888 = vpop.f32.mrb[0].mxu0
  %889 = vdwg.mxu0
  %vm890 = vcmp.ge.f32.partialorder %v884, 0.0
  %vm891 = vcmp.ge.f32.partialorder %v887, 0.0
  %v892 = vmul.f32 %v884, 0.2
  %v893 = vmul.f32 %v887, 0.2
  %v894 = vsel %vm890, %v884, %v892
  %v895 = vsel %vm891, %v887, %v893
  %v896 = vsub.f32 0.0, %v884
  %v897 = vsub.f32 0.0, %v887
  %v898 = vmul.f32 %v896, 1.442695
  %v899 = vpow.pop %v898
  %v900 = vmul.f32 %v897, 1.442695
  %v901 = vpow.pop %v900
  %v902 = vadd.f32 %v899, 1.0
  %v903 = vadd.f32 %v901, 1.0
  %v904 = vrcp.pop %v902
  %v905 = vrcp.pop %v903
  %908 = vrot.lane.b32.xlu0 %v904, 112
  %v909 = vpop.permute.xlu0 %908
  %910 = vrot.lane.b32.xlu0 %v905, 112
  %v911 = vpop.permute.xlu0 %910
  %v914 = vmul.f32 %v894, %v909
  %v915 = vmul.f32 %v895, %v911
  %v916 = vpack.c.bf16 %v915, %v914
  %v918 = vunpack.c.l.b16 %v916
  %v919 = vunpack.c.h.b16 %v916
  %v920 = vpack.c.b16 %v918, %v918
  %v921 = vpack.c.b16 %v919, %v919
  %vm924 = vcmask 125952
  %925 = vst.msk [vmem:[%s3] sm:$0xf] %vm924, %v920
  %926 = vst.msk [vmem:[%s3 + $0x4] sm:$0xf] %vm924, %v921
  // Predicated region
  $region14: #{discriminator_forward.8} parent=0 // pred_check
    _
  $region15: #{discriminator_forward.8} parent=0 // pred_check_branch
    %928 = sbr.rel (0) target = $region17
  $region16: #{discriminator_forward.8} parent=0 // pred_region
    _
  $region17: #{discriminator_forward.8} parent=0 // pred_fallthru
    _
  // Predicated region
  $region18: #{discriminator_forward.8} parent=0 // pred_check
    _
  $region19: #{discriminator_forward.8} parent=0 // pred_check_branch
    %930 = sbr.rel (0) target = $region21
  $region20: #{discriminator_forward.8} parent=0 // pred_region
    _
  $region21: #{discriminator_forward.8} parent=0 // pred_fallthru
    _

// kernel: discriminator_forward.9
$region0: #{discriminator_forward.9}
  #allocation0 [shape = 'u32[]', space=smem, size = 0x4, offset = 0x4, fixed_abs, tag = 'smem constant byte address 0x4 - core index']
  #allocation1 [shape = 'u32[144,128]{1,0:T(1,128)}', space=vmem, size = 0x12000, scoped, tag = 'internal scratch']
  %s0 = inlined_call_operand.vmem [shape: bf16[16,1200], index: 0, kind: input, shape index: {}]
  %s1 = inlined_call_operand.vmem [shape: bf16[1200,32], index: 1, kind: input, shape index: {}]
  %s2 = inlined_call_operand.vmem [shape: f32[1,32], index: 2, kind: input, shape index: {}]
  %s3 = inlined_call_operand.vmem [shape: f32[16,16], index: 3, kind: output, shape index: {}]
  %s4 = sld [smem:[#allocation0]]
  $region22: #{discriminator_forward.9} parent=0
    _
  %s6 = ssub.s32 1, %s4
  %s7 = scalar_select 0, %s6, %s4
  // Predicated region
  $region2: #{discriminator_forward.9} parent=0 // pred_check
    _
  $region3: #{discriminator_forward.9} parent=0 // pred_check_branch
    %9 = sbr.rel (0) target = $region5
  $region4: #{discriminator_forward.9} parent=0 // pred_region
    _
  $region5: #{discriminator_forward.9} parent=0 // pred_fallthru
    _
  // Predicated region
  $region6: #{discriminator_forward.9} parent=0 // pred_check
    _
  $region7: #{discriminator_forward.9} parent=0 // pred_check_branch
    %11 = sbr.rel (0) target = $region9
  $region8: #{discriminator_forward.9} parent=0 // pred_region
    _
  $region9: #{discriminator_forward.9} parent=0 // pred_fallthru
    _
  // Predicated region
  $region10: #{discriminator_forward.9} parent=0 // pred_check
    _
  $region11: #{discriminator_forward.9} parent=0 // pred_check_branch
    %13 = sbr.rel (0) target = $region13
  $region12: #{discriminator_forward.9} parent=0 // pred_region
    _
  $region13: #{discriminator_forward.9} parent=0 // pred_fallthru
    _
  %v15 = vld [vmem:[%s0] sm:$0xff]
  %v16 = vld [vmem:[%s0 + $0x8] sm:$0xff]
  %v17 = vld [vmem:[%s0 + $0x10] sm:$0xff]
  %v18 = vld [vmem:[%s0 + $0x18] sm:$0xff]
  %v19 = vld [vmem:[%s0 + $0x20] sm:$0xff]
  %v20 = vld [vmem:[%s0 + $0x28] sm:$0xff]
  %v21 = vld [vmem:[%s0 + $0x30] sm:$0xff]
  %v22 = vld [vmem:[%s0 + $0x38] sm:$0xff]
  %v23 = vld [vmem:[%s0 + $0x40] sm:$0xff]
  %v24 = vld [vmem:[%s0 + $0x48] sm:$0xff]
  %v25 = vld [vmem:[%s1] sm:$0xf]
  %v26 = vld [vmem:[%s1 + $0x4] sm:$0xf]
  %v27 = vld [vmem:[%s1 + $0x8] sm:$0xf]
  %v28 = vld [vmem:[%s1 + $0xc] sm:$0xf]
  %v29 = vld [vmem:[%s1 + $0x10] sm:$0xf]
  %v30 = vld [vmem:[%s1 + $0x14] sm:$0xf]
  %v31 = vld [vmem:[%s1 + $0x18] sm:$0xf]
  %v32 = vld [vmem:[%s1 + $0x1c] sm:$0xf]
  %v33 = vld [vmem:[%s1 + $0x20] sm:$0xf]
  %v34 = vld [vmem:[%s1 + $0x24] sm:$0xf]
  %v35 = vld [vmem:[%s1 + $0x28] sm:$0xf]
  %v36 = vld [vmem:[%s1 + $0x2c] sm:$0xf]
  %v37 = vld [vmem:[%s1 + $0x30] sm:$0xf]
  %v38 = vld [vmem:[%s1 + $0x34] sm:$0xf]
  %v39 = vld [vmem:[%s1 + $0x38] sm:$0xf]
  %v40 = vld [vmem:[%s1 + $0x3c] sm:$0xf]
  %v41 = vld [vmem:[%s1 + $0x40] sm:$0xf]
  %v42 = vld [vmem:[%s1 + $0x44] sm:$0xf]
  %v43 = vld [vmem:[%s1 + $0x48] sm:$0xf]
  %v44 = vld [vmem:[%s1 + $0x4c] sm:$0xf]
  %v45 = vld [vmem:[%s1 + $0x50] sm:$0xf]
  %v46 = vld [vmem:[%s1 + $0x54] sm:$0xf]
  %v47 = vld [vmem:[%s1 + $0x58] sm:$0xf]
  %v48 = vld [vmem:[%s1 + $0x5c] sm:$0xf]
  %v49 = vld [vmem:[%s1 + $0x60] sm:$0xf]
  %v50 = vld [vmem:[%s1 + $0x64] sm:$0xf]
  %v51 = vld [vmem:[%s1 + $0x68] sm:$0xf]
  %v52 = vld [vmem:[%s1 + $0x6c] sm:$0xf]
  %v53 = vld [vmem:[%s1 + $0x70] sm:$0xf]
  %v54 = vld [vmem:[%s1 + $0x74] sm:$0xf]
  %v55 = vld [vmem:[%s1 + $0x78] sm:$0xf]
  %v56 = vld [vmem:[%s1 + $0x7c] sm:$0xf]
  %v57 = vld [vmem:[%s1 + $0x80] sm:$0xf]
  %v58 = vld [vmem:[%s1 + $0x84] sm:$0xf]
  %v59 = vld [vmem:[%s1 + $0x88] sm:$0xf]
  %v60 = vld [vmem:[%s1 + $0x8c] sm:$0xf]
  %v61 = vld [vmem:[%s1 + $0x90] sm:$0xf]
  %v62 = vld [vmem:[%s1 + $0x94] sm:$0xf]
  %v63 = vld [vmem:[%s1 + $0x98] sm:$0xf]
  %v64 = vld [vmem:[%s1 + $0x9c] sm:$0xf]
  %v65 = vld [vmem:[%s1 + $0xa0] sm:$0xf]
  %v66 = vld [vmem:[%s1 + $0xa4] sm:$0xf]
  %v67 = vld [vmem:[%s1 + $0xa8] sm:$0xf]
  %v68 = vld [vmem:[%s1 + $0xac] sm:$0xf]
  %v69 = vld [vmem:[%s1 + $0xb0] sm:$0xf]
  %v70 = vld [vmem:[%s1 + $0xb4] sm:$0xf]
  %v71 = vld [vmem:[%s1 + $0xb8] sm:$0xf]
  %v72 = vld [vmem:[%s1 + $0xbc] sm:$0xf]
  %v73 = vld [vmem:[%s1 + $0xc0] sm:$0xf]
  %v74 = vld [vmem:[%s1 + $0xc4] sm:$0xf]
  %v75 = vld [vmem:[%s1 + $0xc8] sm:$0xf]
  %v76 = vld [vmem:[%s1 + $0xcc] sm:$0xf]
  %v77 = vld [vmem:[%s1 + $0xd0] sm:$0xf]
  %v78 = vld [vmem:[%s1 + $0xd4] sm:$0xf]
  %v79 = vld [vmem:[%s1 + $0xd8] sm:$0xf]
  %v80 = vld [vmem:[%s1 + $0xdc] sm:$0xf]
  %v81 = vld [vmem:[%s1 + $0xe0] sm:$0xf]
  %v82 = vld [vmem:[%s1 + $0xe4] sm:$0xf]
  %v83 = vld [vmem:[%s1 + $0xe8] sm:$0xf]
  %v84 = vld [vmem:[%s1 + $0xec] sm:$0xf]
  %v85 = vld [vmem:[%s1 + $0xf0] sm:$0xf]
  %v86 = vld [vmem:[%s1 + $0xf4] sm:$0xf]
  %v87 = vld [vmem:[%s1 + $0xf8] sm:$0xf]
  %v88 = vld [vmem:[%s1 + $0xfc] sm:$0xf]
  %v89 = vld [vmem:[%s1 + $0x100] sm:$0xf]
  %v90 = vld [vmem:[%s1 + $0x104] sm:$0xf]
  %v91 = vld [vmem:[%s1 + $0x108] sm:$0xf]
  %v92 = vld [vmem:[%s1 + $0x10c] sm:$0xf]
  %v93 = vld [vmem:[%s1 + $0x110] sm:$0xf]
  %v94 = vld [vmem:[%s1 + $0x114] sm:$0xf]
  %v95 = vld [vmem:[%s1 + $0x118] sm:$0xf]
  %v96 = vld [vmem:[%s1 + $0x11c] sm:$0xf]
  %v97 = vld [vmem:[%s1 + $0x120] sm:$0xf]
  %v98 = vld [vmem:[%s1 + $0x124] sm:$0xf]
  %v99 = vld [vmem:[%s1 + $0x128] sm:$0xf]
  %v100 = vld [vmem:[%s1 + $0x12c] sm:$0xf]
  %v101 = vld [vmem:[%s1 + $0x130] sm:$0xf]
  %v102 = vld [vmem:[%s1 + $0x134] sm:$0xf]
  %v103 = vld [vmem:[%s1 + $0x138] sm:$0xf]
  %v104 = vld [vmem:[%s1 + $0x13c] sm:$0xf]
  %v105 = vld [vmem:[%s1 + $0x140] sm:$0xf]
  %v106 = vld [vmem:[%s1 + $0x144] sm:$0xf]
  %v107 = vld [vmem:[%s1 + $0x148] sm:$0xf]
  %v108 = vld [vmem:[%s1 + $0x14c] sm:$0xf]
  %v109 = vld [vmem:[%s1 + $0x150] sm:$0xf]
  %v110 = vld [vmem:[%s1 + $0x154] sm:$0xf]
  %v111 = vld [vmem:[%s1 + $0x158] sm:$0xf]
  %v112 = vld [vmem:[%s1 + $0x15c] sm:$0xf]
  %v113 = vld [vmem:[%s1 + $0x160] sm:$0xf]
  %v114 = vld [vmem:[%s1 + $0x164] sm:$0xf]
  %v115 = vld [vmem:[%s1 + $0x168] sm:$0xf]
  %v116 = vld [vmem:[%s1 + $0x16c] sm:$0xf]
  %v117 = vld [vmem:[%s1 + $0x170] sm:$0xf]
  %v118 = vld [vmem:[%s1 + $0x174] sm:$0xf]
  %v119 = vld [vmem:[%s1 + $0x178] sm:$0xf]
  %v120 = vld [vmem:[%s1 + $0x17c] sm:$0xf]
  %v121 = vld [vmem:[%s1 + $0x180] sm:$0xf]
  %v122 = vld [vmem:[%s1 + $0x184] sm:$0xf]
  %v123 = vld [vmem:[%s1 + $0x188] sm:$0xf]
  %v124 = vld [vmem:[%s1 + $0x18c] sm:$0xf]
  %v125 = vld [vmem:[%s1 + $0x190] sm:$0xf]
  %v126 = vld [vmem:[%s1 + $0x194] sm:$0xf]
  %v127 = vld [vmem:[%s1 + $0x198] sm:$0xf]
  %v128 = vld [vmem:[%s1 + $0x19c] sm:$0xf]
  %v129 = vld [vmem:[%s1 + $0x1a0] sm:$0xf]
  %v130 = vld [vmem:[%s1 + $0x1a4] sm:$0xf]
  %v131 = vld [vmem:[%s1 + $0x1a8] sm:$0xf]
  %v132 = vld [vmem:[%s1 + $0x1ac] sm:$0xf]
  %v133 = vld [vmem:[%s1 + $0x1b0] sm:$0xf]
  %v134 = vld [vmem:[%s1 + $0x1b4] sm:$0xf]
  %v135 = vld [vmem:[%s1 + $0x1b8] sm:$0xf]
  %v136 = vld [vmem:[%s1 + $0x1bc] sm:$0xf]
  %v137 = vld [vmem:[%s1 + $0x1c0] sm:$0xf]
  %v138 = vld [vmem:[%s1 + $0x1c4] sm:$0xf]
  %v139 = vld [vmem:[%s1 + $0x1c8] sm:$0xf]
  %v140 = vld [vmem:[%s1 + $0x1cc] sm:$0xf]
  %v141 = vld [vmem:[%s1 + $0x1d0] sm:$0xf]
  %v142 = vld [vmem:[%s1 + $0x1d4] sm:$0xf]
  %v143 = vld [vmem:[%s1 + $0x1d8] sm:$0xf]
  %v144 = vld [vmem:[%s1 + $0x1dc] sm:$0xf]
  %v145 = vld [vmem:[%s1 + $0x1e0] sm:$0xf]
  %v146 = vld [vmem:[%s1 + $0x1e4] sm:$0xf]
  %v147 = vld [vmem:[%s1 + $0x1e8] sm:$0xf]
  %v148 = vld [vmem:[%s1 + $0x1ec] sm:$0xf]
  %v149 = vld [vmem:[%s1 + $0x1f0] sm:$0xf]
  %v150 = vld [vmem:[%s1 + $0x1f4] sm:$0xf]
  %v151 = vld [vmem:[%s1 + $0x1f8] sm:$0xf]
  %v152 = vld [vmem:[%s1 + $0x1fc] sm:$0xf]
  %v153 = vld [vmem:[%s1 + $0x200] sm:$0xf]
  %v154 = vld [vmem:[%s1 + $0x204] sm:$0xf]
  %v155 = vld [vmem:[%s1 + $0x208] sm:$0xf]
  %v156 = vld [vmem:[%s1 + $0x20c] sm:$0xf]
  %v157 = vld [vmem:[%s1 + $0x210] sm:$0xf]
  %v158 = vld [vmem:[%s1 + $0x214] sm:$0xf]
  %v159 = vld [vmem:[%s1 + $0x218] sm:$0xf]
  %v160 = vld [vmem:[%s1 + $0x21c] sm:$0xf]
  %v161 = vld [vmem:[%s1 + $0x220] sm:$0xf]
  %v162 = vld [vmem:[%s1 + $0x224] sm:$0xf]
  %v163 = vld [vmem:[%s1 + $0x228] sm:$0xf]
  %v164 = vld [vmem:[%s1 + $0x22c] sm:$0xf]
  %v165 = vld [vmem:[%s1 + $0x230] sm:$0xf]
  %v166 = vld [vmem:[%s1 + $0x234] sm:$0xf]
  %v167 = vld [vmem:[%s1 + $0x238] sm:$0xf]
  %v168 = vld [vmem:[%s1 + $0x23c] sm:$0xf]
  %v169 = vld [vmem:[%s1 + $0x240] sm:$0xf]
  %v170 = vld [vmem:[%s1 + $0x244] sm:$0xf]
  %v171 = vld [vmem:[%s1 + $0x248] sm:$0xf]
  %v172 = vld [vmem:[%s1 + $0x24c] sm:$0xf]
  %v173 = vld [vmem:[%s1 + $0x250] sm:$0xf]
  %v174 = vld [vmem:[%s1 + $0x254] sm:$0xf]
  %v175 = vld [vmem:[%s2] sm:$0x1]
  %v177 = vlaneseq
  %v178 = vshrl.u32 %v177, 7
  %v179 = vsub.s32 0, %v178
  %v180 = vrot.slane %v175, %v179
  %v192 = vunpack.c.l.b16 %v15
  %v193 = vunpack.c.h.b16 %v15
  %v194 = vunpack.c.l.b16 %v16
  %v195 = vunpack.c.h.b16 %v16
  %v196 = vunpack.c.l.b16 %v17
  %v197 = vunpack.c.h.b16 %v17
  %v198 = vunpack.c.l.b16 %v18
  %v199 = vunpack.c.h.b16 %v18
  %v200 = vunpack.c.l.b16 %v19
  %v201 = vunpack.c.h.b16 %v19
  %v202 = vunpack.c.l.b16 %v20
  %v203 = vunpack.c.h.b16 %v20
  %v204 = vunpack.c.l.b16 %v21
  %v205 = vunpack.c.h.b16 %v21
  %v206 = vunpack.c.l.b16 %v22
  %v207 = vunpack.c.h.b16 %v22
  %v208 = vunpack.c.l.b16 %v23
  %v209 = vunpack.c.h.b16 %v23
  %v210 = vunpack.c.l.b16 %v24
  %v211 = vunpack.c.h.b16 %v24
  %v212 = vpack.c.b16 %v202, %v192
  %v213 = vpack.c.b16 %v203, %v193
  %v214 = vpack.c.b16 %v204, %v194
  %v215 = vpack.c.b16 %v205, %v195
  %v216 = vpack.c.b16 %v206, %v196
  %v217 = vpack.c.b16 %v207, %v197
  %v218 = vpack.c.b16 %v208, %v198
  %v219 = vpack.c.b16 %v209, %v199
  %v220 = vpack.c.b16 %v210, %v200
  %v221 = vpack.c.b16 %v211, %v201
  %v381 = vunpack.c.l.b16 %v25
  %v382 = vunpack.c.l.b16 %v26
  %v383 = vunpack.c.l.b16 %v27
  %v384 = vunpack.c.l.b16 %v28
  %v385 = vunpack.c.l.b16 %v29
  %v386 = vunpack.c.l.b16 %v30
  %v387 = vunpack.c.l.b16 %v31
  %v388 = vunpack.c.l.b16 %v32
  %v389 = vunpack.c.l.b16 %v33
  %v390 = vunpack.c.l.b16 %v34
  %v391 = vunpack.c.l.b16 %v35
  %v392 = vunpack.c.l.b16 %v36
  %v393 = vunpack.c.l.b16 %v37
  %v394 = vunpack.c.l.b16 %v38
  %v395 = vunpack.c.l.b16 %v39
  %v396 = vunpack.c.l.b16 %v40
  %v397 = vunpack.c.l.b16 %v41
  %v398 = vunpack.c.l.b16 %v42
  %v399 = vunpack.c.l.b16 %v43
  %v400 = vunpack.c.l.b16 %v44
  %v401 = vunpack.c.l.b16 %v45
  %v402 = vunpack.c.l.b16 %v46
  %v403 = vunpack.c.l.b16 %v47
  %v404 = vunpack.c.l.b16 %v48
  %v405 = vunpack.c.l.b16 %v49
  %v406 = vunpack.c.l.b16 %v50
  %v407 = vunpack.c.l.b16 %v51
  %v408 = vunpack.c.l.b16 %v52
  %v409 = vunpack.c.l.b16 %v53
  %v410 = vunpack.c.l.b16 %v54
  %v411 = vunpack.c.l.b16 %v55
  %v412 = vunpack.c.l.b16 %v56
  %v413 = vunpack.c.l.b16 %v57
  %v414 = vunpack.c.l.b16 %v58
  %v415 = vunpack.c.l.b16 %v59
  %v416 = vunpack.c.l.b16 %v60
  %v417 = vunpack.c.l.b16 %v61
  %v418 = vunpack.c.l.b16 %v62
  %v419 = vunpack.c.l.b16 %v63
  %v420 = vunpack.c.l.b16 %v64
  %v421 = vunpack.c.l.b16 %v65
  %v422 = vunpack.c.l.b16 %v66
  %v423 = vunpack.c.l.b16 %v67
  %v424 = vunpack.c.l.b16 %v68
  %v425 = vunpack.c.l.b16 %v69
  %v426 = vunpack.c.l.b16 %v70
  %v427 = vunpack.c.l.b16 %v71
  %v428 = vunpack.c.l.b16 %v72
  %v429 = vunpack.c.l.b16 %v73
  %v430 = vunpack.c.l.b16 %v74
  %v431 = vunpack.c.l.b16 %v75
  %v432 = vunpack.c.l.b16 %v76
  %v433 = vunpack.c.l.b16 %v77
  %v434 = vunpack.c.l.b16 %v78
  %v435 = vunpack.c.l.b16 %v79
  %v436 = vunpack.c.l.b16 %v80
  %v437 = vunpack.c.l.b16 %v81
  %v438 = vunpack.c.l.b16 %v82
  %v439 = vunpack.c.l.b16 %v83
  %v440 = vunpack.c.l.b16 %v84
  %v441 = vunpack.c.l.b16 %v85
  %v442 = vunpack.c.l.b16 %v86
  %v443 = vunpack.c.l.b16 %v87
  %v444 = vunpack.c.l.b16 %v88
  %v445 = vunpack.c.l.b16 %v89
  %v446 = vunpack.c.l.b16 %v90
  %v447 = vunpack.c.l.b16 %v91
  %v448 = vunpack.c.l.b16 %v92
  %v449 = vunpack.c.l.b16 %v93
  %v450 = vunpack.c.l.b16 %v94
  %v451 = vunpack.c.l.b16 %v95
  %v452 = vunpack.c.l.b16 %v96
  %v453 = vunpack.c.l.b16 %v97
  %v454 = vunpack.c.l.b16 %v98
  %v455 = vunpack.c.l.b16 %v99
  %v456 = vunpack.c.l.b16 %v100
  %v457 = vunpack.c.l.b16 %v101
  %v458 = vunpack.c.l.b16 %v102
  %v459 = vunpack.c.l.b16 %v103
  %v460 = vunpack.c.l.b16 %v104
  %v461 = vunpack.c.l.b16 %v105
  %v462 = vunpack.c.l.b16 %v106
  %v463 = vunpack.c.l.b16 %v107
  %v464 = vunpack.c.l.b16 %v108
  %v465 = vunpack.c.l.b16 %v109
  %v466 = vunpack.c.l.b16 %v110
  %v467 = vunpack.c.l.b16 %v111
  %v468 = vunpack.c.l.b16 %v112
  %v469 = vunpack.c.l.b16 %v113
  %v470 = vunpack.c.l.b16 %v114
  %v471 = vunpack.c.l.b16 %v115
  %v472 = vunpack.c.l.b16 %v116
  %v473 = vunpack.c.l.b16 %v117
  %v474 = vunpack.c.l.b16 %v118
  %v475 = vunpack.c.l.b16 %v119
  %v476 = vunpack.c.l.b16 %v120
  %v477 = vunpack.c.l.b16 %v121
  %v478 = vunpack.c.l.b16 %v122
  %v479 = vunpack.c.l.b16 %v123
  %v480 = vunpack.c.l.b16 %v124
  %v481 = vunpack.c.l.b16 %v125
  %v482 = vunpack.c.l.b16 %v126
  %v483 = vunpack.c.l.b16 %v127
  %v484 = vunpack.c.l.b16 %v128
  %v485 = vunpack.c.l.b16 %v129
  %v486 = vunpack.c.l.b16 %v130
  %v487 = vunpack.c.l.b16 %v131
  %v488 = vunpack.c.l.b16 %v132
  %v489 = vunpack.c.l.b16 %v133
  %v490 = vunpack.c.l.b16 %v134
  %v491 = vunpack.c.l.b16 %v135
  %v492 = vunpack.c.l.b16 %v136
  %v493 = vunpack.c.l.b16 %v137
  %v494 = vunpack.c.l.b16 %v138
  %v495 = vunpack.c.l.b16 %v139
  %v496 = vunpack.c.l.b16 %v140
  %v497 = vunpack.c.l.b16 %v141
  %v498 = vunpack.c.l.b16 %v142
  %v499 = vunpack.c.l.b16 %v143
  %v500 = vunpack.c.l.b16 %v144
  %v501 = vunpack.c.l.b16 %v145
  %v502 = vunpack.c.l.b16 %v146
  %v503 = vunpack.c.l.b16 %v147
  %v504 = vunpack.c.l.b16 %v148
  %v505 = vunpack.c.l.b16 %v149
  %v506 = vunpack.c.l.b16 %v150
  %v507 = vunpack.c.l.b16 %v151
  %v508 = vunpack.c.l.b16 %v152
  %v509 = vunpack.c.l.b16 %v153
  %v510 = vunpack.c.l.b16 %v154
  %v511 = vunpack.c.l.b16 %v155
  %v512 = vunpack.c.l.b16 %v156
  %v513 = vunpack.c.l.b16 %v157
  %v514 = vunpack.c.l.b16 %v158
  %v515 = vunpack.c.l.b16 %v159
  %v516 = vunpack.c.l.b16 %v160
  %v517 = vunpack.c.l.b16 %v161
  %v518 = vunpack.c.l.b16 %v162
  %v519 = vunpack.c.l.b16 %v163
  %v520 = vunpack.c.l.b16 %v164
  %v521 = vunpack.c.l.b16 %v165
  %v522 = vunpack.c.l.b16 %v166
  %v523 = vunpack.c.l.b16 %v167
  %v524 = vunpack.c.l.b16 %v168
  %v525 = vunpack.c.l.b16 %v169
  %v526 = vunpack.c.l.b16 %v170
  %v527 = vunpack.c.l.b16 %v171
  %v528 = vunpack.c.l.b16 %v172
  %v529 = vunpack.c.l.b16 %v173
  %v530 = vunpack.c.l.b16 %v174
  %v531 = vpack.c.b16 %v382, %v381
  %v532 = vpack.c.b16 %v384, %v383
  %v533 = vpack.c.b16 %v386, %v385
  %v534 = vpack.c.b16 %v388, %v387
  %v535 = vpack.c.b16 %v390, %v389
  %v536 = vpack.c.b16 %v392, %v391
  %v537 = vpack.c.b16 %v394, %v393
  %v538 = vpack.c.b16 %v396, %v395
  %v539 = vpack.c.b16 %v398, %v397
  %v540 = vpack.c.b16 %v400, %v399
  %v541 = vpack.c.b16 %v402, %v401
  %v542 = vpack.c.b16 %v404, %v403
  %v543 = vpack.c.b16 %v406, %v405
  %v544 = vpack.c.b16 %v408, %v407
  %v545 = vpack.c.b16 %v410, %v409
  %v546 = vpack.c.b16 %v412, %v411
  %v547 = vpack.c.b16 %v414, %v413
  %v548 = vpack.c.b16 %v416, %v415
  %v549 = vpack.c.b16 %v418, %v417
  %v550 = vpack.c.b16 %v420, %v419
  %v551 = vpack.c.b16 %v422, %v421
  %v552 = vpack.c.b16 %v424, %v423
  %v553 = vpack.c.b16 %v426, %v425
  %v554 = vpack.c.b16 %v428, %v427
  %v555 = vpack.c.b16 %v430, %v429
  %v556 = vpack.c.b16 %v432, %v431
  %v557 = vpack.c.b16 %v434, %v433
  %v558 = vpack.c.b16 %v436, %v435
  %v559 = vpack.c.b16 %v438, %v437
  %v560 = vpack.c.b16 %v440, %v439
  %v561 = vpack.c.b16 %v442, %v441
  %v562 = vpack.c.b16 %v444, %v443
  %v563 = vpack.c.b16 %v446, %v445
  %v564 = vpack.c.b16 %v448, %v447
  %v565 = vpack.c.b16 %v450, %v449
  %v566 = vpack.c.b16 %v452, %v451
  %v567 = vpack.c.b16 %v454, %v453
  %v568 = vpack.c.b16 %v456, %v455
  %v569 = vpack.c.b16 %v458, %v457
  %v570 = vpack.c.b16 %v460, %v459
  %v571 = vpack.c.b16 %v462, %v461
  %v572 = vpack.c.b16 %v464, %v463
  %v573 = vpack.c.b16 %v466, %v465
  %v574 = vpack.c.b16 %v468, %v467
  %v575 = vpack.c.b16 %v470, %v469
  %v576 = vpack.c.b16 %v472, %v471
  %v577 = vpack.c.b16 %v474, %v473
  %v578 = vpack.c.b16 %v476, %v475
  %v579 = vpack.c.b16 %v478, %v477
  %v580 = vpack.c.b16 %v480, %v479
  %v581 = vpack.c.b16 %v482, %v481
  %v582 = vpack.c.b16 %v484, %v483
  %v583 = vpack.c.b16 %v486, %v485
  %v584 = vpack.c.b16 %v488, %v487
  %v585 = vpack.c.b16 %v490, %v489
  %v586 = vpack.c.b16 %v492, %v491
  %v587 = vpack.c.b16 %v494, %v493
  %v588 = vpack.c.b16 %v496, %v495
  %v589 = vpack.c.b16 %v498, %v497
  %v590 = vpack.c.b16 %v500, %v499
  %v591 = vpack.c.b16 %v502, %v501
  %v592 = vpack.c.b16 %v504, %v503
  %v593 = vpack.c.b16 %v506, %v505
  %v594 = vpack.c.b16 %v508, %v507
  %v595 = vpack.c.b16 %v510, %v509
  %v596 = vpack.c.b16 %v512, %v511
  %v597 = vpack.c.b16 %v514, %v513
  %v598 = vpack.c.b16 %v516, %v515
  %v599 = vpack.c.b16 %v518, %v517
  %v600 = vpack.c.b16 %v520, %v519
  %v601 = vpack.c.b16 %v522, %v521
  %v602 = vpack.c.b16 %v524, %v523
  %v603 = vpack.c.b16 %v526, %v525
  %v604 = vpack.c.b16 %v528, %v527
  %v605 = vpack.c.b16 %v530, %v529
  %vm681 = vcmask 392192
  %v683 = vsel %vm681, %v221, 0
  %685 = vmatprep.subr.bf16.mxu0 0
  %686 = vmatpush1.bf16.msra.mxu0 %v531
  %687 = vmatprep.subr.bf16.mxu0 0
  %688 = vmatpush1.bf16.msra.mxu0 %v532
  %689 = vmatprep.subr.bf16.mxu0 0
  %690 = vmatpush1.bf16.msra.mxu0 %v533
  %691 = vmatprep.subr.bf16.mxu0 0
  %692 = vmatpush1.bf16.msra.mxu0 %v534
  %693 = vmatprep.subr.bf16.mxu0 0
  %694 = vmatpush1.bf16.msra.mxu0 %v535
  %695 = vmatprep.subr.bf16.mxu0 0
  %696 = vmatpush1.bf16.msra.mxu0 %v536
  %697 = vmatprep.subr.bf16.mxu0 0
  %698 = vmatpush1.bf16.msra.mxu0 %v537
  %699 = vmatprep.subr.bf16.mxu0 0
  %700 = vmatpush1.bf16.msra.mxu0 %v538
  %701 = vmatprep.subr.bf16.mxu0 0
  %702 = vmatpush1.bf16.msra.mxu0 %v539
  %703 = vmatprep.subr.bf16.mxu0 0
  %704 = vmatpush1.bf16.msra.mxu0 %v540
  %705 = vmatprep.subr.bf16.mxu0 0
  %706 = vmatpush1.bf16.msra.mxu0 %v541
  %707 = vmatprep.subr.bf16.mxu0 0
  %708 = vmatpush1.bf16.msra.mxu0 %v542
  %709 = vmatprep.subr.bf16.mxu0 0
  %710 = vmatpush1.bf16.msra.mxu0 %v543
  %711 = vmatprep.subr.bf16.mxu0 0
  %712 = vmatpush1.bf16.msra.mxu0 %v544
  %713 = vmatprep.subr.bf16.mxu0 0
  %714 = vmatpush1.bf16.msra.mxu0 %v545
  %715 = vmatprep.subr.bf16.mxu0 0
  %716 = vmatpush1.bf16.msra.mxu0 %v546
  %717 = vmatprep.mubr.bf16.mxu0 %v213
  %718 = vmatmul.mubr.bf16.gmra.mrb[0].mxu0 %v212
  %v719 = vpop.f32.mrb[0].mxu0
  %v720 = vadd.f32 %v180, %v719
  %v721 = vpop.f32.mrb[0].mxu0
  %v722 = vpop.f32.mrb[0].mxu0
  %v723 = vadd.f32 %v180, %v722
  %v724 = vpop.f32.mrb[0].mxu0
  %725 = vdwg.mxu0
  %726 = vmatprep.subr.bf16.mxu0 0
  %727 = vmatpush1.bf16.msra.mxu0 %v547
  %728 = vmatprep.subr.bf16.mxu0 0
  %729 = vmatpush1.bf16.msra.mxu0 %v548
  %730 = vmatprep.subr.bf16.mxu0 0
  %731 = vmatpush1.bf16.msra.mxu0 %v549
  %732 = vmatprep.subr.bf16.mxu0 0
  %733 = vmatpush1.bf16.msra.mxu0 %v550
  %734 = vmatprep.subr.bf16.mxu0 0
  %735 = vmatpush1.bf16.msra.mxu0 %v551
  %736 = vmatprep.subr.bf16.mxu0 0
  %737 = vmatpush1.bf16.msra.mxu0 %v552
  %738 = vmatprep.subr.bf16.mxu0 0
  %739 = vmatpush1.bf16.msra.mxu0 %v553
  %740 = vmatprep.subr.bf16.mxu0 0
  %741 = vmatpush1.bf16.msra.mxu0 %v554
  %742 = vmatprep.subr.bf16.mxu0 0
  %743 = vmatpush1.bf16.msra.mxu0 %v555
  %744 = vmatprep.subr.bf16.mxu0 0
  %745 = vmatpush1.bf16.msra.mxu0 %v556
  %746 = vmatprep.subr.bf16.mxu0 0
  %747 = vmatpush1.bf16.msra.mxu0 %v557
  %748 = vmatprep.subr.bf16.mxu0 0
  %749 = vmatpush1.bf16.msra.mxu0 %v558
  %750 = vmatprep.subr.bf16.mxu0 0
  %751 = vmatpush1.bf16.msra.mxu0 %v559
  %752 = vmatprep.subr.bf16.mxu0 0
  %753 = vmatpush1.bf16.msra.mxu0 %v560
  %754 = vmatprep.subr.bf16.mxu0 0
  %755 = vmatpush1.bf16.msra.mxu0 %v561
  %756 = vmatprep.subr.bf16.mxu0 0
  %757 = vmatpush1.bf16.msra.mxu0 %v562
  %758 = vmatprep.mubr.bf16.mxu0 %v215
  %759 = vmatmul.mubr.bf16.gmra.mrb[0].mxu0 %v214
  %v760 = vpop.f32.mrb[0].mxu0
  %v761 = vadd.f32 %v720, %v760
  %v762 = vpop.f32.mrb[0].mxu0
  %v763 = vpop.f32.mrb[0].mxu0
  %v764 = vadd.f32 %v723, %v763
  %v765 = vpop.f32.mrb[0].mxu0
  %766 = vdwg.mxu0
  %767 = vmatprep.subr.bf16.mxu0 0
  %768 = vmatpush1.bf16.msra.mxu0 %v563
  %769 = vmatprep.subr.bf16.mxu0 0
  %770 = vmatpush1.bf16.msra.mxu0 %v564
  %771 = vmatprep.subr.bf16.mxu0 0
  %772 = vmatpush1.bf16.msra.mxu0 %v565
  %773 = vmatprep.subr.bf16.mxu0 0
  %774 = vmatpush1.bf16.msra.mxu0 %v566
  %775 = vmatprep.subr.bf16.mxu0 0
  %776 = vmatpush1.bf16.msra.mxu0 %v567
  %777 = vmatprep.subr.bf16.mxu0 0
  %778 = vmatpush1.bf16.msra.mxu0 %v568
  %779 = vmatprep.subr.bf16.mxu0 0
  %780 = vmatpush1.bf16.msra.mxu0 %v569
  %781 = vmatprep.subr.bf16.mxu0 0
  %782 = vmatpush1.bf16.msra.mxu0 %v570
  %783 = vmatprep.subr.bf16.mxu0 0
  %784 = vmatpush1.bf16.msra.mxu0 %v571
  %785 = vmatprep.subr.bf16.mxu0 0
  %786 = vmatpush1.bf16.msra.mxu0 %v572
  %787 = vmatprep.subr.bf16.mxu0 0
  %788 = vmatpush1.bf16.msra.mxu0 %v573
  %789 = vmatprep.subr.bf16.mxu0 0
  %790 = vmatpush1.bf16.msra.mxu0 %v574
  %791 = vmatprep.subr.bf16.mxu0 0
  %792 = vmatpush1.bf16.msra.mxu0 %v575
  %793 = vmatprep.subr.bf16.mxu0 0
  %794 = vmatpush1.bf16.msra.mxu0 %v576
  %795 = vmatprep.subr.bf16.mxu0 0
  %796 = vmatpush1.bf16.msra.mxu0 %v577
  %797 = vmatprep.subr.bf16.mxu0 0
  %798 = vmatpush1.bf16.msra.mxu0 %v578
  %799 = vmatprep.mubr.bf16.mxu0 %v217
  %800 = vmatmul.mubr.bf16.gmra.mrb[0].mxu0 %v216
  %v801 = vpop.f32.mrb[0].mxu0
  %v802 = vadd.f32 %v761, %v801
  %v803 = vpop.f32.mrb[0].mxu0
  %v804 = vpop.f32.mrb[0].mxu0
  %v805 = vadd.f32 %v764, %v804
  %v806 = vpop.f32.mrb[0].mxu0
  %807 = vdwg.mxu0
  %808 = vmatprep.subr.bf16.mxu0 0
  %809 = vmatpush1.bf16.msra.mxu0 %v579
  %810 = vmatprep.subr.bf16.mxu0 0
  %811 = vmatpush1.bf16.msra.mxu0 %v580
  %812 = vmatprep.subr.bf16.mxu0 0
  %813 = vmatpush1.bf16.msra.mxu0 %v581
  %814 = vmatprep.subr.bf16.mxu0 0
  %815 = vmatpush1.bf16.msra.mxu0 %v582
  %816 = vmatprep.subr.bf16.mxu0 0
  %817 = vmatpush1.bf16.msra.mxu0 %v583
  %818 = vmatprep.subr.bf16.mxu0 0
  %819 = vmatpush1.bf16.msra.mxu0 %v584
  %820 = vmatprep.subr.bf16.mxu0 0
  %821 = vmatpush1.bf16.msra.mxu0 %v585
  %822 = vmatprep.subr.bf16.mxu0 0
  %823 = vmatpush1.bf16.msra.mxu0 %v586
  %824 = vmatprep.subr.bf16.mxu0 0
  %825 = vmatpush1.bf16.msra.mxu0 %v587
  %826 = vmatprep.subr.bf16.mxu0 0
  %827 = vmatpush1.bf16.msra.mxu0 %v588
  %828 = vmatprep.subr.bf16.mxu0 0
  %829 = vmatpush1.bf16.msra.mxu0 %v589
  %830 = vmatprep.subr.bf16.mxu0 0
  %831 = vmatpush1.bf16.msra.mxu0 %v590
  %832 = vmatprep.subr.bf16.mxu0 0
  %833 = vmatpush1.bf16.msra.mxu0 %v591
  %834 = vmatprep.subr.bf16.mxu0 0
  %835 = vmatpush1.bf16.msra.mxu0 %v592
  %836 = vmatprep.subr.bf16.mxu0 0
  %837 = vmatpush1.bf16.msra.mxu0 %v593
  %838 = vmatprep.subr.bf16.mxu0 0
  %839 = vmatpush1.bf16.msra.mxu0 %v594
  %840 = vmatprep.mubr.bf16.mxu0 %v219
  %841 = vmatmul.mubr.bf16.gmra.mrb[0].mxu0 %v218
  %v842 = vpop.f32.mrb[0].mxu0
  %v843 = vadd.f32 %v802, %v842
  %v844 = vpop.f32.mrb[0].mxu0
  %v845 = vpop.f32.mrb[0].mxu0
  %v846 = vadd.f32 %v805, %v845
  %v847 = vpop.f32.mrb[0].mxu0
  %848 = vdwg.mxu0
  %849 = vmatprep.subr.bf16.mxu0 0
  %850 = vmatpush1.bf16.msra.mxu0 %v595
  %851 = vmatprep.subr.bf16.mxu0 0
  %852 = vmatpush1.bf16.msra.mxu0 %v596
  %853 = vmatprep.subr.bf16.mxu0 0
  %854 = vmatpush1.bf16.msra.mxu0 %v597
  %855 = vmatprep.subr.bf16.mxu0 0
  %856 = vmatpush1.bf16.msra.mxu0 %v598
  %857 = vmatprep.subr.bf16.mxu0 0
  %858 = vmatpush1.bf16.msra.mxu0 %v599
  %859 = vmatprep.subr.bf16.mxu0 0
  %860 = vmatpush1.bf16.msra.mxu0 %v600
  %861 = vmatprep.subr.bf16.mxu0 0
  %862 = vmatpush1.bf16.msra.mxu0 %v601
  %863 = vmatprep.subr.bf16.mxu0 0
  %864 = vmatpush1.bf16.msra.mxu0 %v602
  %865 = vmatprep.subr.bf16.mxu0 0
  %866 = vmatpush1.bf16.msra.mxu0 %v603
  %867 = vmatprep.subr.bf16.mxu0 0
  %868 = vmatpush1.bf16.msra.mxu0 %v604
  %869 = vmatprep.subr.bf16.mxu0 0
  %870 = vmatpush1.bf16.msra.mxu0 %v605
  %871 = vmatprep.subr.bf16.mxu0 0
  %872 = vmatpush1.bf16.msra.mxu0 0
  %873 = vmatprep.subr.bf16.mxu0 0
  %874 = vmatpush1.bf16.msra.mxu0 0
  %875 = vmatprep.subr.bf16.mxu0 0
  %876 = vmatpush1.bf16.msra.mxu0 0
  %877 = vmatprep.subr.bf16.mxu0 0
  %878 = vmatpush1.bf16.msra.mxu0 0
  %879 = vmatprep.subr.bf16.mxu0 0
  %880 = vmatpush1.bf16.msra.mxu0 0
  %881 = vmatprep.mubr.bf16.mxu0 %v683
  %882 = vmatmul.mubr.bf16.gmra.mrb[0].mxu0 %v220
  %v883 = vpop.f32.mrb[0].mxu0
  %v884 = vadd.f32 %v843, %v883
  %v885 = vpop.f32.mrb[0].mxu0
  %v886 = vpop.f32.mrb[0].mxu0
  %v887 = vadd.f32 %v846, %v886
  %v888 = vpop.f32.mrb[0].mxu0
  %889 = vdwg.mxu0
  %vm890 = vcmp.ge.f32.partialorder %v884, 0.0
  %vm891 = vcmp.ge.f32.partialorder %v887, 0.0
  %v892 = vmul.f32 %v884, 0.2
  %v893 = vmul.f32 %v887, 0.2
  %v894 = vsel %vm890, %v884, %v892
  %v895 = vsel %vm891, %v887, %v893
  %v896 = vsub.f32 0.0, %v884
  %v897 = vsub.f32 0.0, %v887
  %v898 = vmul.f32 %v896, 1.442695
  %v899 = vpow.pop %v898
  %v900 = vmul.f32 %v897, 1.442695
  %v901 = vpow.pop %v900
  %v902 = vadd.f32 %v899, 1.0
  %v903 = vadd.f32 %v901, 1.0
  %v904 = vrcp.pop %v902
  %v905 = vrcp.pop %v903
  %908 = vrot.lane.b32.xlu0 %v904, 112
  %v909 = vpop.permute.xlu0 %908
  %910 = vrot.lane.b32.xlu0 %v905, 112
  %v911 = vpop.permute.xlu0 %910
  %v914 = vmul.f32 %v894, %v909
  %v915 = vmul.f32 %v895, %v911
  %v916 = vsub.f32 0.0, %v914
  %v917 = vsub.f32 0.0, %v915
  %v918 = vmul.f32 %v916, 1.442695
  %v919 = vpow.pop %v918
  %v920 = vmul.f32 %v917, 1.442695
  %v921 = vpow.pop %v920
  %v922 = vadd.f32 %v919, 1.0
  %v923 = vadd.f32 %v921, 1.0
  %v924 = vrcp.pop %v922
  %v925 = vmul.f32 1.0, %v924
  %v926 = vrcp.pop %v923
  %v927 = vmul.f32 1.0, %v926
  %vm928 = vcmask 130048
  %929 = vst.msk [vmem:[%s3] sm:$0xff] %vm928, %v925
  %930 = vst.msk [vmem:[%s3 + $0x8] sm:$0xff] %vm928, %v927
  // Predicated region
  $region14: #{discriminator_forward.9} parent=0 // pred_check
    _
  $region15: #{discriminator_forward.9} parent=0 // pred_check_branch
    %932 = sbr.rel (0) target = $region17
  $region16: #{discriminator_forward.9} parent=0 // pred_region
    _
  $region17: #{discriminator_forward.9} parent=0 // pred_fallthru
    _
  // Predicated region
  $region18: #{discriminator_forward.9} parent=0 // pred_check
    _
  $region19: #{discriminator_forward.9} parent=0 // pred_check_branch
    %934 = sbr.rel (0) target = $region21
  $region20: #{discriminator_forward.9} parent=0 // pred_region
    _
  $region21: #{discriminator_forward.9} parent=0 // pred_fallthru
    _

</llo_original>
